<compile_context>
chip_gen: v5e
topology: v5e:2x2
jax: 0.10.0
libtpu: 0.0.40
codegen_flags: <defaults>
</compile_context>

<pallas_src>
import functools

import jax
import jax.numpy as jnp
from jax.experimental import pallas as pl
from jax.experimental.pallas import tpu as pltpu

TAU = 2.0      # spikingjelly LIFNode default tau
V_TH = 1.0     # default v_threshold
CPAD = 128     # lane-dense padded output-channel count
MAX_TILE_M = 512


# ----------------------------------------------------------------------------
# Fused Pallas kernel: conv-as-matmul + BN bias + block LIF + out LIF + mean
#   grid = (M tiles, T);  T axis is "arbitrary" (temporal carry in scratch)
#   p_ref : [tile_m, K]     bf16   im2col patches for this (tile, t)
#   w_ref : [K, 128]        bf16   conv weights with BN scale folded in
#   b_ref : [1, 128]        f32    BN bias
#   s_ref : [tile_m, 128]   bf16   spike output for this (tile, t)
#   d_ref : [tile_m, 128]   f32    decoded output (resident across t)
#   v1/v2 : [tile_m, 128]   f32    LIF membrane potentials (scratch)
# ----------------------------------------------------------------------------
def _fused_conv_lif_kernel(p_ref, w_ref, b_ref, s_ref, d_ref,
                           v1_ref, v2_ref, *, T, inv_T):
    t = pl.program_id(1)

    @pl.when(t == 0)
    def _():
        v1_ref[...] = jnp.zeros_like(v1_ref)
        v2_ref[...] = jnp.zeros_like(v2_ref)
        d_ref[...] = jnp.zeros_like(d_ref)

    # conv (im2col matmul, bf16 in / f32 accumulate) + folded-BN bias
    pre = jnp.dot(p_ref[...], w_ref[...], preferred_element_type=jnp.float32)
    pre = pre + b_ref[...]

    # block LIF (decay_input=True, hard reset to v_reset=0): v += (x - v)/tau
    v1 = v1_ref[...] + (pre - v1_ref[...]) * (1.0 / TAU)
    s1 = (v1 >= V_TH).astype(jnp.float32)
    v1_ref[...] = jnp.where(s1 > 0.0, 0.0, v1)
    s_ref[...] = s1.astype(s_ref.dtype)

    # out_module LIF on the spike train + MeanDecodeNode accumulation
    v2 = v2_ref[...] + (s1 - v2_ref[...]) * (1.0 / TAU)
    s2 = (v2 >= V_TH).astype(jnp.float32)
    v2_ref[...] = jnp.where(s2 > 0.0, 0.0, v2)
    d_ref[...] = d_ref[...] + s2

    @pl.when(t == T - 1)
    def _():
        d_ref[...] = d_ref[...] * inv_T       # mean over time


# ----------------------------------------------------------------------------
# Host-side glue
# ----------------------------------------------------------------------------
def im2col_s2(x_nhwc, k=3, stride=2, pad=1):
    """x_nhwc: [TN, H, W, C] -> ([TN*Ho*Wo, k*k*C], Ho, Wo)."""
    TN, H, W, C = x_nhwc.shape
    xp = jnp.pad(x_nhwc, ((0, 0), (pad, pad), (pad, pad), (0, 0)))
    Ho = (H + 2 * pad - k) // stride + 1
    Wo = (W + 2 * pad - k) // stride + 1
    cols = []
    for di in range(k):
        for dj in range(k):
            cols.append(
                xp[:, di:di + stride * Ho:stride, dj:dj + stride * Wo:stride, :])
    patches = jnp.stack(cols, axis=3)            # [TN, Ho, Wo, k*k, C]
    return patches.reshape(TN * Ho * Wo, k * k * C), Ho, Wo


def _pick_tile_m(mpad):
    for cand in (MAX_TILE_M, 256, 128):
        if mpad % cand == 0:
            return cand
    return 128


def fused_down_block(x_nhwc, params, T, N):
    """One stage: conv3x3(s2) + folded BN + LIF, plus out_module LIF + mean.

    x_nhwc: [T*N, H, W, Cin] bf16 spikes (or bf16 input frames).
    Returns (spikes [T*N, Ho, Wo, Cout] bf16, decoded [N, Cout, Ho, Wo] f32).
    """
    w, scale, bias = params                      # w: [Cout, Cin, 3, 3]
    Cout, Cin = w.shape[0], w.shape[1]
    assert Cout <= CPAD

    patches, Ho, Wo = im2col_s2(x_nhwc)          # [T*N*Ho*Wo, 9*Cin] bf16
    K = 9 * Cin
    M = N * Ho * Wo
    patches = patches.reshape(T, M, K).astype(jnp.bfloat16)

    # Fold BN scale into the weights, pad Cout to 128 lanes.
    w_mat = w.transpose(2, 3, 1, 0).reshape(K, Cout).astype(jnp.float32)
    w_mat = (w_mat * scale[None, :].astype(jnp.float32)).astype(jnp.bfloat16)
    w_mat = jnp.pad(w_mat, ((0, 0), (0, CPAD - Cout)))
    b_vec = jnp.pad(bias.astype(jnp.float32), (0, CPAD - Cout)).reshape(1, CPAD)

    Mpad = ((M + 127) // 128) * 128
    if Mpad > M:
        # padded rows see pre-activation == bias only; harmless, sliced off.
        patches = jnp.pad(patches, ((0, 0), (0, Mpad - M), (0, 0)))
    tile_m = _pick_tile_m(Mpad)

    spikes, dec = pl.pallas_call(
        functools.partial(_fused_conv_lif_kernel, T=T, inv_T=1.0 / T),
        out_shape=(jax.ShapeDtypeStruct((T, Mpad, CPAD), jnp.bfloat16),
                   jax.ShapeDtypeStruct((Mpad, CPAD), jnp.float32)),
        grid=(Mpad // tile_m, T),
        in_specs=[
            pl.BlockSpec((None, tile_m, K), lambda i, t: (t, i, 0)),
            pl.BlockSpec((K, CPAD), lambda i, t: (0, 0)),
            pl.BlockSpec((1, CPAD), lambda i, t: (0, 0)),
        ],
        out_specs=(pl.BlockSpec((None, tile_m, CPAD), lambda i, t: (t, i, 0)),
                   pl.BlockSpec((tile_m, CPAD), lambda i, t: (i, 0))),
        scratch_shapes=[pltpu.VMEM((tile_m, CPAD), jnp.float32),
                        pltpu.VMEM((tile_m, CPAD), jnp.float32)],
        compiler_params=pltpu.CompilerParams(
            dimension_semantics=("parallel", "arbitrary")),
    )(patches, w_mat, b_vec)

    spikes_nhwc = spikes[:, :M, :Cout].reshape(T * N, Ho, Wo, Cout)
    dec_nchw = dec[:M, :Cout].reshape(N, Ho, Wo, Cout).transpose(0, 3, 1, 2)
    return spikes_nhwc, dec_nchw


def detection_backbone_forward(x, params_list, fusion=False):
    """x: [T, N, C, H, W] f32 event frames -> detection_feed (list of 5)."""
    T, N, C, H, W = x.shape
    # one-time conversion to channels-last bf16; stays channels-last afterwards
    cur = x.reshape(T * N, C, H, W).transpose(0, 2, 3, 1).astype(jnp.bfloat16)

    detection_feed = []
    for p in params_list:                        # 3 backbone stages + 2 extras
        spikes_nhwc, dec_nchw = fused_down_block(cur, p, T=T, N=N)
        if fusion:
            TN, Ho, Wo, Cc = spikes_nhwc.shape
            fm = spikes_nhwc.reshape(T, N, Ho, Wo, Cc).transpose(
                0, 1, 4, 2, 3).astype(jnp.float32)
            detection_feed.append(fm)            # spiking feature map [T,N,C,H,W]
        else:
            detection_feed.append(dec_nchw)      # LIF + mean decode [N,C,H,W]
        cur = spikes_nhwc
    return detection_feed


def init_params(key, c_in, channels):
    """Deterministic conv + folded-BN params for each down block."""
    params = []
    for cout in channels:
        key, kw = jax.random.split(key)
        fan_in = 9 * c_in
        w = jax.random.normal(kw, (cout, c_in, 3, 3), jnp.float32) * (
            (2.0 / fan_in) ** 0.5)               # kaiming-like init_weights
        gamma = jnp.ones((cout,), jnp.float32)
        beta = jnp.zeros((cout,), jnp.float32)
        # BN folded with running_mean=0, running_var=1, eps=1e-5
        scale = gamma / jnp.sqrt(1.0 + 1e-5)
        bias = beta
        params.append((w, scale, bias))
        c_in = cout
    return params


if __name__ == "__main__":
    key = jax.random.PRNGKey(0)
    k_x, k_p = jax.random.split(key)

    # Small shapes: T=4 time steps, batch=2, 2 event-polarity channels, 32x32
    T, N, C, H, W = 4, 2, 2, 32, 32
    x = (jax.random.uniform(k_x, (T, N, C, H, W)) < 0.5).astype(jnp.float32)

    out_channels = [8, 16, 32]     # backbone stages (strides /2, /4, /8)
    extras_fm = [32, 32]           # args.extras
    params = init_params(k_p, C, out_channels + extras_fm)

    forward = jax.jit(functools.partial(detection_backbone_forward,
                                        fusion=False))
    detection_feed = forward(x, params)
    detection_feed = jax.block_until_ready(detection_feed)

    expected = [(N, 8, 16, 16), (N, 16, 8, 8), (N, 32, 4, 4),
                (N, 32, 2, 2), (N, 32, 1, 1)]
    assert [tuple(f.shape) for f in detection_feed] == expected, \
        [tuple(f.shape) for f in detection_feed]
    assert all(f.dtype == jnp.float32 for f in detection_feed)
    print("KERNEL_OK")
</pallas_src>

<mosaic_0001>
module attributes {stable_mosaic.version = 11 : i64} {
  func.func @_fused_conv_lif_kernel(%arg0: i32, %arg1: i32, %arg2: memref<1x512x18xbf16, #tpu.memory_space<vmem>>, %arg3: memref<18x128xbf16, #tpu.memory_space<vmem>>, %arg4: memref<1x128xf32, #tpu.memory_space<vmem>>, %arg5: memref<1x512x128xbf16, #tpu.memory_space<vmem>>, %arg6: memref<512x128xf32, #tpu.memory_space<vmem>>, %arg7: memref<512x128xf32, #tpu.memory_space<vmem>>, %arg8: memref<512x128xf32, #tpu.memory_space<vmem>>) attributes {dimension_semantics = [#tpu.dimension_semantics<parallel>, #tpu.dimension_semantics<arbitrary>], iteration_bounds = array<i64: 1, 4>, scalar_prefetch = 0 : i64, scratch_operands = 2 : i64, tpu.core_type = #tpu.core_type<tc>, window_params = [{transform_indices = @transform_0, window_bounds = array<i64: 1, 512, 18>}, {pipeline_mode = #tpu.pipeline_mode<synchronous>, transform_indices = @transform_1, window_bounds = array<i64: 18, 128>}, {pipeline_mode = #tpu.pipeline_mode<synchronous>, transform_indices = @transform_2, window_bounds = array<i64: 1, 128>}, {transform_indices = @transform_3, window_bounds = array<i64: 1, 512, 128>}, {transform_indices = @transform_4, window_bounds = array<i64: 512, 128>}]} {
    %c0_i32 = arith.constant 0 : i32
    %0 = arith.cmpi eq, %arg1, %c0_i32 : i32
    %1 = arith.extui %0 : i1 to i32
    %c0_i32_0 = arith.constant 0 : i32
    %2 = arith.cmpi ne, %1, %c0_i32_0 : i32
    scf.if %2 {
      %cst_35 = arith.constant 0.000000e+00 : f32
      %50 = vector.broadcast %cst_35 : f32 to vector<512x128xf32>
      %c0_36 = arith.constant 0 : index
      %c0_37 = arith.constant 0 : index
      %51 = vector.load %arg7[%c0_36, %c0_37] : memref<512x128xf32, #tpu.memory_space<vmem>>, vector<512x128xf32>
      tpu.vector_store %arg7[%c0_36, %c0_37], %50 {strides = array<i32>} : memref<512x128xf32, #tpu.memory_space<vmem>>, vector<512x128xf32>,
      %cst_38 = arith.constant 0.000000e+00 : f32
      %52 = vector.broadcast %cst_38 : f32 to vector<512x128xf32>
      %c0_39 = arith.constant 0 : index
      %c0_40 = arith.constant 0 : index
      %53 = vector.load %arg8[%c0_39, %c0_40] : memref<512x128xf32, #tpu.memory_space<vmem>>, vector<512x128xf32>
      tpu.vector_store %arg8[%c0_39, %c0_40], %52 {strides = array<i32>} : memref<512x128xf32, #tpu.memory_space<vmem>>, vector<512x128xf32>,
      %cst_41 = arith.constant 0.000000e+00 : f32
      %54 = vector.broadcast %cst_41 : f32 to vector<512x128xf32>
      %c0_42 = arith.constant 0 : index
      %c0_43 = arith.constant 0 : index
      %55 = vector.load %arg6[%c0_42, %c0_43] : memref<512x128xf32, #tpu.memory_space<vmem>>, vector<512x128xf32>
      tpu.vector_store %arg6[%c0_42, %c0_43], %54 {strides = array<i32>} : memref<512x128xf32, #tpu.memory_space<vmem>>, vector<512x128xf32>,
    } else {
    }
    %c0 = arith.constant 0 : index
    %c0_1 = arith.constant 0 : index
    %c0_2 = arith.constant 0 : index
    %3 = vector.load %arg2[%c0, %c0_1, %c0_2] : memref<1x512x18xbf16, #tpu.memory_space<vmem>>, vector<1x512x18xbf16>
    %4 = vector.shape_cast %3 : vector<1x512x18xbf16> to vector<512x18xbf16>
    %c0_3 = arith.constant 0 : index
    %c0_4 = arith.constant 0 : index
    %5 = vector.load %arg3[%c0_3, %c0_4] : memref<18x128xbf16, #tpu.memory_space<vmem>>, vector<18x128xbf16>
    %cst = arith.constant dense<0.000000e+00> : vector<512x128xf32>
    %6 = tpu.matmul %4, %5, %cst {dimension_numbers = #tpu.dot_dimension_numbers<[1], [0], [0], [1], [0, 0, 1, 1], [], []>} : vector<512x18xbf16>, vector<18x128xbf16>, vector<512x128xf32> -> vector<512x128xf32>
    %c0_5 = arith.constant 0 : index
    %c0_6 = arith.constant 0 : index
    %7 = vector.load %arg4[%c0_5, %c0_6] : memref<1x128xf32, #tpu.memory_space<vmem>>, vector<1x128xf32>
    %8 = vector.broadcast %7 : vector<1x128xf32> to vector<512x128xf32>
    %9 = arith.addf %6, %8 : vector<512x128xf32>
    %c0_7 = arith.constant 0 : index
    %c0_8 = arith.constant 0 : index
    %10 = vector.load %arg7[%c0_7, %c0_8] : memref<512x128xf32, #tpu.memory_space<vmem>>, vector<512x128xf32>
    %c0_9 = arith.constant 0 : index
    %c0_10 = arith.constant 0 : index
    %11 = vector.load %arg7[%c0_9, %c0_10] : memref<512x128xf32, #tpu.memory_space<vmem>>, vector<512x128xf32>
    %12 = arith.subf %9, %11 : vector<512x128xf32>
    %cst_11 = arith.constant 5.000000e-01 : f32
    %13 = vector.broadcast %cst_11 : f32 to vector<512x128xf32>
    %14 = arith.mulf %12, %13 : vector<512x128xf32>
    %15 = arith.addf %10, %14 : vector<512x128xf32>
    %cst_12 = arith.constant 1.000000e+00 : f32
    %16 = vector.broadcast %cst_12 : f32 to vector<512x128xf32>
    %17 = arith.cmpf oge, %15, %16 : vector<512x128xf32>
    %18 = arith.extui %17 : vector<512x128xi1> to vector<512x128xi32>
    %19 = arith.sitofp %18 : vector<512x128xi32> to vector<512x128xf32>
    %cst_13 = arith.constant 0.000000e+00 : f32
    %20 = vector.broadcast %cst_13 : f32 to vector<512x128xf32>
    %21 = arith.cmpf ogt, %19, %20 : vector<512x128xf32>
    %cst_14 = arith.constant 0.000000e+00 : f32
    %22 = vector.broadcast %cst_14 : f32 to vector<512x128xf32>
    %23 = arith.select %21, %22, %15 : vector<512x128xi1>, vector<512x128xf32>
    %c0_15 = arith.constant 0 : index
    %c0_16 = arith.constant 0 : index
    %24 = vector.load %arg7[%c0_15, %c0_16] : memref<512x128xf32, #tpu.memory_space<vmem>>, vector<512x128xf32>
    tpu.vector_store %arg7[%c0_15, %c0_16], %23 {strides = array<i32>} : memref<512x128xf32, #tpu.memory_space<vmem>>, vector<512x128xf32>,
    %25 = arith.truncf %19 : vector<512x128xf32> to vector<512x128xbf16>
    %c0_17 = arith.constant 0 : index
    %c0_18 = arith.constant 0 : index
    %c0_19 = arith.constant 0 : index
    %26 = vector.load %arg5[%c0_17, %c0_18, %c0_19] : memref<1x512x128xbf16, #tpu.memory_space<vmem>>, vector<1x512x128xbf16>
    %27 = vector.shape_cast %26 : vector<1x512x128xbf16> to vector<512x128xbf16>
    %28 = vector.shape_cast %25 : vector<512x128xbf16> to vector<1x512x128xbf16>
    tpu.vector_store %arg5[%c0_17, %c0_18, %c0_19], %28 {strides = array<i32>} : memref<1x512x128xbf16, #tpu.memory_space<vmem>>, vector<1x512x128xbf16>,
    %c0_20 = arith.constant 0 : index
    %c0_21 = arith.constant 0 : index
    %29 = vector.load %arg8[%c0_20, %c0_21] : memref<512x128xf32, #tpu.memory_space<vmem>>, vector<512x128xf32>
    %c0_22 = arith.constant 0 : index
    %c0_23 = arith.constant 0 : index
    %30 = vector.load %arg8[%c0_22, %c0_23] : memref<512x128xf32, #tpu.memory_space<vmem>>, vector<512x128xf32>
    %31 = arith.subf %19, %30 : vector<512x128xf32>
    %cst_24 = arith.constant 5.000000e-01 : f32
    %32 = vector.broadcast %cst_24 : f32 to vector<512x128xf32>
    %33 = arith.mulf %31, %32 : vector<512x128xf32>
    %34 = arith.addf %29, %33 : vector<512x128xf32>
    %cst_25 = arith.constant 1.000000e+00 : f32
    %35 = vector.broadcast %cst_25 : f32 to vector<512x128xf32>
    %36 = arith.cmpf oge, %34, %35 : vector<512x128xf32>
    %37 = arith.extui %36 : vector<512x128xi1> to vector<512x128xi32>
    %38 = arith.sitofp %37 : vector<512x128xi32> to vector<512x128xf32>
    %cst_26 = arith.constant 0.000000e+00 : f32
    %39 = vector.broadcast %cst_26 : f32 to vector<512x128xf32>
    %40 = arith.cmpf ogt, %38, %39 : vector<512x128xf32>
    %cst_27 = arith.constant 0.000000e+00 : f32
    %41 = vector.broadcast %cst_27 : f32 to vector<512x128xf32>
    %42 = arith.select %40, %41, %34 : vector<512x128xi1>, vector<512x128xf32>
    %c0_28 = arith.constant 0 : index
    %c0_29 = arith.constant 0 : index
    %43 = vector.load %arg8[%c0_28, %c0_29] : memref<512x128xf32, #tpu.memory_space<vmem>>, vector<512x128xf32>
    tpu.vector_store %arg8[%c0_28, %c0_29], %42 {strides = array<i32>} : memref<512x128xf32, #tpu.memory_space<vmem>>, vector<512x128xf32>,
    %c0_30 = arith.constant 0 : index
    %c0_31 = arith.constant 0 : index
    %44 = vector.load %arg6[%c0_30, %c0_31] : memref<512x128xf32, #tpu.memory_space<vmem>>, vector<512x128xf32>
    %45 = arith.addf %44, %38 : vector<512x128xf32>
    %c0_32 = arith.constant 0 : index
    %c0_33 = arith.constant 0 : index
    %46 = vector.load %arg6[%c0_32, %c0_33] : memref<512x128xf32, #tpu.memory_space<vmem>>, vector<512x128xf32>
    tpu.vector_store %arg6[%c0_32, %c0_33], %45 {strides = array<i32>} : memref<512x128xf32, #tpu.memory_space<vmem>>, vector<512x128xf32>,
    %c3_i32 = arith.constant 3 : i32
    %47 = arith.cmpi eq, %arg1, %c3_i32 : i32
    %48 = arith.extui %47 : i1 to i32
    %c0_i32_34 = arith.constant 0 : i32
    %49 = arith.cmpi ne, %48, %c0_i32_34 : i32
    scf.if %49 {
      %c0_35 = arith.constant 0 : index
      %c0_36 = arith.constant 0 : index
      %50 = vector.load %arg6[%c0_35, %c0_36] : memref<512x128xf32, #tpu.memory_space<vmem>>, vector<512x128xf32>
      %cst_37 = arith.constant 2.500000e-01 : f32
      %51 = vector.broadcast %cst_37 : f32 to vector<512x128xf32>
      %52 = arith.mulf %50, %51 : vector<512x128xf32>
      %c0_38 = arith.constant 0 : index
      %c0_39 = arith.constant 0 : index
      %53 = vector.load %arg6[%c0_38, %c0_39] : memref<512x128xf32, #tpu.memory_space<vmem>>, vector<512x128xf32>
      tpu.vector_store %arg6[%c0_38, %c0_39], %52 {strides = array<i32>} : memref<512x128xf32, #tpu.memory_space<vmem>>, vector<512x128xf32>,
    } else {
    }
    return
  }
  func.func @transform_0(%arg0: i32, %arg1: i32) -> (i32, i32, i32) {
    %c0_i32 = arith.constant 0 : i32
    %c0_i32_0 = arith.constant 0 : i32
    return %arg1, %arg0, %c0_i32 : i32, i32, i32
  }
  func.func @transform_1(%arg0: i32, %arg1: i32) -> (i32, i32) {
    %c0_i32 = arith.constant 0 : i32
    %c0_i32_0 = arith.constant 0 : i32
    %c0_i32_1 = arith.constant 0 : i32
    return %c0_i32, %c0_i32_0 : i32, i32
  }
  func.func @transform_2(%arg0: i32, %arg1: i32) -> (i32, i32) {
    %c0_i32 = arith.constant 0 : i32
    %c0_i32_0 = arith.constant 0 : i32
    %c0_i32_1 = arith.constant 0 : i32
    return %c0_i32, %c0_i32_0 : i32, i32
  }
  func.func @transform_3(%arg0: i32, %arg1: i32) -> (i32, i32, i32) {
    %c0_i32 = arith.constant 0 : i32
    %c0_i32_0 = arith.constant 0 : i32
    return %arg1, %arg0, %c0_i32 : i32, i32, i32
  }
  func.func @transform_4(%arg0: i32, %arg1: i32) -> (i32, i32) {
    %c0_i32 = arith.constant 0 : i32
    %c0_i32_0 = arith.constant 0 : i32
    return %arg0, %c0_i32 : i32, i32
  }
}

module attributes {stable_mosaic.version = 11 : i64} {
  func.func @_fused_conv_lif_kernel(%arg0: i32, %arg1: i32, %arg2: memref<1x128x72xbf16, #tpu.memory_space<vmem>>, %arg3: memref<72x128xbf16, #tpu.memory_space<vmem>>, %arg4: memref<1x128xf32, #tpu.memory_space<vmem>>, %arg5: memref<1x128x128xbf16, #tpu.memory_space<vmem>>, %arg6: memref<128x128xf32, #tpu.memory_space<vmem>>, %arg7: memref<128x128xf32, #tpu.memory_space<vmem>>, %arg8: memref<128x128xf32, #tpu.memory_space<vmem>>) attributes {dimension_semantics = [#tpu.dimension_semantics<parallel>, #tpu.dimension_semantics<arbitrary>], iteration_bounds = array<i64: 1, 4>, scalar_prefetch = 0 : i64, scratch_operands = 2 : i64, tpu.core_type = #tpu.core_type<tc>, window_params = [{transform_indices = @transform_0, window_bounds = array<i64: 1, 128, 72>}, {pipeline_mode = #tpu.pipeline_mode<synchronous>, transform_indices = @transform_1, window_bounds = array<i64: 72, 128>}, {pipeline_mode = #tpu.pipeline_mode<synchronous>, transform_indices = @transform_2, window_bounds = array<i64: 1, 128>}, {transform_indices = @transform_3, window_bounds = array<i64: 1, 128, 128>}, {transform_indices = @transform_4, window_bounds = array<i64: 128, 128>}]} {
    %c0_i32 = arith.constant 0 : i32
    %0 = arith.cmpi eq, %arg1, %c0_i32 : i32
    %1 = arith.extui %0 : i1 to i32
    %c0_i32_0 = arith.constant 0 : i32
    %2 = arith.cmpi ne, %1, %c0_i32_0 : i32
    scf.if %2 {
      %cst_35 = arith.constant 0.000000e+00 : f32
      %50 = vector.broadcast %cst_35 : f32 to vector<128x128xf32>
      %c0_36 = arith.constant 0 : index
      %c0_37 = arith.constant 0 : index
      %51 = vector.load %arg7[%c0_36, %c0_37] : memref<128x128xf32, #tpu.memory_space<vmem>>, vector<128x128xf32>
      tpu.vector_store %arg7[%c0_36, %c0_37], %50 {strides = array<i32>} : memref<128x128xf32, #tpu.memory_space<vmem>>, vector<128x128xf32>,
      %cst_38 = arith.constant 0.000000e+00 : f32
      %52 = vector.broadcast %cst_38 : f32 to vector<128x128xf32>
      %c0_39 = arith.constant 0 : index
      %c0_40 = arith.constant 0 : index
      %53 = vector.load %arg8[%c0_39, %c0_40] : memref<128x128xf32, #tpu.memory_space<vmem>>, vector<128x128xf32>
      tpu.vector_store %arg8[%c0_39, %c0_40], %52 {strides = array<i32>} : memref<128x128xf32, #tpu.memory_space<vmem>>, vector<128x128xf32>,
      %cst_41 = arith.constant 0.000000e+00 : f32
      %54 = vector.broadcast %cst_41 : f32 to vector<128x128xf32>
      %c0_42 = arith.constant 0 : index
      %c0_43 = arith.constant 0 : index
      %55 = vector.load %arg6[%c0_42, %c0_43] : memref<128x128xf32, #tpu.memory_space<vmem>>, vector<128x128xf32>
      tpu.vector_store %arg6[%c0_42, %c0_43], %54 {strides = array<i32>} : memref<128x128xf32, #tpu.memory_space<vmem>>, vector<128x128xf32>,
    } else {
    }
    %c0 = arith.constant 0 : index
    %c0_1 = arith.constant 0 : index
    %c0_2 = arith.constant 0 : index
    %3 = vector.load %arg2[%c0, %c0_1, %c0_2] : memref<1x128x72xbf16, #tpu.memory_space<vmem>>, vector<1x128x72xbf16>
    %4 = vector.shape_cast %3 : vector<1x128x72xbf16> to vector<128x72xbf16>
    %c0_3 = arith.constant 0 : index
    %c0_4 = arith.constant 0 : index
    %5 = vector.load %arg3[%c0_3, %c0_4] : memref<72x128xbf16, #tpu.memory_space<vmem>>, vector<72x128xbf16>
    %cst = arith.constant dense<0.000000e+00> : vector<128x128xf32>
    %6 = tpu.matmul %4, %5, %cst {dimension_numbers = #tpu.dot_dimension_numbers<[1], [0], [0], [1], [0, 0, 1, 1], [], []>} : vector<128x72xbf16>, vector<72x128xbf16>, vector<128x128xf32> -> vector<128x128xf32>
    %c0_5 = arith.constant 0 : index
    %c0_6 = arith.constant 0 : index
    %7 = vector.load %arg4[%c0_5, %c0_6] : memref<1x128xf32, #tpu.memory_space<vmem>>, vector<1x128xf32>
    %8 = vector.broadcast %7 : vector<1x128xf32> to vector<128x128xf32>
    %9 = arith.addf %6, %8 : vector<128x128xf32>
    %c0_7 = arith.constant 0 : index
    %c0_8 = arith.constant 0 : index
    %10 = vector.load %arg7[%c0_7, %c0_8] : memref<128x128xf32, #tpu.memory_space<vmem>>, vector<128x128xf32>
    %c0_9 = arith.constant 0 : index
    %c0_10 = arith.constant 0 : index
    %11 = vector.load %arg7[%c0_9, %c0_10] : memref<128x128xf32, #tpu.memory_space<vmem>>, vector<128x128xf32>
    %12 = arith.subf %9, %11 : vector<128x128xf32>
    %cst_11 = arith.constant 5.000000e-01 : f32
    %13 = vector.broadcast %cst_11 : f32 to vector<128x128xf32>
    %14 = arith.mulf %12, %13 : vector<128x128xf32>
    %15 = arith.addf %10, %14 : vector<128x128xf32>
    %cst_12 = arith.constant 1.000000e+00 : f32
    %16 = vector.broadcast %cst_12 : f32 to vector<128x128xf32>
    %17 = arith.cmpf oge, %15, %16 : vector<128x128xf32>
    %18 = arith.extui %17 : vector<128x128xi1> to vector<128x128xi32>
    %19 = arith.sitofp %18 : vector<128x128xi32> to vector<128x128xf32>
    %cst_13 = arith.constant 0.000000e+00 : f32
    %20 = vector.broadcast %cst_13 : f32 to vector<128x128xf32>
    %21 = arith.cmpf ogt, %19, %20 : vector<128x128xf32>
    %cst_14 = arith.constant 0.000000e+00 : f32
    %22 = vector.broadcast %cst_14 : f32 to vector<128x128xf32>
    %23 = arith.select %21, %22, %15 : vector<128x128xi1>, vector<128x128xf32>
    %c0_15 = arith.constant 0 : index
    %c0_16 = arith.constant 0 : index
    %24 = vector.load %arg7[%c0_15, %c0_16] : memref<128x128xf32, #tpu.memory_space<vmem>>, vector<128x128xf32>
    tpu.vector_store %arg7[%c0_15, %c0_16], %23 {strides = array<i32>} : memref<128x128xf32, #tpu.memory_space<vmem>>, vector<128x128xf32>,
    %25 = arith.truncf %19 : vector<128x128xf32> to vector<128x128xbf16>
    %c0_17 = arith.constant 0 : index
    %c0_18 = arith.constant 0 : index
    %c0_19 = arith.constant 0 : index
    %26 = vector.load %arg5[%c0_17, %c0_18, %c0_19] : memref<1x128x128xbf16, #tpu.memory_space<vmem>>, vector<1x128x128xbf16>
    %27 = vector.shape_cast %26 : vector<1x128x128xbf16> to vector<128x128xbf16>
    %28 = vector.shape_cast %25 : vector<128x128xbf16> to vector<1x128x128xbf16>
    tpu.vector_store %arg5[%c0_17, %c0_18, %c0_19], %28 {strides = array<i32>} : memref<1x128x128xbf16, #tpu.memory_space<vmem>>, vector<1x128x128xbf16>,
    %c0_20 = arith.constant 0 : index
    %c0_21 = arith.constant 0 : index
    %29 = vector.load %arg8[%c0_20, %c0_21] : memref<128x128xf32, #tpu.memory_space<vmem>>, vector<128x128xf32>
    %c0_22 = arith.constant 0 : index
    %c0_23 = arith.constant 0 : index
    %30 = vector.load %arg8[%c0_22, %c0_23] : memref<128x128xf32, #tpu.memory_space<vmem>>, vector<128x128xf32>
    %31 = arith.subf %19, %30 : vector<128x128xf32>
    %cst_24 = arith.constant 5.000000e-01 : f32
    %32 = vector.broadcast %cst_24 : f32 to vector<128x128xf32>
    %33 = arith.mulf %31, %32 : vector<128x128xf32>
    %34 = arith.addf %29, %33 : vector<128x128xf32>
    %cst_25 = arith.constant 1.000000e+00 : f32
    %35 = vector.broadcast %cst_25 : f32 to vector<128x128xf32>
    %36 = arith.cmpf oge, %34, %35 : vector<128x128xf32>
    %37 = arith.extui %36 : vector<128x128xi1> to vector<128x128xi32>
    %38 = arith.sitofp %37 : vector<128x128xi32> to vector<128x128xf32>
    %cst_26 = arith.constant 0.000000e+00 : f32
    %39 = vector.broadcast %cst_26 : f32 to vector<128x128xf32>
    %40 = arith.cmpf ogt, %38, %39 : vector<128x128xf32>
    %cst_27 = arith.constant 0.000000e+00 : f32
    %41 = vector.broadcast %cst_27 : f32 to vector<128x128xf32>
    %42 = arith.select %40, %41, %34 : vector<128x128xi1>, vector<128x128xf32>
    %c0_28 = arith.constant 0 : index
    %c0_29 = arith.constant 0 : index
    %43 = vector.load %arg8[%c0_28, %c0_29] : memref<128x128xf32, #tpu.memory_space<vmem>>, vector<128x128xf32>
    tpu.vector_store %arg8[%c0_28, %c0_29], %42 {strides = array<i32>} : memref<128x128xf32, #tpu.memory_space<vmem>>, vector<128x128xf32>,
    %c0_30 = arith.constant 0 : index
    %c0_31 = arith.constant 0 : index
    %44 = vector.load %arg6[%c0_30, %c0_31] : memref<128x128xf32, #tpu.memory_space<vmem>>, vector<128x128xf32>
    %45 = arith.addf %44, %38 : vector<128x128xf32>
    %c0_32 = arith.constant 0 : index
    %c0_33 = arith.constant 0 : index
    %46 = vector.load %arg6[%c0_32, %c0_33] : memref<128x128xf32, #tpu.memory_space<vmem>>, vector<128x128xf32>
    tpu.vector_store %arg6[%c0_32, %c0_33], %45 {strides = array<i32>} : memref<128x128xf32, #tpu.memory_space<vmem>>, vector<128x128xf32>,
    %c3_i32 = arith.constant 3 : i32
    %47 = arith.cmpi eq, %arg1, %c3_i32 : i32
    %48 = arith.extui %47 : i1 to i32
    %c0_i32_34 = arith.constant 0 : i32
    %49 = arith.cmpi ne, %48, %c0_i32_34 : i32
    scf.if %49 {
      %c0_35 = arith.constant 0 : index
      %c0_36 = arith.constant 0 : index
      %50 = vector.load %arg6[%c0_35, %c0_36] : memref<128x128xf32, #tpu.memory_space<vmem>>, vector<128x128xf32>
      %cst_37 = arith.constant 2.500000e-01 : f32
      %51 = vector.broadcast %cst_37 : f32 to vector<128x128xf32>
      %52 = arith.mulf %50, %51 : vector<128x128xf32>
      %c0_38 = arith.constant 0 : index
      %c0_39 = arith.constant 0 : index
      %53 = vector.load %arg6[%c0_38, %c0_39] : memref<128x128xf32, #tpu.memory_space<vmem>>, vector<128x128xf32>
      tpu.vector_store %arg6[%c0_38, %c0_39], %52 {strides = array<i32>} : memref<128x128xf32, #tpu.memory_space<vmem>>, vector<128x128xf32>,
    } else {
    }
    return
  }
  func.func @transform_0(%arg0: i32, %arg1: i32) -> (i32, i32, i32) {
    %c0_i32 = arith.constant 0 : i32
    %c0_i32_0 = arith.constant 0 : i32
    return %arg1, %arg0, %c0_i32 : i32, i32, i32
  }
  func.func @transform_1(%arg0: i32, %arg1: i32) -> (i32, i32) {
    %c0_i32 = arith.constant 0 : i32
    %c0_i32_0 = arith.constant 0 : i32
    %c0_i32_1 = arith.constant 0 : i32
    return %c0_i32, %c0_i32_0 : i32, i32
  }
  func.func @transform_2(%arg0: i32, %arg1: i32) -> (i32, i32) {
    %c0_i32 = arith.constant 0 : i32
    %c0_i32_0 = arith.constant 0 : i32
    %c0_i32_1 = arith.constant 0 : i32
    return %c0_i32, %c0_i32_0 : i32, i32
  }
  func.func @transform_3(%arg0: i32, %arg1: i32) -> (i32, i32, i32) {
    %c0_i32 = arith.constant 0 : i32
    %c0_i32_0 = arith.constant 0 : i32
    return %arg1, %arg0, %c0_i32 : i32, i32, i32
  }
  func.func @transform_4(%arg0: i32, %arg1: i32) -> (i32, i32) {
    %c0_i32 = arith.constant 0 : i32
    %c0_i32_0 = arith.constant 0 : i32
    return %arg0, %c0_i32 : i32, i32
  }
}

module attributes {stable_mosaic.version = 11 : i64} {
  func.func @_fused_conv_lif_kernel(%arg0: i32, %arg1: i32, %arg2: memref<1x128x144xbf16, #tpu.memory_space<vmem>>, %arg3: memref<144x128xbf16, #tpu.memory_space<vmem>>, %arg4: memref<1x128xf32, #tpu.memory_space<vmem>>, %arg5: memref<1x128x128xbf16, #tpu.memory_space<vmem>>, %arg6: memref<128x128xf32, #tpu.memory_space<vmem>>, %arg7: memref<128x128xf32, #tpu.memory_space<vmem>>, %arg8: memref<128x128xf32, #tpu.memory_space<vmem>>) attributes {dimension_semantics = [#tpu.dimension_semantics<parallel>, #tpu.dimension_semantics<arbitrary>], iteration_bounds = array<i64: 1, 4>, scalar_prefetch = 0 : i64, scratch_operands = 2 : i64, tpu.core_type = #tpu.core_type<tc>, window_params = [{transform_indices = @transform_0, window_bounds = array<i64: 1, 128, 144>}, {pipeline_mode = #tpu.pipeline_mode<synchronous>, transform_indices = @transform_1, window_bounds = array<i64: 144, 128>}, {pipeline_mode = #tpu.pipeline_mode<synchronous>, transform_indices = @transform_2, window_bounds = array<i64: 1, 128>}, {transform_indices = @transform_3, window_bounds = array<i64: 1, 128, 128>}, {transform_indices = @transform_4, window_bounds = array<i64: 128, 128>}]} {
    %c0_i32 = arith.constant 0 : i32
    %0 = arith.cmpi eq, %arg1, %c0_i32 : i32
    %1 = arith.extui %0 : i1 to i32
    %c0_i32_0 = arith.constant 0 : i32
    %2 = arith.cmpi ne, %1, %c0_i32_0 : i32
    scf.if %2 {
      %cst_35 = arith.constant 0.000000e+00 : f32
      %50 = vector.broadcast %cst_35 : f32 to vector<128x128xf32>
      %c0_36 = arith.constant 0 : index
      %c0_37 = arith.constant 0 : index
      %51 = vector.load %arg7[%c0_36, %c0_37] : memref<128x128xf32, #tpu.memory_space<vmem>>, vector<128x128xf32>
      tpu.vector_store %arg7[%c0_36, %c0_37], %50 {strides = array<i32>} : memref<128x128xf32, #tpu.memory_space<vmem>>, vector<128x128xf32>,
      %cst_38 = arith.constant 0.000000e+00 : f32
      %52 = vector.broadcast %cst_38 : f32 to vector<128x128xf32>
      %c0_39 = arith.constant 0 : index
      %c0_40 = arith.constant 0 : index
      %53 = vector.load %arg8[%c0_39, %c0_40] : memref<128x128xf32, #tpu.memory_space<vmem>>, vector<128x128xf32>
      tpu.vector_store %arg8[%c0_39, %c0_40], %52 {strides = array<i32>} : memref<128x128xf32, #tpu.memory_space<vmem>>, vector<128x128xf32>,
      %cst_41 = arith.constant 0.000000e+00 : f32
      %54 = vector.broadcast %cst_41 : f32 to vector<128x128xf32>
      %c0_42 = arith.constant 0 : index
      %c0_43 = arith.constant 0 : index
      %55 = vector.load %arg6[%c0_42, %c0_43] : memref<128x128xf32, #tpu.memory_space<vmem>>, vector<128x128xf32>
      tpu.vector_store %arg6[%c0_42, %c0_43], %54 {strides = array<i32>} : memref<128x128xf32, #tpu.memory_space<vmem>>, vector<128x128xf32>,
    } else {
    }
    %c0 = arith.constant 0 : index
    %c0_1 = arith.constant 0 : index
    %c0_2 = arith.constant 0 : index
    %3 = vector.load %arg2[%c0, %c0_1, %c0_2] : memref<1x128x144xbf16, #tpu.memory_space<vmem>>, vector<1x128x144xbf16>
    %4 = vector.shape_cast %3 : vector<1x128x144xbf16> to vector<128x144xbf16>
    %c0_3 = arith.constant 0 : index
    %c0_4 = arith.constant 0 : index
    %5 = vector.load %arg3[%c0_3, %c0_4] : memref<144x128xbf16, #tpu.memory_space<vmem>>, vector<144x128xbf16>
    %cst = arith.constant dense<0.000000e+00> : vector<128x128xf32>
    %6 = tpu.matmul %4, %5, %cst {dimension_numbers = #tpu.dot_dimension_numbers<[1], [0], [0], [1], [0, 0, 1, 1], [], []>} : vector<128x144xbf16>, vector<144x128xbf16>, vector<128x128xf32> -> vector<128x128xf32>
    %c0_5 = arith.constant 0 : index
    %c0_6 = arith.constant 0 : index
    %7 = vector.load %arg4[%c0_5, %c0_6] : memref<1x128xf32, #tpu.memory_space<vmem>>, vector<1x128xf32>
    %8 = vector.broadcast %7 : vector<1x128xf32> to vector<128x128xf32>
    %9 = arith.addf %6, %8 : vector<128x128xf32>
    %c0_7 = arith.constant 0 : index
    %c0_8 = arith.constant 0 : index
    %10 = vector.load %arg7[%c0_7, %c0_8] : memref<128x128xf32, #tpu.memory_space<vmem>>, vector<128x128xf32>
    %c0_9 = arith.constant 0 : index
    %c0_10 = arith.constant 0 : index
    %11 = vector.load %arg7[%c0_9, %c0_10] : memref<128x128xf32, #tpu.memory_space<vmem>>, vector<128x128xf32>
    %12 = arith.subf %9, %11 : vector<128x128xf32>
    %cst_11 = arith.constant 5.000000e-01 : f32
    %13 = vector.broadcast %cst_11 : f32 to vector<128x128xf32>
    %14 = arith.mulf %12, %13 : vector<128x128xf32>
    %15 = arith.addf %10, %14 : vector<128x128xf32>
    %cst_12 = arith.constant 1.000000e+00 : f32
    %16 = vector.broadcast %cst_12 : f32 to vector<128x128xf32>
    %17 = arith.cmpf oge, %15, %16 : vector<128x128xf32>
    %18 = arith.extui %17 : vector<128x128xi1> to vector<128x128xi32>
    %19 = arith.sitofp %18 : vector<128x128xi32> to vector<128x128xf32>
    %cst_13 = arith.constant 0.000000e+00 : f32
    %20 = vector.broadcast %cst_13 : f32 to vector<128x128xf32>
    %21 = arith.cmpf ogt, %19, %20 : vector<128x128xf32>
    %cst_14 = arith.constant 0.000000e+00 : f32
    %22 = vector.broadcast %cst_14 : f32 to vector<128x128xf32>
    %23 = arith.select %21, %22, %15 : vector<128x128xi1>, vector<128x128xf32>
    %c0_15 = arith.constant 0 : index
    %c0_16 = arith.constant 0 : index
    %24 = vector.load %arg7[%c0_15, %c0_16] : memref<128x128xf32, #tpu.memory_space<vmem>>, vector<128x128xf32>
    tpu.vector_store %arg7[%c0_15, %c0_16], %23 {strides = array<i32>} : memref<128x128xf32, #tpu.memory_space<vmem>>, vector<128x128xf32>,
    %25 = arith.truncf %19 : vector<128x128xf32> to vector<128x128xbf16>
    %c0_17 = arith.constant 0 : index
    %c0_18 = arith.constant 0 : index
    %c0_19 = arith.constant 0 : index
    %26 = vector.load %arg5[%c0_17, %c0_18, %c0_19] : memref<1x128x128xbf16, #tpu.memory_space<vmem>>, vector<1x128x128xbf16>
    %27 = vector.shape_cast %26 : vector<1x128x128xbf16> to vector<128x128xbf16>
    %28 = vector.shape_cast %25 : vector<128x128xbf16> to vector<1x128x128xbf16>
    tpu.vector_store %arg5[%c0_17, %c0_18, %c0_19], %28 {strides = array<i32>} : memref<1x128x128xbf16, #tpu.memory_space<vmem>>, vector<1x128x128xbf16>,
    %c0_20 = arith.constant 0 : index
    %c0_21 = arith.constant 0 : index
    %29 = vector.load %arg8[%c0_20, %c0_21] : memref<128x128xf32, #tpu.memory_space<vmem>>, vector<128x128xf32>
    %c0_22 = arith.constant 0 : index
    %c0_23 = arith.constant 0 : index
    %30 = vector.load %arg8[%c0_22, %c0_23] : memref<128x128xf32, #tpu.memory_space<vmem>>, vector<128x128xf32>
    %31 = arith.subf %19, %30 : vector<128x128xf32>
    %cst_24 = arith.constant 5.000000e-01 : f32
    %32 = vector.broadcast %cst_24 : f32 to vector<128x128xf32>
    %33 = arith.mulf %31, %32 : vector<128x128xf32>
    %34 = arith.addf %29, %33 : vector<128x128xf32>
    %cst_25 = arith.constant 1.000000e+00 : f32
    %35 = vector.broadcast %cst_25 : f32 to vector<128x128xf32>
    %36 = arith.cmpf oge, %34, %35 : vector<128x128xf32>
    %37 = arith.extui %36 : vector<128x128xi1> to vector<128x128xi32>
    %38 = arith.sitofp %37 : vector<128x128xi32> to vector<128x128xf32>
    %cst_26 = arith.constant 0.000000e+00 : f32
    %39 = vector.broadcast %cst_26 : f32 to vector<128x128xf32>
    %40 = arith.cmpf ogt, %38, %39 : vector<128x128xf32>
    %cst_27 = arith.constant 0.000000e+00 : f32
    %41 = vector.broadcast %cst_27 : f32 to vector<128x128xf32>
    %42 = arith.select %40, %41, %34 : vector<128x128xi1>, vector<128x128xf32>
    %c0_28 = arith.constant 0 : index
    %c0_29 = arith.constant 0 : index
    %43 = vector.load %arg8[%c0_28, %c0_29] : memref<128x128xf32, #tpu.memory_space<vmem>>, vector<128x128xf32>
    tpu.vector_store %arg8[%c0_28, %c0_29], %42 {strides = array<i32>} : memref<128x128xf32, #tpu.memory_space<vmem>>, vector<128x128xf32>,
    %c0_30 = arith.constant 0 : index
    %c0_31 = arith.constant 0 : index
    %44 = vector.load %arg6[%c0_30, %c0_31] : memref<128x128xf32, #tpu.memory_space<vmem>>, vector<128x128xf32>
    %45 = arith.addf %44, %38 : vector<128x128xf32>
    %c0_32 = arith.constant 0 : index
    %c0_33 = arith.constant 0 : index
    %46 = vector.load %arg6[%c0_32, %c0_33] : memref<128x128xf32, #tpu.memory_space<vmem>>, vector<128x128xf32>
    tpu.vector_store %arg6[%c0_32, %c0_33], %45 {strides = array<i32>} : memref<128x128xf32, #tpu.memory_space<vmem>>, vector<128x128xf32>,
    %c3_i32 = arith.constant 3 : i32
    %47 = arith.cmpi eq, %arg1, %c3_i32 : i32
    %48 = arith.extui %47 : i1 to i32
    %c0_i32_34 = arith.constant 0 : i32
    %49 = arith.cmpi ne, %48, %c0_i32_34 : i32
    scf.if %49 {
      %c0_35 = arith.constant 0 : index
      %c0_36 = arith.constant 0 : index
      %50 = vector.load %arg6[%c0_35, %c0_36] : memref<128x128xf32, #tpu.memory_space<vmem>>, vector<128x128xf32>
      %cst_37 = arith.constant 2.500000e-01 : f32
      %51 = vector.broadcast %cst_37 : f32 to vector<128x128xf32>
      %52 = arith.mulf %50, %51 : vector<128x128xf32>
      %c0_38 = arith.constant 0 : index
      %c0_39 = arith.constant 0 : index
      %53 = vector.load %arg6[%c0_38, %c0_39] : memref<128x128xf32, #tpu.memory_space<vmem>>, vector<128x128xf32>
      tpu.vector_store %arg6[%c0_38, %c0_39], %52 {strides = array<i32>} : memref<128x128xf32, #tpu.memory_space<vmem>>, vector<128x128xf32>,
    } else {
    }
    return
  }
  func.func @transform_0(%arg0: i32, %arg1: i32) -> (i32, i32, i32) {
    %c0_i32 = arith.constant 0 : i32
    %c0_i32_0 = arith.constant 0 : i32
    return %arg1, %arg0, %c0_i32 : i32, i32, i32
  }
  func.func @transform_1(%arg0: i32, %arg1: i32) -> (i32, i32) {
    %c0_i32 = arith.constant 0 : i32
    %c0_i32_0 = arith.constant 0 : i32
    %c0_i32_1 = arith.constant 0 : i32
    return %c0_i32, %c0_i32_0 : i32, i32
  }
  func.func @transform_2(%arg0: i32, %arg1: i32) -> (i32, i32) {
    %c0_i32 = arith.constant 0 : i32
    %c0_i32_0 = arith.constant 0 : i32
    %c0_i32_1 = arith.constant 0 : i32
    return %c0_i32, %c0_i32_0 : i32, i32
  }
  func.func @transform_3(%arg0: i32, %arg1: i32) -> (i32, i32, i32) {
    %c0_i32 = arith.constant 0 : i32
    %c0_i32_0 = arith.constant 0 : i32
    return %arg1, %arg0, %c0_i32 : i32, i32, i32
  }
  func.func @transform_4(%arg0: i32, %arg1: i32) -> (i32, i32) {
    %c0_i32 = arith.constant 0 : i32
    %c0_i32_0 = arith.constant 0 : i32
    return %arg0, %c0_i32 : i32, i32
  }
}

module attributes {stable_mosaic.version = 11 : i64} {
  func.func @_fused_conv_lif_kernel(%arg0: i32, %arg1: i32, %arg2: memref<1x128x288xbf16, #tpu.memory_space<vmem>>, %arg3: memref<288x128xbf16, #tpu.memory_space<vmem>>, %arg4: memref<1x128xf32, #tpu.memory_space<vmem>>, %arg5: memref<1x128x128xbf16, #tpu.memory_space<vmem>>, %arg6: memref<128x128xf32, #tpu.memory_space<vmem>>, %arg7: memref<128x128xf32, #tpu.memory_space<vmem>>, %arg8: memref<128x128xf32, #tpu.memory_space<vmem>>) attributes {dimension_semantics = [#tpu.dimension_semantics<parallel>, #tpu.dimension_semantics<arbitrary>], iteration_bounds = array<i64: 1, 4>, scalar_prefetch = 0 : i64, scratch_operands = 2 : i64, tpu.core_type = #tpu.core_type<tc>, window_params = [{transform_indices = @transform_0, window_bounds = array<i64: 1, 128, 288>}, {pipeline_mode = #tpu.pipeline_mode<synchronous>, transform_indices = @transform_1, window_bounds = array<i64: 288, 128>}, {pipeline_mode = #tpu.pipeline_mode<synchronous>, transform_indices = @transform_2, window_bounds = array<i64: 1, 128>}, {transform_indices = @transform_3, window_bounds = array<i64: 1, 128, 128>}, {transform_indices = @transform_4, window_bounds = array<i64: 128, 128>}]} {
    %c0_i32 = arith.constant 0 : i32
    %0 = arith.cmpi eq, %arg1, %c0_i32 : i32
    %1 = arith.extui %0 : i1 to i32
    %c0_i32_0 = arith.constant 0 : i32
    %2 = arith.cmpi ne, %1, %c0_i32_0 : i32
    scf.if %2 {
      %cst_35 = arith.constant 0.000000e+00 : f32
      %50 = vector.broadcast %cst_35 : f32 to vector<128x128xf32>
      %c0_36 = arith.constant 0 : index
      %c0_37 = arith.constant 0 : index
      %51 = vector.load %arg7[%c0_36, %c0_37] : memref<128x128xf32, #tpu.memory_space<vmem>>, vector<128x128xf32>
      tpu.vector_store %arg7[%c0_36, %c0_37], %50 {strides = array<i32>} : memref<128x128xf32, #tpu.memory_space<vmem>>, vector<128x128xf32>,
      %cst_38 = arith.constant 0.000000e+00 : f32
      %52 = vector.broadcast %cst_38 : f32 to vector<128x128xf32>
      %c0_39 = arith.constant 0 : index
      %c0_40 = arith.constant 0 : index
      %53 = vector.load %arg8[%c0_39, %c0_40] : memref<128x128xf32, #tpu.memory_space<vmem>>, vector<128x128xf32>
      tpu.vector_store %arg8[%c0_39, %c0_40], %52 {strides = array<i32>} : memref<128x128xf32, #tpu.memory_space<vmem>>, vector<128x128xf32>,
      %cst_41 = arith.constant 0.000000e+00 : f32
      %54 = vector.broadcast %cst_41 : f32 to vector<128x128xf32>
      %c0_42 = arith.constant 0 : index
      %c0_43 = arith.constant 0 : index
      %55 = vector.load %arg6[%c0_42, %c0_43] : memref<128x128xf32, #tpu.memory_space<vmem>>, vector<128x128xf32>
      tpu.vector_store %arg6[%c0_42, %c0_43], %54 {strides = array<i32>} : memref<128x128xf32, #tpu.memory_space<vmem>>, vector<128x128xf32>,
    } else {
    }
    %c0 = arith.constant 0 : index
    %c0_1 = arith.constant 0 : index
    %c0_2 = arith.constant 0 : index
    %3 = vector.load %arg2[%c0, %c0_1, %c0_2] : memref<1x128x288xbf16, #tpu.memory_space<vmem>>, vector<1x128x288xbf16>
    %4 = vector.shape_cast %3 : vector<1x128x288xbf16> to vector<128x288xbf16>
    %c0_3 = arith.constant 0 : index
    %c0_4 = arith.constant 0 : index
    %5 = vector.load %arg3[%c0_3, %c0_4] : memref<288x128xbf16, #tpu.memory_space<vmem>>, vector<288x128xbf16>
    %cst = arith.constant dense<0.000000e+00> : vector<128x128xf32>
    %6 = tpu.matmul %4, %5, %cst {dimension_numbers = #tpu.dot_dimension_numbers<[1], [0], [0], [1], [0, 0, 1, 1], [], []>} : vector<128x288xbf16>, vector<288x128xbf16>, vector<128x128xf32> -> vector<128x128xf32>
    %c0_5 = arith.constant 0 : index
    %c0_6 = arith.constant 0 : index
    %7 = vector.load %arg4[%c0_5, %c0_6] : memref<1x128xf32, #tpu.memory_space<vmem>>, vector<1x128xf32>
    %8 = vector.broadcast %7 : vector<1x128xf32> to vector<128x128xf32>
    %9 = arith.addf %6, %8 : vector<128x128xf32>
    %c0_7 = arith.constant 0 : index
    %c0_8 = arith.constant 0 : index
    %10 = vector.load %arg7[%c0_7, %c0_8] : memref<128x128xf32, #tpu.memory_space<vmem>>, vector<128x128xf32>
    %c0_9 = arith.constant 0 : index
    %c0_10 = arith.constant 0 : index
    %11 = vector.load %arg7[%c0_9, %c0_10] : memref<128x128xf32, #tpu.memory_space<vmem>>, vector<128x128xf32>
    %12 = arith.subf %9, %11 : vector<128x128xf32>
    %cst_11 = arith.constant 5.000000e-01 : f32
    %13 = vector.broadcast %cst_11 : f32 to vector<128x128xf32>
    %14 = arith.mulf %12, %13 : vector<128x128xf32>
    %15 = arith.addf %10, %14 : vector<128x128xf32>
    %cst_12 = arith.constant 1.000000e+00 : f32
    %16 = vector.broadcast %cst_12 : f32 to vector<128x128xf32>
    %17 = arith.cmpf oge, %15, %16 : vector<128x128xf32>
    %18 = arith.extui %17 : vector<128x128xi1> to vector<128x128xi32>
    %19 = arith.sitofp %18 : vector<128x128xi32> to vector<128x128xf32>
    %cst_13 = arith.constant 0.000000e+00 : f32
    %20 = vector.broadcast %cst_13 : f32 to vector<128x128xf32>
    %21 = arith.cmpf ogt, %19, %20 : vector<128x128xf32>
    %cst_14 = arith.constant 0.000000e+00 : f32
    %22 = vector.broadcast %cst_14 : f32 to vector<128x128xf32>
    %23 = arith.select %21, %22, %15 : vector<128x128xi1>, vector<128x128xf32>
    %c0_15 = arith.constant 0 : index
    %c0_16 = arith.constant 0 : index
    %24 = vector.load %arg7[%c0_15, %c0_16] : memref<128x128xf32, #tpu.memory_space<vmem>>, vector<128x128xf32>
    tpu.vector_store %arg7[%c0_15, %c0_16], %23 {strides = array<i32>} : memref<128x128xf32, #tpu.memory_space<vmem>>, vector<128x128xf32>,
    %25 = arith.truncf %19 : vector<128x128xf32> to vector<128x128xbf16>
    %c0_17 = arith.constant 0 : index
    %c0_18 = arith.constant 0 : index
    %c0_19 = arith.constant 0 : index
    %26 = vector.load %arg5[%c0_17, %c0_18, %c0_19] : memref<1x128x128xbf16, #tpu.memory_space<vmem>>, vector<1x128x128xbf16>
    %27 = vector.shape_cast %26 : vector<1x128x128xbf16> to vector<128x128xbf16>
    %28 = vector.shape_cast %25 : vector<128x128xbf16> to vector<1x128x128xbf16>
    tpu.vector_store %arg5[%c0_17, %c0_18, %c0_19], %28 {strides = array<i32>} : memref<1x128x128xbf16, #tpu.memory_space<vmem>>, vector<1x128x128xbf16>,
    %c0_20 = arith.constant 0 : index
    %c0_21 = arith.constant 0 : index
    %29 = vector.load %arg8[%c0_20, %c0_21] : memref<128x128xf32, #tpu.memory_space<vmem>>, vector<128x128xf32>
    %c0_22 = arith.constant 0 : index
    %c0_23 = arith.constant 0 : index
    %30 = vector.load %arg8[%c0_22, %c0_23] : memref<128x128xf32, #tpu.memory_space<vmem>>, vector<128x128xf32>
    %31 = arith.subf %19, %30 : vector<128x128xf32>
    %cst_24 = arith.constant 5.000000e-01 : f32
    %32 = vector.broadcast %cst_24 : f32 to vector<128x128xf32>
    %33 = arith.mulf %31, %32 : vector<128x128xf32>
    %34 = arith.addf %29, %33 : vector<128x128xf32>
    %cst_25 = arith.constant 1.000000e+00 : f32
    %35 = vector.broadcast %cst_25 : f32 to vector<128x128xf32>
    %36 = arith.cmpf oge, %34, %35 : vector<128x128xf32>
    %37 = arith.extui %36 : vector<128x128xi1> to vector<128x128xi32>
    %38 = arith.sitofp %37 : vector<128x128xi32> to vector<128x128xf32>
    %cst_26 = arith.constant 0.000000e+00 : f32
    %39 = vector.broadcast %cst_26 : f32 to vector<128x128xf32>
    %40 = arith.cmpf ogt, %38, %39 : vector<128x128xf32>
    %cst_27 = arith.constant 0.000000e+00 : f32
    %41 = vector.broadcast %cst_27 : f32 to vector<128x128xf32>
    %42 = arith.select %40, %41, %34 : vector<128x128xi1>, vector<128x128xf32>
    %c0_28 = arith.constant 0 : index
    %c0_29 = arith.constant 0 : index
    %43 = vector.load %arg8[%c0_28, %c0_29] : memref<128x128xf32, #tpu.memory_space<vmem>>, vector<128x128xf32>
    tpu.vector_store %arg8[%c0_28, %c0_29], %42 {strides = array<i32>} : memref<128x128xf32, #tpu.memory_space<vmem>>, vector<128x128xf32>,
    %c0_30 = arith.constant 0 : index
    %c0_31 = arith.constant 0 : index
    %44 = vector.load %arg6[%c0_30, %c0_31] : memref<128x128xf32, #tpu.memory_space<vmem>>, vector<128x128xf32>
    %45 = arith.addf %44, %38 : vector<128x128xf32>
    %c0_32 = arith.constant 0 : index
    %c0_33 = arith.constant 0 : index
    %46 = vector.load %arg6[%c0_32, %c0_33] : memref<128x128xf32, #tpu.memory_space<vmem>>, vector<128x128xf32>
    tpu.vector_store %arg6[%c0_32, %c0_33], %45 {strides = array<i32>} : memref<128x128xf32, #tpu.memory_space<vmem>>, vector<128x128xf32>,
    %c3_i32 = arith.constant 3 : i32
    %47 = arith.cmpi eq, %arg1, %c3_i32 : i32
    %48 = arith.extui %47 : i1 to i32
    %c0_i32_34 = arith.constant 0 : i32
    %49 = arith.cmpi ne, %48, %c0_i32_34 : i32
    scf.if %49 {
      %c0_35 = arith.constant 0 : index
      %c0_36 = arith.constant 0 : index
      %50 = vector.load %arg6[%c0_35, %c0_36] : memref<128x128xf32, #tpu.memory_space<vmem>>, vector<128x128xf32>
      %cst_37 = arith.constant 2.500000e-01 : f32
      %51 = vector.broadcast %cst_37 : f32 to vector<128x128xf32>
      %52 = arith.mulf %50, %51 : vector<128x128xf32>
      %c0_38 = arith.constant 0 : index
      %c0_39 = arith.constant 0 : index
      %53 = vector.load %arg6[%c0_38, %c0_39] : memref<128x128xf32, #tpu.memory_space<vmem>>, vector<128x128xf32>
      tpu.vector_store %arg6[%c0_38, %c0_39], %52 {strides = array<i32>} : memref<128x128xf32, #tpu.memory_space<vmem>>, vector<128x128xf32>,
    } else {
    }
    return
  }
  func.func @transform_0(%arg0: i32, %arg1: i32) -> (i32, i32, i32) {
    %c0_i32 = arith.constant 0 : i32
    %c0_i32_0 = arith.constant 0 : i32
    return %arg1, %arg0, %c0_i32 : i32, i32, i32
  }
  func.func @transform_1(%arg0: i32, %arg1: i32) -> (i32, i32) {
    %c0_i32 = arith.constant 0 : i32
    %c0_i32_0 = arith.constant 0 : i32
    %c0_i32_1 = arith.constant 0 : i32
    return %c0_i32, %c0_i32_0 : i32, i32
  }
  func.func @transform_2(%arg0: i32, %arg1: i32) -> (i32, i32) {
    %c0_i32 = arith.constant 0 : i32
    %c0_i32_0 = arith.constant 0 : i32
    %c0_i32_1 = arith.constant 0 : i32
    return %c0_i32, %c0_i32_0 : i32, i32
  }
  func.func @transform_3(%arg0: i32, %arg1: i32) -> (i32, i32, i32) {
    %c0_i32 = arith.constant 0 : i32
    %c0_i32_0 = arith.constant 0 : i32
    return %arg1, %arg0, %c0_i32 : i32, i32, i32
  }
  func.func @transform_4(%arg0: i32, %arg1: i32) -> (i32, i32) {
    %c0_i32 = arith.constant 0 : i32
    %c0_i32_0 = arith.constant 0 : i32
    return %arg0, %c0_i32 : i32, i32
  }
}

module attributes {stable_mosaic.version = 11 : i64} {
  func.func @_fused_conv_lif_kernel(%arg0: i32, %arg1: i32, %arg2: memref<1x128x288xbf16, #tpu.memory_space<vmem>>, %arg3: memref<288x128xbf16, #tpu.memory_space<vmem>>, %arg4: memref<1x128xf32, #tpu.memory_space<vmem>>, %arg5: memref<1x128x128xbf16, #tpu.memory_space<vmem>>, %arg6: memref<128x128xf32, #tpu.memory_space<vmem>>, %arg7: memref<128x128xf32, #tpu.memory_space<vmem>>, %arg8: memref<128x128xf32, #tpu.memory_space<vmem>>) attributes {dimension_semantics = [#tpu.dimension_semantics<parallel>, #tpu.dimension_semantics<arbitrary>], iteration_bounds = array<i64: 1, 4>, scalar_prefetch = 0 : i64, scratch_operands = 2 : i64, tpu.core_type = #tpu.core_type<tc>, window_params = [{transform_indices = @transform_0, window_bounds = array<i64: 1, 128, 288>}, {pipeline_mode = #tpu.pipeline_mode<synchronous>, transform_indices = @transform_1, window_bounds = array<i64: 288, 128>}, {pipeline_mode = #tpu.pipeline_mode<synchronous>, transform_indices = @transform_2, window_bounds = array<i64: 1, 128>}, {transform_indices = @transform_3, window_bounds = array<i64: 1, 128, 128>}, {transform_indices = @transform_4, window_bounds = array<i64: 128, 128>}]} {
    %c0_i32 = arith.constant 0 : i32
    %0 = arith.cmpi eq, %arg1, %c0_i32 : i32
    %1 = arith.extui %0 : i1 to i32
    %c0_i32_0 = arith.constant 0 : i32
    %2 = arith.cmpi ne, %1, %c0_i32_0 : i32
    scf.if %2 {
      %cst_35 = arith.constant 0.000000e+00 : f32
      %50 = vector.broadcast %cst_35 : f32 to vector<128x128xf32>
      %c0_36 = arith.constant 0 : index
      %c0_37 = arith.constant 0 : index
      %51 = vector.load %arg7[%c0_36, %c0_37] : memref<128x128xf32, #tpu.memory_space<vmem>>, vector<128x128xf32>
      tpu.vector_store %arg7[%c0_36, %c0_37], %50 {strides = array<i32>} : memref<128x128xf32, #tpu.memory_space<vmem>>, vector<128x128xf32>,
      %cst_38 = arith.constant 0.000000e+00 : f32
      %52 = vector.broadcast %cst_38 : f32 to vector<128x128xf32>
      %c0_39 = arith.constant 0 : index
      %c0_40 = arith.constant 0 : index
      %53 = vector.load %arg8[%c0_39, %c0_40] : memref<128x128xf32, #tpu.memory_space<vmem>>, vector<128x128xf32>
      tpu.vector_store %arg8[%c0_39, %c0_40], %52 {strides = array<i32>} : memref<128x128xf32, #tpu.memory_space<vmem>>, vector<128x128xf32>,
      %cst_41 = arith.constant 0.000000e+00 : f32
      %54 = vector.broadcast %cst_41 : f32 to vector<128x128xf32>
      %c0_42 = arith.constant 0 : index
      %c0_43 = arith.constant 0 : index
      %55 = vector.load %arg6[%c0_42, %c0_43] : memref<128x128xf32, #tpu.memory_space<vmem>>, vector<128x128xf32>
      tpu.vector_store %arg6[%c0_42, %c0_43], %54 {strides = array<i32>} : memref<128x128xf32, #tpu.memory_space<vmem>>, vector<128x128xf32>,
    } else {
    }
    %c0 = arith.constant 0 : index
    %c0_1 = arith.constant 0 : index
    %c0_2 = arith.constant 0 : index
    %3 = vector.load %arg2[%c0, %c0_1, %c0_2] : memref<1x128x288xbf16, #tpu.memory_space<vmem>>, vector<1x128x288xbf16>
    %4 = vector.shape_cast %3 : vector<1x128x288xbf16> to vector<128x288xbf16>
    %c0_3 = arith.constant 0 : index
    %c0_4 = arith.constant 0 : index
    %5 = vector.load %arg3[%c0_3, %c0_4] : memref<288x128xbf16, #tpu.memory_space<vmem>>, vector<288x128xbf16>
    %cst = arith.constant dense<0.000000e+00> : vector<128x128xf32>
    %6 = tpu.matmul %4, %5, %cst {dimension_numbers = #tpu.dot_dimension_numbers<[1], [0], [0], [1], [0, 0, 1, 1], [], []>} : vector<128x288xbf16>, vector<288x128xbf16>, vector<128x128xf32> -> vector<128x128xf32>
    %c0_5 = arith.constant 0 : index
    %c0_6 = arith.constant 0 : index
    %7 = vector.load %arg4[%c0_5, %c0_6] : memref<1x128xf32, #tpu.memory_space<vmem>>, vector<1x128xf32>
    %8 = vector.broadcast %7 : vector<1x128xf32> to vector<128x128xf32>
    %9 = arith.addf %6, %8 : vector<128x128xf32>
    %c0_7 = arith.constant 0 : index
    %c0_8 = arith.constant 0 : index
    %10 = vector.load %arg7[%c0_7, %c0_8] : memref<128x128xf32, #tpu.memory_space<vmem>>, vector<128x128xf32>
    %c0_9 = arith.constant 0 : index
    %c0_10 = arith.constant 0 : index
    %11 = vector.load %arg7[%c0_9, %c0_10] : memref<128x128xf32, #tpu.memory_space<vmem>>, vector<128x128xf32>
    %12 = arith.subf %9, %11 : vector<128x128xf32>
    %cst_11 = arith.constant 5.000000e-01 : f32
    %13 = vector.broadcast %cst_11 : f32 to vector<128x128xf32>
    %14 = arith.mulf %12, %13 : vector<128x128xf32>
    %15 = arith.addf %10, %14 : vector<128x128xf32>
    %cst_12 = arith.constant 1.000000e+00 : f32
    %16 = vector.broadcast %cst_12 : f32 to vector<128x128xf32>
    %17 = arith.cmpf oge, %15, %16 : vector<128x128xf32>
    %18 = arith.extui %17 : vector<128x128xi1> to vector<128x128xi32>
    %19 = arith.sitofp %18 : vector<128x128xi32> to vector<128x128xf32>
    %cst_13 = arith.constant 0.000000e+00 : f32
    %20 = vector.broadcast %cst_13 : f32 to vector<128x128xf32>
    %21 = arith.cmpf ogt, %19, %20 : vector<128x128xf32>
    %cst_14 = arith.constant 0.000000e+00 : f32
    %22 = vector.broadcast %cst_14 : f32 to vector<128x128xf32>
    %23 = arith.select %21, %22, %15 : vector<128x128xi1>, vector<128x128xf32>
    %c0_15 = arith.constant 0 : index
    %c0_16 = arith.constant 0 : index
    %24 = vector.load %arg7[%c0_15, %c0_16] : memref<128x128xf32, #tpu.memory_space<vmem>>, vector<128x128xf32>
    tpu.vector_store %arg7[%c0_15, %c0_16], %23 {strides = array<i32>} : memref<128x128xf32, #tpu.memory_space<vmem>>, vector<128x128xf32>,
    %25 = arith.truncf %19 : vector<128x128xf32> to vector<128x128xbf16>
    %c0_17 = arith.constant 0 : index
    %c0_18 = arith.constant 0 : index
    %c0_19 = arith.constant 0 : index
    %26 = vector.load %arg5[%c0_17, %c0_18, %c0_19] : memref<1x128x128xbf16, #tpu.memory_space<vmem>>, vector<1x128x128xbf16>
    %27 = vector.shape_cast %26 : vector<1x128x128xbf16> to vector<128x128xbf16>
    %28 = vector.shape_cast %25 : vector<128x128xbf16> to vector<1x128x128xbf16>
    tpu.vector_store %arg5[%c0_17, %c0_18, %c0_19], %28 {strides = array<i32>} : memref<1x128x128xbf16, #tpu.memory_space<vmem>>, vector<1x128x128xbf16>,
    %c0_20 = arith.constant 0 : index
    %c0_21 = arith.constant 0 : index
    %29 = vector.load %arg8[%c0_20, %c0_21] : memref<128x128xf32, #tpu.memory_space<vmem>>, vector<128x128xf32>
    %c0_22 = arith.constant 0 : index
    %c0_23 = arith.constant 0 : index
    %30 = vector.load %arg8[%c0_22, %c0_23] : memref<128x128xf32, #tpu.memory_space<vmem>>, vector<128x128xf32>
    %31 = arith.subf %19, %30 : vector<128x128xf32>
    %cst_24 = arith.constant 5.000000e-01 : f32
    %32 = vector.broadcast %cst_24 : f32 to vector<128x128xf32>
    %33 = arith.mulf %31, %32 : vector<128x128xf32>
    %34 = arith.addf %29, %33 : vector<128x128xf32>
    %cst_25 = arith.constant 1.000000e+00 : f32
    %35 = vector.broadcast %cst_25 : f32 to vector<128x128xf32>
    %36 = arith.cmpf oge, %34, %35 : vector<128x128xf32>
    %37 = arith.extui %36 : vector<128x128xi1> to vector<128x128xi32>
    %38 = arith.sitofp %37 : vector<128x128xi32> to vector<128x128xf32>
    %cst_26 = arith.constant 0.000000e+00 : f32
    %39 = vector.broadcast %cst_26 : f32 to vector<128x128xf32>
    %40 = arith.cmpf ogt, %38, %39 : vector<128x128xf32>
    %cst_27 = arith.constant 0.000000e+00 : f32
    %41 = vector.broadcast %cst_27 : f32 to vector<128x128xf32>
    %42 = arith.select %40, %41, %34 : vector<128x128xi1>, vector<128x128xf32>
    %c0_28 = arith.constant 0 : index
    %c0_29 = arith.constant 0 : index
    %43 = vector.load %arg8[%c0_28, %c0_29] : memref<128x128xf32, #tpu.memory_space<vmem>>, vector<128x128xf32>
    tpu.vector_store %arg8[%c0_28, %c0_29], %42 {strides = array<i32>} : memref<128x128xf32, #tpu.memory_space<vmem>>, vector<128x128xf32>,
    %c0_30 = arith.constant 0 : index
    %c0_31 = arith.constant 0 : index
    %44 = vector.load %arg6[%c0_30, %c0_31] : memref<128x128xf32, #tpu.memory_space<vmem>>, vector<128x128xf32>
    %45 = arith.addf %44, %38 : vector<128x128xf32>
    %c0_32 = arith.constant 0 : index
    %c0_33 = arith.constant 0 : index
    %46 = vector.load %arg6[%c0_32, %c0_33] : memref<128x128xf32, #tpu.memory_space<vmem>>, vector<128x128xf32>
    tpu.vector_store %arg6[%c0_32, %c0_33], %45 {strides = array<i32>} : memref<128x128xf32, #tpu.memory_space<vmem>>, vector<128x128xf32>,
    %c3_i32 = arith.constant 3 : i32
    %47 = arith.cmpi eq, %arg1, %c3_i32 : i32
    %48 = arith.extui %47 : i1 to i32
    %c0_i32_34 = arith.constant 0 : i32
    %49 = arith.cmpi ne, %48, %c0_i32_34 : i32
    scf.if %49 {
      %c0_35 = arith.constant 0 : index
      %c0_36 = arith.constant 0 : index
      %50 = vector.load %arg6[%c0_35, %c0_36] : memref<128x128xf32, #tpu.memory_space<vmem>>, vector<128x128xf32>
      %cst_37 = arith.constant 2.500000e-01 : f32
      %51 = vector.broadcast %cst_37 : f32 to vector<128x128xf32>
      %52 = arith.mulf %50, %51 : vector<128x128xf32>
      %c0_38 = arith.constant 0 : index
      %c0_39 = arith.constant 0 : index
      %53 = vector.load %arg6[%c0_38, %c0_39] : memref<128x128xf32, #tpu.memory_space<vmem>>, vector<128x128xf32>
      tpu.vector_store %arg6[%c0_38, %c0_39], %52 {strides = array<i32>} : memref<128x128xf32, #tpu.memory_space<vmem>>, vector<128x128xf32>,
    } else {
    }
    return
  }
  func.func @transform_0(%arg0: i32, %arg1: i32) -> (i32, i32, i32) {
    %c0_i32 = arith.constant 0 : i32
    %c0_i32_0 = arith.constant 0 : i32
    return %arg1, %arg0, %c0_i32 : i32, i32, i32
  }
  func.func @transform_1(%arg0: i32, %arg1: i32) -> (i32, i32) {
    %c0_i32 = arith.constant 0 : i32
    %c0_i32_0 = arith.constant 0 : i32
    %c0_i32_1 = arith.constant 0 : i32
    return %c0_i32, %c0_i32_0 : i32, i32
  }
  func.func @transform_2(%arg0: i32, %arg1: i32) -> (i32, i32) {
    %c0_i32 = arith.constant 0 : i32
    %c0_i32_0 = arith.constant 0 : i32
    %c0_i32_1 = arith.constant 0 : i32
    return %c0_i32, %c0_i32_0 : i32, i32
  }
  func.func @transform_3(%arg0: i32, %arg1: i32) -> (i32, i32, i32) {
    %c0_i32 = arith.constant 0 : i32
    %c0_i32_0 = arith.constant 0 : i32
    return %arg1, %arg0, %c0_i32 : i32, i32, i32
  }
  func.func @transform_4(%arg0: i32, %arg1: i32) -> (i32, i32) {
    %c0_i32 = arith.constant 0 : i32
    %c0_i32_0 = arith.constant 0 : i32
    return %arg0, %c0_i32 : i32, i32
  }
}

</mosaic_0001>

<llo_original>
// kernel: detection_backbone_forward.5
$region0: #{detection_backbone_forward.5}
  #allocation0 [shape = 'u32[]', space=smem, size = 0x4, offset = 0x4, fixed_abs, tag = 'smem constant byte address 0x4 - core index']
  #allocation1 [shape = 'u32[72,128]{1,0:T(1,128)}', space=vmem, size = 0x9000, scoped, tag = 'internal scratch']
  #allocation2 [shape = 'f32[512,128]{1,0:T(8,128)}', space=vmem, size = 0x40000, scoped, tag = 'scratch operand']
  #allocation3 [shape = 'f32[512,128]{1,0:T(8,128)}', space=vmem, size = 0x40000, scoped, tag = 'scratch operand']
  %s0 = inlined_call_operand.vmem [shape: bf16[4,512,18], index: 0, kind: input, shape index: {}]
  %s1 = inlined_call_operand.vmem [shape: bf16[18,128], index: 1, kind: input, shape index: {}]
  %s2 = inlined_call_operand.vmem [shape: f32[1,128], index: 2, kind: input, shape index: {}]
  %s3 = inlined_call_operand.vmem [shape: bf16[4,512,128], index: 3, kind: output, shape index: {0}]
  %s4 = inlined_call_operand.vmem [shape: f32[512,128], index: 4, kind: output, shape index: {1}]
  %5 = xla_tuple %s3, %s4
  %s6 = sld [smem:[#allocation0]]
  $region61: #{detection_backbone_forward.5} parent=0
    _
  %s8 = ssub.s32 1, %s6
  %s9 = scalar_select 0, %s8, %s6
  loop: start=0, step=1, limit=6
  $region2: #{detection_backbone_forward.5} parent=0 // loop_pre_header
    _
  $region3: #{detection_backbone_forward.5} parent=0 // loop_header
    %s11 = sphi 0, %s15
    %p12 = scmp.ge.s32.totalorder %s11, 6
    %s18 = sphi 0, %s30
    %s19 = sphi 0, %s26
    %s20 = sphi 0, %s18
    %s21 = sphi 0, %s19
    %s22 = sphi 0, %s20
    %s23 = sphi 0, %s21
    %s35 = sphi 0, %s37
    %s38 = sphi 0, %s35
    %s39 = sphi 0, %s38
    %s55 = sphi 0, %s39
    %s59 = sphi 0, %s59
    %s61 = sphi 0, %s59
    %s62 = sphi 0, %s61
    %s76 = sphi 0, %s62
    %s80 = sphi 0, %s80
    %s82 = sphi 0, %s80
    %s83 = sphi 0, %s82
    %s97 = sphi 0, %s83
    %s105 = sphi 0, %s107
    %s108 = sphi 0, %s105
    %s109 = sphi 0, %s108
    %s125 = sphi 0, %s109
    %s131 = sphi 0, %s133
    %s134 = sphi 0, %s131
    %s135 = sphi 0, %s134
    %s151 = sphi 0, %s135
  $region4: #{detection_backbone_forward.5} parent=0 // loop_header_branch
    %14 = sbr.rel (%p12) target = $region8
  $region5: #{detection_backbone_forward.5} parent=0 // loop_body
    %s16 = ssub.s32 %s11, 1
    %s17 = ssub.s32 %s11, 2
    %s24 = sadd.s32 1, %s19
    %p25 = scmp.ge.s32.totalorder %s24, 4
    %s26 = scalar_select %p25, 0, %s24
    %s27 = sadd.s32 1, %s18
    %s28 = scalar_select %p25, %s27, %s18
    %p29 = scmp.ge.s32.totalorder %s28, 1
    %s30 = scalar_select %p29, 0, %s28
    %s31 = ssub.s32 %s19, %s26
    %s32 = ssub.s32 %s18, %s30
    %s33 = sor.u32 %s31, %s32
    %p34 = scmp.eq.s32.totalorder %s33, 0
    %s36 = sadd.s32 %s35, 1
    %s37 = scalar_select %p34, %s35, %s36
    %p40 = pneg %p34
    %p41 = scmp.eq.s32.totalorder %s11, 3
    %p42 = por %p40, %p41
    %p43 = scmp.ne.s32.totalorder %s35, %s38
    %p44 = scmp.eq.s32.totalorder %s11, 0
    %p45 = por %p43, %p44
    %p46 = scmp.ne.s32.totalorder %s35, %s38
    %p47 = scmp.eq.s32.totalorder %s16, 3
    %p48 = por %p46, %p47
    %p49 = scmp.ne.s32.totalorder %s38, %s39
    %p50 = scmp.eq.s32.totalorder %s16, 0
    %p51 = por %p49, %p50
    %p52 = scmp.ne.s32.totalorder %s38, %s39
    %p53 = scmp.eq.s32.totalorder %s17, 3
    %p54 = por %p52, %p53
    %p56 = scmp.ne.s32.totalorder %s39, %s55
    %p57 = scmp.eq.s32.totalorder %s17, 0
    %p58 = por %p56, %p57
    %s60 = sadd.s32 %s59, 1
    %p63 = scmp.eq.s32.totalorder %s11, 3
    %p64 = scmp.ne.s32.totalorder %s59, %s61
    %p65 = scmp.eq.s32.totalorder %s11, 0
    %p66 = por %p64, %p65
    %p67 = scmp.ne.s32.totalorder %s59, %s61
    %p68 = scmp.eq.s32.totalorder %s16, 3
    %p69 = por %p67, %p68
    %p70 = scmp.ne.s32.totalorder %s61, %s62
    %p71 = scmp.eq.s32.totalorder %s16, 0
    %p72 = por %p70, %p71
    %p73 = scmp.ne.s32.totalorder %s61, %s62
    %p74 = scmp.eq.s32.totalorder %s17, 3
    %p75 = por %p73, %p74
    %p77 = scmp.ne.s32.totalorder %s62, %s76
    %p78 = scmp.eq.s32.totalorder %s17, 0
    %p79 = por %p77, %p78
    %s81 = sadd.s32 %s80, 1
    %p84 = scmp.eq.s32.totalorder %s11, 3
    %p85 = scmp.ne.s32.totalorder %s80, %s82
    %p86 = scmp.eq.s32.totalorder %s11, 0
    %p87 = por %p85, %p86
    %p88 = scmp.ne.s32.totalorder %s80, %s82
    %p89 = scmp.eq.s32.totalorder %s16, 3
    %p90 = por %p88, %p89
    %p91 = scmp.ne.s32.totalorder %s82, %s83
    %p92 = scmp.eq.s32.totalorder %s16, 0
    %p93 = por %p91, %p92
    %p94 = scmp.ne.s32.totalorder %s82, %s83
    %p95 = scmp.eq.s32.totalorder %s17, 3
    %p96 = por %p94, %p95
    %p98 = scmp.ne.s32.totalorder %s83, %s97
    %p99 = scmp.eq.s32.totalorder %s17, 0
    %p100 = por %p98, %p99
    %s101 = ssub.s32 %s19, %s26
    %s102 = ssub.s32 %s18, %s30
    %s103 = sor.u32 %s101, %s102
    %p104 = scmp.eq.s32.totalorder %s103, 0
    %s106 = sadd.s32 %s105, 1
    %s107 = scalar_select %p104, %s105, %s106
    %p110 = pneg %p104
    %p111 = scmp.eq.s32.totalorder %s11, 3
    %p112 = por %p110, %p111
    %p113 = scmp.ne.s32.totalorder %s105, %s108
    %p114 = scmp.eq.s32.totalorder %s11, 0
    %p115 = por %p113, %p114
    %p116 = scmp.ne.s32.totalorder %s105, %s108
    %p117 = scmp.eq.s32.totalorder %s16, 3
    %p118 = por %p116, %p117
    %p119 = scmp.ne.s32.totalorder %s108, %s109
    %p120 = scmp.eq.s32.totalorder %s16, 0
    %p121 = por %p119, %p120
    %p122 = scmp.ne.s32.totalorder %s108, %s109
    %p123 = scmp.eq.s32.totalorder %s17, 3
    %p124 = por %p122, %p123
    %p126 = scmp.ne.s32.totalorder %s109, %s125
    %p127 = scmp.eq.s32.totalorder %s17, 0
    %p128 = por %p126, %p127
    %s129 = ssub.s32 %s18, %s30
    %p130 = scmp.eq.s32.totalorder %s129, 0
    %s132 = sadd.s32 %s131, 1
    %s133 = scalar_select %p130, %s131, %s132
    %p136 = pneg %p130
    %p137 = scmp.eq.s32.totalorder %s11, 3
    %p138 = por %p136, %p137
    %p139 = scmp.ne.s32.totalorder %s131, %s134
    %p140 = scmp.eq.s32.totalorder %s11, 0
    %p141 = por %p139, %p140
    %p142 = scmp.ne.s32.totalorder %s131, %s134
    %p143 = scmp.eq.s32.totalorder %s16, 3
    %p144 = por %p142, %p143
    %p145 = scmp.ne.s32.totalorder %s134, %s135
    %p146 = scmp.eq.s32.totalorder %s16, 0
    %p147 = por %p145, %p146
    %p148 = scmp.ne.s32.totalorder %s134, %s135
    %p149 = scmp.eq.s32.totalorder %s17, 3
    %p150 = por %p148, %p149
    %p152 = scmp.ne.s32.totalorder %s135, %s151
    %p153 = scmp.eq.s32.totalorder %s17, 0
    %p154 = por %p152, %p153
    %p155 = scmp.le.s32.totalorder 1, %s11
    %p156 = scmp.lt.s32.totalorder %s11, 5
    %p157 = pnand %p155, %p156
    %p158 = pneg %p157
    // Predicated region
    $region9: #{detection_backbone_forward.5} parent=5 // pred_check
      _
    $region10: #{detection_backbone_forward.5} parent=5 // pred_check_branch
      %160 = sbr.rel (%p157) target = $region12
    $region11: #{detection_backbone_forward.5} parent=5 // pred_region
      %s161 = ssub.s32 %s11, 1
      // Predicated region
      $region13: #{detection_backbone_forward.5} parent=11 // pred_check
        %p162 = pneg %p72
      $region14: #{detection_backbone_forward.5} parent=11 // pred_check_branch
        %164 = sbr.rel (%p162) target = $region16
      $region15: #{detection_backbone_forward.5} parent=11 // pred_region
        _
      $region16: #{detection_backbone_forward.5} parent=11 // pred_fallthru
        _
      // Predicated region
      $region17: #{detection_backbone_forward.5} parent=11 // pred_check
        %p165 = pneg %p93
      $region18: #{detection_backbone_forward.5} parent=11 // pred_check_branch
        %167 = sbr.rel (%p165) target = $region20
      $region19: #{detection_backbone_forward.5} parent=11 // pred_region
        _
      $region20: #{detection_backbone_forward.5} parent=11 // pred_fallthru
        _
    $region12: #{detection_backbone_forward.5} parent=5 // pred_fallthru
      _
    %p168 = scmp.lt.s32.totalorder %s11, 4
    // Predicated region
    $region21: #{detection_backbone_forward.5} parent=5 // pred_check
      %p169 = pneg %p168
    $region22: #{detection_backbone_forward.5} parent=5 // pred_check_branch
      %171 = sbr.rel (%p169) target = $region24
    $region23: #{detection_backbone_forward.5} parent=5 // pred_region
      // Predicated region
      $region25: #{detection_backbone_forward.5} parent=23 // pred_check
        %p172 = pneg %p45
      $region26: #{detection_backbone_forward.5} parent=23 // pred_check_branch
        %174 = sbr.rel (%p172) target = $region28
      $region27: #{detection_backbone_forward.5} parent=23 // pred_region
        %s175 = smul.u32 64, %s18
        %p176 = scmp.lt.s32.totalorder %s19, 3
        %s177 = scalar_select %p176, %s19, 3
        %p178 = scmp.lt.s32.totalorder %s175, 63
        %s179 = scalar_select %p178, %s175, 63
        %s180 = smul.addr %s177, 64
        %s181 = sadd.s32 %s179, %s180
        %s182 = smul.addr %s181, 4
        %s183 = scalar_lea.vmem %s0, %s182
        %s184 = smul.u32 64, %s18
      $region28: #{detection_backbone_forward.5} parent=23 // pred_fallthru
        _
    $region24: #{detection_backbone_forward.5} parent=5 // pred_fallthru
      _
    %p185 = scmp.le.s32.totalorder 1, %s11
    %p186 = scmp.lt.s32.totalorder %s11, 5
    %p187 = pnand %p185, %p186
    %p188 = pneg %p187
    // Predicated region
    $region29: #{detection_backbone_forward.5} parent=5 // pred_check
      _
    $region30: #{detection_backbone_forward.5} parent=5 // pred_check_branch
      %190 = sbr.rel (%p187) target = $region32
    $region31: #{detection_backbone_forward.5} parent=5 // pred_region
      %s191 = ssub.s32 %s11, 1
      %s192 = smul.u32 64, %s20
      %p193 = scmp.lt.s32.totalorder %s21, 3
      %s194 = scalar_select %p193, %s21, 3
      %p195 = scmp.lt.s32.totalorder %s192, 63
      %s196 = scalar_select %p195, %s192, 63
      %s197 = smul.addr %s194, 64
      %s198 = sadd.s32 %s196, %s197
      %s199 = smul.addr %s198, 4
      %s200 = scalar_lea.vmem %s0, %s199
      %p201 = pneg %p51
      %p202 = pneg %p48
      %p203 = pneg %p72
      %p204 = pneg %p69
      %p205 = pneg %p93
      %p206 = pneg %p90
      %p207 = pneg %p121
      %p208 = pneg %p118
      %s209 = smul.u32 64, %s20
      %p210 = scmp.lt.s32.totalorder %s21, 3
      %s211 = scalar_select %p210, %s21, 3
      %p212 = scmp.lt.s32.totalorder %s209, 63
      %s213 = scalar_select %p212, %s209, 63
      %s214 = smul.addr %s211, 64
      %s215 = sadd.s32 %s213, %s214
      %s216 = smul.addr %s215, 4
      %s217 = scalar_lea.vmem %s3, %s216
      %p218 = pneg %p147
      %p219 = pneg %p144
      %s220 = smul.u32 64, %s20
      %p221 = scmp.lt.s32.totalorder %s220, 63
      %s222 = scalar_select %p221, %s220, 63
      %s223 = smul.addr %s222, 8
      %s224 = scalar_lea.vmem %s4, %s223
      %s225 = smul.u32 64, %s20
      %p226 = scmp.lt.s32.totalorder %s21, 3
      %s227 = scalar_select %p226, %s21, 3
      %p228 = scmp.lt.s32.totalorder %s225, 63
      %s229 = scalar_select %p228, %s225, 63
      %s230 = smul.addr %s227, 64
      %s231 = sadd.s32 %s229, %s230
      %s232 = smul.addr %s231, 4
      %s233 = scalar_lea.vmem %s0, %s232
      %s234 = smul.u32 64, %s20
      %s235 = smul.u32 64, %s20
      %p236 = scmp.lt.s32.totalorder %s21, 3
      %s237 = scalar_select %p236, %s21, 3
      %p238 = scmp.lt.s32.totalorder %s235, 63
      %s239 = scalar_select %p238, %s235, 63
      %s240 = smul.addr %s237, 64
      %s241 = sadd.s32 %s239, %s240
      %s242 = smul.addr %s241, 4
      %s243 = scalar_lea.vmem %s3, %s242
      %s244 = smul.u32 64, %s20
      %s245 = smul.u32 64, %s20
      %p246 = scmp.lt.s32.totalorder %s245, 63
      %s247 = scalar_select %p246, %s245, 63
      %s248 = smul.addr %s247, 8
      %s249 = scalar_lea.vmem %s4, %s248
      %s250 = smul.u32 64, %s20
      %p252 = scmp.eq.s32.totalorder %s21, 0
      // Predicated region
      $region33: #{detection_backbone_forward.5} parent=31 // pred_check
        %p253 = pneg %p252
      $region34: #{detection_backbone_forward.5} parent=31 // pred_check_branch
        %255 = sbr.rel (%p253) target = $region36
      $region35: #{detection_backbone_forward.5} parent=31 // pred_region
        %256 = vst [vmem:[#allocation2] sm:$0xff] 0.0
        %257 = vst [vmem:[#allocation2 + $0x8] sm:$0xff] 0.0
        %258 = vst [vmem:[#allocation2 + $0x10] sm:$0xff] 0.0
        %259 = vst [vmem:[#allocation2 + $0x18] sm:$0xff] 0.0
        %260 = vst [vmem:[#allocation2 + $0x20] sm:$0xff] 0.0
        %261 = vst [vmem:[#allocation2 + $0x28] sm:$0xff] 0.0
        %262 = vst [vmem:[#allocation2 + $0x30] sm:$0xff] 0.0
        %263 = vst [vmem:[#allocation2 + $0x38] sm:$0xff] 0.0
        %264 = vst [vmem:[#allocation2 + $0x40] sm:$0xff] 0.0
        %265 = vst [vmem:[#allocation2 + $0x48] sm:$0xff] 0.0
        %266 = vst [vmem:[#allocation2 + $0x50] sm:$0xff] 0.0
        %267 = vst [vmem:[#allocation2 + $0x58] sm:$0xff] 0.0
        %268 = vst [vmem:[#allocation2 + $0x60] sm:$0xff] 0.0
        %269 = vst [vmem:[#allocation2 + $0x68] sm:$0xff] 0.0
        %270 = vst [vmem:[#allocation2 + $0x70] sm:$0xff] 0.0
        %271 = vst [vmem:[#allocation2 + $0x78] sm:$0xff] 0.0
        %272 = vst [vmem:[#allocation2 + $0x80] sm:$0xff] 0.0
        %273 = vst [vmem:[#allocation2 + $0x88] sm:$0xff] 0.0
        %274 = vst [vmem:[#allocation2 + $0x90] sm:$0xff] 0.0
        %275 = vst [vmem:[#allocation2 + $0x98] sm:$0xff] 0.0
        %276 = vst [vmem:[#allocation2 + $0xa0] sm:$0xff] 0.0
        %277 = vst [vmem:[#allocation2 + $0xa8] sm:$0xff] 0.0
        %278 = vst [vmem:[#allocation2 + $0xb0] sm:$0xff] 0.0
        %279 = vst [vmem:[#allocation2 + $0xb8] sm:$0xff] 0.0
        %280 = vst [vmem:[#allocation2 + $0xc0] sm:$0xff] 0.0
        %281 = vst [vmem:[#allocation2 + $0xc8] sm:$0xff] 0.0
        %282 = vst [vmem:[#allocation2 + $0xd0] sm:$0xff] 0.0
        %283 = vst [vmem:[#allocation2 + $0xd8] sm:$0xff] 0.0
        %284 = vst [vmem:[#allocation2 + $0xe0] sm:$0xff] 0.0
        %285 = vst [vmem:[#allocation2 + $0xe8] sm:$0xff] 0.0
        %286 = vst [vmem:[#allocation2 + $0xf0] sm:$0xff] 0.0
        %287 = vst [vmem:[#allocation2 + $0xf8] sm:$0xff] 0.0
        %288 = vst [vmem:[#allocation2 + $0x100] sm:$0xff] 0.0
        %289 = vst [vmem:[#allocation2 + $0x108] sm:$0xff] 0.0
        %290 = vst [vmem:[#allocation2 + $0x110] sm:$0xff] 0.0
        %291 = vst [vmem:[#allocation2 + $0x118] sm:$0xff] 0.0
        %292 = vst [vmem:[#allocation2 + $0x120] sm:$0xff] 0.0
        %293 = vst [vmem:[#allocation2 + $0x128] sm:$0xff] 0.0
        %294 = vst [vmem:[#allocation2 + $0x130] sm:$0xff] 0.0
        %295 = vst [vmem:[#allocation2 + $0x138] sm:$0xff] 0.0
        %296 = vst [vmem:[#allocation2 + $0x140] sm:$0xff] 0.0
        %297 = vst [vmem:[#allocation2 + $0x148] sm:$0xff] 0.0
        %298 = vst [vmem:[#allocation2 + $0x150] sm:$0xff] 0.0
        %299 = vst [vmem:[#allocation2 + $0x158] sm:$0xff] 0.0
        %300 = vst [vmem:[#allocation2 + $0x160] sm:$0xff] 0.0
        %301 = vst [vmem:[#allocation2 + $0x168] sm:$0xff] 0.0
        %302 = vst [vmem:[#allocation2 + $0x170] sm:$0xff] 0.0
        %303 = vst [vmem:[#allocation2 + $0x178] sm:$0xff] 0.0
        %304 = vst [vmem:[#allocation2 + $0x180] sm:$0xff] 0.0
        %305 = vst [vmem:[#allocation2 + $0x188] sm:$0xff] 0.0
        %306 = vst [vmem:[#allocation2 + $0x190] sm:$0xff] 0.0
        %307 = vst [vmem:[#allocation2 + $0x198] sm:$0xff] 0.0
        %308 = vst [vmem:[#allocation2 + $0x1a0] sm:$0xff] 0.0
        %309 = vst [vmem:[#allocation2 + $0x1a8] sm:$0xff] 0.0
        %310 = vst [vmem:[#allocation2 + $0x1b0] sm:$0xff] 0.0
        %311 = vst [vmem:[#allocation2 + $0x1b8] sm:$0xff] 0.0
        %312 = vst [vmem:[#allocation2 + $0x1c0] sm:$0xff] 0.0
        %313 = vst [vmem:[#allocation2 + $0x1c8] sm:$0xff] 0.0
        %314 = vst [vmem:[#allocation2 + $0x1d0] sm:$0xff] 0.0
        %315 = vst [vmem:[#allocation2 + $0x1d8] sm:$0xff] 0.0
        %316 = vst [vmem:[#allocation2 + $0x1e0] sm:$0xff] 0.0
        %317 = vst [vmem:[#allocation2 + $0x1e8] sm:$0xff] 0.0
        %318 = vst [vmem:[#allocation2 + $0x1f0] sm:$0xff] 0.0
        %319 = vst [vmem:[#allocation2 + $0x1f8] sm:$0xff] 0.0
        %320 = vst [vmem:[#allocation3] sm:$0xff] 0.0
        %321 = vst [vmem:[#allocation3 + $0x8] sm:$0xff] 0.0
        %322 = vst [vmem:[#allocation3 + $0x10] sm:$0xff] 0.0
        %323 = vst [vmem:[#allocation3 + $0x18] sm:$0xff] 0.0
        %324 = vst [vmem:[#allocation3 + $0x20] sm:$0xff] 0.0
        %325 = vst [vmem:[#allocation3 + $0x28] sm:$0xff] 0.0
        %326 = vst [vmem:[#allocation3 + $0x30] sm:$0xff] 0.0
        %327 = vst [vmem:[#allocation3 + $0x38] sm:$0xff] 0.0
        %328 = vst [vmem:[#allocation3 + $0x40] sm:$0xff] 0.0
        %329 = vst [vmem:[#allocation3 + $0x48] sm:$0xff] 0.0
        %330 = vst [vmem:[#allocation3 + $0x50] sm:$0xff] 0.0
        %331 = vst [vmem:[#allocation3 + $0x58] sm:$0xff] 0.0
        %332 = vst [vmem:[#allocation3 + $0x60] sm:$0xff] 0.0
        %333 = vst [vmem:[#allocation3 + $0x68] sm:$0xff] 0.0
        %334 = vst [vmem:[#allocation3 + $0x70] sm:$0xff] 0.0
        %335 = vst [vmem:[#allocation3 + $0x78] sm:$0xff] 0.0
        %336 = vst [vmem:[#allocation3 + $0x80] sm:$0xff] 0.0
        %337 = vst [vmem:[#allocation3 + $0x88] sm:$0xff] 0.0
        %338 = vst [vmem:[#allocation3 + $0x90] sm:$0xff] 0.0
        %339 = vst [vmem:[#allocation3 + $0x98] sm:$0xff] 0.0
        %340 = vst [vmem:[#allocation3 + $0xa0] sm:$0xff] 0.0
        %341 = vst [vmem:[#allocation3 + $0xa8] sm:$0xff] 0.0
        %342 = vst [vmem:[#allocation3 + $0xb0] sm:$0xff] 0.0
        %343 = vst [vmem:[#allocation3 + $0xb8] sm:$0xff] 0.0
        %344 = vst [vmem:[#allocation3 + $0xc0] sm:$0xff] 0.0
        %345 = vst [vmem:[#allocation3 + $0xc8] sm:$0xff] 0.0
        %346 = vst [vmem:[#allocation3 + $0xd0] sm:$0xff] 0.0
        %347 = vst [vmem:[#allocation3 + $0xd8] sm:$0xff] 0.0
        %348 = vst [vmem:[#allocation3 + $0xe0] sm:$0xff] 0.0
        %349 = vst [vmem:[#allocation3 + $0xe8] sm:$0xff] 0.0
        %350 = vst [vmem:[#allocation3 + $0xf0] sm:$0xff] 0.0
        %351 = vst [vmem:[#allocation3 + $0xf8] sm:$0xff] 0.0
        %352 = vst [vmem:[#allocation3 + $0x100] sm:$0xff] 0.0
        %353 = vst [vmem:[#allocation3 + $0x108] sm:$0xff] 0.0
        %354 = vst [vmem:[#allocation3 + $0x110] sm:$0xff] 0.0
        %355 = vst [vmem:[#allocation3 + $0x118] sm:$0xff] 0.0
        %356 = vst [vmem:[#allocation3 + $0x120] sm:$0xff] 0.0
        %357 = vst [vmem:[#allocation3 + $0x128] sm:$0xff] 0.0
        %358 = vst [vmem:[#allocation3 + $0x130] sm:$0xff] 0.0
        %359 = vst [vmem:[#allocation3 + $0x138] sm:$0xff] 0.0
        %360 = vst [vmem:[#allocation3 + $0x140] sm:$0xff] 0.0
        %361 = vst [vmem:[#allocation3 + $0x148] sm:$0xff] 0.0
        %362 = vst [vmem:[#allocation3 + $0x150] sm:$0xff] 0.0
        %363 = vst [vmem:[#allocation3 + $0x158] sm:$0xff] 0.0
        %364 = vst [vmem:[#allocation3 + $0x160] sm:$0xff] 0.0
        %365 = vst [vmem:[#allocation3 + $0x168] sm:$0xff] 0.0
        %366 = vst [vmem:[#allocation3 + $0x170] sm:$0xff] 0.0
        %367 = vst [vmem:[#allocation3 + $0x178] sm:$0xff] 0.0
        %368 = vst [vmem:[#allocation3 + $0x180] sm:$0xff] 0.0
        %369 = vst [vmem:[#allocation3 + $0x188] sm:$0xff] 0.0
        %370 = vst [vmem:[#allocation3 + $0x190] sm:$0xff] 0.0
        %371 = vst [vmem:[#allocation3 + $0x198] sm:$0xff] 0.0
        %372 = vst [vmem:[#allocation3 + $0x1a0] sm:$0xff] 0.0
        %373 = vst [vmem:[#allocation3 + $0x1a8] sm:$0xff] 0.0
        %374 = vst [vmem:[#allocation3 + $0x1b0] sm:$0xff] 0.0
        %375 = vst [vmem:[#allocation3 + $0x1b8] sm:$0xff] 0.0
        %376 = vst [vmem:[#allocation3 + $0x1c0] sm:$0xff] 0.0
        %377 = vst [vmem:[#allocation3 + $0x1c8] sm:$0xff] 0.0
        %378 = vst [vmem:[#allocation3 + $0x1d0] sm:$0xff] 0.0
        %379 = vst [vmem:[#allocation3 + $0x1d8] sm:$0xff] 0.0
        %380 = vst [vmem:[#allocation3 + $0x1e0] sm:$0xff] 0.0
        %381 = vst [vmem:[#allocation3 + $0x1e8] sm:$0xff] 0.0
        %382 = vst [vmem:[#allocation3 + $0x1f0] sm:$0xff] 0.0
        %383 = vst [vmem:[#allocation3 + $0x1f8] sm:$0xff] 0.0
        %384 = vst [vmem:[%s249] sm:$0xff] 0.0
        %385 = vst [vmem:[%s249 + $0x8] sm:$0xff] 0.0
        %386 = vst [vmem:[%s249 + $0x10] sm:$0xff] 0.0
        %387 = vst [vmem:[%s249 + $0x18] sm:$0xff] 0.0
        %388 = vst [vmem:[%s249 + $0x20] sm:$0xff] 0.0
        %389 = vst [vmem:[%s249 + $0x28] sm:$0xff] 0.0
        %390 = vst [vmem:[%s249 + $0x30] sm:$0xff] 0.0
        %391 = vst [vmem:[%s249 + $0x38] sm:$0xff] 0.0
        %392 = vst [vmem:[%s249 + $0x40] sm:$0xff] 0.0
        %393 = vst [vmem:[%s249 + $0x48] sm:$0xff] 0.0
        %394 = vst [vmem:[%s249 + $0x50] sm:$0xff] 0.0
        %395 = vst [vmem:[%s249 + $0x58] sm:$0xff] 0.0
        %396 = vst [vmem:[%s249 + $0x60] sm:$0xff] 0.0
        %397 = vst [vmem:[%s249 + $0x68] sm:$0xff] 0.0
        %398 = vst [vmem:[%s249 + $0x70] sm:$0xff] 0.0
        %399 = vst [vmem:[%s249 + $0x78] sm:$0xff] 0.0
        %400 = vst [vmem:[%s249 + $0x80] sm:$0xff] 0.0
        %401 = vst [vmem:[%s249 + $0x88] sm:$0xff] 0.0
        %402 = vst [vmem:[%s249 + $0x90] sm:$0xff] 0.0
        %403 = vst [vmem:[%s249 + $0x98] sm:$0xff] 0.0
        %404 = vst [vmem:[%s249 + $0xa0] sm:$0xff] 0.0
        %405 = vst [vmem:[%s249 + $0xa8] sm:$0xff] 0.0
        %406 = vst [vmem:[%s249 + $0xb0] sm:$0xff] 0.0
        %407 = vst [vmem:[%s249 + $0xb8] sm:$0xff] 0.0
        %408 = vst [vmem:[%s249 + $0xc0] sm:$0xff] 0.0
        %409 = vst [vmem:[%s249 + $0xc8] sm:$0xff] 0.0
        %410 = vst [vmem:[%s249 + $0xd0] sm:$0xff] 0.0
        %411 = vst [vmem:[%s249 + $0xd8] sm:$0xff] 0.0
        %412 = vst [vmem:[%s249 + $0xe0] sm:$0xff] 0.0
        %413 = vst [vmem:[%s249 + $0xe8] sm:$0xff] 0.0
        %414 = vst [vmem:[%s249 + $0xf0] sm:$0xff] 0.0
        %415 = vst [vmem:[%s249 + $0xf8] sm:$0xff] 0.0
        %416 = vst [vmem:[%s249 + $0x100] sm:$0xff] 0.0
        %417 = vst [vmem:[%s249 + $0x108] sm:$0xff] 0.0
        %418 = vst [vmem:[%s249 + $0x110] sm:$0xff] 0.0
        %419 = vst [vmem:[%s249 + $0x118] sm:$0xff] 0.0
        %420 = vst [vmem:[%s249 + $0x120] sm:$0xff] 0.0
        %421 = vst [vmem:[%s249 + $0x128] sm:$0xff] 0.0
        %422 = vst [vmem:[%s249 + $0x130] sm:$0xff] 0.0
        %423 = vst [vmem:[%s249 + $0x138] sm:$0xff] 0.0
        %424 = vst [vmem:[%s249 + $0x140] sm:$0xff] 0.0
        %425 = vst [vmem:[%s249 + $0x148] sm:$0xff] 0.0
        %426 = vst [vmem:[%s249 + $0x150] sm:$0xff] 0.0
        %427 = vst [vmem:[%s249 + $0x158] sm:$0xff] 0.0
        %428 = vst [vmem:[%s249 + $0x160] sm:$0xff] 0.0
        %429 = vst [vmem:[%s249 + $0x168] sm:$0xff] 0.0
        %430 = vst [vmem:[%s249 + $0x170] sm:$0xff] 0.0
        %431 = vst [vmem:[%s249 + $0x178] sm:$0xff] 0.0
        %432 = vst [vmem:[%s249 + $0x180] sm:$0xff] 0.0
        %433 = vst [vmem:[%s249 + $0x188] sm:$0xff] 0.0
        %434 = vst [vmem:[%s249 + $0x190] sm:$0xff] 0.0
        %435 = vst [vmem:[%s249 + $0x198] sm:$0xff] 0.0
        %436 = vst [vmem:[%s249 + $0x1a0] sm:$0xff] 0.0
        %437 = vst [vmem:[%s249 + $0x1a8] sm:$0xff] 0.0
        %438 = vst [vmem:[%s249 + $0x1b0] sm:$0xff] 0.0
        %439 = vst [vmem:[%s249 + $0x1b8] sm:$0xff] 0.0
        %440 = vst [vmem:[%s249 + $0x1c0] sm:$0xff] 0.0
        %441 = vst [vmem:[%s249 + $0x1c8] sm:$0xff] 0.0
        %442 = vst [vmem:[%s249 + $0x1d0] sm:$0xff] 0.0
        %443 = vst [vmem:[%s249 + $0x1d8] sm:$0xff] 0.0
        %444 = vst [vmem:[%s249 + $0x1e0] sm:$0xff] 0.0
        %445 = vst [vmem:[%s249 + $0x1e8] sm:$0xff] 0.0
        %446 = vst [vmem:[%s249 + $0x1f0] sm:$0xff] 0.0
        %447 = vst [vmem:[%s249 + $0x1f8] sm:$0xff] 0.0
      $region36: #{detection_backbone_forward.5} parent=31 // pred_fallthru
        _
      %v448 = vld [vmem:[%s233] sm:$0xf]
      %v449 = vld [vmem:[%s233 + $0x4] sm:$0xf]
      %v450 = vld [vmem:[%s233 + $0x8] sm:$0xf]
      %v451 = vld [vmem:[%s233 + $0xc] sm:$0xf]
      %v452 = vld [vmem:[%s233 + $0x10] sm:$0xf]
      %v453 = vld [vmem:[%s233 + $0x14] sm:$0xf]
      %v454 = vld [vmem:[%s233 + $0x18] sm:$0xf]
      %v455 = vld [vmem:[%s233 + $0x1c] sm:$0xf]
      %v456 = vld [vmem:[%s233 + $0x20] sm:$0xf]
      %v457 = vld [vmem:[%s233 + $0x24] sm:$0xf]
      %v458 = vld [vmem:[%s233 + $0x28] sm:$0xf]
      %v459 = vld [vmem:[%s233 + $0x2c] sm:$0xf]
      %v460 = vld [vmem:[%s233 + $0x30] sm:$0xf]
      %v461 = vld [vmem:[%s233 + $0x34] sm:$0xf]
      %v462 = vld [vmem:[%s233 + $0x38] sm:$0xf]
      %v463 = vld [vmem:[%s233 + $0x3c] sm:$0xf]
      %v464 = vld [vmem:[%s233 + $0x40] sm:$0xf]
      %v465 = vld [vmem:[%s233 + $0x44] sm:$0xf]
      %v466 = vld [vmem:[%s233 + $0x48] sm:$0xf]
      %v467 = vld [vmem:[%s233 + $0x4c] sm:$0xf]
      %v468 = vld [vmem:[%s233 + $0x50] sm:$0xf]
      %v469 = vld [vmem:[%s233 + $0x54] sm:$0xf]
      %v470 = vld [vmem:[%s233 + $0x58] sm:$0xf]
      %v471 = vld [vmem:[%s233 + $0x5c] sm:$0xf]
      %v472 = vld [vmem:[%s233 + $0x60] sm:$0xf]
      %v473 = vld [vmem:[%s233 + $0x64] sm:$0xf]
      %v474 = vld [vmem:[%s233 + $0x68] sm:$0xf]
      %v475 = vld [vmem:[%s233 + $0x6c] sm:$0xf]
      %v476 = vld [vmem:[%s233 + $0x70] sm:$0xf]
      %v477 = vld [vmem:[%s233 + $0x74] sm:$0xf]
      %v478 = vld [vmem:[%s233 + $0x78] sm:$0xf]
      %v479 = vld [vmem:[%s233 + $0x7c] sm:$0xf]
      %v480 = vld [vmem:[%s233 + $0x80] sm:$0xf]
      %v481 = vld [vmem:[%s233 + $0x84] sm:$0xf]
      %v482 = vld [vmem:[%s233 + $0x88] sm:$0xf]
      %v483 = vld [vmem:[%s233 + $0x8c] sm:$0xf]
      %v484 = vld [vmem:[%s233 + $0x90] sm:$0xf]
      %v485 = vld [vmem:[%s233 + $0x94] sm:$0xf]
      %v486 = vld [vmem:[%s233 + $0x98] sm:$0xf]
      %v487 = vld [vmem:[%s233 + $0x9c] sm:$0xf]
      %v488 = vld [vmem:[%s233 + $0xa0] sm:$0xf]
      %v489 = vld [vmem:[%s233 + $0xa4] sm:$0xf]
      %v490 = vld [vmem:[%s233 + $0xa8] sm:$0xf]
      %v491 = vld [vmem:[%s233 + $0xac] sm:$0xf]
      %v492 = vld [vmem:[%s233 + $0xb0] sm:$0xf]
      %v493 = vld [vmem:[%s233 + $0xb4] sm:$0xf]
      %v494 = vld [vmem:[%s233 + $0xb8] sm:$0xf]
      %v495 = vld [vmem:[%s233 + $0xbc] sm:$0xf]
      %v496 = vld [vmem:[%s233 + $0xc0] sm:$0xf]
      %v497 = vld [vmem:[%s233 + $0xc4] sm:$0xf]
      %v498 = vld [vmem:[%s233 + $0xc8] sm:$0xf]
      %v499 = vld [vmem:[%s233 + $0xcc] sm:$0xf]
      %v500 = vld [vmem:[%s233 + $0xd0] sm:$0xf]
      %v501 = vld [vmem:[%s233 + $0xd4] sm:$0xf]
      %v502 = vld [vmem:[%s233 + $0xd8] sm:$0xf]
      %v503 = vld [vmem:[%s233 + $0xdc] sm:$0xf]
      %v504 = vld [vmem:[%s233 + $0xe0] sm:$0xf]
      %v505 = vld [vmem:[%s233 + $0xe4] sm:$0xf]
      %v506 = vld [vmem:[%s233 + $0xe8] sm:$0xf]
      %v507 = vld [vmem:[%s233 + $0xec] sm:$0xf]
      %v508 = vld [vmem:[%s233 + $0xf0] sm:$0xf]
      %v509 = vld [vmem:[%s233 + $0xf4] sm:$0xf]
      %v510 = vld [vmem:[%s233 + $0xf8] sm:$0xf]
      %v511 = vld [vmem:[%s233 + $0xfc] sm:$0xf]
      %v512 = vld [vmem:[%s1] sm:$0xf]
      %v513 = vld [vmem:[%s1 + $0x4] sm:$0xf]
      %v514 = vld [vmem:[%s1 + $0x8] sm:$0x1]
      %v515 = vld [vmem:[%s2] sm:$0x1]
      %v517 = vperm.slane %v515, 0
      %v583 = vunpack.c.l.b16 %v448
      %v584 = vunpack.c.l.b16 %v449
      %v585 = vunpack.c.l.b16 %v450
      %v586 = vunpack.c.l.b16 %v451
      %v587 = vunpack.c.l.b16 %v452
      %v588 = vunpack.c.l.b16 %v453
      %v589 = vunpack.c.l.b16 %v454
      %v590 = vunpack.c.l.b16 %v455
      %v591 = vunpack.c.l.b16 %v456
      %v592 = vunpack.c.l.b16 %v457
      %v593 = vunpack.c.l.b16 %v458
      %v594 = vunpack.c.l.b16 %v459
      %v595 = vunpack.c.l.b16 %v460
      %v596 = vunpack.c.l.b16 %v461
      %v597 = vunpack.c.l.b16 %v462
      %v598 = vunpack.c.l.b16 %v463
      %v599 = vunpack.c.l.b16 %v464
      %v600 = vunpack.c.l.b16 %v465
      %v601 = vunpack.c.l.b16 %v466
      %v602 = vunpack.c.l.b16 %v467
      %v603 = vunpack.c.l.b16 %v468
      %v604 = vunpack.c.l.b16 %v469
      %v605 = vunpack.c.l.b16 %v470
      %v606 = vunpack.c.l.b16 %v471
      %v607 = vunpack.c.l.b16 %v472
      %v608 = vunpack.c.l.b16 %v473
      %v609 = vunpack.c.l.b16 %v474
      %v610 = vunpack.c.l.b16 %v475
      %v611 = vunpack.c.l.b16 %v476
      %v612 = vunpack.c.l.b16 %v477
      %v613 = vunpack.c.l.b16 %v478
      %v614 = vunpack.c.l.b16 %v479
      %v615 = vunpack.c.l.b16 %v480
      %v616 = vunpack.c.l.b16 %v481
      %v617 = vunpack.c.l.b16 %v482
      %v618 = vunpack.c.l.b16 %v483
      %v619 = vunpack.c.l.b16 %v484
      %v620 = vunpack.c.l.b16 %v485
      %v621 = vunpack.c.l.b16 %v486
      %v622 = vunpack.c.l.b16 %v487
      %v623 = vunpack.c.l.b16 %v488
      %v624 = vunpack.c.l.b16 %v489
      %v625 = vunpack.c.l.b16 %v490
      %v626 = vunpack.c.l.b16 %v491
      %v627 = vunpack.c.l.b16 %v492
      %v628 = vunpack.c.l.b16 %v493
      %v629 = vunpack.c.l.b16 %v494
      %v630 = vunpack.c.l.b16 %v495
      %v631 = vunpack.c.l.b16 %v496
      %v632 = vunpack.c.l.b16 %v497
      %v633 = vunpack.c.l.b16 %v498
      %v634 = vunpack.c.l.b16 %v499
      %v635 = vunpack.c.l.b16 %v500
      %v636 = vunpack.c.l.b16 %v501
      %v637 = vunpack.c.l.b16 %v502
      %v638 = vunpack.c.l.b16 %v503
      %v639 = vunpack.c.l.b16 %v504
      %v640 = vunpack.c.l.b16 %v505
      %v641 = vunpack.c.l.b16 %v506
      %v642 = vunpack.c.l.b16 %v507
      %v643 = vunpack.c.l.b16 %v508
      %v644 = vunpack.c.l.b16 %v509
      %v645 = vunpack.c.l.b16 %v510
      %v646 = vunpack.c.l.b16 %v511
      %v647 = vpack.c.b16 %v584, %v583
      %v648 = vpack.c.b16 %v586, %v585
      %v649 = vpack.c.b16 %v588, %v587
      %v650 = vpack.c.b16 %v590, %v589
      %v651 = vpack.c.b16 %v592, %v591
      %v652 = vpack.c.b16 %v594, %v593
      %v653 = vpack.c.b16 %v596, %v595
      %v654 = vpack.c.b16 %v598, %v597
      %v655 = vpack.c.b16 %v600, %v599
      %v656 = vpack.c.b16 %v602, %v601
      %v657 = vpack.c.b16 %v604, %v603
      %v658 = vpack.c.b16 %v606, %v605
      %v659 = vpack.c.b16 %v608, %v607
      %v660 = vpack.c.b16 %v610, %v609
      %v661 = vpack.c.b16 %v612, %v611
      %v662 = vpack.c.b16 %v614, %v613
      %v663 = vpack.c.b16 %v616, %v615
      %v664 = vpack.c.b16 %v618, %v617
      %v665 = vpack.c.b16 %v620, %v619
      %v666 = vpack.c.b16 %v622, %v621
      %v667 = vpack.c.b16 %v624, %v623
      %v668 = vpack.c.b16 %v626, %v625
      %v669 = vpack.c.b16 %v628, %v627
      %v670 = vpack.c.b16 %v630, %v629
      %v671 = vpack.c.b16 %v632, %v631
      %v672 = vpack.c.b16 %v634, %v633
      %v673 = vpack.c.b16 %v636, %v635
      %v674 = vpack.c.b16 %v638, %v637
      %v675 = vpack.c.b16 %v640, %v639
      %v676 = vpack.c.b16 %v642, %v641
      %v677 = vpack.c.b16 %v644, %v643
      %v678 = vpack.c.b16 %v646, %v645
      %v682 = vunpack.c.l.b16 %v512
      %v683 = vunpack.c.l.b16 %v513
      %v684 = vunpack.c.l.b16 %v514
      %v685 = vpack.c.b16 %v683, %v682
      %v686 = vpack.c.b16 %v684, %v684
      %vm688 = vcmask 146432
      %v690 = vsel %vm688, %v647, 0
      %v693 = vsel %vm688, %v648, 0
      %v696 = vsel %vm688, %v649, 0
      %v699 = vsel %vm688, %v650, 0
      %v702 = vsel %vm688, %v651, 0
      %v705 = vsel %vm688, %v652, 0
      %v708 = vsel %vm688, %v653, 0
      %v711 = vsel %vm688, %v654, 0
      %v714 = vsel %vm688, %v655, 0
      %v717 = vsel %vm688, %v656, 0
      %v720 = vsel %vm688, %v657, 0
      %v723 = vsel %vm688, %v658, 0
      %v726 = vsel %vm688, %v659, 0
      %v729 = vsel %vm688, %v660, 0
      %v732 = vsel %vm688, %v661, 0
      %v735 = vsel %vm688, %v662, 0
      %v738 = vsel %vm688, %v663, 0
      %v741 = vsel %vm688, %v664, 0
      %v744 = vsel %vm688, %v665, 0
      %v747 = vsel %vm688, %v666, 0
      %v750 = vsel %vm688, %v667, 0
      %v753 = vsel %vm688, %v668, 0
      %v756 = vsel %vm688, %v669, 0
      %v759 = vsel %vm688, %v670, 0
      %v762 = vsel %vm688, %v671, 0
      %v765 = vsel %vm688, %v672, 0
      %v768 = vsel %vm688, %v673, 0
      %v771 = vsel %vm688, %v674, 0
      %v774 = vsel %vm688, %v675, 0
      %v777 = vsel %vm688, %v676, 0
      %v780 = vsel %vm688, %v677, 0
      %v783 = vsel %vm688, %v678, 0
      %vm785 = vcmask 1040384
      %v787 = vsel %vm785, %v686, 0
      %789 = vmatpush.bf16.msra.mxu0 0
      %790 = vmatpush.bf16.msra.mxu0 0
      %791 = vmatpush.bf16.msra.mxu0 0
      %792 = vmatpush.bf16.msra.mxu0 0
      %793 = vmatpush.bf16.msra.mxu0 0
      %794 = vmatpush.bf16.msra.mxu0 0
      %795 = vmatpush.bf16.msra.mxu0 %v787
      %796 = vmatpush.bf16.msra.mxu0 %v685
      %797 = vmatmul.bf16.gmra.mxu0 %v690
      %v798 = vpop.f32.mrf.mxu0
      %v799 = vadd.f32 %v517, %v798
      %v800 = vpop.f32.mrf.mxu0
      %v801 = vadd.f32 %v517, %v800
      %802 = vmatmul.bf16.gmra.mxu0 %v693
      %v803 = vpop.f32.mrf.mxu0
      %v804 = vadd.f32 %v517, %v803
      %v805 = vpop.f32.mrf.mxu0
      %v806 = vadd.f32 %v517, %v805
      %807 = vmatmul.bf16.gmra.mxu0 %v696
      %v808 = vpop.f32.mrf.mxu0
      %v809 = vadd.f32 %v517, %v808
      %v810 = vpop.f32.mrf.mxu0
      %v811 = vadd.f32 %v517, %v810
      %812 = vmatmul.bf16.gmra.mxu0 %v699
      %v813 = vpop.f32.mrf.mxu0
      %v814 = vadd.f32 %v517, %v813
      %v815 = vpop.f32.mrf.mxu0
      %v816 = vadd.f32 %v517, %v815
      %817 = vmatmul.bf16.gmra.mxu0 %v702
      %v818 = vpop.f32.mrf.mxu0
      %v819 = vadd.f32 %v517, %v818
      %v820 = vpop.f32.mrf.mxu0
      %v821 = vadd.f32 %v517, %v820
      %822 = vmatmul.bf16.gmra.mxu0 %v705
      %v823 = vpop.f32.mrf.mxu0
      %v824 = vadd.f32 %v517, %v823
      %v825 = vpop.f32.mrf.mxu0
      %v826 = vadd.f32 %v517, %v825
      %827 = vmatmul.bf16.gmra.mxu0 %v708
      %v828 = vpop.f32.mrf.mxu0
      %v829 = vadd.f32 %v517, %v828
      %v830 = vpop.f32.mrf.mxu0
      %v831 = vadd.f32 %v517, %v830
      %832 = vmatmul.bf16.gmra.mxu0 %v711
      %v833 = vpop.f32.mrf.mxu0
      %v834 = vadd.f32 %v517, %v833
      %v835 = vpop.f32.mrf.mxu0
      %v836 = vadd.f32 %v517, %v835
      %837 = vmatmul.bf16.gmra.mxu0 %v714
      %v838 = vpop.f32.mrf.mxu0
      %v839 = vadd.f32 %v517, %v838
      %v840 = vpop.f32.mrf.mxu0
      %v841 = vadd.f32 %v517, %v840
      %842 = vmatmul.bf16.gmra.mxu0 %v717
      %v843 = vpop.f32.mrf.mxu0
      %v844 = vadd.f32 %v517, %v843
      %v845 = vpop.f32.mrf.mxu0
      %v846 = vadd.f32 %v517, %v845
      %847 = vmatmul.bf16.gmra.mxu0 %v720
      %v848 = vpop.f32.mrf.mxu0
      %v849 = vadd.f32 %v517, %v848
      %v850 = vpop.f32.mrf.mxu0
      %v851 = vadd.f32 %v517, %v850
      %852 = vmatmul.bf16.gmra.mxu0 %v723
      %v853 = vpop.f32.mrf.mxu0
      %v854 = vadd.f32 %v517, %v853
      %v855 = vpop.f32.mrf.mxu0
      %v856 = vadd.f32 %v517, %v855
      %857 = vmatmul.bf16.gmra.mxu0 %v726
      %v858 = vpop.f32.mrf.mxu0
      %v859 = vadd.f32 %v517, %v858
      %v860 = vpop.f32.mrf.mxu0
      %v861 = vadd.f32 %v517, %v860
      %862 = vmatmul.bf16.gmra.mxu0 %v729
      %v863 = vpop.f32.mrf.mxu0
      %v864 = vadd.f32 %v517, %v863
      %v865 = vpop.f32.mrf.mxu0
      %v866 = vadd.f32 %v517, %v865
      %867 = vmatmul.bf16.gmra.mxu0 %v732
      %v868 = vpop.f32.mrf.mxu0
      %v869 = vadd.f32 %v517, %v868
      %v870 = vpop.f32.mrf.mxu0
      %v871 = vadd.f32 %v517, %v870
      %872 = vmatmul.bf16.gmra.mxu0 %v735
      %v873 = vpop.f32.mrf.mxu0
      %v874 = vadd.f32 %v517, %v873
      %v875 = vpop.f32.mrf.mxu0
      %v876 = vadd.f32 %v517, %v875
      %877 = vmatmul.bf16.gmra.mxu0 %v738
      %v878 = vpop.f32.mrf.mxu0
      %v879 = vadd.f32 %v517, %v878
      %v880 = vpop.f32.mrf.mxu0
      %v881 = vadd.f32 %v517, %v880
      %882 = vmatmul.bf16.gmra.mxu0 %v741
      %v883 = vpop.f32.mrf.mxu0
      %v884 = vadd.f32 %v517, %v883
      %v885 = vpop.f32.mrf.mxu0
      %v886 = vadd.f32 %v517, %v885
      %887 = vmatmul.bf16.gmra.mxu0 %v744
      %v888 = vpop.f32.mrf.mxu0
      %v889 = vadd.f32 %v517, %v888
      %v890 = vpop.f32.mrf.mxu0
      %v891 = vadd.f32 %v517, %v890
      %892 = vmatmul.bf16.gmra.mxu0 %v747
      %v893 = vpop.f32.mrf.mxu0
      %v894 = vadd.f32 %v517, %v893
      %v895 = vpop.f32.mrf.mxu0
      %v896 = vadd.f32 %v517, %v895
      %897 = vmatmul.bf16.gmra.mxu0 %v750
      %v898 = vpop.f32.mrf.mxu0
      %v899 = vadd.f32 %v517, %v898
      %v900 = vpop.f32.mrf.mxu0
      %v901 = vadd.f32 %v517, %v900
      %902 = vmatmul.bf16.gmra.mxu0 %v753
      %v903 = vpop.f32.mrf.mxu0
      %v904 = vadd.f32 %v517, %v903
      %v905 = vpop.f32.mrf.mxu0
      %v906 = vadd.f32 %v517, %v905
      %907 = vmatmul.bf16.gmra.mxu0 %v756
      %v908 = vpop.f32.mrf.mxu0
      %v909 = vadd.f32 %v517, %v908
      %v910 = vpop.f32.mrf.mxu0
      %v911 = vadd.f32 %v517, %v910
      %912 = vmatmul.bf16.gmra.mxu0 %v759
      %v913 = vpop.f32.mrf.mxu0
      %v914 = vadd.f32 %v517, %v913
      %v915 = vpop.f32.mrf.mxu0
      %v916 = vadd.f32 %v517, %v915
      %917 = vmatmul.bf16.gmra.mxu0 %v762
      %v918 = vpop.f32.mrf.mxu0
      %v919 = vadd.f32 %v517, %v918
      %v920 = vpop.f32.mrf.mxu0
      %v921 = vadd.f32 %v517, %v920
      %922 = vmatmul.bf16.gmra.mxu0 %v765
      %v923 = vpop.f32.mrf.mxu0
      %v924 = vadd.f32 %v517, %v923
      %v925 = vpop.f32.mrf.mxu0
      %v926 = vadd.f32 %v517, %v925
      %927 = vmatmul.bf16.gmra.mxu0 %v768
      %v928 = vpop.f32.mrf.mxu0
      %v929 = vadd.f32 %v517, %v928
      %v930 = vpop.f32.mrf.mxu0
      %v931 = vadd.f32 %v517, %v930
      %932 = vmatmul.bf16.gmra.mxu0 %v771
      %v933 = vpop.f32.mrf.mxu0
      %v934 = vadd.f32 %v517, %v933
      %v935 = vpop.f32.mrf.mxu0
      %v936 = vadd.f32 %v517, %v935
      %937 = vmatmul.bf16.gmra.mxu0 %v774
      %v938 = vpop.f32.mrf.mxu0
      %v939 = vadd.f32 %v517, %v938
      %v940 = vpop.f32.mrf.mxu0
      %v941 = vadd.f32 %v517, %v940
      %942 = vmatmul.bf16.gmra.mxu0 %v777
      %v943 = vpop.f32.mrf.mxu0
      %v944 = vadd.f32 %v517, %v943
      %v945 = vpop.f32.mrf.mxu0
      %v946 = vadd.f32 %v517, %v945
      %947 = vmatmul.bf16.gmra.mxu0 %v780
      %v948 = vpop.f32.mrf.mxu0
      %v949 = vadd.f32 %v517, %v948
      %v950 = vpop.f32.mrf.mxu0
      %v951 = vadd.f32 %v517, %v950
      %952 = vmatmul.bf16.gmra.mxu0 %v783
      %v953 = vpop.f32.mrf.mxu0
      %v954 = vadd.f32 %v517, %v953
      %v955 = vpop.f32.mrf.mxu0
      %v956 = vadd.f32 %v517, %v955
      %957 = vdwg.mxu0
      %v958 = vld [vmem:[#allocation2] sm:$0xff]
      %v959 = vld [vmem:[#allocation2 + $0x8] sm:$0xff]
      %v960 = vld [vmem:[#allocation2 + $0x10] sm:$0xff]
      %v961 = vld [vmem:[#allocation2 + $0x18] sm:$0xff]
      %v962 = vld [vmem:[#allocation2 + $0x20] sm:$0xff]
      %v963 = vld [vmem:[#allocation2 + $0x28] sm:$0xff]
      %v964 = vld [vmem:[#allocation2 + $0x30] sm:$0xff]
      %v965 = vld [vmem:[#allocation2 + $0x38] sm:$0xff]
      %v966 = vld [vmem:[#allocation2 + $0x40] sm:$0xff]
      %v967 = vld [vmem:[#allocation2 + $0x48] sm:$0xff]
      %v968 = vld [vmem:[#allocation2 + $0x50] sm:$0xff]
      %v969 = vld [vmem:[#allocation2 + $0x58] sm:$0xff]
      %v970 = vld [vmem:[#allocation2 + $0x60] sm:$0xff]
      %v971 = vld [vmem:[#allocation2 + $0x68] sm:$0xff]
      %v972 = vld [vmem:[#allocation2 + $0x70] sm:$0xff]
      %v973 = vld [vmem:[#allocation2 + $0x78] sm:$0xff]
      %v974 = vld [vmem:[#allocation2 + $0x80] sm:$0xff]
      %v975 = vld [vmem:[#allocation2 + $0x88] sm:$0xff]
      %v976 = vld [vmem:[#allocation2 + $0x90] sm:$0xff]
      %v977 = vld [vmem:[#allocation2 + $0x98] sm:$0xff]
      %v978 = vld [vmem:[#allocation2 + $0xa0] sm:$0xff]
      %v979 = vld [vmem:[#allocation2 + $0xa8] sm:$0xff]
      %v980 = vld [vmem:[#allocation2 + $0xb0] sm:$0xff]
      %v981 = vld [vmem:[#allocation2 + $0xb8] sm:$0xff]
      %v982 = vld [vmem:[#allocation2 + $0xc0] sm:$0xff]
      %v983 = vld [vmem:[#allocation2 + $0xc8] sm:$0xff]
      %v984 = vld [vmem:[#allocation2 + $0xd0] sm:$0xff]
      %v985 = vld [vmem:[#allocation2 + $0xd8] sm:$0xff]
      %v986 = vld [vmem:[#allocation2 + $0xe0] sm:$0xff]
      %v987 = vld [vmem:[#allocation2 + $0xe8] sm:$0xff]
      %v988 = vld [vmem:[#allocation2 + $0xf0] sm:$0xff]
      %v989 = vld [vmem:[#allocation2 + $0xf8] sm:$0xff]
      %v990 = vld [vmem:[#allocation2 + $0x100] sm:$0xff]
      %v991 = vld [vmem:[#allocation2 + $0x108] sm:$0xff]
      %v992 = vld [vmem:[#allocation2 + $0x110] sm:$0xff]
      %v993 = vld [vmem:[#allocation2 + $0x118] sm:$0xff]
      %v994 = vld [vmem:[#allocation2 + $0x120] sm:$0xff]
      %v995 = vld [vmem:[#allocation2 + $0x128] sm:$0xff]
      %v996 = vld [vmem:[#allocation2 + $0x130] sm:$0xff]
      %v997 = vld [vmem:[#allocation2 + $0x138] sm:$0xff]
      %v998 = vld [vmem:[#allocation2 + $0x140] sm:$0xff]
      %v999 = vld [vmem:[#allocation2 + $0x148] sm:$0xff]
      %v1000 = vld [vmem:[#allocation2 + $0x150] sm:$0xff]
      %v1001 = vld [vmem:[#allocation2 + $0x158] sm:$0xff]
      %v1002 = vld [vmem:[#allocation2 + $0x160] sm:$0xff]
      %v1003 = vld [vmem:[#allocation2 + $0x168] sm:$0xff]
      %v1004 = vld [vmem:[#allocation2 + $0x170] sm:$0xff]
      %v1005 = vld [vmem:[#allocation2 + $0x178] sm:$0xff]
      %v1006 = vld [vmem:[#allocation2 + $0x180] sm:$0xff]
      %v1007 = vld [vmem:[#allocation2 + $0x188] sm:$0xff]
      %v1008 = vld [vmem:[#allocation2 + $0x190] sm:$0xff]
      %v1009 = vld [vmem:[#allocation2 + $0x198] sm:$0xff]
      %v1010 = vld [vmem:[#allocation2 + $0x1a0] sm:$0xff]
      %v1011 = vld [vmem:[#allocation2 + $0x1a8] sm:$0xff]
      %v1012 = vld [vmem:[#allocation2 + $0x1b0] sm:$0xff]
      %v1013 = vld [vmem:[#allocation2 + $0x1b8] sm:$0xff]
      %v1014 = vld [vmem:[#allocation2 + $0x1c0] sm:$0xff]
      %v1015 = vld [vmem:[#allocation2 + $0x1c8] sm:$0xff]
      %v1016 = vld [vmem:[#allocation2 + $0x1d0] sm:$0xff]
      %v1017 = vld [vmem:[#allocation2 + $0x1d8] sm:$0xff]
      %v1018 = vld [vmem:[#allocation2 + $0x1e0] sm:$0xff]
      %v1019 = vld [vmem:[#allocation2 + $0x1e8] sm:$0xff]
      %v1020 = vld [vmem:[#allocation2 + $0x1f0] sm:$0xff]
      %v1021 = vld [vmem:[#allocation2 + $0x1f8] sm:$0xff]
      %v1022 = vsub.f32 %v799, %v958
      %v1023 = vsub.f32 %v801, %v959
      %v1024 = vsub.f32 %v804, %v960
      %v1025 = vsub.f32 %v806, %v961
      %v1026 = vsub.f32 %v809, %v962
      %v1027 = vsub.f32 %v811, %v963
      %v1028 = vsub.f32 %v814, %v964
      %v1029 = vsub.f32 %v816, %v965
      %v1030 = vsub.f32 %v819, %v966
      %v1031 = vsub.f32 %v821, %v967
      %v1032 = vsub.f32 %v824, %v968
      %v1033 = vsub.f32 %v826, %v969
      %v1034 = vsub.f32 %v829, %v970
      %v1035 = vsub.f32 %v831, %v971
      %v1036 = vsub.f32 %v834, %v972
      %v1037 = vsub.f32 %v836, %v973
      %v1038 = vsub.f32 %v839, %v974
      %v1039 = vsub.f32 %v841, %v975
      %v1040 = vsub.f32 %v844, %v976
      %v1041 = vsub.f32 %v846, %v977
      %v1042 = vsub.f32 %v849, %v978
      %v1043 = vsub.f32 %v851, %v979
      %v1044 = vsub.f32 %v854, %v980
      %v1045 = vsub.f32 %v856, %v981
      %v1046 = vsub.f32 %v859, %v982
      %v1047 = vsub.f32 %v861, %v983
      %v1048 = vsub.f32 %v864, %v984
      %v1049 = vsub.f32 %v866, %v985
      %v1050 = vsub.f32 %v869, %v986
      %v1051 = vsub.f32 %v871, %v987
      %v1052 = vsub.f32 %v874, %v988
      %v1053 = vsub.f32 %v876, %v989
      %v1054 = vsub.f32 %v879, %v990
      %v1055 = vsub.f32 %v881, %v991
      %v1056 = vsub.f32 %v884, %v992
      %v1057 = vsub.f32 %v886, %v993
      %v1058 = vsub.f32 %v889, %v994
      %v1059 = vsub.f32 %v891, %v995
      %v1060 = vsub.f32 %v894, %v996
      %v1061 = vsub.f32 %v896, %v997
      %v1062 = vsub.f32 %v899, %v998
      %v1063 = vsub.f32 %v901, %v999
      %v1064 = vsub.f32 %v904, %v1000
      %v1065 = vsub.f32 %v906, %v1001
      %v1066 = vsub.f32 %v909, %v1002
      %v1067 = vsub.f32 %v911, %v1003
      %v1068 = vsub.f32 %v914, %v1004
      %v1069 = vsub.f32 %v916, %v1005
      %v1070 = vsub.f32 %v919, %v1006
      %v1071 = vsub.f32 %v921, %v1007
      %v1072 = vsub.f32 %v924, %v1008
      %v1073 = vsub.f32 %v926, %v1009
      %v1074 = vsub.f32 %v929, %v1010
      %v1075 = vsub.f32 %v931, %v1011
      %v1076 = vsub.f32 %v934, %v1012
      %v1077 = vsub.f32 %v936, %v1013
      %v1078 = vsub.f32 %v939, %v1014
      %v1079 = vsub.f32 %v941, %v1015
      %v1080 = vsub.f32 %v944, %v1016
      %v1081 = vsub.f32 %v946, %v1017
      %v1082 = vsub.f32 %v949, %v1018
      %v1083 = vsub.f32 %v951, %v1019
      %v1084 = vsub.f32 %v954, %v1020
      %v1085 = vsub.f32 %v956, %v1021
      %v1086 = vmul.f32 %v1022, 0.5
      %v1087 = vmul.f32 %v1023, 0.5
      %v1088 = vmul.f32 %v1024, 0.5
      %v1089 = vmul.f32 %v1025, 0.5
      %v1090 = vmul.f32 %v1026, 0.5
      %v1091 = vmul.f32 %v1027, 0.5
      %v1092 = vmul.f32 %v1028, 0.5
      %v1093 = vmul.f32 %v1029, 0.5
      %v1094 = vmul.f32 %v1030, 0.5
      %v1095 = vmul.f32 %v1031, 0.5
      %v1096 = vmul.f32 %v1032, 0.5
      %v1097 = vmul.f32 %v1033, 0.5
      %v1098 = vmul.f32 %v1034, 0.5
      %v1099 = vmul.f32 %v1035, 0.5
      %v1100 = vmul.f32 %v1036, 0.5
      %v1101 = vmul.f32 %v1037, 0.5
      %v1102 = vmul.f32 %v1038, 0.5
      %v1103 = vmul.f32 %v1039, 0.5
      %v1104 = vmul.f32 %v1040, 0.5
      %v1105 = vmul.f32 %v1041, 0.5
      %v1106 = vmul.f32 %v1042, 0.5
      %v1107 = vmul.f32 %v1043, 0.5
      %v1108 = vmul.f32 %v1044, 0.5
      %v1109 = vmul.f32 %v1045, 0.5
      %v1110 = vmul.f32 %v1046, 0.5
      %v1111 = vmul.f32 %v1047, 0.5
      %v1112 = vmul.f32 %v1048, 0.5
      %v1113 = vmul.f32 %v1049, 0.5
      %v1114 = vmul.f32 %v1050, 0.5
      %v1115 = vmul.f32 %v1051, 0.5
      %v1116 = vmul.f32 %v1052, 0.5
      %v1117 = vmul.f32 %v1053, 0.5
      %v1118 = vmul.f32 %v1054, 0.5
      %v1119 = vmul.f32 %v1055, 0.5
      %v1120 = vmul.f32 %v1056, 0.5
      %v1121 = vmul.f32 %v1057, 0.5
      %v1122 = vmul.f32 %v1058, 0.5
      %v1123 = vmul.f32 %v1059, 0.5
      %v1124 = vmul.f32 %v1060, 0.5
      %v1125 = vmul.f32 %v1061, 0.5
      %v1126 = vmul.f32 %v1062, 0.5
      %v1127 = vmul.f32 %v1063, 0.5
      %v1128 = vmul.f32 %v1064, 0.5
      %v1129 = vmul.f32 %v1065, 0.5
      %v1130 = vmul.f32 %v1066, 0.5
      %v1131 = vmul.f32 %v1067, 0.5
      %v1132 = vmul.f32 %v1068, 0.5
      %v1133 = vmul.f32 %v1069, 0.5
      %v1134 = vmul.f32 %v1070, 0.5
      %v1135 = vmul.f32 %v1071, 0.5
      %v1136 = vmul.f32 %v1072, 0.5
      %v1137 = vmul.f32 %v1073, 0.5
      %v1138 = vmul.f32 %v1074, 0.5
      %v1139 = vmul.f32 %v1075, 0.5
      %v1140 = vmul.f32 %v1076, 0.5
      %v1141 = vmul.f32 %v1077, 0.5
      %v1142 = vmul.f32 %v1078, 0.5
      %v1143 = vmul.f32 %v1079, 0.5
      %v1144 = vmul.f32 %v1080, 0.5
      %v1145 = vmul.f32 %v1081, 0.5
      %v1146 = vmul.f32 %v1082, 0.5
      %v1147 = vmul.f32 %v1083, 0.5
      %v1148 = vmul.f32 %v1084, 0.5
      %v1149 = vmul.f32 %v1085, 0.5
      %v1150 = vadd.f32 %v958, %v1086
      %v1151 = vadd.f32 %v959, %v1087
      %v1152 = vadd.f32 %v960, %v1088
      %v1153 = vadd.f32 %v961, %v1089
      %v1154 = vadd.f32 %v962, %v1090
      %v1155 = vadd.f32 %v963, %v1091
      %v1156 = vadd.f32 %v964, %v1092
      %v1157 = vadd.f32 %v965, %v1093
      %v1158 = vadd.f32 %v966, %v1094
      %v1159 = vadd.f32 %v967, %v1095
      %v1160 = vadd.f32 %v968, %v1096
      %v1161 = vadd.f32 %v969, %v1097
      %v1162 = vadd.f32 %v970, %v1098
      %v1163 = vadd.f32 %v971, %v1099
      %v1164 = vadd.f32 %v972, %v1100
      %v1165 = vadd.f32 %v973, %v1101
      %v1166 = vadd.f32 %v974, %v1102
      %v1167 = vadd.f32 %v975, %v1103
      %v1168 = vadd.f32 %v976, %v1104
      %v1169 = vadd.f32 %v977, %v1105
      %v1170 = vadd.f32 %v978, %v1106
      %v1171 = vadd.f32 %v979, %v1107
      %v1172 = vadd.f32 %v980, %v1108
      %v1173 = vadd.f32 %v981, %v1109
      %v1174 = vadd.f32 %v982, %v1110
      %v1175 = vadd.f32 %v983, %v1111
      %v1176 = vadd.f32 %v984, %v1112
      %v1177 = vadd.f32 %v985, %v1113
      %v1178 = vadd.f32 %v986, %v1114
      %v1179 = vadd.f32 %v987, %v1115
      %v1180 = vadd.f32 %v988, %v1116
      %v1181 = vadd.f32 %v989, %v1117
      %v1182 = vadd.f32 %v990, %v1118
      %v1183 = vadd.f32 %v991, %v1119
      %v1184 = vadd.f32 %v992, %v1120
      %v1185 = vadd.f32 %v993, %v1121
      %v1186 = vadd.f32 %v994, %v1122
      %v1187 = vadd.f32 %v995, %v1123
      %v1188 = vadd.f32 %v996, %v1124
      %v1189 = vadd.f32 %v997, %v1125
      %v1190 = vadd.f32 %v998, %v1126
      %v1191 = vadd.f32 %v999, %v1127
      %v1192 = vadd.f32 %v1000, %v1128
      %v1193 = vadd.f32 %v1001, %v1129
      %v1194 = vadd.f32 %v1002, %v1130
      %v1195 = vadd.f32 %v1003, %v1131
      %v1196 = vadd.f32 %v1004, %v1132
      %v1197 = vadd.f32 %v1005, %v1133
      %v1198 = vadd.f32 %v1006, %v1134
      %v1199 = vadd.f32 %v1007, %v1135
      %v1200 = vadd.f32 %v1008, %v1136
      %v1201 = vadd.f32 %v1009, %v1137
      %v1202 = vadd.f32 %v1010, %v1138
      %v1203 = vadd.f32 %v1011, %v1139
      %v1204 = vadd.f32 %v1012, %v1140
      %v1205 = vadd.f32 %v1013, %v1141
      %v1206 = vadd.f32 %v1014, %v1142
      %v1207 = vadd.f32 %v1015, %v1143
      %v1208 = vadd.f32 %v1016, %v1144
      %v1209 = vadd.f32 %v1017, %v1145
      %v1210 = vadd.f32 %v1018, %v1146
      %v1211 = vadd.f32 %v1019, %v1147
      %v1212 = vadd.f32 %v1020, %v1148
      %v1213 = vadd.f32 %v1021, %v1149
      %vm1214 = vcmp.ge.f32.partialorder %v1150, 1.0
      %vm1215 = vcmp.ge.f32.partialorder %v1151, 1.0
      %vm1216 = vcmp.ge.f32.partialorder %v1152, 1.0
      %vm1217 = vcmp.ge.f32.partialorder %v1153, 1.0
      %vm1218 = vcmp.ge.f32.partialorder %v1154, 1.0
      %vm1219 = vcmp.ge.f32.partialorder %v1155, 1.0
      %vm1220 = vcmp.ge.f32.partialorder %v1156, 1.0
      %vm1221 = vcmp.ge.f32.partialorder %v1157, 1.0
      %vm1222 = vcmp.ge.f32.partialorder %v1158, 1.0
      %vm1223 = vcmp.ge.f32.partialorder %v1159, 1.0
      %vm1224 = vcmp.ge.f32.partialorder %v1160, 1.0
      %vm1225 = vcmp.ge.f32.partialorder %v1161, 1.0
      %vm1226 = vcmp.ge.f32.partialorder %v1162, 1.0
      %vm1227 = vcmp.ge.f32.partialorder %v1163, 1.0
      %vm1228 = vcmp.ge.f32.partialorder %v1164, 1.0
      %vm1229 = vcmp.ge.f32.partialorder %v1165, 1.0
      %vm1230 = vcmp.ge.f32.partialorder %v1166, 1.0
      %vm1231 = vcmp.ge.f32.partialorder %v1167, 1.0
      %vm1232 = vcmp.ge.f32.partialorder %v1168, 1.0
      %vm1233 = vcmp.ge.f32.partialorder %v1169, 1.0
      %vm1234 = vcmp.ge.f32.partialorder %v1170, 1.0
      %vm1235 = vcmp.ge.f32.partialorder %v1171, 1.0
      %vm1236 = vcmp.ge.f32.partialorder %v1172, 1.0
      %vm1237 = vcmp.ge.f32.partialorder %v1173, 1.0
      %vm1238 = vcmp.ge.f32.partialorder %v1174, 1.0
      %vm1239 = vcmp.ge.f32.partialorder %v1175, 1.0
      %vm1240 = vcmp.ge.f32.partialorder %v1176, 1.0
      %vm1241 = vcmp.ge.f32.partialorder %v1177, 1.0
      %vm1242 = vcmp.ge.f32.partialorder %v1178, 1.0
      %vm1243 = vcmp.ge.f32.partialorder %v1179, 1.0
      %vm1244 = vcmp.ge.f32.partialorder %v1180, 1.0
      %vm1245 = vcmp.ge.f32.partialorder %v1181, 1.0
      %vm1246 = vcmp.ge.f32.partialorder %v1182, 1.0
      %vm1247 = vcmp.ge.f32.partialorder %v1183, 1.0
      %vm1248 = vcmp.ge.f32.partialorder %v1184, 1.0
      %vm1249 = vcmp.ge.f32.partialorder %v1185, 1.0
      %vm1250 = vcmp.ge.f32.partialorder %v1186, 1.0
      %vm1251 = vcmp.ge.f32.partialorder %v1187, 1.0
      %vm1252 = vcmp.ge.f32.partialorder %v1188, 1.0
      %vm1253 = vcmp.ge.f32.partialorder %v1189, 1.0
      %vm1254 = vcmp.ge.f32.partialorder %v1190, 1.0
      %vm1255 = vcmp.ge.f32.partialorder %v1191, 1.0
      %vm1256 = vcmp.ge.f32.partialorder %v1192, 1.0
      %vm1257 = vcmp.ge.f32.partialorder %v1193, 1.0
      %vm1258 = vcmp.ge.f32.partialorder %v1194, 1.0
      %vm1259 = vcmp.ge.f32.partialorder %v1195, 1.0
      %vm1260 = vcmp.ge.f32.partialorder %v1196, 1.0
      %vm1261 = vcmp.ge.f32.partialorder %v1197, 1.0
      %vm1262 = vcmp.ge.f32.partialorder %v1198, 1.0
      %vm1263 = vcmp.ge.f32.partialorder %v1199, 1.0
      %vm1264 = vcmp.ge.f32.partialorder %v1200, 1.0
      %vm1265 = vcmp.ge.f32.partialorder %v1201, 1.0
      %vm1266 = vcmp.ge.f32.partialorder %v1202, 1.0
      %vm1267 = vcmp.ge.f32.partialorder %v1203, 1.0
      %vm1268 = vcmp.ge.f32.partialorder %v1204, 1.0
      %vm1269 = vcmp.ge.f32.partialorder %v1205, 1.0
      %vm1270 = vcmp.ge.f32.partialorder %v1206, 1.0
      %vm1271 = vcmp.ge.f32.partialorder %v1207, 1.0
      %vm1272 = vcmp.ge.f32.partialorder %v1208, 1.0
      %vm1273 = vcmp.ge.f32.partialorder %v1209, 1.0
      %vm1274 = vcmp.ge.f32.partialorder %v1210, 1.0
      %vm1275 = vcmp.ge.f32.partialorder %v1211, 1.0
      %vm1276 = vcmp.ge.f32.partialorder %v1212, 1.0
      %vm1277 = vcmp.ge.f32.partialorder %v1213, 1.0
      %v1278 = vsel %vm1214, 1, 0
      %v1279 = vsel %vm1215, 1, 0
      %v1280 = vsel %vm1216, 1, 0
      %v1281 = vsel %vm1217, 1, 0
      %v1282 = vsel %vm1218, 1, 0
      %v1283 = vsel %vm1219, 1, 0
      %v1284 = vsel %vm1220, 1, 0
      %v1285 = vsel %vm1221, 1, 0
      %v1286 = vsel %vm1222, 1, 0
      %v1287 = vsel %vm1223, 1, 0
      %v1288 = vsel %vm1224, 1, 0
      %v1289 = vsel %vm1225, 1, 0
      %v1290 = vsel %vm1226, 1, 0
      %v1291 = vsel %vm1227, 1, 0
      %v1292 = vsel %vm1228, 1, 0
      %v1293 = vsel %vm1229, 1, 0
      %v1294 = vsel %vm1230, 1, 0
      %v1295 = vsel %vm1231, 1, 0
      %v1296 = vsel %vm1232, 1, 0
      %v1297 = vsel %vm1233, 1, 0
      %v1298 = vsel %vm1234, 1, 0
      %v1299 = vsel %vm1235, 1, 0
      %v1300 = vsel %vm1236, 1, 0
      %v1301 = vsel %vm1237, 1, 0
      %v1302 = vsel %vm1238, 1, 0
      %v1303 = vsel %vm1239, 1, 0
      %v1304 = vsel %vm1240, 1, 0
      %v1305 = vsel %vm1241, 1, 0
      %v1306 = vsel %vm1242, 1, 0
      %v1307 = vsel %vm1243, 1, 0
      %v1308 = vsel %vm1244, 1, 0
      %v1309 = vsel %vm1245, 1, 0
      %v1310 = vsel %vm1246, 1, 0
      %v1311 = vsel %vm1247, 1, 0
      %v1312 = vsel %vm1248, 1, 0
      %v1313 = vsel %vm1249, 1, 0
      %v1314 = vsel %vm1250, 1, 0
      %v1315 = vsel %vm1251, 1, 0
      %v1316 = vsel %vm1252, 1, 0
      %v1317 = vsel %vm1253, 1, 0
      %v1318 = vsel %vm1254, 1, 0
      %v1319 = vsel %vm1255, 1, 0
      %v1320 = vsel %vm1256, 1, 0
      %v1321 = vsel %vm1257, 1, 0
      %v1322 = vsel %vm1258, 1, 0
      %v1323 = vsel %vm1259, 1, 0
      %v1324 = vsel %vm1260, 1, 0
      %v1325 = vsel %vm1261, 1, 0
      %v1326 = vsel %vm1262, 1, 0
      %v1327 = vsel %vm1263, 1, 0
      %v1328 = vsel %vm1264, 1, 0
      %v1329 = vsel %vm1265, 1, 0
      %v1330 = vsel %vm1266, 1, 0
      %v1331 = vsel %vm1267, 1, 0
      %v1332 = vsel %vm1268, 1, 0
      %v1333 = vsel %vm1269, 1, 0
      %v1334 = vsel %vm1270, 1, 0
      %v1335 = vsel %vm1271, 1, 0
      %v1336 = vsel %vm1272, 1, 0
      %v1337 = vsel %vm1273, 1, 0
      %v1338 = vsel %vm1274, 1, 0
      %v1339 = vsel %vm1275, 1, 0
      %v1340 = vsel %vm1276, 1, 0
      %v1341 = vsel %vm1277, 1, 0
      %v1342 = vcvt.s32.f32 %v1278
      %v1343 = vcvt.s32.f32 %v1279
      %v1344 = vcvt.s32.f32 %v1280
      %v1345 = vcvt.s32.f32 %v1281
      %v1346 = vcvt.s32.f32 %v1282
      %v1347 = vcvt.s32.f32 %v1283
      %v1348 = vcvt.s32.f32 %v1284
      %v1349 = vcvt.s32.f32 %v1285
      %v1350 = vcvt.s32.f32 %v1286
      %v1351 = vcvt.s32.f32 %v1287
      %v1352 = vcvt.s32.f32 %v1288
      %v1353 = vcvt.s32.f32 %v1289
      %v1354 = vcvt.s32.f32 %v1290
      %v1355 = vcvt.s32.f32 %v1291
      %v1356 = vcvt.s32.f32 %v1292
      %v1357 = vcvt.s32.f32 %v1293
      %v1358 = vcvt.s32.f32 %v1294
      %v1359 = vcvt.s32.f32 %v1295
      %v1360 = vcvt.s32.f32 %v1296
      %v1361 = vcvt.s32.f32 %v1297
      %v1362 = vcvt.s32.f32 %v1298
      %v1363 = vcvt.s32.f32 %v1299
      %v1364 = vcvt.s32.f32 %v1300
      %v1365 = vcvt.s32.f32 %v1301
      %v1366 = vcvt.s32.f32 %v1302
      %v1367 = vcvt.s32.f32 %v1303
      %v1368 = vcvt.s32.f32 %v1304
      %v1369 = vcvt.s32.f32 %v1305
      %v1370 = vcvt.s32.f32 %v1306
      %v1371 = vcvt.s32.f32 %v1307
      %v1372 = vcvt.s32.f32 %v1308
      %v1373 = vcvt.s32.f32 %v1309
      %v1374 = vcvt.s32.f32 %v1310
      %v1375 = vcvt.s32.f32 %v1311
      %v1376 = vcvt.s32.f32 %v1312
      %v1377 = vcvt.s32.f32 %v1313
      %v1378 = vcvt.s32.f32 %v1314
      %v1379 = vcvt.s32.f32 %v1315
      %v1380 = vcvt.s32.f32 %v1316
      %v1381 = vcvt.s32.f32 %v1317
      %v1382 = vcvt.s32.f32 %v1318
      %v1383 = vcvt.s32.f32 %v1319
      %v1384 = vcvt.s32.f32 %v1320
      %v1385 = vcvt.s32.f32 %v1321
      %v1386 = vcvt.s32.f32 %v1322
      %v1387 = vcvt.s32.f32 %v1323
      %v1388 = vcvt.s32.f32 %v1324
      %v1389 = vcvt.s32.f32 %v1325
      %v1390 = vcvt.s32.f32 %v1326
      %v1391 = vcvt.s32.f32 %v1327
      %v1392 = vcvt.s32.f32 %v1328
      %v1393 = vcvt.s32.f32 %v1329
      %v1394 = vcvt.s32.f32 %v1330
      %v1395 = vcvt.s32.f32 %v1331
      %v1396 = vcvt.s32.f32 %v1332
      %v1397 = vcvt.s32.f32 %v1333
      %v1398 = vcvt.s32.f32 %v1334
      %v1399 = vcvt.s32.f32 %v1335
      %v1400 = vcvt.s32.f32 %v1336
      %v1401 = vcvt.s32.f32 %v1337
      %v1402 = vcvt.s32.f32 %v1338
      %v1403 = vcvt.s32.f32 %v1339
      %v1404 = vcvt.s32.f32 %v1340
      %v1405 = vcvt.s32.f32 %v1341
      %vm1406 = vcmp.gt.f32.partialorder %v1342, 0.0
      %vm1407 = vcmp.gt.f32.partialorder %v1343, 0.0
      %vm1408 = vcmp.gt.f32.partialorder %v1344, 0.0
      %vm1409 = vcmp.gt.f32.partialorder %v1345, 0.0
      %vm1410 = vcmp.gt.f32.partialorder %v1346, 0.0
      %vm1411 = vcmp.gt.f32.partialorder %v1347, 0.0
      %vm1412 = vcmp.gt.f32.partialorder %v1348, 0.0
      %vm1413 = vcmp.gt.f32.partialorder %v1349, 0.0
      %vm1414 = vcmp.gt.f32.partialorder %v1350, 0.0
      %vm1415 = vcmp.gt.f32.partialorder %v1351, 0.0
      %vm1416 = vcmp.gt.f32.partialorder %v1352, 0.0
      %vm1417 = vcmp.gt.f32.partialorder %v1353, 0.0
      %vm1418 = vcmp.gt.f32.partialorder %v1354, 0.0
      %vm1419 = vcmp.gt.f32.partialorder %v1355, 0.0
      %vm1420 = vcmp.gt.f32.partialorder %v1356, 0.0
      %vm1421 = vcmp.gt.f32.partialorder %v1357, 0.0
      %vm1422 = vcmp.gt.f32.partialorder %v1358, 0.0
      %vm1423 = vcmp.gt.f32.partialorder %v1359, 0.0
      %vm1424 = vcmp.gt.f32.partialorder %v1360, 0.0
      %vm1425 = vcmp.gt.f32.partialorder %v1361, 0.0
      %vm1426 = vcmp.gt.f32.partialorder %v1362, 0.0
      %vm1427 = vcmp.gt.f32.partialorder %v1363, 0.0
      %vm1428 = vcmp.gt.f32.partialorder %v1364, 0.0
      %vm1429 = vcmp.gt.f32.partialorder %v1365, 0.0
      %vm1430 = vcmp.gt.f32.partialorder %v1366, 0.0
      %vm1431 = vcmp.gt.f32.partialorder %v1367, 0.0
      %vm1432 = vcmp.gt.f32.partialorder %v1368, 0.0
      %vm1433 = vcmp.gt.f32.partialorder %v1369, 0.0
      %vm1434 = vcmp.gt.f32.partialorder %v1370, 0.0
      %vm1435 = vcmp.gt.f32.partialorder %v1371, 0.0
      %vm1436 = vcmp.gt.f32.partialorder %v1372, 0.0
      %vm1437 = vcmp.gt.f32.partialorder %v1373, 0.0
      %vm1438 = vcmp.gt.f32.partialorder %v1374, 0.0
      %vm1439 = vcmp.gt.f32.partialorder %v1375, 0.0
      %vm1440 = vcmp.gt.f32.partialorder %v1376, 0.0
      %vm1441 = vcmp.gt.f32.partialorder %v1377, 0.0
      %vm1442 = vcmp.gt.f32.partialorder %v1378, 0.0
      %vm1443 = vcmp.gt.f32.partialorder %v1379, 0.0
      %vm1444 = vcmp.gt.f32.partialorder %v1380, 0.0
      %vm1445 = vcmp.gt.f32.partialorder %v1381, 0.0
      %vm1446 = vcmp.gt.f32.partialorder %v1382, 0.0
      %vm1447 = vcmp.gt.f32.partialorder %v1383, 0.0
      %vm1448 = vcmp.gt.f32.partialorder %v1384, 0.0
      %vm1449 = vcmp.gt.f32.partialorder %v1385, 0.0
      %vm1450 = vcmp.gt.f32.partialorder %v1386, 0.0
      %vm1451 = vcmp.gt.f32.partialorder %v1387, 0.0
      %vm1452 = vcmp.gt.f32.partialorder %v1388, 0.0
      %vm1453 = vcmp.gt.f32.partialorder %v1389, 0.0
      %vm1454 = vcmp.gt.f32.partialorder %v1390, 0.0
      %vm1455 = vcmp.gt.f32.partialorder %v1391, 0.0
      %vm1456 = vcmp.gt.f32.partialorder %v1392, 0.0
      %vm1457 = vcmp.gt.f32.partialorder %v1393, 0.0
      %vm1458 = vcmp.gt.f32.partialorder %v1394, 0.0
      %vm1459 = vcmp.gt.f32.partialorder %v1395, 0.0
      %vm1460 = vcmp.gt.f32.partialorder %v1396, 0.0
      %vm1461 = vcmp.gt.f32.partialorder %v1397, 0.0
      %vm1462 = vcmp.gt.f32.partialorder %v1398, 0.0
      %vm1463 = vcmp.gt.f32.partialorder %v1399, 0.0
      %vm1464 = vcmp.gt.f32.partialorder %v1400, 0.0
      %vm1465 = vcmp.gt.f32.partialorder %v1401, 0.0
      %vm1466 = vcmp.gt.f32.partialorder %v1402, 0.0
      %vm1467 = vcmp.gt.f32.partialorder %v1403, 0.0
      %vm1468 = vcmp.gt.f32.partialorder %v1404, 0.0
      %vm1469 = vcmp.gt.f32.partialorder %v1405, 0.0
      %v1470 = vsel %vm1406, 0.0, %v1150
      %v1471 = vsel %vm1407, 0.0, %v1151
      %v1472 = vsel %vm1408, 0.0, %v1152
      %v1473 = vsel %vm1409, 0.0, %v1153
      %v1474 = vsel %vm1410, 0.0, %v1154
      %v1475 = vsel %vm1411, 0.0, %v1155
      %v1476 = vsel %vm1412, 0.0, %v1156
      %v1477 = vsel %vm1413, 0.0, %v1157
      %v1478 = vsel %vm1414, 0.0, %v1158
      %v1479 = vsel %vm1415, 0.0, %v1159
      %v1480 = vsel %vm1416, 0.0, %v1160
      %v1481 = vsel %vm1417, 0.0, %v1161
      %v1482 = vsel %vm1418, 0.0, %v1162
      %v1483 = vsel %vm1419, 0.0, %v1163
      %v1484 = vsel %vm1420, 0.0, %v1164
      %v1485 = vsel %vm1421, 0.0, %v1165
      %v1486 = vsel %vm1422, 0.0, %v1166
      %v1487 = vsel %vm1423, 0.0, %v1167
      %v1488 = vsel %vm1424, 0.0, %v1168
      %v1489 = vsel %vm1425, 0.0, %v1169
      %v1490 = vsel %vm1426, 0.0, %v1170
      %v1491 = vsel %vm1427, 0.0, %v1171
      %v1492 = vsel %vm1428, 0.0, %v1172
      %v1493 = vsel %vm1429, 0.0, %v1173
      %v1494 = vsel %vm1430, 0.0, %v1174
      %v1495 = vsel %vm1431, 0.0, %v1175
      %v1496 = vsel %vm1432, 0.0, %v1176
      %v1497 = vsel %vm1433, 0.0, %v1177
      %v1498 = vsel %vm1434, 0.0, %v1178
      %v1499 = vsel %vm1435, 0.0, %v1179
      %v1500 = vsel %vm1436, 0.0, %v1180
      %v1501 = vsel %vm1437, 0.0, %v1181
      %v1502 = vsel %vm1438, 0.0, %v1182
      %v1503 = vsel %vm1439, 0.0, %v1183
      %v1504 = vsel %vm1440, 0.0, %v1184
      %v1505 = vsel %vm1441, 0.0, %v1185
      %v1506 = vsel %vm1442, 0.0, %v1186
      %v1507 = vsel %vm1443, 0.0, %v1187
      %v1508 = vsel %vm1444, 0.0, %v1188
      %v1509 = vsel %vm1445, 0.0, %v1189
      %v1510 = vsel %vm1446, 0.0, %v1190
      %v1511 = vsel %vm1447, 0.0, %v1191
      %v1512 = vsel %vm1448, 0.0, %v1192
      %v1513 = vsel %vm1449, 0.0, %v1193
      %v1514 = vsel %vm1450, 0.0, %v1194
      %v1515 = vsel %vm1451, 0.0, %v1195
      %v1516 = vsel %vm1452, 0.0, %v1196
      %v1517 = vsel %vm1453, 0.0, %v1197
      %v1518 = vsel %vm1454, 0.0, %v1198
      %v1519 = vsel %vm1455, 0.0, %v1199
      %v1520 = vsel %vm1456, 0.0, %v1200
      %v1521 = vsel %vm1457, 0.0, %v1201
      %v1522 = vsel %vm1458, 0.0, %v1202
      %v1523 = vsel %vm1459, 0.0, %v1203
      %v1524 = vsel %vm1460, 0.0, %v1204
      %v1525 = vsel %vm1461, 0.0, %v1205
      %v1526 = vsel %vm1462, 0.0, %v1206
      %v1527 = vsel %vm1463, 0.0, %v1207
      %v1528 = vsel %vm1464, 0.0, %v1208
      %v1529 = vsel %vm1465, 0.0, %v1209
      %v1530 = vsel %vm1466, 0.0, %v1210
      %v1531 = vsel %vm1467, 0.0, %v1211
      %v1532 = vsel %vm1468, 0.0, %v1212
      %v1533 = vsel %vm1469, 0.0, %v1213
      %1534 = vst [vmem:[#allocation2] sm:$0xff] %v1470
      %1535 = vst [vmem:[#allocation2 + $0x8] sm:$0xff] %v1471
      %1536 = vst [vmem:[#allocation2 + $0x10] sm:$0xff] %v1472
      %1537 = vst [vmem:[#allocation2 + $0x18] sm:$0xff] %v1473
      %1538 = vst [vmem:[#allocation2 + $0x20] sm:$0xff] %v1474
      %1539 = vst [vmem:[#allocation2 + $0x28] sm:$0xff] %v1475
      %1540 = vst [vmem:[#allocation2 + $0x30] sm:$0xff] %v1476
      %1541 = vst [vmem:[#allocation2 + $0x38] sm:$0xff] %v1477
      %1542 = vst [vmem:[#allocation2 + $0x40] sm:$0xff] %v1478
      %1543 = vst [vmem:[#allocation2 + $0x48] sm:$0xff] %v1479
      %1544 = vst [vmem:[#allocation2 + $0x50] sm:$0xff] %v1480
      %1545 = vst [vmem:[#allocation2 + $0x58] sm:$0xff] %v1481
      %1546 = vst [vmem:[#allocation2 + $0x60] sm:$0xff] %v1482
      %1547 = vst [vmem:[#allocation2 + $0x68] sm:$0xff] %v1483
      %1548 = vst [vmem:[#allocation2 + $0x70] sm:$0xff] %v1484
      %1549 = vst [vmem:[#allocation2 + $0x78] sm:$0xff] %v1485
      %1550 = vst [vmem:[#allocation2 + $0x80] sm:$0xff] %v1486
      %1551 = vst [vmem:[#allocation2 + $0x88] sm:$0xff] %v1487
      %1552 = vst [vmem:[#allocation2 + $0x90] sm:$0xff] %v1488
      %1553 = vst [vmem:[#allocation2 + $0x98] sm:$0xff] %v1489
      %1554 = vst [vmem:[#allocation2 + $0xa0] sm:$0xff] %v1490
      %1555 = vst [vmem:[#allocation2 + $0xa8] sm:$0xff] %v1491
      %1556 = vst [vmem:[#allocation2 + $0xb0] sm:$0xff] %v1492
      %1557 = vst [vmem:[#allocation2 + $0xb8] sm:$0xff] %v1493
      %1558 = vst [vmem:[#allocation2 + $0xc0] sm:$0xff] %v1494
      %1559 = vst [vmem:[#allocation2 + $0xc8] sm:$0xff] %v1495
      %1560 = vst [vmem:[#allocation2 + $0xd0] sm:$0xff] %v1496
      %1561 = vst [vmem:[#allocation2 + $0xd8] sm:$0xff] %v1497
      %1562 = vst [vmem:[#allocation2 + $0xe0] sm:$0xff] %v1498
      %1563 = vst [vmem:[#allocation2 + $0xe8] sm:$0xff] %v1499
      %1564 = vst [vmem:[#allocation2 + $0xf0] sm:$0xff] %v1500
      %1565 = vst [vmem:[#allocation2 + $0xf8] sm:$0xff] %v1501
      %1566 = vst [vmem:[#allocation2 + $0x100] sm:$0xff] %v1502
      %1567 = vst [vmem:[#allocation2 + $0x108] sm:$0xff] %v1503
      %1568 = vst [vmem:[#allocation2 + $0x110] sm:$0xff] %v1504
      %1569 = vst [vmem:[#allocation2 + $0x118] sm:$0xff] %v1505
      %1570 = vst [vmem:[#allocation2 + $0x120] sm:$0xff] %v1506
      %1571 = vst [vmem:[#allocation2 + $0x128] sm:$0xff] %v1507
      %1572 = vst [vmem:[#allocation2 + $0x130] sm:$0xff] %v1508
      %1573 = vst [vmem:[#allocation2 + $0x138] sm:$0xff] %v1509
      %1574 = vst [vmem:[#allocation2 + $0x140] sm:$0xff] %v1510
      %1575 = vst [vmem:[#allocation2 + $0x148] sm:$0xff] %v1511
      %1576 = vst [vmem:[#allocation2 + $0x150] sm:$0xff] %v1512
      %1577 = vst [vmem:[#allocation2 + $0x158] sm:$0xff] %v1513
      %1578 = vst [vmem:[#allocation2 + $0x160] sm:$0xff] %v1514
      %1579 = vst [vmem:[#allocation2 + $0x168] sm:$0xff] %v1515
      %1580 = vst [vmem:[#allocation2 + $0x170] sm:$0xff] %v1516
      %1581 = vst [vmem:[#allocation2 + $0x178] sm:$0xff] %v1517
      %1582 = vst [vmem:[#allocation2 + $0x180] sm:$0xff] %v1518
      %1583 = vst [vmem:[#allocation2 + $0x188] sm:$0xff] %v1519
      %1584 = vst [vmem:[#allocation2 + $0x190] sm:$0xff] %v1520
      %1585 = vst [vmem:[#allocation2 + $0x198] sm:$0xff] %v1521
      %1586 = vst [vmem:[#allocation2 + $0x1a0] sm:$0xff] %v1522
      %1587 = vst [vmem:[#allocation2 + $0x1a8] sm:$0xff] %v1523
      %1588 = vst [vmem:[#allocation2 + $0x1b0] sm:$0xff] %v1524
      %1589 = vst [vmem:[#allocation2 + $0x1b8] sm:$0xff] %v1525
      %1590 = vst [vmem:[#allocation2 + $0x1c0] sm:$0xff] %v1526
      %1591 = vst [vmem:[#allocation2 + $0x1c8] sm:$0xff] %v1527
      %1592 = vst [vmem:[#allocation2 + $0x1d0] sm:$0xff] %v1528
      %1593 = vst [vmem:[#allocation2 + $0x1d8] sm:$0xff] %v1529
      %1594 = vst [vmem:[#allocation2 + $0x1e0] sm:$0xff] %v1530
      %1595 = vst [vmem:[#allocation2 + $0x1e8] sm:$0xff] %v1531
      %1596 = vst [vmem:[#allocation2 + $0x1f0] sm:$0xff] %v1532
      %1597 = vst [vmem:[#allocation2 + $0x1f8] sm:$0xff] %v1533
      %v1598 = vpack.c.bf16 %v1342, %v1342
      %v1599 = vpack.c.bf16 %v1343, %v1343
      %v1600 = vpack.c.bf16 %v1344, %v1344
      %v1601 = vpack.c.bf16 %v1345, %v1345
      %v1602 = vpack.c.bf16 %v1346, %v1346
      %v1603 = vpack.c.bf16 %v1347, %v1347
      %v1604 = vpack.c.bf16 %v1348, %v1348
      %v1605 = vpack.c.bf16 %v1349, %v1349
      %v1606 = vpack.c.bf16 %v1350, %v1350
      %v1607 = vpack.c.bf16 %v1351, %v1351
      %v1608 = vpack.c.bf16 %v1352, %v1352
      %v1609 = vpack.c.bf16 %v1353, %v1353
      %v1610 = vpack.c.bf16 %v1354, %v1354
      %v1611 = vpack.c.bf16 %v1355, %v1355
      %v1612 = vpack.c.bf16 %v1356, %v1356
      %v1613 = vpack.c.bf16 %v1357, %v1357
      %v1614 = vpack.c.bf16 %v1358, %v1358
      %v1615 = vpack.c.bf16 %v1359, %v1359
      %v1616 = vpack.c.bf16 %v1360, %v1360
      %v1617 = vpack.c.bf16 %v1361, %v1361
      %v1618 = vpack.c.bf16 %v1362, %v1362
      %v1619 = vpack.c.bf16 %v1363, %v1363
      %v1620 = vpack.c.bf16 %v1364, %v1364
      %v1621 = vpack.c.bf16 %v1365, %v1365
      %v1622 = vpack.c.bf16 %v1366, %v1366
      %v1623 = vpack.c.bf16 %v1367, %v1367
      %v1624 = vpack.c.bf16 %v1368, %v1368
      %v1625 = vpack.c.bf16 %v1369, %v1369
      %v1626 = vpack.c.bf16 %v1370, %v1370
      %v1627 = vpack.c.bf16 %v1371, %v1371
      %v1628 = vpack.c.bf16 %v1372, %v1372
      %v1629 = vpack.c.bf16 %v1373, %v1373
      %v1630 = vpack.c.bf16 %v1374, %v1374
      %v1631 = vpack.c.bf16 %v1375, %v1375
      %v1632 = vpack.c.bf16 %v1376, %v1376
      %v1633 = vpack.c.bf16 %v1377, %v1377
      %v1634 = vpack.c.bf16 %v1378, %v1378
      %v1635 = vpack.c.bf16 %v1379, %v1379
      %v1636 = vpack.c.bf16 %v1380, %v1380
      %v1637 = vpack.c.bf16 %v1381, %v1381
      %v1638 = vpack.c.bf16 %v1382, %v1382
      %v1639 = vpack.c.bf16 %v1383, %v1383
      %v1640 = vpack.c.bf16 %v1384, %v1384
      %v1641 = vpack.c.bf16 %v1385, %v1385
      %v1642 = vpack.c.bf16 %v1386, %v1386
      %v1643 = vpack.c.bf16 %v1387, %v1387
      %v1644 = vpack.c.bf16 %v1388, %v1388
      %v1645 = vpack.c.bf16 %v1389, %v1389
      %v1646 = vpack.c.bf16 %v1390, %v1390
      %v1647 = vpack.c.bf16 %v1391, %v1391
      %v1648 = vpack.c.bf16 %v1392, %v1392
      %v1649 = vpack.c.bf16 %v1393, %v1393
      %v1650 = vpack.c.bf16 %v1394, %v1394
      %v1651 = vpack.c.bf16 %v1395, %v1395
      %v1652 = vpack.c.bf16 %v1396, %v1396
      %v1653 = vpack.c.bf16 %v1397, %v1397
      %v1654 = vpack.c.bf16 %v1398, %v1398
      %v1655 = vpack.c.bf16 %v1399, %v1399
      %v1656 = vpack.c.bf16 %v1400, %v1400
      %v1657 = vpack.c.bf16 %v1401, %v1401
      %v1658 = vpack.c.bf16 %v1402, %v1402
      %v1659 = vpack.c.bf16 %v1403, %v1403
      %v1660 = vpack.c.bf16 %v1404, %v1404
      %v1661 = vpack.c.bf16 %v1405, %v1405
      %1662 = vst [vmem:[%s243] sm:$0xf] %v1598
      %1663 = vst [vmem:[%s243 + $0x4] sm:$0xf] %v1599
      %1664 = vst [vmem:[%s243 + $0x8] sm:$0xf] %v1600
      %1665 = vst [vmem:[%s243 + $0xc] sm:$0xf] %v1601
      %1666 = vst [vmem:[%s243 + $0x10] sm:$0xf] %v1602
      %1667 = vst [vmem:[%s243 + $0x14] sm:$0xf] %v1603
      %1668 = vst [vmem:[%s243 + $0x18] sm:$0xf] %v1604
      %1669 = vst [vmem:[%s243 + $0x1c] sm:$0xf] %v1605
      %1670 = vst [vmem:[%s243 + $0x20] sm:$0xf] %v1606
      %1671 = vst [vmem:[%s243 + $0x24] sm:$0xf] %v1607
      %1672 = vst [vmem:[%s243 + $0x28] sm:$0xf] %v1608
      %1673 = vst [vmem:[%s243 + $0x2c] sm:$0xf] %v1609
      %1674 = vst [vmem:[%s243 + $0x30] sm:$0xf] %v1610
      %1675 = vst [vmem:[%s243 + $0x34] sm:$0xf] %v1611
      %1676 = vst [vmem:[%s243 + $0x38] sm:$0xf] %v1612
      %1677 = vst [vmem:[%s243 + $0x3c] sm:$0xf] %v1613
      %1678 = vst [vmem:[%s243 + $0x40] sm:$0xf] %v1614
      %1679 = vst [vmem:[%s243 + $0x44] sm:$0xf] %v1615
      %1680 = vst [vmem:[%s243 + $0x48] sm:$0xf] %v1616
      %1681 = vst [vmem:[%s243 + $0x4c] sm:$0xf] %v1617
      %1682 = vst [vmem:[%s243 + $0x50] sm:$0xf] %v1618
      %1683 = vst [vmem:[%s243 + $0x54] sm:$0xf] %v1619
      %1684 = vst [vmem:[%s243 + $0x58] sm:$0xf] %v1620
      %1685 = vst [vmem:[%s243 + $0x5c] sm:$0xf] %v1621
      %1686 = vst [vmem:[%s243 + $0x60] sm:$0xf] %v1622
      %1687 = vst [vmem:[%s243 + $0x64] sm:$0xf] %v1623
      %1688 = vst [vmem:[%s243 + $0x68] sm:$0xf] %v1624
      %1689 = vst [vmem:[%s243 + $0x6c] sm:$0xf] %v1625
      %1690 = vst [vmem:[%s243 + $0x70] sm:$0xf] %v1626
      %1691 = vst [vmem:[%s243 + $0x74] sm:$0xf] %v1627
      %1692 = vst [vmem:[%s243 + $0x78] sm:$0xf] %v1628
      %1693 = vst [vmem:[%s243 + $0x7c] sm:$0xf] %v1629
      %1694 = vst [vmem:[%s243 + $0x80] sm:$0xf] %v1630
      %1695 = vst [vmem:[%s243 + $0x84] sm:$0xf] %v1631
      %1696 = vst [vmem:[%s243 + $0x88] sm:$0xf] %v1632
      %1697 = vst [vmem:[%s243 + $0x8c] sm:$0xf] %v1633
      %1698 = vst [vmem:[%s243 + $0x90] sm:$0xf] %v1634
      %1699 = vst [vmem:[%s243 + $0x94] sm:$0xf] %v1635
      %1700 = vst [vmem:[%s243 + $0x98] sm:$0xf] %v1636
      %1701 = vst [vmem:[%s243 + $0x9c] sm:$0xf] %v1637
      %1702 = vst [vmem:[%s243 + $0xa0] sm:$0xf] %v1638
      %1703 = vst [vmem:[%s243 + $0xa4] sm:$0xf] %v1639
      %1704 = vst [vmem:[%s243 + $0xa8] sm:$0xf] %v1640
      %1705 = vst [vmem:[%s243 + $0xac] sm:$0xf] %v1641
      %1706 = vst [vmem:[%s243 + $0xb0] sm:$0xf] %v1642
      %1707 = vst [vmem:[%s243 + $0xb4] sm:$0xf] %v1643
      %1708 = vst [vmem:[%s243 + $0xb8] sm:$0xf] %v1644
      %1709 = vst [vmem:[%s243 + $0xbc] sm:$0xf] %v1645
      %1710 = vst [vmem:[%s243 + $0xc0] sm:$0xf] %v1646
      %1711 = vst [vmem:[%s243 + $0xc4] sm:$0xf] %v1647
      %1712 = vst [vmem:[%s243 + $0xc8] sm:$0xf] %v1648
      %1713 = vst [vmem:[%s243 + $0xcc] sm:$0xf] %v1649
      %1714 = vst [vmem:[%s243 + $0xd0] sm:$0xf] %v1650
      %1715 = vst [vmem:[%s243 + $0xd4] sm:$0xf] %v1651
      %1716 = vst [vmem:[%s243 + $0xd8] sm:$0xf] %v1652
      %1717 = vst [vmem:[%s243 + $0xdc] sm:$0xf] %v1653
      %1718 = vst [vmem:[%s243 + $0xe0] sm:$0xf] %v1654
      %1719 = vst [vmem:[%s243 + $0xe4] sm:$0xf] %v1655
      %1720 = vst [vmem:[%s243 + $0xe8] sm:$0xf] %v1656
      %1721 = vst [vmem:[%s243 + $0xec] sm:$0xf] %v1657
      %1722 = vst [vmem:[%s243 + $0xf0] sm:$0xf] %v1658
      %1723 = vst [vmem:[%s243 + $0xf4] sm:$0xf] %v1659
      %1724 = vst [vmem:[%s243 + $0xf8] sm:$0xf] %v1660
      %1725 = vst [vmem:[%s243 + $0xfc] sm:$0xf] %v1661
      %v1726 = vld [vmem:[#allocation3] sm:$0xff]
      %v1727 = vld [vmem:[#allocation3 + $0x8] sm:$0xff]
      %v1728 = vld [vmem:[#allocation3 + $0x10] sm:$0xff]
      %v1729 = vld [vmem:[#allocation3 + $0x18] sm:$0xff]
      %v1730 = vld [vmem:[#allocation3 + $0x20] sm:$0xff]
      %v1731 = vld [vmem:[#allocation3 + $0x28] sm:$0xff]
      %v1732 = vld [vmem:[#allocation3 + $0x30] sm:$0xff]
      %v1733 = vld [vmem:[#allocation3 + $0x38] sm:$0xff]
      %v1734 = vld [vmem:[#allocation3 + $0x40] sm:$0xff]
      %v1735 = vld [vmem:[#allocation3 + $0x48] sm:$0xff]
      %v1736 = vld [vmem:[#allocation3 + $0x50] sm:$0xff]
      %v1737 = vld [vmem:[#allocation3 + $0x58] sm:$0xff]
      %v1738 = vld [vmem:[#allocation3 + $0x60] sm:$0xff]
      %v1739 = vld [vmem:[#allocation3 + $0x68] sm:$0xff]
      %v1740 = vld [vmem:[#allocation3 + $0x70] sm:$0xff]
      %v1741 = vld [vmem:[#allocation3 + $0x78] sm:$0xff]
      %v1742 = vld [vmem:[#allocation3 + $0x80] sm:$0xff]
      %v1743 = vld [vmem:[#allocation3 + $0x88] sm:$0xff]
      %v1744 = vld [vmem:[#allocation3 + $0x90] sm:$0xff]
      %v1745 = vld [vmem:[#allocation3 + $0x98] sm:$0xff]
      %v1746 = vld [vmem:[#allocation3 + $0xa0] sm:$0xff]
      %v1747 = vld [vmem:[#allocation3 + $0xa8] sm:$0xff]
      %v1748 = vld [vmem:[#allocation3 + $0xb0] sm:$0xff]
      %v1749 = vld [vmem:[#allocation3 + $0xb8] sm:$0xff]
      %v1750 = vld [vmem:[#allocation3 + $0xc0] sm:$0xff]
      %v1751 = vld [vmem:[#allocation3 + $0xc8] sm:$0xff]
      %v1752 = vld [vmem:[#allocation3 + $0xd0] sm:$0xff]
      %v1753 = vld [vmem:[#allocation3 + $0xd8] sm:$0xff]
      %v1754 = vld [vmem:[#allocation3 + $0xe0] sm:$0xff]
      %v1755 = vld [vmem:[#allocation3 + $0xe8] sm:$0xff]
      %v1756 = vld [vmem:[#allocation3 + $0xf0] sm:$0xff]
      %v1757 = vld [vmem:[#allocation3 + $0xf8] sm:$0xff]
      %v1758 = vld [vmem:[#allocation3 + $0x100] sm:$0xff]
      %v1759 = vld [vmem:[#allocation3 + $0x108] sm:$0xff]
      %v1760 = vld [vmem:[#allocation3 + $0x110] sm:$0xff]
      %v1761 = vld [vmem:[#allocation3 + $0x118] sm:$0xff]
      %v1762 = vld [vmem:[#allocation3 + $0x120] sm:$0xff]
      %v1763 = vld [vmem:[#allocation3 + $0x128] sm:$0xff]
      %v1764 = vld [vmem:[#allocation3 + $0x130] sm:$0xff]
      %v1765 = vld [vmem:[#allocation3 + $0x138] sm:$0xff]
      %v1766 = vld [vmem:[#allocation3 + $0x140] sm:$0xff]
      %v1767 = vld [vmem:[#allocation3 + $0x148] sm:$0xff]
      %v1768 = vld [vmem:[#allocation3 + $0x150] sm:$0xff]
      %v1769 = vld [vmem:[#allocation3 + $0x158] sm:$0xff]
      %v1770 = vld [vmem:[#allocation3 + $0x160] sm:$0xff]
      %v1771 = vld [vmem:[#allocation3 + $0x168] sm:$0xff]
      %v1772 = vld [vmem:[#allocation3 + $0x170] sm:$0xff]
      %v1773 = vld [vmem:[#allocation3 + $0x178] sm:$0xff]
      %v1774 = vld [vmem:[#allocation3 + $0x180] sm:$0xff]
      %v1775 = vld [vmem:[#allocation3 + $0x188] sm:$0xff]
      %v1776 = vld [vmem:[#allocation3 + $0x190] sm:$0xff]
      %v1777 = vld [vmem:[#allocation3 + $0x198] sm:$0xff]
      %v1778 = vld [vmem:[#allocation3 + $0x1a0] sm:$0xff]
      %v1779 = vld [vmem:[#allocation3 + $0x1a8] sm:$0xff]
      %v1780 = vld [vmem:[#allocation3 + $0x1b0] sm:$0xff]
      %v1781 = vld [vmem:[#allocation3 + $0x1b8] sm:$0xff]
      %v1782 = vld [vmem:[#allocation3 + $0x1c0] sm:$0xff]
      %v1783 = vld [vmem:[#allocation3 + $0x1c8] sm:$0xff]
      %v1784 = vld [vmem:[#allocation3 + $0x1d0] sm:$0xff]
      %v1785 = vld [vmem:[#allocation3 + $0x1d8] sm:$0xff]
      %v1786 = vld [vmem:[#allocation3 + $0x1e0] sm:$0xff]
      %v1787 = vld [vmem:[#allocation3 + $0x1e8] sm:$0xff]
      %v1788 = vld [vmem:[#allocation3 + $0x1f0] sm:$0xff]
      %v1789 = vld [vmem:[#allocation3 + $0x1f8] sm:$0xff]
      %v1790 = vsub.f32 %v1342, %v1726
      %v1791 = vsub.f32 %v1343, %v1727
      %v1792 = vsub.f32 %v1344, %v1728
      %v1793 = vsub.f32 %v1345, %v1729
      %v1794 = vsub.f32 %v1346, %v1730
      %v1795 = vsub.f32 %v1347, %v1731
      %v1796 = vsub.f32 %v1348, %v1732
      %v1797 = vsub.f32 %v1349, %v1733
      %v1798 = vsub.f32 %v1350, %v1734
      %v1799 = vsub.f32 %v1351, %v1735
      %v1800 = vsub.f32 %v1352, %v1736
      %v1801 = vsub.f32 %v1353, %v1737
      %v1802 = vsub.f32 %v1354, %v1738
      %v1803 = vsub.f32 %v1355, %v1739
      %v1804 = vsub.f32 %v1356, %v1740
      %v1805 = vsub.f32 %v1357, %v1741
      %v1806 = vsub.f32 %v1358, %v1742
      %v1807 = vsub.f32 %v1359, %v1743
      %v1808 = vsub.f32 %v1360, %v1744
      %v1809 = vsub.f32 %v1361, %v1745
      %v1810 = vsub.f32 %v1362, %v1746
      %v1811 = vsub.f32 %v1363, %v1747
      %v1812 = vsub.f32 %v1364, %v1748
      %v1813 = vsub.f32 %v1365, %v1749
      %v1814 = vsub.f32 %v1366, %v1750
      %v1815 = vsub.f32 %v1367, %v1751
      %v1816 = vsub.f32 %v1368, %v1752
      %v1817 = vsub.f32 %v1369, %v1753
      %v1818 = vsub.f32 %v1370, %v1754
      %v1819 = vsub.f32 %v1371, %v1755
      %v1820 = vsub.f32 %v1372, %v1756
      %v1821 = vsub.f32 %v1373, %v1757
      %v1822 = vsub.f32 %v1374, %v1758
      %v1823 = vsub.f32 %v1375, %v1759
      %v1824 = vsub.f32 %v1376, %v1760
      %v1825 = vsub.f32 %v1377, %v1761
      %v1826 = vsub.f32 %v1378, %v1762
      %v1827 = vsub.f32 %v1379, %v1763
      %v1828 = vsub.f32 %v1380, %v1764
      %v1829 = vsub.f32 %v1381, %v1765
      %v1830 = vsub.f32 %v1382, %v1766
      %v1831 = vsub.f32 %v1383, %v1767
      %v1832 = vsub.f32 %v1384, %v1768
      %v1833 = vsub.f32 %v1385, %v1769
      %v1834 = vsub.f32 %v1386, %v1770
      %v1835 = vsub.f32 %v1387, %v1771
      %v1836 = vsub.f32 %v1388, %v1772
      %v1837 = vsub.f32 %v1389, %v1773
      %v1838 = vsub.f32 %v1390, %v1774
      %v1839 = vsub.f32 %v1391, %v1775
      %v1840 = vsub.f32 %v1392, %v1776
      %v1841 = vsub.f32 %v1393, %v1777
      %v1842 = vsub.f32 %v1394, %v1778
      %v1843 = vsub.f32 %v1395, %v1779
      %v1844 = vsub.f32 %v1396, %v1780
      %v1845 = vsub.f32 %v1397, %v1781
      %v1846 = vsub.f32 %v1398, %v1782
      %v1847 = vsub.f32 %v1399, %v1783
      %v1848 = vsub.f32 %v1400, %v1784
      %v1849 = vsub.f32 %v1401, %v1785
      %v1850 = vsub.f32 %v1402, %v1786
      %v1851 = vsub.f32 %v1403, %v1787
      %v1852 = vsub.f32 %v1404, %v1788
      %v1853 = vsub.f32 %v1405, %v1789
      %v1854 = vmul.f32 %v1790, 0.5
      %v1855 = vmul.f32 %v1791, 0.5
      %v1856 = vmul.f32 %v1792, 0.5
      %v1857 = vmul.f32 %v1793, 0.5
      %v1858 = vmul.f32 %v1794, 0.5
      %v1859 = vmul.f32 %v1795, 0.5
      %v1860 = vmul.f32 %v1796, 0.5
      %v1861 = vmul.f32 %v1797, 0.5
      %v1862 = vmul.f32 %v1798, 0.5
      %v1863 = vmul.f32 %v1799, 0.5
      %v1864 = vmul.f32 %v1800, 0.5
      %v1865 = vmul.f32 %v1801, 0.5
      %v1866 = vmul.f32 %v1802, 0.5
      %v1867 = vmul.f32 %v1803, 0.5
      %v1868 = vmul.f32 %v1804, 0.5
      %v1869 = vmul.f32 %v1805, 0.5
      %v1870 = vmul.f32 %v1806, 0.5
      %v1871 = vmul.f32 %v1807, 0.5
      %v1872 = vmul.f32 %v1808, 0.5
      %v1873 = vmul.f32 %v1809, 0.5
      %v1874 = vmul.f32 %v1810, 0.5
      %v1875 = vmul.f32 %v1811, 0.5
      %v1876 = vmul.f32 %v1812, 0.5
      %v1877 = vmul.f32 %v1813, 0.5
      %v1878 = vmul.f32 %v1814, 0.5
      %v1879 = vmul.f32 %v1815, 0.5
      %v1880 = vmul.f32 %v1816, 0.5
      %v1881 = vmul.f32 %v1817, 0.5
      %v1882 = vmul.f32 %v1818, 0.5
      %v1883 = vmul.f32 %v1819, 0.5
      %v1884 = vmul.f32 %v1820, 0.5
      %v1885 = vmul.f32 %v1821, 0.5
      %v1886 = vmul.f32 %v1822, 0.5
      %v1887 = vmul.f32 %v1823, 0.5
      %v1888 = vmul.f32 %v1824, 0.5
      %v1889 = vmul.f32 %v1825, 0.5
      %v1890 = vmul.f32 %v1826, 0.5
      %v1891 = vmul.f32 %v1827, 0.5
      %v1892 = vmul.f32 %v1828, 0.5
      %v1893 = vmul.f32 %v1829, 0.5
      %v1894 = vmul.f32 %v1830, 0.5
      %v1895 = vmul.f32 %v1831, 0.5
      %v1896 = vmul.f32 %v1832, 0.5
      %v1897 = vmul.f32 %v1833, 0.5
      %v1898 = vmul.f32 %v1834, 0.5
      %v1899 = vmul.f32 %v1835, 0.5
      %v1900 = vmul.f32 %v1836, 0.5
      %v1901 = vmul.f32 %v1837, 0.5
      %v1902 = vmul.f32 %v1838, 0.5
      %v1903 = vmul.f32 %v1839, 0.5
      %v1904 = vmul.f32 %v1840, 0.5
      %v1905 = vmul.f32 %v1841, 0.5
      %v1906 = vmul.f32 %v1842, 0.5
      %v1907 = vmul.f32 %v1843, 0.5
      %v1908 = vmul.f32 %v1844, 0.5
      %v1909 = vmul.f32 %v1845, 0.5
      %v1910 = vmul.f32 %v1846, 0.5
      %v1911 = vmul.f32 %v1847, 0.5
      %v1912 = vmul.f32 %v1848, 0.5
      %v1913 = vmul.f32 %v1849, 0.5
      %v1914 = vmul.f32 %v1850, 0.5
      %v1915 = vmul.f32 %v1851, 0.5
      %v1916 = vmul.f32 %v1852, 0.5
      %v1917 = vmul.f32 %v1853, 0.5
      %v1918 = vadd.f32 %v1726, %v1854
      %v1919 = vadd.f32 %v1727, %v1855
      %v1920 = vadd.f32 %v1728, %v1856
      %v1921 = vadd.f32 %v1729, %v1857
      %v1922 = vadd.f32 %v1730, %v1858
      %v1923 = vadd.f32 %v1731, %v1859
      %v1924 = vadd.f32 %v1732, %v1860
      %v1925 = vadd.f32 %v1733, %v1861
      %v1926 = vadd.f32 %v1734, %v1862
      %v1927 = vadd.f32 %v1735, %v1863
      %v1928 = vadd.f32 %v1736, %v1864
      %v1929 = vadd.f32 %v1737, %v1865
      %v1930 = vadd.f32 %v1738, %v1866
      %v1931 = vadd.f32 %v1739, %v1867
      %v1932 = vadd.f32 %v1740, %v1868
      %v1933 = vadd.f32 %v1741, %v1869
      %v1934 = vadd.f32 %v1742, %v1870
      %v1935 = vadd.f32 %v1743, %v1871
      %v1936 = vadd.f32 %v1744, %v1872
      %v1937 = vadd.f32 %v1745, %v1873
      %v1938 = vadd.f32 %v1746, %v1874
      %v1939 = vadd.f32 %v1747, %v1875
      %v1940 = vadd.f32 %v1748, %v1876
      %v1941 = vadd.f32 %v1749, %v1877
      %v1942 = vadd.f32 %v1750, %v1878
      %v1943 = vadd.f32 %v1751, %v1879
      %v1944 = vadd.f32 %v1752, %v1880
      %v1945 = vadd.f32 %v1753, %v1881
      %v1946 = vadd.f32 %v1754, %v1882
      %v1947 = vadd.f32 %v1755, %v1883
      %v1948 = vadd.f32 %v1756, %v1884
      %v1949 = vadd.f32 %v1757, %v1885
      %v1950 = vadd.f32 %v1758, %v1886
      %v1951 = vadd.f32 %v1759, %v1887
      %v1952 = vadd.f32 %v1760, %v1888
      %v1953 = vadd.f32 %v1761, %v1889
      %v1954 = vadd.f32 %v1762, %v1890
      %v1955 = vadd.f32 %v1763, %v1891
      %v1956 = vadd.f32 %v1764, %v1892
      %v1957 = vadd.f32 %v1765, %v1893
      %v1958 = vadd.f32 %v1766, %v1894
      %v1959 = vadd.f32 %v1767, %v1895
      %v1960 = vadd.f32 %v1768, %v1896
      %v1961 = vadd.f32 %v1769, %v1897
      %v1962 = vadd.f32 %v1770, %v1898
      %v1963 = vadd.f32 %v1771, %v1899
      %v1964 = vadd.f32 %v1772, %v1900
      %v1965 = vadd.f32 %v1773, %v1901
      %v1966 = vadd.f32 %v1774, %v1902
      %v1967 = vadd.f32 %v1775, %v1903
      %v1968 = vadd.f32 %v1776, %v1904
      %v1969 = vadd.f32 %v1777, %v1905
      %v1970 = vadd.f32 %v1778, %v1906
      %v1971 = vadd.f32 %v1779, %v1907
      %v1972 = vadd.f32 %v1780, %v1908
      %v1973 = vadd.f32 %v1781, %v1909
      %v1974 = vadd.f32 %v1782, %v1910
      %v1975 = vadd.f32 %v1783, %v1911
      %v1976 = vadd.f32 %v1784, %v1912
      %v1977 = vadd.f32 %v1785, %v1913
      %v1978 = vadd.f32 %v1786, %v1914
      %v1979 = vadd.f32 %v1787, %v1915
      %v1980 = vadd.f32 %v1788, %v1916
      %v1981 = vadd.f32 %v1789, %v1917
      %vm1982 = vcmp.ge.f32.partialorder %v1918, 1.0
      %vm1983 = vcmp.ge.f32.partialorder %v1919, 1.0
      %vm1984 = vcmp.ge.f32.partialorder %v1920, 1.0
      %vm1985 = vcmp.ge.f32.partialorder %v1921, 1.0
      %vm1986 = vcmp.ge.f32.partialorder %v1922, 1.0
      %vm1987 = vcmp.ge.f32.partialorder %v1923, 1.0
      %vm1988 = vcmp.ge.f32.partialorder %v1924, 1.0
      %vm1989 = vcmp.ge.f32.partialorder %v1925, 1.0
      %vm1990 = vcmp.ge.f32.partialorder %v1926, 1.0
      %vm1991 = vcmp.ge.f32.partialorder %v1927, 1.0
      %vm1992 = vcmp.ge.f32.partialorder %v1928, 1.0
      %vm1993 = vcmp.ge.f32.partialorder %v1929, 1.0
      %vm1994 = vcmp.ge.f32.partialorder %v1930, 1.0
      %vm1995 = vcmp.ge.f32.partialorder %v1931, 1.0
      %vm1996 = vcmp.ge.f32.partialorder %v1932, 1.0
      %vm1997 = vcmp.ge.f32.partialorder %v1933, 1.0
      %vm1998 = vcmp.ge.f32.partialorder %v1934, 1.0
      %vm1999 = vcmp.ge.f32.partialorder %v1935, 1.0
      %vm2000 = vcmp.ge.f32.partialorder %v1936, 1.0
      %vm2001 = vcmp.ge.f32.partialorder %v1937, 1.0
      %vm2002 = vcmp.ge.f32.partialorder %v1938, 1.0
      %vm2003 = vcmp.ge.f32.partialorder %v1939, 1.0
      %vm2004 = vcmp.ge.f32.partialorder %v1940, 1.0
      %vm2005 = vcmp.ge.f32.partialorder %v1941, 1.0
      %vm2006 = vcmp.ge.f32.partialorder %v1942, 1.0
      %vm2007 = vcmp.ge.f32.partialorder %v1943, 1.0
      %vm2008 = vcmp.ge.f32.partialorder %v1944, 1.0
      %vm2009 = vcmp.ge.f32.partialorder %v1945, 1.0
      %vm2010 = vcmp.ge.f32.partialorder %v1946, 1.0
      %vm2011 = vcmp.ge.f32.partialorder %v1947, 1.0
      %vm2012 = vcmp.ge.f32.partialorder %v1948, 1.0
      %vm2013 = vcmp.ge.f32.partialorder %v1949, 1.0
      %vm2014 = vcmp.ge.f32.partialorder %v1950, 1.0
      %vm2015 = vcmp.ge.f32.partialorder %v1951, 1.0
      %vm2016 = vcmp.ge.f32.partialorder %v1952, 1.0
      %vm2017 = vcmp.ge.f32.partialorder %v1953, 1.0
      %vm2018 = vcmp.ge.f32.partialorder %v1954, 1.0
      %vm2019 = vcmp.ge.f32.partialorder %v1955, 1.0
      %vm2020 = vcmp.ge.f32.partialorder %v1956, 1.0
      %vm2021 = vcmp.ge.f32.partialorder %v1957, 1.0
      %vm2022 = vcmp.ge.f32.partialorder %v1958, 1.0
      %vm2023 = vcmp.ge.f32.partialorder %v1959, 1.0
      %vm2024 = vcmp.ge.f32.partialorder %v1960, 1.0
      %vm2025 = vcmp.ge.f32.partialorder %v1961, 1.0
      %vm2026 = vcmp.ge.f32.partialorder %v1962, 1.0
      %vm2027 = vcmp.ge.f32.partialorder %v1963, 1.0
      %vm2028 = vcmp.ge.f32.partialorder %v1964, 1.0
      %vm2029 = vcmp.ge.f32.partialorder %v1965, 1.0
      %vm2030 = vcmp.ge.f32.partialorder %v1966, 1.0
      %vm2031 = vcmp.ge.f32.partialorder %v1967, 1.0
      %vm2032 = vcmp.ge.f32.partialorder %v1968, 1.0
      %vm2033 = vcmp.ge.f32.partialorder %v1969, 1.0
      %vm2034 = vcmp.ge.f32.partialorder %v1970, 1.0
      %vm2035 = vcmp.ge.f32.partialorder %v1971, 1.0
      %vm2036 = vcmp.ge.f32.partialorder %v1972, 1.0
      %vm2037 = vcmp.ge.f32.partialorder %v1973, 1.0
      %vm2038 = vcmp.ge.f32.partialorder %v1974, 1.0
      %vm2039 = vcmp.ge.f32.partialorder %v1975, 1.0
      %vm2040 = vcmp.ge.f32.partialorder %v1976, 1.0
      %vm2041 = vcmp.ge.f32.partialorder %v1977, 1.0
      %vm2042 = vcmp.ge.f32.partialorder %v1978, 1.0
      %vm2043 = vcmp.ge.f32.partialorder %v1979, 1.0
      %vm2044 = vcmp.ge.f32.partialorder %v1980, 1.0
      %vm2045 = vcmp.ge.f32.partialorder %v1981, 1.0
      %v2046 = vsel %vm1982, 1, 0
      %v2047 = vsel %vm1983, 1, 0
      %v2048 = vsel %vm1984, 1, 0
      %v2049 = vsel %vm1985, 1, 0
      %v2050 = vsel %vm1986, 1, 0
      %v2051 = vsel %vm1987, 1, 0
      %v2052 = vsel %vm1988, 1, 0
      %v2053 = vsel %vm1989, 1, 0
      %v2054 = vsel %vm1990, 1, 0
      %v2055 = vsel %vm1991, 1, 0
      %v2056 = vsel %vm1992, 1, 0
      %v2057 = vsel %vm1993, 1, 0
      %v2058 = vsel %vm1994, 1, 0
      %v2059 = vsel %vm1995, 1, 0
      %v2060 = vsel %vm1996, 1, 0
      %v2061 = vsel %vm1997, 1, 0
      %v2062 = vsel %vm1998, 1, 0
      %v2063 = vsel %vm1999, 1, 0
      %v2064 = vsel %vm2000, 1, 0
      %v2065 = vsel %vm2001, 1, 0
      %v2066 = vsel %vm2002, 1, 0
      %v2067 = vsel %vm2003, 1, 0
      %v2068 = vsel %vm2004, 1, 0
      %v2069 = vsel %vm2005, 1, 0
      %v2070 = vsel %vm2006, 1, 0
      %v2071 = vsel %vm2007, 1, 0
      %v2072 = vsel %vm2008, 1, 0
      %v2073 = vsel %vm2009, 1, 0
      %v2074 = vsel %vm2010, 1, 0
      %v2075 = vsel %vm2011, 1, 0
      %v2076 = vsel %vm2012, 1, 0
      %v2077 = vsel %vm2013, 1, 0
      %v2078 = vsel %vm2014, 1, 0
      %v2079 = vsel %vm2015, 1, 0
      %v2080 = vsel %vm2016, 1, 0
      %v2081 = vsel %vm2017, 1, 0
      %v2082 = vsel %vm2018, 1, 0
      %v2083 = vsel %vm2019, 1, 0
      %v2084 = vsel %vm2020, 1, 0
      %v2085 = vsel %vm2021, 1, 0
      %v2086 = vsel %vm2022, 1, 0
      %v2087 = vsel %vm2023, 1, 0
      %v2088 = vsel %vm2024, 1, 0
      %v2089 = vsel %vm2025, 1, 0
      %v2090 = vsel %vm2026, 1, 0
      %v2091 = vsel %vm2027, 1, 0
      %v2092 = vsel %vm2028, 1, 0
      %v2093 = vsel %vm2029, 1, 0
      %v2094 = vsel %vm2030, 1, 0
      %v2095 = vsel %vm2031, 1, 0
      %v2096 = vsel %vm2032, 1, 0
      %v2097 = vsel %vm2033, 1, 0
      %v2098 = vsel %vm2034, 1, 0
      %v2099 = vsel %vm2035, 1, 0
      %v2100 = vsel %vm2036, 1, 0
      %v2101 = vsel %vm2037, 1, 0
      %v2102 = vsel %vm2038, 1, 0
      %v2103 = vsel %vm2039, 1, 0
      %v2104 = vsel %vm2040, 1, 0
      %v2105 = vsel %vm2041, 1, 0
      %v2106 = vsel %vm2042, 1, 0
      %v2107 = vsel %vm2043, 1, 0
      %v2108 = vsel %vm2044, 1, 0
      %v2109 = vsel %vm2045, 1, 0
      %v2110 = vcvt.s32.f32 %v2046
      %v2111 = vcvt.s32.f32 %v2047
      %v2112 = vcvt.s32.f32 %v2048
      %v2113 = vcvt.s32.f32 %v2049
      %v2114 = vcvt.s32.f32 %v2050
      %v2115 = vcvt.s32.f32 %v2051
      %v2116 = vcvt.s32.f32 %v2052
      %v2117 = vcvt.s32.f32 %v2053
      %v2118 = vcvt.s32.f32 %v2054
      %v2119 = vcvt.s32.f32 %v2055
      %v2120 = vcvt.s32.f32 %v2056
      %v2121 = vcvt.s32.f32 %v2057
      %v2122 = vcvt.s32.f32 %v2058
      %v2123 = vcvt.s32.f32 %v2059
      %v2124 = vcvt.s32.f32 %v2060
      %v2125 = vcvt.s32.f32 %v2061
      %v2126 = vcvt.s32.f32 %v2062
      %v2127 = vcvt.s32.f32 %v2063
      %v2128 = vcvt.s32.f32 %v2064
      %v2129 = vcvt.s32.f32 %v2065
      %v2130 = vcvt.s32.f32 %v2066
      %v2131 = vcvt.s32.f32 %v2067
      %v2132 = vcvt.s32.f32 %v2068
      %v2133 = vcvt.s32.f32 %v2069
      %v2134 = vcvt.s32.f32 %v2070
      %v2135 = vcvt.s32.f32 %v2071
      %v2136 = vcvt.s32.f32 %v2072
      %v2137 = vcvt.s32.f32 %v2073
      %v2138 = vcvt.s32.f32 %v2074
      %v2139 = vcvt.s32.f32 %v2075
      %v2140 = vcvt.s32.f32 %v2076
      %v2141 = vcvt.s32.f32 %v2077
      %v2142 = vcvt.s32.f32 %v2078
      %v2143 = vcvt.s32.f32 %v2079
      %v2144 = vcvt.s32.f32 %v2080
      %v2145 = vcvt.s32.f32 %v2081
      %v2146 = vcvt.s32.f32 %v2082
      %v2147 = vcvt.s32.f32 %v2083
      %v2148 = vcvt.s32.f32 %v2084
      %v2149 = vcvt.s32.f32 %v2085
      %v2150 = vcvt.s32.f32 %v2086
      %v2151 = vcvt.s32.f32 %v2087
      %v2152 = vcvt.s32.f32 %v2088
      %v2153 = vcvt.s32.f32 %v2089
      %v2154 = vcvt.s32.f32 %v2090
      %v2155 = vcvt.s32.f32 %v2091
      %v2156 = vcvt.s32.f32 %v2092
      %v2157 = vcvt.s32.f32 %v2093
      %v2158 = vcvt.s32.f32 %v2094
      %v2159 = vcvt.s32.f32 %v2095
      %v2160 = vcvt.s32.f32 %v2096
      %v2161 = vcvt.s32.f32 %v2097
      %v2162 = vcvt.s32.f32 %v2098
      %v2163 = vcvt.s32.f32 %v2099
      %v2164 = vcvt.s32.f32 %v2100
      %v2165 = vcvt.s32.f32 %v2101
      %v2166 = vcvt.s32.f32 %v2102
      %v2167 = vcvt.s32.f32 %v2103
      %v2168 = vcvt.s32.f32 %v2104
      %v2169 = vcvt.s32.f32 %v2105
      %v2170 = vcvt.s32.f32 %v2106
      %v2171 = vcvt.s32.f32 %v2107
      %v2172 = vcvt.s32.f32 %v2108
      %v2173 = vcvt.s32.f32 %v2109
      %vm2174 = vcmp.gt.f32.partialorder %v2110, 0.0
      %vm2175 = vcmp.gt.f32.partialorder %v2111, 0.0
      %vm2176 = vcmp.gt.f32.partialorder %v2112, 0.0
      %vm2177 = vcmp.gt.f32.partialorder %v2113, 0.0
      %vm2178 = vcmp.gt.f32.partialorder %v2114, 0.0
      %vm2179 = vcmp.gt.f32.partialorder %v2115, 0.0
      %vm2180 = vcmp.gt.f32.partialorder %v2116, 0.0
      %vm2181 = vcmp.gt.f32.partialorder %v2117, 0.0
      %vm2182 = vcmp.gt.f32.partialorder %v2118, 0.0
      %vm2183 = vcmp.gt.f32.partialorder %v2119, 0.0
      %vm2184 = vcmp.gt.f32.partialorder %v2120, 0.0
      %vm2185 = vcmp.gt.f32.partialorder %v2121, 0.0
      %vm2186 = vcmp.gt.f32.partialorder %v2122, 0.0
      %vm2187 = vcmp.gt.f32.partialorder %v2123, 0.0
      %vm2188 = vcmp.gt.f32.partialorder %v2124, 0.0
      %vm2189 = vcmp.gt.f32.partialorder %v2125, 0.0
      %vm2190 = vcmp.gt.f32.partialorder %v2126, 0.0
      %vm2191 = vcmp.gt.f32.partialorder %v2127, 0.0
      %vm2192 = vcmp.gt.f32.partialorder %v2128, 0.0
      %vm2193 = vcmp.gt.f32.partialorder %v2129, 0.0
      %vm2194 = vcmp.gt.f32.partialorder %v2130, 0.0
      %vm2195 = vcmp.gt.f32.partialorder %v2131, 0.0
      %vm2196 = vcmp.gt.f32.partialorder %v2132, 0.0
      %vm2197 = vcmp.gt.f32.partialorder %v2133, 0.0
      %vm2198 = vcmp.gt.f32.partialorder %v2134, 0.0
      %vm2199 = vcmp.gt.f32.partialorder %v2135, 0.0
      %vm2200 = vcmp.gt.f32.partialorder %v2136, 0.0
      %vm2201 = vcmp.gt.f32.partialorder %v2137, 0.0
      %vm2202 = vcmp.gt.f32.partialorder %v2138, 0.0
      %vm2203 = vcmp.gt.f32.partialorder %v2139, 0.0
      %vm2204 = vcmp.gt.f32.partialorder %v2140, 0.0
      %vm2205 = vcmp.gt.f32.partialorder %v2141, 0.0
      %vm2206 = vcmp.gt.f32.partialorder %v2142, 0.0
      %vm2207 = vcmp.gt.f32.partialorder %v2143, 0.0
      %vm2208 = vcmp.gt.f32.partialorder %v2144, 0.0
      %vm2209 = vcmp.gt.f32.partialorder %v2145, 0.0
      %vm2210 = vcmp.gt.f32.partialorder %v2146, 0.0
      %vm2211 = vcmp.gt.f32.partialorder %v2147, 0.0
      %vm2212 = vcmp.gt.f32.partialorder %v2148, 0.0
      %vm2213 = vcmp.gt.f32.partialorder %v2149, 0.0
      %vm2214 = vcmp.gt.f32.partialorder %v2150, 0.0
      %vm2215 = vcmp.gt.f32.partialorder %v2151, 0.0
      %vm2216 = vcmp.gt.f32.partialorder %v2152, 0.0
      %vm2217 = vcmp.gt.f32.partialorder %v2153, 0.0
      %vm2218 = vcmp.gt.f32.partialorder %v2154, 0.0
      %vm2219 = vcmp.gt.f32.partialorder %v2155, 0.0
      %vm2220 = vcmp.gt.f32.partialorder %v2156, 0.0
      %vm2221 = vcmp.gt.f32.partialorder %v2157, 0.0
      %vm2222 = vcmp.gt.f32.partialorder %v2158, 0.0
      %vm2223 = vcmp.gt.f32.partialorder %v2159, 0.0
      %vm2224 = vcmp.gt.f32.partialorder %v2160, 0.0
      %vm2225 = vcmp.gt.f32.partialorder %v2161, 0.0
      %vm2226 = vcmp.gt.f32.partialorder %v2162, 0.0
      %vm2227 = vcmp.gt.f32.partialorder %v2163, 0.0
      %vm2228 = vcmp.gt.f32.partialorder %v2164, 0.0
      %vm2229 = vcmp.gt.f32.partialorder %v2165, 0.0
      %vm2230 = vcmp.gt.f32.partialorder %v2166, 0.0
      %vm2231 = vcmp.gt.f32.partialorder %v2167, 0.0
      %vm2232 = vcmp.gt.f32.partialorder %v2168, 0.0
      %vm2233 = vcmp.gt.f32.partialorder %v2169, 0.0
      %vm2234 = vcmp.gt.f32.partialorder %v2170, 0.0
      %vm2235 = vcmp.gt.f32.partialorder %v2171, 0.0
      %vm2236 = vcmp.gt.f32.partialorder %v2172, 0.0
      %vm2237 = vcmp.gt.f32.partialorder %v2173, 0.0
      %v2238 = vsel %vm2174, 0.0, %v1918
      %v2239 = vsel %vm2175, 0.0, %v1919
      %v2240 = vsel %vm2176, 0.0, %v1920
      %v2241 = vsel %vm2177, 0.0, %v1921
      %v2242 = vsel %vm2178, 0.0, %v1922
      %v2243 = vsel %vm2179, 0.0, %v1923
      %v2244 = vsel %vm2180, 0.0, %v1924
      %v2245 = vsel %vm2181, 0.0, %v1925
      %v2246 = vsel %vm2182, 0.0, %v1926
      %v2247 = vsel %vm2183, 0.0, %v1927
      %v2248 = vsel %vm2184, 0.0, %v1928
      %v2249 = vsel %vm2185, 0.0, %v1929
      %v2250 = vsel %vm2186, 0.0, %v1930
      %v2251 = vsel %vm2187, 0.0, %v1931
      %v2252 = vsel %vm2188, 0.0, %v1932
      %v2253 = vsel %vm2189, 0.0, %v1933
      %v2254 = vsel %vm2190, 0.0, %v1934
      %v2255 = vsel %vm2191, 0.0, %v1935
      %v2256 = vsel %vm2192, 0.0, %v1936
      %v2257 = vsel %vm2193, 0.0, %v1937
      %v2258 = vsel %vm2194, 0.0, %v1938
      %v2259 = vsel %vm2195, 0.0, %v1939
      %v2260 = vsel %vm2196, 0.0, %v1940
      %v2261 = vsel %vm2197, 0.0, %v1941
      %v2262 = vsel %vm2198, 0.0, %v1942
      %v2263 = vsel %vm2199, 0.0, %v1943
      %v2264 = vsel %vm2200, 0.0, %v1944
      %v2265 = vsel %vm2201, 0.0, %v1945
      %v2266 = vsel %vm2202, 0.0, %v1946
      %v2267 = vsel %vm2203, 0.0, %v1947
      %v2268 = vsel %vm2204, 0.0, %v1948
      %v2269 = vsel %vm2205, 0.0, %v1949
      %v2270 = vsel %vm2206, 0.0, %v1950
      %v2271 = vsel %vm2207, 0.0, %v1951
      %v2272 = vsel %vm2208, 0.0, %v1952
      %v2273 = vsel %vm2209, 0.0, %v1953
      %v2274 = vsel %vm2210, 0.0, %v1954
      %v2275 = vsel %vm2211, 0.0, %v1955
      %v2276 = vsel %vm2212, 0.0, %v1956
      %v2277 = vsel %vm2213, 0.0, %v1957
      %v2278 = vsel %vm2214, 0.0, %v1958
      %v2279 = vsel %vm2215, 0.0, %v1959
      %v2280 = vsel %vm2216, 0.0, %v1960
      %v2281 = vsel %vm2217, 0.0, %v1961
      %v2282 = vsel %vm2218, 0.0, %v1962
      %v2283 = vsel %vm2219, 0.0, %v1963
      %v2284 = vsel %vm2220, 0.0, %v1964
      %v2285 = vsel %vm2221, 0.0, %v1965
      %v2286 = vsel %vm2222, 0.0, %v1966
      %v2287 = vsel %vm2223, 0.0, %v1967
      %v2288 = vsel %vm2224, 0.0, %v1968
      %v2289 = vsel %vm2225, 0.0, %v1969
      %v2290 = vsel %vm2226, 0.0, %v1970
      %v2291 = vsel %vm2227, 0.0, %v1971
      %v2292 = vsel %vm2228, 0.0, %v1972
      %v2293 = vsel %vm2229, 0.0, %v1973
      %v2294 = vsel %vm2230, 0.0, %v1974
      %v2295 = vsel %vm2231, 0.0, %v1975
      %v2296 = vsel %vm2232, 0.0, %v1976
      %v2297 = vsel %vm2233, 0.0, %v1977
      %v2298 = vsel %vm2234, 0.0, %v1978
      %v2299 = vsel %vm2235, 0.0, %v1979
      %v2300 = vsel %vm2236, 0.0, %v1980
      %v2301 = vsel %vm2237, 0.0, %v1981
      %2302 = vst [vmem:[#allocation3] sm:$0xff] %v2238
      %2303 = vst [vmem:[#allocation3 + $0x8] sm:$0xff] %v2239
      %2304 = vst [vmem:[#allocation3 + $0x10] sm:$0xff] %v2240
      %2305 = vst [vmem:[#allocation3 + $0x18] sm:$0xff] %v2241
      %2306 = vst [vmem:[#allocation3 + $0x20] sm:$0xff] %v2242
      %2307 = vst [vmem:[#allocation3 + $0x28] sm:$0xff] %v2243
      %2308 = vst [vmem:[#allocation3 + $0x30] sm:$0xff] %v2244
      %2309 = vst [vmem:[#allocation3 + $0x38] sm:$0xff] %v2245
      %2310 = vst [vmem:[#allocation3 + $0x40] sm:$0xff] %v2246
      %2311 = vst [vmem:[#allocation3 + $0x48] sm:$0xff] %v2247
      %2312 = vst [vmem:[#allocation3 + $0x50] sm:$0xff] %v2248
      %2313 = vst [vmem:[#allocation3 + $0x58] sm:$0xff] %v2249
      %2314 = vst [vmem:[#allocation3 + $0x60] sm:$0xff] %v2250
      %2315 = vst [vmem:[#allocation3 + $0x68] sm:$0xff] %v2251
      %2316 = vst [vmem:[#allocation3 + $0x70] sm:$0xff] %v2252
      %2317 = vst [vmem:[#allocation3 + $0x78] sm:$0xff] %v2253
      %2318 = vst [vmem:[#allocation3 + $0x80] sm:$0xff] %v2254
      %2319 = vst [vmem:[#allocation3 + $0x88] sm:$0xff] %v2255
      %2320 = vst [vmem:[#allocation3 + $0x90] sm:$0xff] %v2256
      %2321 = vst [vmem:[#allocation3 + $0x98] sm:$0xff] %v2257
      %2322 = vst [vmem:[#allocation3 + $0xa0] sm:$0xff] %v2258
      %2323 = vst [vmem:[#allocation3 + $0xa8] sm:$0xff] %v2259
      %2324 = vst [vmem:[#allocation3 + $0xb0] sm:$0xff] %v2260
      %2325 = vst [vmem:[#allocation3 + $0xb8] sm:$0xff] %v2261
      %2326 = vst [vmem:[#allocation3 + $0xc0] sm:$0xff] %v2262
      %2327 = vst [vmem:[#allocation3 + $0xc8] sm:$0xff] %v2263
      %2328 = vst [vmem:[#allocation3 + $0xd0] sm:$0xff] %v2264
      %2329 = vst [vmem:[#allocation3 + $0xd8] sm:$0xff] %v2265
      %2330 = vst [vmem:[#allocation3 + $0xe0] sm:$0xff] %v2266
      %2331 = vst [vmem:[#allocation3 + $0xe8] sm:$0xff] %v2267
      %2332 = vst [vmem:[#allocation3 + $0xf0] sm:$0xff] %v2268
      %2333 = vst [vmem:[#allocation3 + $0xf8] sm:$0xff] %v2269
      %2334 = vst [vmem:[#allocation3 + $0x100] sm:$0xff] %v2270
      %2335 = vst [vmem:[#allocation3 + $0x108] sm:$0xff] %v2271
      %2336 = vst [vmem:[#allocation3 + $0x110] sm:$0xff] %v2272
      %2337 = vst [vmem:[#allocation3 + $0x118] sm:$0xff] %v2273
      %2338 = vst [vmem:[#allocation3 + $0x120] sm:$0xff] %v2274
      %2339 = vst [vmem:[#allocation3 + $0x128] sm:$0xff] %v2275
      %2340 = vst [vmem:[#allocation3 + $0x130] sm:$0xff] %v2276
      %2341 = vst [vmem:[#allocation3 + $0x138] sm:$0xff] %v2277
      %2342 = vst [vmem:[#allocation3 + $0x140] sm:$0xff] %v2278
      %2343 = vst [vmem:[#allocation3 + $0x148] sm:$0xff] %v2279
      %2344 = vst [vmem:[#allocation3 + $0x150] sm:$0xff] %v2280
      %2345 = vst [vmem:[#allocation3 + $0x158] sm:$0xff] %v2281
      %2346 = vst [vmem:[#allocation3 + $0x160] sm:$0xff] %v2282
      %2347 = vst [vmem:[#allocation3 + $0x168] sm:$0xff] %v2283
      %2348 = vst [vmem:[#allocation3 + $0x170] sm:$0xff] %v2284
      %2349 = vst [vmem:[#allocation3 + $0x178] sm:$0xff] %v2285
      %2350 = vst [vmem:[#allocation3 + $0x180] sm:$0xff] %v2286
      %2351 = vst [vmem:[#allocation3 + $0x188] sm:$0xff] %v2287
      %2352 = vst [vmem:[#allocation3 + $0x190] sm:$0xff] %v2288
      %2353 = vst [vmem:[#allocation3 + $0x198] sm:$0xff] %v2289
      %2354 = vst [vmem:[#allocation3 + $0x1a0] sm:$0xff] %v2290
      %2355 = vst [vmem:[#allocation3 + $0x1a8] sm:$0xff] %v2291
      %2356 = vst [vmem:[#allocation3 + $0x1b0] sm:$0xff] %v2292
      %2357 = vst [vmem:[#allocation3 + $0x1b8] sm:$0xff] %v2293
      %2358 = vst [vmem:[#allocation3 + $0x1c0] sm:$0xff] %v2294
      %2359 = vst [vmem:[#allocation3 + $0x1c8] sm:$0xff] %v2295
      %2360 = vst [vmem:[#allocation3 + $0x1d0] sm:$0xff] %v2296
      %2361 = vst [vmem:[#allocation3 + $0x1d8] sm:$0xff] %v2297
      %2362 = vst [vmem:[#allocation3 + $0x1e0] sm:$0xff] %v2298
      %2363 = vst [vmem:[#allocation3 + $0x1e8] sm:$0xff] %v2299
      %2364 = vst [vmem:[#allocation3 + $0x1f0] sm:$0xff] %v2300
      %2365 = vst [vmem:[#allocation3 + $0x1f8] sm:$0xff] %v2301
      %v2366 = vld [vmem:[%s249] sm:$0xff]
      %v2367 = vld [vmem:[%s249 + $0x8] sm:$0xff]
      %v2368 = vld [vmem:[%s249 + $0x10] sm:$0xff]
      %v2369 = vld [vmem:[%s249 + $0x18] sm:$0xff]
      %v2370 = vld [vmem:[%s249 + $0x20] sm:$0xff]
      %v2371 = vld [vmem:[%s249 + $0x28] sm:$0xff]
      %v2372 = vld [vmem:[%s249 + $0x30] sm:$0xff]
      %v2373 = vld [vmem:[%s249 + $0x38] sm:$0xff]
      %v2374 = vld [vmem:[%s249 + $0x40] sm:$0xff]
      %v2375 = vld [vmem:[%s249 + $0x48] sm:$0xff]
      %v2376 = vld [vmem:[%s249 + $0x50] sm:$0xff]
      %v2377 = vld [vmem:[%s249 + $0x58] sm:$0xff]
      %v2378 = vld [vmem:[%s249 + $0x60] sm:$0xff]
      %v2379 = vld [vmem:[%s249 + $0x68] sm:$0xff]
      %v2380 = vld [vmem:[%s249 + $0x70] sm:$0xff]
      %v2381 = vld [vmem:[%s249 + $0x78] sm:$0xff]
      %v2382 = vld [vmem:[%s249 + $0x80] sm:$0xff]
      %v2383 = vld [vmem:[%s249 + $0x88] sm:$0xff]
      %v2384 = vld [vmem:[%s249 + $0x90] sm:$0xff]
      %v2385 = vld [vmem:[%s249 + $0x98] sm:$0xff]
      %v2386 = vld [vmem:[%s249 + $0xa0] sm:$0xff]
      %v2387 = vld [vmem:[%s249 + $0xa8] sm:$0xff]
      %v2388 = vld [vmem:[%s249 + $0xb0] sm:$0xff]
      %v2389 = vld [vmem:[%s249 + $0xb8] sm:$0xff]
      %v2390 = vld [vmem:[%s249 + $0xc0] sm:$0xff]
      %v2391 = vld [vmem:[%s249 + $0xc8] sm:$0xff]
      %v2392 = vld [vmem:[%s249 + $0xd0] sm:$0xff]
      %v2393 = vld [vmem:[%s249 + $0xd8] sm:$0xff]
      %v2394 = vld [vmem:[%s249 + $0xe0] sm:$0xff]
      %v2395 = vld [vmem:[%s249 + $0xe8] sm:$0xff]
      %v2396 = vld [vmem:[%s249 + $0xf0] sm:$0xff]
      %v2397 = vld [vmem:[%s249 + $0xf8] sm:$0xff]
      %v2398 = vld [vmem:[%s249 + $0x100] sm:$0xff]
      %v2399 = vld [vmem:[%s249 + $0x108] sm:$0xff]
      %v2400 = vld [vmem:[%s249 + $0x110] sm:$0xff]
      %v2401 = vld [vmem:[%s249 + $0x118] sm:$0xff]
      %v2402 = vld [vmem:[%s249 + $0x120] sm:$0xff]
      %v2403 = vld [vmem:[%s249 + $0x128] sm:$0xff]
      %v2404 = vld [vmem:[%s249 + $0x130] sm:$0xff]
      %v2405 = vld [vmem:[%s249 + $0x138] sm:$0xff]
      %v2406 = vld [vmem:[%s249 + $0x140] sm:$0xff]
      %v2407 = vld [vmem:[%s249 + $0x148] sm:$0xff]
      %v2408 = vld [vmem:[%s249 + $0x150] sm:$0xff]
      %v2409 = vld [vmem:[%s249 + $0x158] sm:$0xff]
      %v2410 = vld [vmem:[%s249 + $0x160] sm:$0xff]
      %v2411 = vld [vmem:[%s249 + $0x168] sm:$0xff]
      %v2412 = vld [vmem:[%s249 + $0x170] sm:$0xff]
      %v2413 = vld [vmem:[%s249 + $0x178] sm:$0xff]
      %v2414 = vld [vmem:[%s249 + $0x180] sm:$0xff]
      %v2415 = vld [vmem:[%s249 + $0x188] sm:$0xff]
      %v2416 = vld [vmem:[%s249 + $0x190] sm:$0xff]
      %v2417 = vld [vmem:[%s249 + $0x198] sm:$0xff]
      %v2418 = vld [vmem:[%s249 + $0x1a0] sm:$0xff]
      %v2419 = vld [vmem:[%s249 + $0x1a8] sm:$0xff]
      %v2420 = vld [vmem:[%s249 + $0x1b0] sm:$0xff]
      %v2421 = vld [vmem:[%s249 + $0x1b8] sm:$0xff]
      %v2422 = vld [vmem:[%s249 + $0x1c0] sm:$0xff]
      %v2423 = vld [vmem:[%s249 + $0x1c8] sm:$0xff]
      %v2424 = vld [vmem:[%s249 + $0x1d0] sm:$0xff]
      %v2425 = vld [vmem:[%s249 + $0x1d8] sm:$0xff]
      %v2426 = vld [vmem:[%s249 + $0x1e0] sm:$0xff]
      %v2427 = vld [vmem:[%s249 + $0x1e8] sm:$0xff]
      %v2428 = vld [vmem:[%s249 + $0x1f0] sm:$0xff]
      %v2429 = vld [vmem:[%s249 + $0x1f8] sm:$0xff]
      %v2430 = vadd.f32 %v2366, %v2110
      %v2431 = vadd.f32 %v2367, %v2111
      %v2432 = vadd.f32 %v2368, %v2112
      %v2433 = vadd.f32 %v2369, %v2113
      %v2434 = vadd.f32 %v2370, %v2114
      %v2435 = vadd.f32 %v2371, %v2115
      %v2436 = vadd.f32 %v2372, %v2116
      %v2437 = vadd.f32 %v2373, %v2117
      %v2438 = vadd.f32 %v2374, %v2118
      %v2439 = vadd.f32 %v2375, %v2119
      %v2440 = vadd.f32 %v2376, %v2120
      %v2441 = vadd.f32 %v2377, %v2121
      %v2442 = vadd.f32 %v2378, %v2122
      %v2443 = vadd.f32 %v2379, %v2123
      %v2444 = vadd.f32 %v2380, %v2124
      %v2445 = vadd.f32 %v2381, %v2125
      %v2446 = vadd.f32 %v2382, %v2126
      %v2447 = vadd.f32 %v2383, %v2127
      %v2448 = vadd.f32 %v2384, %v2128
      %v2449 = vadd.f32 %v2385, %v2129
      %v2450 = vadd.f32 %v2386, %v2130
      %v2451 = vadd.f32 %v2387, %v2131
      %v2452 = vadd.f32 %v2388, %v2132
      %v2453 = vadd.f32 %v2389, %v2133
      %v2454 = vadd.f32 %v2390, %v2134
      %v2455 = vadd.f32 %v2391, %v2135
      %v2456 = vadd.f32 %v2392, %v2136
      %v2457 = vadd.f32 %v2393, %v2137
      %v2458 = vadd.f32 %v2394, %v2138
      %v2459 = vadd.f32 %v2395, %v2139
      %v2460 = vadd.f32 %v2396, %v2140
      %v2461 = vadd.f32 %v2397, %v2141
      %v2462 = vadd.f32 %v2398, %v2142
      %v2463 = vadd.f32 %v2399, %v2143
      %v2464 = vadd.f32 %v2400, %v2144
      %v2465 = vadd.f32 %v2401, %v2145
      %v2466 = vadd.f32 %v2402, %v2146
      %v2467 = vadd.f32 %v2403, %v2147
      %v2468 = vadd.f32 %v2404, %v2148
      %v2469 = vadd.f32 %v2405, %v2149
      %v2470 = vadd.f32 %v2406, %v2150
      %v2471 = vadd.f32 %v2407, %v2151
      %v2472 = vadd.f32 %v2408, %v2152
      %v2473 = vadd.f32 %v2409, %v2153
      %v2474 = vadd.f32 %v2410, %v2154
      %v2475 = vadd.f32 %v2411, %v2155
      %v2476 = vadd.f32 %v2412, %v2156
      %v2477 = vadd.f32 %v2413, %v2157
      %v2478 = vadd.f32 %v2414, %v2158
      %v2479 = vadd.f32 %v2415, %v2159
      %v2480 = vadd.f32 %v2416, %v2160
      %v2481 = vadd.f32 %v2417, %v2161
      %v2482 = vadd.f32 %v2418, %v2162
      %v2483 = vadd.f32 %v2419, %v2163
      %v2484 = vadd.f32 %v2420, %v2164
      %v2485 = vadd.f32 %v2421, %v2165
      %v2486 = vadd.f32 %v2422, %v2166
      %v2487 = vadd.f32 %v2423, %v2167
      %v2488 = vadd.f32 %v2424, %v2168
      %v2489 = vadd.f32 %v2425, %v2169
      %v2490 = vadd.f32 %v2426, %v2170
      %v2491 = vadd.f32 %v2427, %v2171
      %v2492 = vadd.f32 %v2428, %v2172
      %v2493 = vadd.f32 %v2429, %v2173
      %2494 = vst [vmem:[%s249] sm:$0xff] %v2430
      %2495 = vst [vmem:[%s249 + $0x8] sm:$0xff] %v2431
      %2496 = vst [vmem:[%s249 + $0x10] sm:$0xff] %v2432
      %2497 = vst [vmem:[%s249 + $0x18] sm:$0xff] %v2433
      %2498 = vst [vmem:[%s249 + $0x20] sm:$0xff] %v2434
      %2499 = vst [vmem:[%s249 + $0x28] sm:$0xff] %v2435
      %2500 = vst [vmem:[%s249 + $0x30] sm:$0xff] %v2436
      %2501 = vst [vmem:[%s249 + $0x38] sm:$0xff] %v2437
      %2502 = vst [vmem:[%s249 + $0x40] sm:$0xff] %v2438
      %2503 = vst [vmem:[%s249 + $0x48] sm:$0xff] %v2439
      %2504 = vst [vmem:[%s249 + $0x50] sm:$0xff] %v2440
      %2505 = vst [vmem:[%s249 + $0x58] sm:$0xff] %v2441
      %2506 = vst [vmem:[%s249 + $0x60] sm:$0xff] %v2442
      %2507 = vst [vmem:[%s249 + $0x68] sm:$0xff] %v2443
      %2508 = vst [vmem:[%s249 + $0x70] sm:$0xff] %v2444
      %2509 = vst [vmem:[%s249 + $0x78] sm:$0xff] %v2445
      %2510 = vst [vmem:[%s249 + $0x80] sm:$0xff] %v2446
      %2511 = vst [vmem:[%s249 + $0x88] sm:$0xff] %v2447
      %2512 = vst [vmem:[%s249 + $0x90] sm:$0xff] %v2448
      %2513 = vst [vmem:[%s249 + $0x98] sm:$0xff] %v2449
      %2514 = vst [vmem:[%s249 + $0xa0] sm:$0xff] %v2450
      %2515 = vst [vmem:[%s249 + $0xa8] sm:$0xff] %v2451
      %2516 = vst [vmem:[%s249 + $0xb0] sm:$0xff] %v2452
      %2517 = vst [vmem:[%s249 + $0xb8] sm:$0xff] %v2453
      %2518 = vst [vmem:[%s249 + $0xc0] sm:$0xff] %v2454
      %2519 = vst [vmem:[%s249 + $0xc8] sm:$0xff] %v2455
      %2520 = vst [vmem:[%s249 + $0xd0] sm:$0xff] %v2456
      %2521 = vst [vmem:[%s249 + $0xd8] sm:$0xff] %v2457
      %2522 = vst [vmem:[%s249 + $0xe0] sm:$0xff] %v2458
      %2523 = vst [vmem:[%s249 + $0xe8] sm:$0xff] %v2459
      %2524 = vst [vmem:[%s249 + $0xf0] sm:$0xff] %v2460
      %2525 = vst [vmem:[%s249 + $0xf8] sm:$0xff] %v2461
      %2526 = vst [vmem:[%s249 + $0x100] sm:$0xff] %v2462
      %2527 = vst [vmem:[%s249 + $0x108] sm:$0xff] %v2463
      %2528 = vst [vmem:[%s249 + $0x110] sm:$0xff] %v2464
      %2529 = vst [vmem:[%s249 + $0x118] sm:$0xff] %v2465
      %2530 = vst [vmem:[%s249 + $0x120] sm:$0xff] %v2466
      %2531 = vst [vmem:[%s249 + $0x128] sm:$0xff] %v2467
      %2532 = vst [vmem:[%s249 + $0x130] sm:$0xff] %v2468
      %2533 = vst [vmem:[%s249 + $0x138] sm:$0xff] %v2469
      %2534 = vst [vmem:[%s249 + $0x140] sm:$0xff] %v2470
      %2535 = vst [vmem:[%s249 + $0x148] sm:$0xff] %v2471
      %2536 = vst [vmem:[%s249 + $0x150] sm:$0xff] %v2472
      %2537 = vst [vmem:[%s249 + $0x158] sm:$0xff] %v2473
      %2538 = vst [vmem:[%s249 + $0x160] sm:$0xff] %v2474
      %2539 = vst [vmem:[%s249 + $0x168] sm:$0xff] %v2475
      %2540 = vst [vmem:[%s249 + $0x170] sm:$0xff] %v2476
      %2541 = vst [vmem:[%s249 + $0x178] sm:$0xff] %v2477
      %2542 = vst [vmem:[%s249 + $0x180] sm:$0xff] %v2478
      %2543 = vst [vmem:[%s249 + $0x188] sm:$0xff] %v2479
      %2544 = vst [vmem:[%s249 + $0x190] sm:$0xff] %v2480
      %2545 = vst [vmem:[%s249 + $0x198] sm:$0xff] %v2481
      %2546 = vst [vmem:[%s249 + $0x1a0] sm:$0xff] %v2482
      %2547 = vst [vmem:[%s249 + $0x1a8] sm:$0xff] %v2483
      %2548 = vst [vmem:[%s249 + $0x1b0] sm:$0xff] %v2484
      %2549 = vst [vmem:[%s249 + $0x1b8] sm:$0xff] %v2485
      %2550 = vst [vmem:[%s249 + $0x1c0] sm:$0xff] %v2486
      %2551 = vst [vmem:[%s249 + $0x1c8] sm:$0xff] %v2487
      %2552 = vst [vmem:[%s249 + $0x1d0] sm:$0xff] %v2488
      %2553 = vst [vmem:[%s249 + $0x1d8] sm:$0xff] %v2489
      %2554 = vst [vmem:[%s249 + $0x1e0] sm:$0xff] %v2490
      %2555 = vst [vmem:[%s249 + $0x1e8] sm:$0xff] %v2491
      %2556 = vst [vmem:[%s249 + $0x1f0] sm:$0xff] %v2492
      %2557 = vst [vmem:[%s249 + $0x1f8] sm:$0xff] %v2493
      %p2558 = scmp.eq.s32.totalorder %s21, 3
      // Predicated region
      $region37: #{detection_backbone_forward.5} parent=31 // pred_check
        %p2559 = pneg %p2558
      $region38: #{detection_backbone_forward.5} parent=31 // pred_check_branch
        %2561 = sbr.rel (%p2559) target = $region40
      $region39: #{detection_backbone_forward.5} parent=31 // pred_region
        %v2562 = vld [vmem:[%s249] sm:$0xff]
        %v2563 = vld [vmem:[%s249 + $0x8] sm:$0xff]
        %v2564 = vld [vmem:[%s249 + $0x10] sm:$0xff]
        %v2565 = vld [vmem:[%s249 + $0x18] sm:$0xff]
        %v2566 = vld [vmem:[%s249 + $0x20] sm:$0xff]
        %v2567 = vld [vmem:[%s249 + $0x28] sm:$0xff]
        %v2568 = vld [vmem:[%s249 + $0x30] sm:$0xff]
        %v2569 = vld [vmem:[%s249 + $0x38] sm:$0xff]
        %v2570 = vld [vmem:[%s249 + $0x40] sm:$0xff]
        %v2571 = vld [vmem:[%s249 + $0x48] sm:$0xff]
        %v2572 = vld [vmem:[%s249 + $0x50] sm:$0xff]
        %v2573 = vld [vmem:[%s249 + $0x58] sm:$0xff]
        %v2574 = vld [vmem:[%s249 + $0x60] sm:$0xff]
        %v2575 = vld [vmem:[%s249 + $0x68] sm:$0xff]
        %v2576 = vld [vmem:[%s249 + $0x70] sm:$0xff]
        %v2577 = vld [vmem:[%s249 + $0x78] sm:$0xff]
        %v2578 = vld [vmem:[%s249 + $0x80] sm:$0xff]
        %v2579 = vld [vmem:[%s249 + $0x88] sm:$0xff]
        %v2580 = vld [vmem:[%s249 + $0x90] sm:$0xff]
        %v2581 = vld [vmem:[%s249 + $0x98] sm:$0xff]
        %v2582 = vld [vmem:[%s249 + $0xa0] sm:$0xff]
        %v2583 = vld [vmem:[%s249 + $0xa8] sm:$0xff]
        %v2584 = vld [vmem:[%s249 + $0xb0] sm:$0xff]
        %v2585 = vld [vmem:[%s249 + $0xb8] sm:$0xff]
        %v2586 = vld [vmem:[%s249 + $0xc0] sm:$0xff]
        %v2587 = vld [vmem:[%s249 + $0xc8] sm:$0xff]
        %v2588 = vld [vmem:[%s249 + $0xd0] sm:$0xff]
        %v2589 = vld [vmem:[%s249 + $0xd8] sm:$0xff]
        %v2590 = vld [vmem:[%s249 + $0xe0] sm:$0xff]
        %v2591 = vld [vmem:[%s249 + $0xe8] sm:$0xff]
        %v2592 = vld [vmem:[%s249 + $0xf0] sm:$0xff]
        %v2593 = vld [vmem:[%s249 + $0xf8] sm:$0xff]
        %v2594 = vld [vmem:[%s249 + $0x100] sm:$0xff]
        %v2595 = vld [vmem:[%s249 + $0x108] sm:$0xff]
        %v2596 = vld [vmem:[%s249 + $0x110] sm:$0xff]
        %v2597 = vld [vmem:[%s249 + $0x118] sm:$0xff]
        %v2598 = vld [vmem:[%s249 + $0x120] sm:$0xff]
        %v2599 = vld [vmem:[%s249 + $0x128] sm:$0xff]
        %v2600 = vld [vmem:[%s249 + $0x130] sm:$0xff]
        %v2601 = vld [vmem:[%s249 + $0x138] sm:$0xff]
        %v2602 = vld [vmem:[%s249 + $0x140] sm:$0xff]
        %v2603 = vld [vmem:[%s249 + $0x148] sm:$0xff]
        %v2604 = vld [vmem:[%s249 + $0x150] sm:$0xff]
        %v2605 = vld [vmem:[%s249 + $0x158] sm:$0xff]
        %v2606 = vld [vmem:[%s249 + $0x160] sm:$0xff]
        %v2607 = vld [vmem:[%s249 + $0x168] sm:$0xff]
        %v2608 = vld [vmem:[%s249 + $0x170] sm:$0xff]
        %v2609 = vld [vmem:[%s249 + $0x178] sm:$0xff]
        %v2610 = vld [vmem:[%s249 + $0x180] sm:$0xff]
        %v2611 = vld [vmem:[%s249 + $0x188] sm:$0xff]
        %v2612 = vld [vmem:[%s249 + $0x190] sm:$0xff]
        %v2613 = vld [vmem:[%s249 + $0x198] sm:$0xff]
        %v2614 = vld [vmem:[%s249 + $0x1a0] sm:$0xff]
        %v2615 = vld [vmem:[%s249 + $0x1a8] sm:$0xff]
        %v2616 = vld [vmem:[%s249 + $0x1b0] sm:$0xff]
        %v2617 = vld [vmem:[%s249 + $0x1b8] sm:$0xff]
        %v2618 = vld [vmem:[%s249 + $0x1c0] sm:$0xff]
        %v2619 = vld [vmem:[%s249 + $0x1c8] sm:$0xff]
        %v2620 = vld [vmem:[%s249 + $0x1d0] sm:$0xff]
        %v2621 = vld [vmem:[%s249 + $0x1d8] sm:$0xff]
        %v2622 = vld [vmem:[%s249 + $0x1e0] sm:$0xff]
        %v2623 = vld [vmem:[%s249 + $0x1e8] sm:$0xff]
        %v2624 = vld [vmem:[%s249 + $0x1f0] sm:$0xff]
        %v2625 = vld [vmem:[%s249 + $0x1f8] sm:$0xff]
        %v2626 = vmul.f32 %v2562, 0.25
        %v2627 = vmul.f32 %v2563, 0.25
        %v2628 = vmul.f32 %v2564, 0.25
        %v2629 = vmul.f32 %v2565, 0.25
        %v2630 = vmul.f32 %v2566, 0.25
        %v2631 = vmul.f32 %v2567, 0.25
        %v2632 = vmul.f32 %v2568, 0.25
        %v2633 = vmul.f32 %v2569, 0.25
        %v2634 = vmul.f32 %v2570, 0.25
        %v2635 = vmul.f32 %v2571, 0.25
        %v2636 = vmul.f32 %v2572, 0.25
        %v2637 = vmul.f32 %v2573, 0.25
        %v2638 = vmul.f32 %v2574, 0.25
        %v2639 = vmul.f32 %v2575, 0.25
        %v2640 = vmul.f32 %v2576, 0.25
        %v2641 = vmul.f32 %v2577, 0.25
        %v2642 = vmul.f32 %v2578, 0.25
        %v2643 = vmul.f32 %v2579, 0.25
        %v2644 = vmul.f32 %v2580, 0.25
        %v2645 = vmul.f32 %v2581, 0.25
        %v2646 = vmul.f32 %v2582, 0.25
        %v2647 = vmul.f32 %v2583, 0.25
        %v2648 = vmul.f32 %v2584, 0.25
        %v2649 = vmul.f32 %v2585, 0.25
        %v2650 = vmul.f32 %v2586, 0.25
        %v2651 = vmul.f32 %v2587, 0.25
        %v2652 = vmul.f32 %v2588, 0.25
        %v2653 = vmul.f32 %v2589, 0.25
        %v2654 = vmul.f32 %v2590, 0.25
        %v2655 = vmul.f32 %v2591, 0.25
        %v2656 = vmul.f32 %v2592, 0.25
        %v2657 = vmul.f32 %v2593, 0.25
        %v2658 = vmul.f32 %v2594, 0.25
        %v2659 = vmul.f32 %v2595, 0.25
        %v2660 = vmul.f32 %v2596, 0.25
        %v2661 = vmul.f32 %v2597, 0.25
        %v2662 = vmul.f32 %v2598, 0.25
        %v2663 = vmul.f32 %v2599, 0.25
        %v2664 = vmul.f32 %v2600, 0.25
        %v2665 = vmul.f32 %v2601, 0.25
        %v2666 = vmul.f32 %v2602, 0.25
        %v2667 = vmul.f32 %v2603, 0.25
        %v2668 = vmul.f32 %v2604, 0.25
        %v2669 = vmul.f32 %v2605, 0.25
        %v2670 = vmul.f32 %v2606, 0.25
        %v2671 = vmul.f32 %v2607, 0.25
        %v2672 = vmul.f32 %v2608, 0.25
        %v2673 = vmul.f32 %v2609, 0.25
        %v2674 = vmul.f32 %v2610, 0.25
        %v2675 = vmul.f32 %v2611, 0.25
        %v2676 = vmul.f32 %v2612, 0.25
        %v2677 = vmul.f32 %v2613, 0.25
        %v2678 = vmul.f32 %v2614, 0.25
        %v2679 = vmul.f32 %v2615, 0.25
        %v2680 = vmul.f32 %v2616, 0.25
        %v2681 = vmul.f32 %v2617, 0.25
        %v2682 = vmul.f32 %v2618, 0.25
        %v2683 = vmul.f32 %v2619, 0.25
        %v2684 = vmul.f32 %v2620, 0.25
        %v2685 = vmul.f32 %v2621, 0.25
        %v2686 = vmul.f32 %v2622, 0.25
        %v2687 = vmul.f32 %v2623, 0.25
        %v2688 = vmul.f32 %v2624, 0.25
        %v2689 = vmul.f32 %v2625, 0.25
        %2690 = vst [vmem:[%s249] sm:$0xff] %v2626
        %2691 = vst [vmem:[%s249 + $0x8] sm:$0xff] %v2627
        %2692 = vst [vmem:[%s249 + $0x10] sm:$0xff] %v2628
        %2693 = vst [vmem:[%s249 + $0x18] sm:$0xff] %v2629
        %2694 = vst [vmem:[%s249 + $0x20] sm:$0xff] %v2630
        %2695 = vst [vmem:[%s249 + $0x28] sm:$0xff] %v2631
        %2696 = vst [vmem:[%s249 + $0x30] sm:$0xff] %v2632
        %2697 = vst [vmem:[%s249 + $0x38] sm:$0xff] %v2633
        %2698 = vst [vmem:[%s249 + $0x40] sm:$0xff] %v2634
        %2699 = vst [vmem:[%s249 + $0x48] sm:$0xff] %v2635
        %2700 = vst [vmem:[%s249 + $0x50] sm:$0xff] %v2636
        %2701 = vst [vmem:[%s249 + $0x58] sm:$0xff] %v2637
        %2702 = vst [vmem:[%s249 + $0x60] sm:$0xff] %v2638
        %2703 = vst [vmem:[%s249 + $0x68] sm:$0xff] %v2639
        %2704 = vst [vmem:[%s249 + $0x70] sm:$0xff] %v2640
        %2705 = vst [vmem:[%s249 + $0x78] sm:$0xff] %v2641
        %2706 = vst [vmem:[%s249 + $0x80] sm:$0xff] %v2642
        %2707 = vst [vmem:[%s249 + $0x88] sm:$0xff] %v2643
        %2708 = vst [vmem:[%s249 + $0x90] sm:$0xff] %v2644
        %2709 = vst [vmem:[%s249 + $0x98] sm:$0xff] %v2645
        %2710 = vst [vmem:[%s249 + $0xa0] sm:$0xff] %v2646
        %2711 = vst [vmem:[%s249 + $0xa8] sm:$0xff] %v2647
        %2712 = vst [vmem:[%s249 + $0xb0] sm:$0xff] %v2648
        %2713 = vst [vmem:[%s249 + $0xb8] sm:$0xff] %v2649
        %2714 = vst [vmem:[%s249 + $0xc0] sm:$0xff] %v2650
        %2715 = vst [vmem:[%s249 + $0xc8] sm:$0xff] %v2651
        %2716 = vst [vmem:[%s249 + $0xd0] sm:$0xff] %v2652
        %2717 = vst [vmem:[%s249 + $0xd8] sm:$0xff] %v2653
        %2718 = vst [vmem:[%s249 + $0xe0] sm:$0xff] %v2654
        %2719 = vst [vmem:[%s249 + $0xe8] sm:$0xff] %v2655
        %2720 = vst [vmem:[%s249 + $0xf0] sm:$0xff] %v2656
        %2721 = vst [vmem:[%s249 + $0xf8] sm:$0xff] %v2657
        %2722 = vst [vmem:[%s249 + $0x100] sm:$0xff] %v2658
        %2723 = vst [vmem:[%s249 + $0x108] sm:$0xff] %v2659
        %2724 = vst [vmem:[%s249 + $0x110] sm:$0xff] %v2660
        %2725 = vst [vmem:[%s249 + $0x118] sm:$0xff] %v2661
        %2726 = vst [vmem:[%s249 + $0x120] sm:$0xff] %v2662
        %2727 = vst [vmem:[%s249 + $0x128] sm:$0xff] %v2663
        %2728 = vst [vmem:[%s249 + $0x130] sm:$0xff] %v2664
        %2729 = vst [vmem:[%s249 + $0x138] sm:$0xff] %v2665
        %2730 = vst [vmem:[%s249 + $0x140] sm:$0xff] %v2666
        %2731 = vst [vmem:[%s249 + $0x148] sm:$0xff] %v2667
        %2732 = vst [vmem:[%s249 + $0x150] sm:$0xff] %v2668
        %2733 = vst [vmem:[%s249 + $0x158] sm:$0xff] %v2669
        %2734 = vst [vmem:[%s249 + $0x160] sm:$0xff] %v2670
        %2735 = vst [vmem:[%s249 + $0x168] sm:$0xff] %v2671
        %2736 = vst [vmem:[%s249 + $0x170] sm:$0xff] %v2672
        %2737 = vst [vmem:[%s249 + $0x178] sm:$0xff] %v2673
        %2738 = vst [vmem:[%s249 + $0x180] sm:$0xff] %v2674
        %2739 = vst [vmem:[%s249 + $0x188] sm:$0xff] %v2675
        %2740 = vst [vmem:[%s249 + $0x190] sm:$0xff] %v2676
        %2741 = vst [vmem:[%s249 + $0x198] sm:$0xff] %v2677
        %2742 = vst [vmem:[%s249 + $0x1a0] sm:$0xff] %v2678
        %2743 = vst [vmem:[%s249 + $0x1a8] sm:$0xff] %v2679
        %2744 = vst [vmem:[%s249 + $0x1b0] sm:$0xff] %v2680
        %2745 = vst [vmem:[%s249 + $0x1b8] sm:$0xff] %v2681
        %2746 = vst [vmem:[%s249 + $0x1c0] sm:$0xff] %v2682
        %2747 = vst [vmem:[%s249 + $0x1c8] sm:$0xff] %v2683
        %2748 = vst [vmem:[%s249 + $0x1d0] sm:$0xff] %v2684
        %2749 = vst [vmem:[%s249 + $0x1d8] sm:$0xff] %v2685
        %2750 = vst [vmem:[%s249 + $0x1e0] sm:$0xff] %v2686
        %2751 = vst [vmem:[%s249 + $0x1e8] sm:$0xff] %v2687
        %2752 = vst [vmem:[%s249 + $0x1f0] sm:$0xff] %v2688
        %2753 = vst [vmem:[%s249 + $0x1f8] sm:$0xff] %v2689
      $region40: #{detection_backbone_forward.5} parent=31 // pred_fallthru
        _
      %s2754 = smul.u32 64, %s20
      %p2755 = scmp.lt.s32.totalorder %s21, 3
      %s2756 = scalar_select %p2755, %s21, 3
      %p2757 = scmp.lt.s32.totalorder %s2754, 63
      %s2758 = scalar_select %p2757, %s2754, 63
      %s2759 = smul.addr %s2756, 64
      %s2760 = sadd.s32 %s2758, %s2759
      %s2761 = smul.addr %s2760, 4
      %s2762 = scalar_lea.vmem %s3, %s2761
      %s2763 = smul.u32 64, %s20
      %p2764 = scmp.lt.s32.totalorder %s2763, 63
      %s2765 = scalar_select %p2764, %s2763, 63
      %s2766 = smul.addr %s2765, 8
      %s2767 = scalar_lea.vmem %s4, %s2766
      // Predicated region
      $region41: #{detection_backbone_forward.5} parent=31 // pred_check
        %p2768 = pneg %p118
      $region42: #{detection_backbone_forward.5} parent=31 // pred_check_branch
        %2770 = sbr.rel (%p2768) target = $region44
      $region43: #{detection_backbone_forward.5} parent=31 // pred_region
        %s2771 = smul.u32 64, %s20
      $region44: #{detection_backbone_forward.5} parent=31 // pred_fallthru
        _
      // Predicated region
      $region45: #{detection_backbone_forward.5} parent=31 // pred_check
        %p2772 = pneg %p144
      $region46: #{detection_backbone_forward.5} parent=31 // pred_check_branch
        %2774 = sbr.rel (%p2772) target = $region48
      $region47: #{detection_backbone_forward.5} parent=31 // pred_region
        %s2775 = smul.u32 64, %s20
      $region48: #{detection_backbone_forward.5} parent=31 // pred_fallthru
        _
      // Predicated region
      $region49: #{detection_backbone_forward.5} parent=31 // pred_check
        %p2776 = pneg %p144
      $region50: #{detection_backbone_forward.5} parent=31 // pred_check_branch
        %2778 = sbr.rel (%p2776) target = $region52
      $region51: #{detection_backbone_forward.5} parent=31 // pred_region
        %s2779 = smul.u32 64, %s20
        %p2780 = scmp.lt.s32.totalorder %s2779, 63
        %s2781 = scalar_select %p2780, %s2779, 63
        %s2782 = smul.addr %s2781, 8
        %s2783 = scalar_lea.vmem %s4, %s2782
      $region52: #{detection_backbone_forward.5} parent=31 // pred_fallthru
        _
    $region32: #{detection_backbone_forward.5} parent=5 // pred_fallthru
      _
    %p2784 = scmp.le.s32.totalorder 2, %s11
    // Predicated region
    $region53: #{detection_backbone_forward.5} parent=5 // pred_check
      %p2785 = pneg %p2784
    $region54: #{detection_backbone_forward.5} parent=5 // pred_check_branch
      %2787 = sbr.rel (%p2785) target = $region56
    $region55: #{detection_backbone_forward.5} parent=5 // pred_region
      %s2788 = ssub.s32 %s11, 2
      // Predicated region
      $region57: #{detection_backbone_forward.5} parent=55 // pred_check
        %p2789 = pneg %p124
      $region58: #{detection_backbone_forward.5} parent=55 // pred_check_branch
        %2791 = sbr.rel (%p2789) target = $region60
      $region59: #{detection_backbone_forward.5} parent=55 // pred_region
        %s2792 = smul.u32 64, %s22
        %p2793 = scmp.lt.s32.totalorder %s23, 3
        %s2794 = scalar_select %p2793, %s23, 3
        %p2795 = scmp.lt.s32.totalorder %s2792, 63
        %s2796 = scalar_select %p2795, %s2792, 63
        %s2797 = smul.addr %s2794, 64
        %s2798 = sadd.s32 %s2796, %s2797
        %s2799 = smul.addr %s2798, 4
        %s2800 = scalar_lea.vmem %s3, %s2799
      $region60: #{detection_backbone_forward.5} parent=55 // pred_fallthru
        _
    $region56: #{detection_backbone_forward.5} parent=5 // pred_fallthru
      _
  $region6: #{detection_backbone_forward.5} parent=0 // loop_footer
    %s15 = sadd.s32 1, %s11
  $region7: #{detection_backbone_forward.5} parent=0 // loop_footer_branch
    %10 = sbr.rel target = $region3
  $region8: #{detection_backbone_forward.5} parent=0 // loop_exit
    _

// kernel: detection_backbone_forward.6
$region0: #{detection_backbone_forward.6}
  #allocation0 [shape = 'u32[]', space=smem, size = 0x4, offset = 0x4, fixed_abs, tag = 'smem constant byte address 0x4 - core index']
  #allocation1 [shape = 'u32[72,128]{1,0:T(1,128)}', space=vmem, size = 0x9000, scoped, tag = 'internal scratch']
  #allocation2 [shape = 'f32[128,128]{1,0:T(8,128)}', space=vmem, size = 0x10000, scoped, tag = 'scratch operand']
  #allocation3 [shape = 'f32[128,128]{1,0:T(8,128)}', space=vmem, size = 0x10000, scoped, tag = 'scratch operand']
  %s0 = inlined_call_operand.vmem [shape: bf16[4,128,72], index: 0, kind: input, shape index: {}]
  %s1 = inlined_call_operand.vmem [shape: bf16[72,128], index: 1, kind: input, shape index: {}]
  %s2 = inlined_call_operand.vmem [shape: f32[1,128], index: 2, kind: input, shape index: {}]
  %s3 = inlined_call_operand.vmem [shape: bf16[4,128,128], index: 3, kind: output, shape index: {0}]
  %s4 = inlined_call_operand.hbm [shape: f32[128,128], index: 4, kind: output, shape index: {1}]
  %5 = xla_tuple %s3, %s4
  %s6 = sld [smem:[#allocation0]]
  $region61: #{detection_backbone_forward.6} parent=0
    _
  %s8 = ssub.s32 1, %s6
  %s9 = scalar_select 0, %s8, %s6
  $region1: #{detection_backbone_forward.6} parent=0
    #allocation4 [shape = 'u8[65536]{0}', space=vmem, size = 0x10000, scoped, tag = 'output window, operand 1, single buffered']
    #allocation5 [shape = 's32[2]{0}', space=sflag, size = 0x8, scoped, tag = 'scoped memory for detection_backbone_forward.6']
    %10 = vsyncpa [#allocation5], 0
    loop: start=0, step=1, limit=6
    $region2: #{detection_backbone_forward.6} parent=1 // loop_pre_header
      _
    $region3: #{detection_backbone_forward.6} parent=1 // loop_header
      %s12 = sphi 0, %s16
      %p13 = scmp.ge.s32.totalorder %s12, 6
      %s19 = sphi 0, %s31
      %s20 = sphi 0, %s27
      %s21 = sphi 0, %s19
      %s22 = sphi 0, %s20
      %s23 = sphi 0, %s21
      %s24 = sphi 0, %s22
      %s36 = sphi 0, %s38
      %s39 = sphi 0, %s36
      %s40 = sphi 0, %s39
      %s56 = sphi 0, %s40
      %s60 = sphi 0, %s60
      %s62 = sphi 0, %s60
      %s63 = sphi 0, %s62
      %s77 = sphi 0, %s63
      %s81 = sphi 0, %s81
      %s83 = sphi 0, %s81
      %s84 = sphi 0, %s83
      %s98 = sphi 0, %s84
      %s106 = sphi 0, %s108
      %s109 = sphi 0, %s106
      %s110 = sphi 0, %s109
      %s126 = sphi 0, %s110
      %s132 = sphi 0, %s134
      %s135 = sphi 0, %s132
      %s136 = sphi 0, %s135
      %s152 = sphi 0, %s136
    $region4: #{detection_backbone_forward.6} parent=1 // loop_header_branch
      %15 = sbr.rel (%p13) target = $region8
    $region5: #{detection_backbone_forward.6} parent=1 // loop_body
      %s17 = ssub.s32 %s12, 1
      %s18 = ssub.s32 %s12, 2
      %s25 = sadd.s32 1, %s20
      %p26 = scmp.ge.s32.totalorder %s25, 4
      %s27 = scalar_select %p26, 0, %s25
      %s28 = sadd.s32 1, %s19
      %s29 = scalar_select %p26, %s28, %s19
      %p30 = scmp.ge.s32.totalorder %s29, 1
      %s31 = scalar_select %p30, 0, %s29
      %s32 = ssub.s32 %s20, %s27
      %s33 = ssub.s32 %s19, %s31
      %s34 = sor.u32 %s32, %s33
      %p35 = scmp.eq.s32.totalorder %s34, 0
      %s37 = sadd.s32 %s36, 1
      %s38 = scalar_select %p35, %s36, %s37
      %p41 = pneg %p35
      %p42 = scmp.eq.s32.totalorder %s12, 3
      %p43 = por %p41, %p42
      %p44 = scmp.ne.s32.totalorder %s36, %s39
      %p45 = scmp.eq.s32.totalorder %s12, 0
      %p46 = por %p44, %p45
      %p47 = scmp.ne.s32.totalorder %s36, %s39
      %p48 = scmp.eq.s32.totalorder %s17, 3
      %p49 = por %p47, %p48
      %p50 = scmp.ne.s32.totalorder %s39, %s40
      %p51 = scmp.eq.s32.totalorder %s17, 0
      %p52 = por %p50, %p51
      %p53 = scmp.ne.s32.totalorder %s39, %s40
      %p54 = scmp.eq.s32.totalorder %s18, 3
      %p55 = por %p53, %p54
      %p57 = scmp.ne.s32.totalorder %s40, %s56
      %p58 = scmp.eq.s32.totalorder %s18, 0
      %p59 = por %p57, %p58
      %s61 = sadd.s32 %s60, 1
      %p64 = scmp.eq.s32.totalorder %s12, 3
      %p65 = scmp.ne.s32.totalorder %s60, %s62
      %p66 = scmp.eq.s32.totalorder %s12, 0
      %p67 = por %p65, %p66
      %p68 = scmp.ne.s32.totalorder %s60, %s62
      %p69 = scmp.eq.s32.totalorder %s17, 3
      %p70 = por %p68, %p69
      %p71 = scmp.ne.s32.totalorder %s62, %s63
      %p72 = scmp.eq.s32.totalorder %s17, 0
      %p73 = por %p71, %p72
      %p74 = scmp.ne.s32.totalorder %s62, %s63
      %p75 = scmp.eq.s32.totalorder %s18, 3
      %p76 = por %p74, %p75
      %p78 = scmp.ne.s32.totalorder %s63, %s77
      %p79 = scmp.eq.s32.totalorder %s18, 0
      %p80 = por %p78, %p79
      %s82 = sadd.s32 %s81, 1
      %p85 = scmp.eq.s32.totalorder %s12, 3
      %p86 = scmp.ne.s32.totalorder %s81, %s83
      %p87 = scmp.eq.s32.totalorder %s12, 0
      %p88 = por %p86, %p87
      %p89 = scmp.ne.s32.totalorder %s81, %s83
      %p90 = scmp.eq.s32.totalorder %s17, 3
      %p91 = por %p89, %p90
      %p92 = scmp.ne.s32.totalorder %s83, %s84
      %p93 = scmp.eq.s32.totalorder %s17, 0
      %p94 = por %p92, %p93
      %p95 = scmp.ne.s32.totalorder %s83, %s84
      %p96 = scmp.eq.s32.totalorder %s18, 3
      %p97 = por %p95, %p96
      %p99 = scmp.ne.s32.totalorder %s84, %s98
      %p100 = scmp.eq.s32.totalorder %s18, 0
      %p101 = por %p99, %p100
      %s102 = ssub.s32 %s20, %s27
      %s103 = ssub.s32 %s19, %s31
      %s104 = sor.u32 %s102, %s103
      %p105 = scmp.eq.s32.totalorder %s104, 0
      %s107 = sadd.s32 %s106, 1
      %s108 = scalar_select %p105, %s106, %s107
      %p111 = pneg %p105
      %p112 = scmp.eq.s32.totalorder %s12, 3
      %p113 = por %p111, %p112
      %p114 = scmp.ne.s32.totalorder %s106, %s109
      %p115 = scmp.eq.s32.totalorder %s12, 0
      %p116 = por %p114, %p115
      %p117 = scmp.ne.s32.totalorder %s106, %s109
      %p118 = scmp.eq.s32.totalorder %s17, 3
      %p119 = por %p117, %p118
      %p120 = scmp.ne.s32.totalorder %s109, %s110
      %p121 = scmp.eq.s32.totalorder %s17, 0
      %p122 = por %p120, %p121
      %p123 = scmp.ne.s32.totalorder %s109, %s110
      %p124 = scmp.eq.s32.totalorder %s18, 3
      %p125 = por %p123, %p124
      %p127 = scmp.ne.s32.totalorder %s110, %s126
      %p128 = scmp.eq.s32.totalorder %s18, 0
      %p129 = por %p127, %p128
      %s130 = ssub.s32 %s19, %s31
      %p131 = scmp.eq.s32.totalorder %s130, 0
      %s133 = sadd.s32 %s132, 1
      %s134 = scalar_select %p131, %s132, %s133
      %p137 = pneg %p131
      %p138 = scmp.eq.s32.totalorder %s12, 3
      %p139 = por %p137, %p138
      %p140 = scmp.ne.s32.totalorder %s132, %s135
      %p141 = scmp.eq.s32.totalorder %s12, 0
      %p142 = por %p140, %p141
      %p143 = scmp.ne.s32.totalorder %s132, %s135
      %p144 = scmp.eq.s32.totalorder %s17, 3
      %p145 = por %p143, %p144
      %p146 = scmp.ne.s32.totalorder %s135, %s136
      %p147 = scmp.eq.s32.totalorder %s17, 0
      %p148 = por %p146, %p147
      %p149 = scmp.ne.s32.totalorder %s135, %s136
      %p150 = scmp.eq.s32.totalorder %s18, 3
      %p151 = por %p149, %p150
      %p153 = scmp.ne.s32.totalorder %s136, %s152
      %p154 = scmp.eq.s32.totalorder %s18, 0
      %p155 = por %p153, %p154
      %p156 = scmp.le.s32.totalorder 1, %s12
      %p157 = scmp.lt.s32.totalorder %s12, 5
      %p158 = pnand %p156, %p157
      %p159 = pneg %p158
      // Predicated region
      $region9: #{detection_backbone_forward.6} parent=5 // pred_check
        _
      $region10: #{detection_backbone_forward.6} parent=5 // pred_check_branch
        %161 = sbr.rel (%p158) target = $region12
      $region11: #{detection_backbone_forward.6} parent=5 // pred_region
        %s162 = ssub.s32 %s12, 1
        // Predicated region
        $region13: #{detection_backbone_forward.6} parent=11 // pred_check
          %p163 = pneg %p73
        $region14: #{detection_backbone_forward.6} parent=11 // pred_check_branch
          %165 = sbr.rel (%p163) target = $region16
        $region15: #{detection_backbone_forward.6} parent=11 // pred_region
          _
        $region16: #{detection_backbone_forward.6} parent=11 // pred_fallthru
          _
        // Predicated region
        $region17: #{detection_backbone_forward.6} parent=11 // pred_check
          %p166 = pneg %p94
        $region18: #{detection_backbone_forward.6} parent=11 // pred_check_branch
          %168 = sbr.rel (%p166) target = $region20
        $region19: #{detection_backbone_forward.6} parent=11 // pred_region
          _
        $region20: #{detection_backbone_forward.6} parent=11 // pred_fallthru
          _
      $region12: #{detection_backbone_forward.6} parent=5 // pred_fallthru
        _
      %p169 = scmp.lt.s32.totalorder %s12, 4
      // Predicated region
      $region21: #{detection_backbone_forward.6} parent=5 // pred_check
        %p170 = pneg %p169
      $region22: #{detection_backbone_forward.6} parent=5 // pred_check_branch
        %172 = sbr.rel (%p170) target = $region24
      $region23: #{detection_backbone_forward.6} parent=5 // pred_region
        // Predicated region
        $region25: #{detection_backbone_forward.6} parent=23 // pred_check
          %p173 = pneg %p46
        $region26: #{detection_backbone_forward.6} parent=23 // pred_check_branch
          %175 = sbr.rel (%p173) target = $region28
        $region27: #{detection_backbone_forward.6} parent=23 // pred_region
          %s176 = smul.u32 16, %s19
          %p177 = scmp.lt.s32.totalorder %s20, 3
          %s178 = scalar_select %p177, %s20, 3
          %p179 = scmp.lt.s32.totalorder %s176, 15
          %s180 = scalar_select %p179, %s176, 15
          %s181 = smul.addr %s178, 16
          %s182 = sadd.s32 %s180, %s181
          %s183 = smul.addr %s182, 4
          %s184 = scalar_lea.vmem %s0, %s183
          %s185 = smul.u32 16, %s19
        $region28: #{detection_backbone_forward.6} parent=23 // pred_fallthru
          _
      $region24: #{detection_backbone_forward.6} parent=5 // pred_fallthru
        _
      %p186 = scmp.le.s32.totalorder 1, %s12
      %p187 = scmp.lt.s32.totalorder %s12, 5
      %p188 = pnand %p186, %p187
      %p189 = pneg %p188
      // Predicated region
      $region29: #{detection_backbone_forward.6} parent=5 // pred_check
        _
      $region30: #{detection_backbone_forward.6} parent=5 // pred_check_branch
        %191 = sbr.rel (%p188) target = $region32
      $region31: #{detection_backbone_forward.6} parent=5 // pred_region
        %s192 = ssub.s32 %s12, 1
        %s193 = smul.u32 16, %s21
        %p194 = scmp.lt.s32.totalorder %s22, 3
        %s195 = scalar_select %p194, %s22, 3
        %p196 = scmp.lt.s32.totalorder %s193, 15
        %s197 = scalar_select %p196, %s193, 15
        %s198 = smul.addr %s195, 16
        %s199 = sadd.s32 %s197, %s198
        %s200 = smul.addr %s199, 4
        %s201 = scalar_lea.vmem %s0, %s200
        %p202 = pneg %p52
        %p203 = pneg %p49
        %p204 = pneg %p73
        %p205 = pneg %p70
        %p206 = pneg %p94
        %p207 = pneg %p91
        %p208 = pneg %p122
        %p209 = pneg %p119
        %s210 = smul.u32 16, %s21
        %p211 = scmp.lt.s32.totalorder %s22, 3
        %s212 = scalar_select %p211, %s22, 3
        %p213 = scmp.lt.s32.totalorder %s210, 15
        %s214 = scalar_select %p213, %s210, 15
        %s215 = smul.addr %s212, 16
        %s216 = sadd.s32 %s214, %s215
        %s217 = smul.addr %s216, 4
        %s218 = scalar_lea.vmem %s3, %s217
        %p219 = pneg %p148
        %p220 = pneg %p145
        %s221 = smul.u32 16, %s21
        %p222 = scmp.lt.s32.totalorder %s22, 3
        %s223 = scalar_select %p222, %s22, 3
        %p224 = scmp.lt.s32.totalorder %s221, 15
        %s225 = scalar_select %p224, %s221, 15
        %s226 = smul.addr %s223, 16
        %s227 = sadd.s32 %s225, %s226
        %s228 = smul.addr %s227, 4
        %s229 = scalar_lea.vmem %s0, %s228
        %s230 = smul.u32 16, %s21
        %s231 = smul.u32 16, %s21
        %p232 = scmp.lt.s32.totalorder %s22, 3
        %s233 = scalar_select %p232, %s22, 3
        %p234 = scmp.lt.s32.totalorder %s231, 15
        %s235 = scalar_select %p234, %s231, 15
        %s236 = smul.addr %s233, 16
        %s237 = sadd.s32 %s235, %s236
        %s238 = smul.addr %s237, 4
        %s239 = scalar_lea.vmem %s3, %s238
        %s240 = smul.u32 16, %s21
        %s241 = smul.u32 16, %s21
        %p243 = scmp.eq.s32.totalorder %s22, 0
        // Predicated region
        $region33: #{detection_backbone_forward.6} parent=31 // pred_check
          %p244 = pneg %p243
        $region34: #{detection_backbone_forward.6} parent=31 // pred_check_branch
          %246 = sbr.rel (%p244) target = $region36
        $region35: #{detection_backbone_forward.6} parent=31 // pred_region
          %247 = vst [vmem:[#allocation2] sm:$0xff] 0.0
          %248 = vst [vmem:[#allocation2 + $0x8] sm:$0xff] 0.0
          %249 = vst [vmem:[#allocation2 + $0x10] sm:$0xff] 0.0
          %250 = vst [vmem:[#allocation2 + $0x18] sm:$0xff] 0.0
          %251 = vst [vmem:[#allocation2 + $0x20] sm:$0xff] 0.0
          %252 = vst [vmem:[#allocation2 + $0x28] sm:$0xff] 0.0
          %253 = vst [vmem:[#allocation2 + $0x30] sm:$0xff] 0.0
          %254 = vst [vmem:[#allocation2 + $0x38] sm:$0xff] 0.0
          %255 = vst [vmem:[#allocation2 + $0x40] sm:$0xff] 0.0
          %256 = vst [vmem:[#allocation2 + $0x48] sm:$0xff] 0.0
          %257 = vst [vmem:[#allocation2 + $0x50] sm:$0xff] 0.0
          %258 = vst [vmem:[#allocation2 + $0x58] sm:$0xff] 0.0
          %259 = vst [vmem:[#allocation2 + $0x60] sm:$0xff] 0.0
          %260 = vst [vmem:[#allocation2 + $0x68] sm:$0xff] 0.0
          %261 = vst [vmem:[#allocation2 + $0x70] sm:$0xff] 0.0
          %262 = vst [vmem:[#allocation2 + $0x78] sm:$0xff] 0.0
          %263 = vst [vmem:[#allocation3] sm:$0xff] 0.0
          %264 = vst [vmem:[#allocation3 + $0x8] sm:$0xff] 0.0
          %265 = vst [vmem:[#allocation3 + $0x10] sm:$0xff] 0.0
          %266 = vst [vmem:[#allocation3 + $0x18] sm:$0xff] 0.0
          %267 = vst [vmem:[#allocation3 + $0x20] sm:$0xff] 0.0
          %268 = vst [vmem:[#allocation3 + $0x28] sm:$0xff] 0.0
          %269 = vst [vmem:[#allocation3 + $0x30] sm:$0xff] 0.0
          %270 = vst [vmem:[#allocation3 + $0x38] sm:$0xff] 0.0
          %271 = vst [vmem:[#allocation3 + $0x40] sm:$0xff] 0.0
          %272 = vst [vmem:[#allocation3 + $0x48] sm:$0xff] 0.0
          %273 = vst [vmem:[#allocation3 + $0x50] sm:$0xff] 0.0
          %274 = vst [vmem:[#allocation3 + $0x58] sm:$0xff] 0.0
          %275 = vst [vmem:[#allocation3 + $0x60] sm:$0xff] 0.0
          %276 = vst [vmem:[#allocation3 + $0x68] sm:$0xff] 0.0
          %277 = vst [vmem:[#allocation3 + $0x70] sm:$0xff] 0.0
          %278 = vst [vmem:[#allocation3 + $0x78] sm:$0xff] 0.0
          %279 = vst [vmem:[#allocation4] sm:$0xff] 0.0
          %280 = vst [vmem:[#allocation4 + $0x8] sm:$0xff] 0.0
          %281 = vst [vmem:[#allocation4 + $0x10] sm:$0xff] 0.0
          %282 = vst [vmem:[#allocation4 + $0x18] sm:$0xff] 0.0
          %283 = vst [vmem:[#allocation4 + $0x20] sm:$0xff] 0.0
          %284 = vst [vmem:[#allocation4 + $0x28] sm:$0xff] 0.0
          %285 = vst [vmem:[#allocation4 + $0x30] sm:$0xff] 0.0
          %286 = vst [vmem:[#allocation4 + $0x38] sm:$0xff] 0.0
          %287 = vst [vmem:[#allocation4 + $0x40] sm:$0xff] 0.0
          %288 = vst [vmem:[#allocation4 + $0x48] sm:$0xff] 0.0
          %289 = vst [vmem:[#allocation4 + $0x50] sm:$0xff] 0.0
          %290 = vst [vmem:[#allocation4 + $0x58] sm:$0xff] 0.0
          %291 = vst [vmem:[#allocation4 + $0x60] sm:$0xff] 0.0
          %292 = vst [vmem:[#allocation4 + $0x68] sm:$0xff] 0.0
          %293 = vst [vmem:[#allocation4 + $0x70] sm:$0xff] 0.0
          %294 = vst [vmem:[#allocation4 + $0x78] sm:$0xff] 0.0
        $region36: #{detection_backbone_forward.6} parent=31 // pred_fallthru
          _
        %v295 = vld [vmem:[%s229] sm:$0xf]
        %v296 = vld [vmem:[%s229 + $0x4] sm:$0xf]
        %v297 = vld [vmem:[%s229 + $0x8] sm:$0xf]
        %v298 = vld [vmem:[%s229 + $0xc] sm:$0xf]
        %v299 = vld [vmem:[%s229 + $0x10] sm:$0xf]
        %v300 = vld [vmem:[%s229 + $0x14] sm:$0xf]
        %v301 = vld [vmem:[%s229 + $0x18] sm:$0xf]
        %v302 = vld [vmem:[%s229 + $0x1c] sm:$0xf]
        %v303 = vld [vmem:[%s229 + $0x20] sm:$0xf]
        %v304 = vld [vmem:[%s229 + $0x24] sm:$0xf]
        %v305 = vld [vmem:[%s229 + $0x28] sm:$0xf]
        %v306 = vld [vmem:[%s229 + $0x2c] sm:$0xf]
        %v307 = vld [vmem:[%s229 + $0x30] sm:$0xf]
        %v308 = vld [vmem:[%s229 + $0x34] sm:$0xf]
        %v309 = vld [vmem:[%s229 + $0x38] sm:$0xf]
        %v310 = vld [vmem:[%s229 + $0x3c] sm:$0xf]
        %v311 = vld [vmem:[%s1] sm:$0xf]
        %v312 = vld [vmem:[%s1 + $0x4] sm:$0xf]
        %v313 = vld [vmem:[%s1 + $0x8] sm:$0xf]
        %v314 = vld [vmem:[%s1 + $0xc] sm:$0xf]
        %v315 = vld [vmem:[%s1 + $0x10] sm:$0xf]
        %v316 = vld [vmem:[%s1 + $0x14] sm:$0xf]
        %v317 = vld [vmem:[%s1 + $0x18] sm:$0xf]
        %v318 = vld [vmem:[%s1 + $0x1c] sm:$0xf]
        %v319 = vld [vmem:[%s1 + $0x20] sm:$0xf]
        %v320 = vld [vmem:[%s2] sm:$0x1]
        %v322 = vperm.slane %v320, 0
        %v340 = vunpack.c.l.b16 %v295
        %v341 = vunpack.c.l.b16 %v296
        %v342 = vunpack.c.l.b16 %v297
        %v343 = vunpack.c.l.b16 %v298
        %v344 = vunpack.c.l.b16 %v299
        %v345 = vunpack.c.l.b16 %v300
        %v346 = vunpack.c.l.b16 %v301
        %v347 = vunpack.c.l.b16 %v302
        %v348 = vunpack.c.l.b16 %v303
        %v349 = vunpack.c.l.b16 %v304
        %v350 = vunpack.c.l.b16 %v305
        %v351 = vunpack.c.l.b16 %v306
        %v352 = vunpack.c.l.b16 %v307
        %v353 = vunpack.c.l.b16 %v308
        %v354 = vunpack.c.l.b16 %v309
        %v355 = vunpack.c.l.b16 %v310
        %v356 = vpack.c.b16 %v341, %v340
        %v357 = vpack.c.b16 %v343, %v342
        %v358 = vpack.c.b16 %v345, %v344
        %v359 = vpack.c.b16 %v347, %v346
        %v360 = vpack.c.b16 %v349, %v348
        %v361 = vpack.c.b16 %v351, %v350
        %v362 = vpack.c.b16 %v353, %v352
        %v363 = vpack.c.b16 %v355, %v354
        %v373 = vunpack.c.l.b16 %v311
        %v374 = vunpack.c.l.b16 %v312
        %v375 = vunpack.c.l.b16 %v313
        %v376 = vunpack.c.l.b16 %v314
        %v377 = vunpack.c.l.b16 %v315
        %v378 = vunpack.c.l.b16 %v316
        %v379 = vunpack.c.l.b16 %v317
        %v380 = vunpack.c.l.b16 %v318
        %v381 = vunpack.c.l.b16 %v319
        %v382 = vpack.c.b16 %v374, %v373
        %v383 = vpack.c.b16 %v376, %v375
        %v384 = vpack.c.b16 %v378, %v377
        %v385 = vpack.c.b16 %v380, %v379
        %v386 = vpack.c.b16 %v381, %v381
        %vm391 = vcmask 588800
        %v393 = vsel %vm391, %v356, 0
        %v396 = vsel %vm391, %v357, 0
        %v399 = vsel %vm391, %v358, 0
        %v402 = vsel %vm391, %v359, 0
        %v405 = vsel %vm391, %v360, 0
        %v408 = vsel %vm391, %v361, 0
        %v411 = vsel %vm391, %v362, 0
        %v414 = vsel %vm391, %v363, 0
        %vm416 = vcmask 1043456
        %v418 = vsel %vm416, %v386, 0
        %420 = vmatpush.bf16.msra.mxu0 0
        %421 = vmatpush.bf16.msra.mxu0 0
        %422 = vmatpush.bf16.msra.mxu0 0
        %423 = vmatpush.bf16.msra.mxu0 %v418
        %424 = vmatpush.bf16.msra.mxu0 %v385
        %425 = vmatpush.bf16.msra.mxu0 %v384
        %426 = vmatpush.bf16.msra.mxu0 %v383
        %427 = vmatpush.bf16.msra.mxu0 %v382
        %428 = vmatmul.bf16.gmra.mxu0 %v393
        %v429 = vpop.f32.mrf.mxu0
        %v430 = vadd.f32 %v322, %v429
        %v431 = vpop.f32.mrf.mxu0
        %v432 = vadd.f32 %v322, %v431
        %433 = vmatmul.bf16.gmra.mxu0 %v396
        %v434 = vpop.f32.mrf.mxu0
        %v435 = vadd.f32 %v322, %v434
        %v436 = vpop.f32.mrf.mxu0
        %v437 = vadd.f32 %v322, %v436
        %438 = vmatmul.bf16.gmra.mxu0 %v399
        %v439 = vpop.f32.mrf.mxu0
        %v440 = vadd.f32 %v322, %v439
        %v441 = vpop.f32.mrf.mxu0
        %v442 = vadd.f32 %v322, %v441
        %443 = vmatmul.bf16.gmra.mxu0 %v402
        %v444 = vpop.f32.mrf.mxu0
        %v445 = vadd.f32 %v322, %v444
        %v446 = vpop.f32.mrf.mxu0
        %v447 = vadd.f32 %v322, %v446
        %448 = vmatmul.bf16.gmra.mxu0 %v405
        %v449 = vpop.f32.mrf.mxu0
        %v450 = vadd.f32 %v322, %v449
        %v451 = vpop.f32.mrf.mxu0
        %v452 = vadd.f32 %v322, %v451
        %453 = vmatmul.bf16.gmra.mxu0 %v408
        %v454 = vpop.f32.mrf.mxu0
        %v455 = vadd.f32 %v322, %v454
        %v456 = vpop.f32.mrf.mxu0
        %v457 = vadd.f32 %v322, %v456
        %458 = vmatmul.bf16.gmra.mxu0 %v411
        %v459 = vpop.f32.mrf.mxu0
        %v460 = vadd.f32 %v322, %v459
        %v461 = vpop.f32.mrf.mxu0
        %v462 = vadd.f32 %v322, %v461
        %463 = vmatmul.bf16.gmra.mxu0 %v414
        %v464 = vpop.f32.mrf.mxu0
        %v465 = vadd.f32 %v322, %v464
        %v466 = vpop.f32.mrf.mxu0
        %v467 = vadd.f32 %v322, %v466
        %468 = vdwg.mxu0
        %v469 = vld [vmem:[#allocation2] sm:$0xff]
        %v470 = vld [vmem:[#allocation2 + $0x8] sm:$0xff]
        %v471 = vld [vmem:[#allocation2 + $0x10] sm:$0xff]
        %v472 = vld [vmem:[#allocation2 + $0x18] sm:$0xff]
        %v473 = vld [vmem:[#allocation2 + $0x20] sm:$0xff]
        %v474 = vld [vmem:[#allocation2 + $0x28] sm:$0xff]
        %v475 = vld [vmem:[#allocation2 + $0x30] sm:$0xff]
        %v476 = vld [vmem:[#allocation2 + $0x38] sm:$0xff]
        %v477 = vld [vmem:[#allocation2 + $0x40] sm:$0xff]
        %v478 = vld [vmem:[#allocation2 + $0x48] sm:$0xff]
        %v479 = vld [vmem:[#allocation2 + $0x50] sm:$0xff]
        %v480 = vld [vmem:[#allocation2 + $0x58] sm:$0xff]
        %v481 = vld [vmem:[#allocation2 + $0x60] sm:$0xff]
        %v482 = vld [vmem:[#allocation2 + $0x68] sm:$0xff]
        %v483 = vld [vmem:[#allocation2 + $0x70] sm:$0xff]
        %v484 = vld [vmem:[#allocation2 + $0x78] sm:$0xff]
        %v485 = vsub.f32 %v430, %v469
        %v486 = vsub.f32 %v432, %v470
        %v487 = vsub.f32 %v435, %v471
        %v488 = vsub.f32 %v437, %v472
        %v489 = vsub.f32 %v440, %v473
        %v490 = vsub.f32 %v442, %v474
        %v491 = vsub.f32 %v445, %v475
        %v492 = vsub.f32 %v447, %v476
        %v493 = vsub.f32 %v450, %v477
        %v494 = vsub.f32 %v452, %v478
        %v495 = vsub.f32 %v455, %v479
        %v496 = vsub.f32 %v457, %v480
        %v497 = vsub.f32 %v460, %v481
        %v498 = vsub.f32 %v462, %v482
        %v499 = vsub.f32 %v465, %v483
        %v500 = vsub.f32 %v467, %v484
        %v501 = vmul.f32 %v485, 0.5
        %v502 = vmul.f32 %v486, 0.5
        %v503 = vmul.f32 %v487, 0.5
        %v504 = vmul.f32 %v488, 0.5
        %v505 = vmul.f32 %v489, 0.5
        %v506 = vmul.f32 %v490, 0.5
        %v507 = vmul.f32 %v491, 0.5
        %v508 = vmul.f32 %v492, 0.5
        %v509 = vmul.f32 %v493, 0.5
        %v510 = vmul.f32 %v494, 0.5
        %v511 = vmul.f32 %v495, 0.5
        %v512 = vmul.f32 %v496, 0.5
        %v513 = vmul.f32 %v497, 0.5
        %v514 = vmul.f32 %v498, 0.5
        %v515 = vmul.f32 %v499, 0.5
        %v516 = vmul.f32 %v500, 0.5
        %v517 = vadd.f32 %v469, %v501
        %v518 = vadd.f32 %v470, %v502
        %v519 = vadd.f32 %v471, %v503
        %v520 = vadd.f32 %v472, %v504
        %v521 = vadd.f32 %v473, %v505
        %v522 = vadd.f32 %v474, %v506
        %v523 = vadd.f32 %v475, %v507
        %v524 = vadd.f32 %v476, %v508
        %v525 = vadd.f32 %v477, %v509
        %v526 = vadd.f32 %v478, %v510
        %v527 = vadd.f32 %v479, %v511
        %v528 = vadd.f32 %v480, %v512
        %v529 = vadd.f32 %v481, %v513
        %v530 = vadd.f32 %v482, %v514
        %v531 = vadd.f32 %v483, %v515
        %v532 = vadd.f32 %v484, %v516
        %vm533 = vcmp.ge.f32.partialorder %v517, 1.0
        %vm534 = vcmp.ge.f32.partialorder %v518, 1.0
        %vm535 = vcmp.ge.f32.partialorder %v519, 1.0
        %vm536 = vcmp.ge.f32.partialorder %v520, 1.0
        %vm537 = vcmp.ge.f32.partialorder %v521, 1.0
        %vm538 = vcmp.ge.f32.partialorder %v522, 1.0
        %vm539 = vcmp.ge.f32.partialorder %v523, 1.0
        %vm540 = vcmp.ge.f32.partialorder %v524, 1.0
        %vm541 = vcmp.ge.f32.partialorder %v525, 1.0
        %vm542 = vcmp.ge.f32.partialorder %v526, 1.0
        %vm543 = vcmp.ge.f32.partialorder %v527, 1.0
        %vm544 = vcmp.ge.f32.partialorder %v528, 1.0
        %vm545 = vcmp.ge.f32.partialorder %v529, 1.0
        %vm546 = vcmp.ge.f32.partialorder %v530, 1.0
        %vm547 = vcmp.ge.f32.partialorder %v531, 1.0
        %vm548 = vcmp.ge.f32.partialorder %v532, 1.0
        %v549 = vsel %vm533, 1, 0
        %v550 = vsel %vm534, 1, 0
        %v551 = vsel %vm535, 1, 0
        %v552 = vsel %vm536, 1, 0
        %v553 = vsel %vm537, 1, 0
        %v554 = vsel %vm538, 1, 0
        %v555 = vsel %vm539, 1, 0
        %v556 = vsel %vm540, 1, 0
        %v557 = vsel %vm541, 1, 0
        %v558 = vsel %vm542, 1, 0
        %v559 = vsel %vm543, 1, 0
        %v560 = vsel %vm544, 1, 0
        %v561 = vsel %vm545, 1, 0
        %v562 = vsel %vm546, 1, 0
        %v563 = vsel %vm547, 1, 0
        %v564 = vsel %vm548, 1, 0
        %v565 = vcvt.s32.f32 %v549
        %v566 = vcvt.s32.f32 %v550
        %v567 = vcvt.s32.f32 %v551
        %v568 = vcvt.s32.f32 %v552
        %v569 = vcvt.s32.f32 %v553
        %v570 = vcvt.s32.f32 %v554
        %v571 = vcvt.s32.f32 %v555
        %v572 = vcvt.s32.f32 %v556
        %v573 = vcvt.s32.f32 %v557
        %v574 = vcvt.s32.f32 %v558
        %v575 = vcvt.s32.f32 %v559
        %v576 = vcvt.s32.f32 %v560
        %v577 = vcvt.s32.f32 %v561
        %v578 = vcvt.s32.f32 %v562
        %v579 = vcvt.s32.f32 %v563
        %v580 = vcvt.s32.f32 %v564
        %vm581 = vcmp.gt.f32.partialorder %v565, 0.0
        %vm582 = vcmp.gt.f32.partialorder %v566, 0.0
        %vm583 = vcmp.gt.f32.partialorder %v567, 0.0
        %vm584 = vcmp.gt.f32.partialorder %v568, 0.0
        %vm585 = vcmp.gt.f32.partialorder %v569, 0.0
        %vm586 = vcmp.gt.f32.partialorder %v570, 0.0
        %vm587 = vcmp.gt.f32.partialorder %v571, 0.0
        %vm588 = vcmp.gt.f32.partialorder %v572, 0.0
        %vm589 = vcmp.gt.f32.partialorder %v573, 0.0
        %vm590 = vcmp.gt.f32.partialorder %v574, 0.0
        %vm591 = vcmp.gt.f32.partialorder %v575, 0.0
        %vm592 = vcmp.gt.f32.partialorder %v576, 0.0
        %vm593 = vcmp.gt.f32.partialorder %v577, 0.0
        %vm594 = vcmp.gt.f32.partialorder %v578, 0.0
        %vm595 = vcmp.gt.f32.partialorder %v579, 0.0
        %vm596 = vcmp.gt.f32.partialorder %v580, 0.0
        %v597 = vsel %vm581, 0.0, %v517
        %v598 = vsel %vm582, 0.0, %v518
        %v599 = vsel %vm583, 0.0, %v519
        %v600 = vsel %vm584, 0.0, %v520
        %v601 = vsel %vm585, 0.0, %v521
        %v602 = vsel %vm586, 0.0, %v522
        %v603 = vsel %vm587, 0.0, %v523
        %v604 = vsel %vm588, 0.0, %v524
        %v605 = vsel %vm589, 0.0, %v525
        %v606 = vsel %vm590, 0.0, %v526
        %v607 = vsel %vm591, 0.0, %v527
        %v608 = vsel %vm592, 0.0, %v528
        %v609 = vsel %vm593, 0.0, %v529
        %v610 = vsel %vm594, 0.0, %v530
        %v611 = vsel %vm595, 0.0, %v531
        %v612 = vsel %vm596, 0.0, %v532
        %613 = vst [vmem:[#allocation2] sm:$0xff] %v597
        %614 = vst [vmem:[#allocation2 + $0x8] sm:$0xff] %v598
        %615 = vst [vmem:[#allocation2 + $0x10] sm:$0xff] %v599
        %616 = vst [vmem:[#allocation2 + $0x18] sm:$0xff] %v600
        %617 = vst [vmem:[#allocation2 + $0x20] sm:$0xff] %v601
        %618 = vst [vmem:[#allocation2 + $0x28] sm:$0xff] %v602
        %619 = vst [vmem:[#allocation2 + $0x30] sm:$0xff] %v603
        %620 = vst [vmem:[#allocation2 + $0x38] sm:$0xff] %v604
        %621 = vst [vmem:[#allocation2 + $0x40] sm:$0xff] %v605
        %622 = vst [vmem:[#allocation2 + $0x48] sm:$0xff] %v606
        %623 = vst [vmem:[#allocation2 + $0x50] sm:$0xff] %v607
        %624 = vst [vmem:[#allocation2 + $0x58] sm:$0xff] %v608
        %625 = vst [vmem:[#allocation2 + $0x60] sm:$0xff] %v609
        %626 = vst [vmem:[#allocation2 + $0x68] sm:$0xff] %v610
        %627 = vst [vmem:[#allocation2 + $0x70] sm:$0xff] %v611
        %628 = vst [vmem:[#allocation2 + $0x78] sm:$0xff] %v612
        %v629 = vpack.c.bf16 %v565, %v565
        %v630 = vpack.c.bf16 %v566, %v566
        %v631 = vpack.c.bf16 %v567, %v567
        %v632 = vpack.c.bf16 %v568, %v568
        %v633 = vpack.c.bf16 %v569, %v569
        %v634 = vpack.c.bf16 %v570, %v570
        %v635 = vpack.c.bf16 %v571, %v571
        %v636 = vpack.c.bf16 %v572, %v572
        %v637 = vpack.c.bf16 %v573, %v573
        %v638 = vpack.c.bf16 %v574, %v574
        %v639 = vpack.c.bf16 %v575, %v575
        %v640 = vpack.c.bf16 %v576, %v576
        %v641 = vpack.c.bf16 %v577, %v577
        %v642 = vpack.c.bf16 %v578, %v578
        %v643 = vpack.c.bf16 %v579, %v579
        %v644 = vpack.c.bf16 %v580, %v580
        %645 = vst [vmem:[%s239] sm:$0xf] %v629
        %646 = vst [vmem:[%s239 + $0x4] sm:$0xf] %v630
        %647 = vst [vmem:[%s239 + $0x8] sm:$0xf] %v631
        %648 = vst [vmem:[%s239 + $0xc] sm:$0xf] %v632
        %649 = vst [vmem:[%s239 + $0x10] sm:$0xf] %v633
        %650 = vst [vmem:[%s239 + $0x14] sm:$0xf] %v634
        %651 = vst [vmem:[%s239 + $0x18] sm:$0xf] %v635
        %652 = vst [vmem:[%s239 + $0x1c] sm:$0xf] %v636
        %653 = vst [vmem:[%s239 + $0x20] sm:$0xf] %v637
        %654 = vst [vmem:[%s239 + $0x24] sm:$0xf] %v638
        %655 = vst [vmem:[%s239 + $0x28] sm:$0xf] %v639
        %656 = vst [vmem:[%s239 + $0x2c] sm:$0xf] %v640
        %657 = vst [vmem:[%s239 + $0x30] sm:$0xf] %v641
        %658 = vst [vmem:[%s239 + $0x34] sm:$0xf] %v642
        %659 = vst [vmem:[%s239 + $0x38] sm:$0xf] %v643
        %660 = vst [vmem:[%s239 + $0x3c] sm:$0xf] %v644
        %v661 = vld [vmem:[#allocation3] sm:$0xff]
        %v662 = vld [vmem:[#allocation3 + $0x8] sm:$0xff]
        %v663 = vld [vmem:[#allocation3 + $0x10] sm:$0xff]
        %v664 = vld [vmem:[#allocation3 + $0x18] sm:$0xff]
        %v665 = vld [vmem:[#allocation3 + $0x20] sm:$0xff]
        %v666 = vld [vmem:[#allocation3 + $0x28] sm:$0xff]
        %v667 = vld [vmem:[#allocation3 + $0x30] sm:$0xff]
        %v668 = vld [vmem:[#allocation3 + $0x38] sm:$0xff]
        %v669 = vld [vmem:[#allocation3 + $0x40] sm:$0xff]
        %v670 = vld [vmem:[#allocation3 + $0x48] sm:$0xff]
        %v671 = vld [vmem:[#allocation3 + $0x50] sm:$0xff]
        %v672 = vld [vmem:[#allocation3 + $0x58] sm:$0xff]
        %v673 = vld [vmem:[#allocation3 + $0x60] sm:$0xff]
        %v674 = vld [vmem:[#allocation3 + $0x68] sm:$0xff]
        %v675 = vld [vmem:[#allocation3 + $0x70] sm:$0xff]
        %v676 = vld [vmem:[#allocation3 + $0x78] sm:$0xff]
        %v677 = vsub.f32 %v565, %v661
        %v678 = vsub.f32 %v566, %v662
        %v679 = vsub.f32 %v567, %v663
        %v680 = vsub.f32 %v568, %v664
        %v681 = vsub.f32 %v569, %v665
        %v682 = vsub.f32 %v570, %v666
        %v683 = vsub.f32 %v571, %v667
        %v684 = vsub.f32 %v572, %v668
        %v685 = vsub.f32 %v573, %v669
        %v686 = vsub.f32 %v574, %v670
        %v687 = vsub.f32 %v575, %v671
        %v688 = vsub.f32 %v576, %v672
        %v689 = vsub.f32 %v577, %v673
        %v690 = vsub.f32 %v578, %v674
        %v691 = vsub.f32 %v579, %v675
        %v692 = vsub.f32 %v580, %v676
        %v693 = vmul.f32 %v677, 0.5
        %v694 = vmul.f32 %v678, 0.5
        %v695 = vmul.f32 %v679, 0.5
        %v696 = vmul.f32 %v680, 0.5
        %v697 = vmul.f32 %v681, 0.5
        %v698 = vmul.f32 %v682, 0.5
        %v699 = vmul.f32 %v683, 0.5
        %v700 = vmul.f32 %v684, 0.5
        %v701 = vmul.f32 %v685, 0.5
        %v702 = vmul.f32 %v686, 0.5
        %v703 = vmul.f32 %v687, 0.5
        %v704 = vmul.f32 %v688, 0.5
        %v705 = vmul.f32 %v689, 0.5
        %v706 = vmul.f32 %v690, 0.5
        %v707 = vmul.f32 %v691, 0.5
        %v708 = vmul.f32 %v692, 0.5
        %v709 = vadd.f32 %v661, %v693
        %v710 = vadd.f32 %v662, %v694
        %v711 = vadd.f32 %v663, %v695
        %v712 = vadd.f32 %v664, %v696
        %v713 = vadd.f32 %v665, %v697
        %v714 = vadd.f32 %v666, %v698
        %v715 = vadd.f32 %v667, %v699
        %v716 = vadd.f32 %v668, %v700
        %v717 = vadd.f32 %v669, %v701
        %v718 = vadd.f32 %v670, %v702
        %v719 = vadd.f32 %v671, %v703
        %v720 = vadd.f32 %v672, %v704
        %v721 = vadd.f32 %v673, %v705
        %v722 = vadd.f32 %v674, %v706
        %v723 = vadd.f32 %v675, %v707
        %v724 = vadd.f32 %v676, %v708
        %vm725 = vcmp.ge.f32.partialorder %v709, 1.0
        %vm726 = vcmp.ge.f32.partialorder %v710, 1.0
        %vm727 = vcmp.ge.f32.partialorder %v711, 1.0
        %vm728 = vcmp.ge.f32.partialorder %v712, 1.0
        %vm729 = vcmp.ge.f32.partialorder %v713, 1.0
        %vm730 = vcmp.ge.f32.partialorder %v714, 1.0
        %vm731 = vcmp.ge.f32.partialorder %v715, 1.0
        %vm732 = vcmp.ge.f32.partialorder %v716, 1.0
        %vm733 = vcmp.ge.f32.partialorder %v717, 1.0
        %vm734 = vcmp.ge.f32.partialorder %v718, 1.0
        %vm735 = vcmp.ge.f32.partialorder %v719, 1.0
        %vm736 = vcmp.ge.f32.partialorder %v720, 1.0
        %vm737 = vcmp.ge.f32.partialorder %v721, 1.0
        %vm738 = vcmp.ge.f32.partialorder %v722, 1.0
        %vm739 = vcmp.ge.f32.partialorder %v723, 1.0
        %vm740 = vcmp.ge.f32.partialorder %v724, 1.0
        %v741 = vsel %vm725, 1, 0
        %v742 = vsel %vm726, 1, 0
        %v743 = vsel %vm727, 1, 0
        %v744 = vsel %vm728, 1, 0
        %v745 = vsel %vm729, 1, 0
        %v746 = vsel %vm730, 1, 0
        %v747 = vsel %vm731, 1, 0
        %v748 = vsel %vm732, 1, 0
        %v749 = vsel %vm733, 1, 0
        %v750 = vsel %vm734, 1, 0
        %v751 = vsel %vm735, 1, 0
        %v752 = vsel %vm736, 1, 0
        %v753 = vsel %vm737, 1, 0
        %v754 = vsel %vm738, 1, 0
        %v755 = vsel %vm739, 1, 0
        %v756 = vsel %vm740, 1, 0
        %v757 = vcvt.s32.f32 %v741
        %v758 = vcvt.s32.f32 %v742
        %v759 = vcvt.s32.f32 %v743
        %v760 = vcvt.s32.f32 %v744
        %v761 = vcvt.s32.f32 %v745
        %v762 = vcvt.s32.f32 %v746
        %v763 = vcvt.s32.f32 %v747
        %v764 = vcvt.s32.f32 %v748
        %v765 = vcvt.s32.f32 %v749
        %v766 = vcvt.s32.f32 %v750
        %v767 = vcvt.s32.f32 %v751
        %v768 = vcvt.s32.f32 %v752
        %v769 = vcvt.s32.f32 %v753
        %v770 = vcvt.s32.f32 %v754
        %v771 = vcvt.s32.f32 %v755
        %v772 = vcvt.s32.f32 %v756
        %vm773 = vcmp.gt.f32.partialorder %v757, 0.0
        %vm774 = vcmp.gt.f32.partialorder %v758, 0.0
        %vm775 = vcmp.gt.f32.partialorder %v759, 0.0
        %vm776 = vcmp.gt.f32.partialorder %v760, 0.0
        %vm777 = vcmp.gt.f32.partialorder %v761, 0.0
        %vm778 = vcmp.gt.f32.partialorder %v762, 0.0
        %vm779 = vcmp.gt.f32.partialorder %v763, 0.0
        %vm780 = vcmp.gt.f32.partialorder %v764, 0.0
        %vm781 = vcmp.gt.f32.partialorder %v765, 0.0
        %vm782 = vcmp.gt.f32.partialorder %v766, 0.0
        %vm783 = vcmp.gt.f32.partialorder %v767, 0.0
        %vm784 = vcmp.gt.f32.partialorder %v768, 0.0
        %vm785 = vcmp.gt.f32.partialorder %v769, 0.0
        %vm786 = vcmp.gt.f32.partialorder %v770, 0.0
        %vm787 = vcmp.gt.f32.partialorder %v771, 0.0
        %vm788 = vcmp.gt.f32.partialorder %v772, 0.0
        %v789 = vsel %vm773, 0.0, %v709
        %v790 = vsel %vm774, 0.0, %v710
        %v791 = vsel %vm775, 0.0, %v711
        %v792 = vsel %vm776, 0.0, %v712
        %v793 = vsel %vm777, 0.0, %v713
        %v794 = vsel %vm778, 0.0, %v714
        %v795 = vsel %vm779, 0.0, %v715
        %v796 = vsel %vm780, 0.0, %v716
        %v797 = vsel %vm781, 0.0, %v717
        %v798 = vsel %vm782, 0.0, %v718
        %v799 = vsel %vm783, 0.0, %v719
        %v800 = vsel %vm784, 0.0, %v720
        %v801 = vsel %vm785, 0.0, %v721
        %v802 = vsel %vm786, 0.0, %v722
        %v803 = vsel %vm787, 0.0, %v723
        %v804 = vsel %vm788, 0.0, %v724
        %805 = vst [vmem:[#allocation3] sm:$0xff] %v789
        %806 = vst [vmem:[#allocation3 + $0x8] sm:$0xff] %v790
        %807 = vst [vmem:[#allocation3 + $0x10] sm:$0xff] %v791
        %808 = vst [vmem:[#allocation3 + $0x18] sm:$0xff] %v792
        %809 = vst [vmem:[#allocation3 + $0x20] sm:$0xff] %v793
        %810 = vst [vmem:[#allocation3 + $0x28] sm:$0xff] %v794
        %811 = vst [vmem:[#allocation3 + $0x30] sm:$0xff] %v795
        %812 = vst [vmem:[#allocation3 + $0x38] sm:$0xff] %v796
        %813 = vst [vmem:[#allocation3 + $0x40] sm:$0xff] %v797
        %814 = vst [vmem:[#allocation3 + $0x48] sm:$0xff] %v798
        %815 = vst [vmem:[#allocation3 + $0x50] sm:$0xff] %v799
        %816 = vst [vmem:[#allocation3 + $0x58] sm:$0xff] %v800
        %817 = vst [vmem:[#allocation3 + $0x60] sm:$0xff] %v801
        %818 = vst [vmem:[#allocation3 + $0x68] sm:$0xff] %v802
        %819 = vst [vmem:[#allocation3 + $0x70] sm:$0xff] %v803
        %820 = vst [vmem:[#allocation3 + $0x78] sm:$0xff] %v804
        %v821 = vld [vmem:[#allocation4] sm:$0xff]
        %v822 = vld [vmem:[#allocation4 + $0x8] sm:$0xff]
        %v823 = vld [vmem:[#allocation4 + $0x10] sm:$0xff]
        %v824 = vld [vmem:[#allocation4 + $0x18] sm:$0xff]
        %v825 = vld [vmem:[#allocation4 + $0x20] sm:$0xff]
        %v826 = vld [vmem:[#allocation4 + $0x28] sm:$0xff]
        %v827 = vld [vmem:[#allocation4 + $0x30] sm:$0xff]
        %v828 = vld [vmem:[#allocation4 + $0x38] sm:$0xff]
        %v829 = vld [vmem:[#allocation4 + $0x40] sm:$0xff]
        %v830 = vld [vmem:[#allocation4 + $0x48] sm:$0xff]
        %v831 = vld [vmem:[#allocation4 + $0x50] sm:$0xff]
        %v832 = vld [vmem:[#allocation4 + $0x58] sm:$0xff]
        %v833 = vld [vmem:[#allocation4 + $0x60] sm:$0xff]
        %v834 = vld [vmem:[#allocation4 + $0x68] sm:$0xff]
        %v835 = vld [vmem:[#allocation4 + $0x70] sm:$0xff]
        %v836 = vld [vmem:[#allocation4 + $0x78] sm:$0xff]
        %v837 = vadd.f32 %v821, %v757
        %v838 = vadd.f32 %v822, %v758
        %v839 = vadd.f32 %v823, %v759
        %v840 = vadd.f32 %v824, %v760
        %v841 = vadd.f32 %v825, %v761
        %v842 = vadd.f32 %v826, %v762
        %v843 = vadd.f32 %v827, %v763
        %v844 = vadd.f32 %v828, %v764
        %v845 = vadd.f32 %v829, %v765
        %v846 = vadd.f32 %v830, %v766
        %v847 = vadd.f32 %v831, %v767
        %v848 = vadd.f32 %v832, %v768
        %v849 = vadd.f32 %v833, %v769
        %v850 = vadd.f32 %v834, %v770
        %v851 = vadd.f32 %v835, %v771
        %v852 = vadd.f32 %v836, %v772
        %853 = vst [vmem:[#allocation4] sm:$0xff] %v837
        %854 = vst [vmem:[#allocation4 + $0x8] sm:$0xff] %v838
        %855 = vst [vmem:[#allocation4 + $0x10] sm:$0xff] %v839
        %856 = vst [vmem:[#allocation4 + $0x18] sm:$0xff] %v840
        %857 = vst [vmem:[#allocation4 + $0x20] sm:$0xff] %v841
        %858 = vst [vmem:[#allocation4 + $0x28] sm:$0xff] %v842
        %859 = vst [vmem:[#allocation4 + $0x30] sm:$0xff] %v843
        %860 = vst [vmem:[#allocation4 + $0x38] sm:$0xff] %v844
        %861 = vst [vmem:[#allocation4 + $0x40] sm:$0xff] %v845
        %862 = vst [vmem:[#allocation4 + $0x48] sm:$0xff] %v846
        %863 = vst [vmem:[#allocation4 + $0x50] sm:$0xff] %v847
        %864 = vst [vmem:[#allocation4 + $0x58] sm:$0xff] %v848
        %865 = vst [vmem:[#allocation4 + $0x60] sm:$0xff] %v849
        %866 = vst [vmem:[#allocation4 + $0x68] sm:$0xff] %v850
        %867 = vst [vmem:[#allocation4 + $0x70] sm:$0xff] %v851
        %868 = vst [vmem:[#allocation4 + $0x78] sm:$0xff] %v852
        %p869 = scmp.eq.s32.totalorder %s22, 3
        // Predicated region
        $region37: #{detection_backbone_forward.6} parent=31 // pred_check
          %p870 = pneg %p869
        $region38: #{detection_backbone_forward.6} parent=31 // pred_check_branch
          %872 = sbr.rel (%p870) target = $region40
        $region39: #{detection_backbone_forward.6} parent=31 // pred_region
          %v873 = vld [vmem:[#allocation4] sm:$0xff]
          %v874 = vld [vmem:[#allocation4 + $0x8] sm:$0xff]
          %v875 = vld [vmem:[#allocation4 + $0x10] sm:$0xff]
          %v876 = vld [vmem:[#allocation4 + $0x18] sm:$0xff]
          %v877 = vld [vmem:[#allocation4 + $0x20] sm:$0xff]
          %v878 = vld [vmem:[#allocation4 + $0x28] sm:$0xff]
          %v879 = vld [vmem:[#allocation4 + $0x30] sm:$0xff]
          %v880 = vld [vmem:[#allocation4 + $0x38] sm:$0xff]
          %v881 = vld [vmem:[#allocation4 + $0x40] sm:$0xff]
          %v882 = vld [vmem:[#allocation4 + $0x48] sm:$0xff]
          %v883 = vld [vmem:[#allocation4 + $0x50] sm:$0xff]
          %v884 = vld [vmem:[#allocation4 + $0x58] sm:$0xff]
          %v885 = vld [vmem:[#allocation4 + $0x60] sm:$0xff]
          %v886 = vld [vmem:[#allocation4 + $0x68] sm:$0xff]
          %v887 = vld [vmem:[#allocation4 + $0x70] sm:$0xff]
          %v888 = vld [vmem:[#allocation4 + $0x78] sm:$0xff]
          %v889 = vmul.f32 %v873, 0.25
          %v890 = vmul.f32 %v874, 0.25
          %v891 = vmul.f32 %v875, 0.25
          %v892 = vmul.f32 %v876, 0.25
          %v893 = vmul.f32 %v877, 0.25
          %v894 = vmul.f32 %v878, 0.25
          %v895 = vmul.f32 %v879, 0.25
          %v896 = vmul.f32 %v880, 0.25
          %v897 = vmul.f32 %v881, 0.25
          %v898 = vmul.f32 %v882, 0.25
          %v899 = vmul.f32 %v883, 0.25
          %v900 = vmul.f32 %v884, 0.25
          %v901 = vmul.f32 %v885, 0.25
          %v902 = vmul.f32 %v886, 0.25
          %v903 = vmul.f32 %v887, 0.25
          %v904 = vmul.f32 %v888, 0.25
          %905 = vst [vmem:[#allocation4] sm:$0xff] %v889
          %906 = vst [vmem:[#allocation4 + $0x8] sm:$0xff] %v890
          %907 = vst [vmem:[#allocation4 + $0x10] sm:$0xff] %v891
          %908 = vst [vmem:[#allocation4 + $0x18] sm:$0xff] %v892
          %909 = vst [vmem:[#allocation4 + $0x20] sm:$0xff] %v893
          %910 = vst [vmem:[#allocation4 + $0x28] sm:$0xff] %v894
          %911 = vst [vmem:[#allocation4 + $0x30] sm:$0xff] %v895
          %912 = vst [vmem:[#allocation4 + $0x38] sm:$0xff] %v896
          %913 = vst [vmem:[#allocation4 + $0x40] sm:$0xff] %v897
          %914 = vst [vmem:[#allocation4 + $0x48] sm:$0xff] %v898
          %915 = vst [vmem:[#allocation4 + $0x50] sm:$0xff] %v899
          %916 = vst [vmem:[#allocation4 + $0x58] sm:$0xff] %v900
          %917 = vst [vmem:[#allocation4 + $0x60] sm:$0xff] %v901
          %918 = vst [vmem:[#allocation4 + $0x68] sm:$0xff] %v902
          %919 = vst [vmem:[#allocation4 + $0x70] sm:$0xff] %v903
          %920 = vst [vmem:[#allocation4 + $0x78] sm:$0xff] %v904
        $region40: #{detection_backbone_forward.6} parent=31 // pred_fallthru
          _
        %s921 = smul.u32 16, %s21
        %p922 = scmp.lt.s32.totalorder %s22, 3
        %s923 = scalar_select %p922, %s22, 3
        %p924 = scmp.lt.s32.totalorder %s921, 15
        %s925 = scalar_select %p924, %s921, 15
        %s926 = smul.addr %s923, 16
        %s927 = sadd.s32 %s925, %s926
        %s928 = smul.addr %s927, 4
        %s929 = scalar_lea.vmem %s3, %s928
        // Predicated region
        $region41: #{detection_backbone_forward.6} parent=31 // pred_check
          %p930 = pneg %p119
        $region42: #{detection_backbone_forward.6} parent=31 // pred_check_branch
          %932 = sbr.rel (%p930) target = $region44
        $region43: #{detection_backbone_forward.6} parent=31 // pred_region
          %s933 = smul.u32 16, %s21
        $region44: #{detection_backbone_forward.6} parent=31 // pred_fallthru
          _
        // Predicated region
        $region45: #{detection_backbone_forward.6} parent=31 // pred_check
          %p934 = pneg %p145
        $region46: #{detection_backbone_forward.6} parent=31 // pred_check_branch
          %936 = sbr.rel (%p934) target = $region48
        $region47: #{detection_backbone_forward.6} parent=31 // pred_region
          %s937 = smul.u32 16, %s21
          %939 = vsyncadd [#allocation5], 0
          %s940 = smul.addr %s937, 8
          %s941 = scalar_lea.hbm %s4, %s940
          %s942 = sshll.u32 [#allocation4], 4
          %s943 = int_to_ptr.vmem [resolvable:$true] %s942
          %s944 = sshll.u32 %s941, 4
          %s945 = int_to_ptr.hbm [resolvable:$true] %s944
          %950 = dma.vmem_to_hbm [thread:$0]  %s943, 2048, %s945, [#allocation5], 128, 128, 8
        $region48: #{detection_backbone_forward.6} parent=31 // pred_fallthru
          _
        // Predicated region
        $region49: #{detection_backbone_forward.6} parent=31 // pred_check
          %p951 = pneg %p145
        $region50: #{detection_backbone_forward.6} parent=31 // pred_check_branch
          %953 = sbr.rel (%p951) target = $region52
        $region51: #{detection_backbone_forward.6} parent=31 // pred_region
          %955 = dma.done [#allocation5], 2048
        $region52: #{detection_backbone_forward.6} parent=31 // pred_fallthru
          _
      $region32: #{detection_backbone_forward.6} parent=5 // pred_fallthru
        _
      %p956 = scmp.le.s32.totalorder 2, %s12
      // Predicated region
      $region53: #{detection_backbone_forward.6} parent=5 // pred_check
        %p957 = pneg %p956
      $region54: #{detection_backbone_forward.6} parent=5 // pred_check_branch
        %959 = sbr.rel (%p957) target = $region56
      $region55: #{detection_backbone_forward.6} parent=5 // pred_region
        %s960 = ssub.s32 %s12, 2
        // Predicated region
        $region57: #{detection_backbone_forward.6} parent=55 // pred_check
          %p961 = pneg %p125
        $region58: #{detection_backbone_forward.6} parent=55 // pred_check_branch
          %963 = sbr.rel (%p961) target = $region60
        $region59: #{detection_backbone_forward.6} parent=55 // pred_region
          %s964 = smul.u32 16, %s23
          %p965 = scmp.lt.s32.totalorder %s24, 3
          %s966 = scalar_select %p965, %s24, 3
          %p967 = scmp.lt.s32.totalorder %s964, 15
          %s968 = scalar_select %p967, %s964, 15
          %s969 = smul.addr %s966, 16
          %s970 = sadd.s32 %s968, %s969
          %s971 = smul.addr %s970, 4
          %s972 = scalar_lea.vmem %s3, %s971
        $region60: #{detection_backbone_forward.6} parent=55 // pred_fallthru
          _
      $region56: #{detection_backbone_forward.6} parent=5 // pred_fallthru
        _
    $region6: #{detection_backbone_forward.6} parent=1 // loop_footer
      %s16 = sadd.s32 1, %s12
    $region7: #{detection_backbone_forward.6} parent=1 // loop_footer_branch
      %11 = sbr.rel target = $region3
    $region8: #{detection_backbone_forward.6} parent=1 // loop_exit
      _
    %973 = vsyncpa [#allocation5], 1
    %s974 = scalar_lea.sflag [#allocation5], 1
    %975 = vsyncpa %s974, 1

// kernel: detection_backbone_forward.7
$region0: #{detection_backbone_forward.7}
  #allocation0 [shape = 'u32[]', space=smem, size = 0x4, offset = 0x4, fixed_abs, tag = 'smem constant byte address 0x4 - core index']
  #allocation1 [shape = 'u32[72,128]{1,0:T(1,128)}', space=vmem, size = 0x9000, scoped, tag = 'internal scratch']
  #allocation2 [shape = 'f32[128,128]{1,0:T(8,128)}', space=vmem, size = 0x10000, scoped, tag = 'scratch operand']
  #allocation3 [shape = 'f32[128,128]{1,0:T(8,128)}', space=vmem, size = 0x10000, scoped, tag = 'scratch operand']
  %s0 = inlined_call_operand.vmem [shape: bf16[4,128,144], index: 0, kind: input, shape index: {}]
  %s1 = inlined_call_operand.vmem [shape: bf16[144,128], index: 1, kind: input, shape index: {}]
  %s2 = inlined_call_operand.vmem [shape: f32[1,128], index: 2, kind: input, shape index: {}]
  %s3 = inlined_call_operand.vmem [shape: bf16[4,128,128], index: 3, kind: output, shape index: {0}]
  %s4 = inlined_call_operand.vmem [shape: f32[128,128], index: 4, kind: output, shape index: {1}]
  %5 = xla_tuple %s3, %s4
  %s6 = sld [smem:[#allocation0]]
  $region61: #{detection_backbone_forward.7} parent=0
    _
  %s8 = ssub.s32 1, %s6
  %s9 = scalar_select 0, %s8, %s6
  loop: start=0, step=1, limit=6
  $region2: #{detection_backbone_forward.7} parent=0 // loop_pre_header
    _
  $region3: #{detection_backbone_forward.7} parent=0 // loop_header
    %s11 = sphi 0, %s15
    %p12 = scmp.ge.s32.totalorder %s11, 6
    %s18 = sphi 0, %s30
    %s19 = sphi 0, %s26
    %s20 = sphi 0, %s18
    %s21 = sphi 0, %s19
    %s22 = sphi 0, %s20
    %s23 = sphi 0, %s21
    %s35 = sphi 0, %s37
    %s38 = sphi 0, %s35
    %s39 = sphi 0, %s38
    %s55 = sphi 0, %s39
    %s59 = sphi 0, %s59
    %s61 = sphi 0, %s59
    %s62 = sphi 0, %s61
    %s76 = sphi 0, %s62
    %s80 = sphi 0, %s80
    %s82 = sphi 0, %s80
    %s83 = sphi 0, %s82
    %s97 = sphi 0, %s83
    %s105 = sphi 0, %s107
    %s108 = sphi 0, %s105
    %s109 = sphi 0, %s108
    %s125 = sphi 0, %s109
    %s131 = sphi 0, %s133
    %s134 = sphi 0, %s131
    %s135 = sphi 0, %s134
    %s151 = sphi 0, %s135
  $region4: #{detection_backbone_forward.7} parent=0 // loop_header_branch
    %14 = sbr.rel (%p12) target = $region8
  $region5: #{detection_backbone_forward.7} parent=0 // loop_body
    %s16 = ssub.s32 %s11, 1
    %s17 = ssub.s32 %s11, 2
    %s24 = sadd.s32 1, %s19
    %p25 = scmp.ge.s32.totalorder %s24, 4
    %s26 = scalar_select %p25, 0, %s24
    %s27 = sadd.s32 1, %s18
    %s28 = scalar_select %p25, %s27, %s18
    %p29 = scmp.ge.s32.totalorder %s28, 1
    %s30 = scalar_select %p29, 0, %s28
    %s31 = ssub.s32 %s19, %s26
    %s32 = ssub.s32 %s18, %s30
    %s33 = sor.u32 %s31, %s32
    %p34 = scmp.eq.s32.totalorder %s33, 0
    %s36 = sadd.s32 %s35, 1
    %s37 = scalar_select %p34, %s35, %s36
    %p40 = pneg %p34
    %p41 = scmp.eq.s32.totalorder %s11, 3
    %p42 = por %p40, %p41
    %p43 = scmp.ne.s32.totalorder %s35, %s38
    %p44 = scmp.eq.s32.totalorder %s11, 0
    %p45 = por %p43, %p44
    %p46 = scmp.ne.s32.totalorder %s35, %s38
    %p47 = scmp.eq.s32.totalorder %s16, 3
    %p48 = por %p46, %p47
    %p49 = scmp.ne.s32.totalorder %s38, %s39
    %p50 = scmp.eq.s32.totalorder %s16, 0
    %p51 = por %p49, %p50
    %p52 = scmp.ne.s32.totalorder %s38, %s39
    %p53 = scmp.eq.s32.totalorder %s17, 3
    %p54 = por %p52, %p53
    %p56 = scmp.ne.s32.totalorder %s39, %s55
    %p57 = scmp.eq.s32.totalorder %s17, 0
    %p58 = por %p56, %p57
    %s60 = sadd.s32 %s59, 1
    %p63 = scmp.eq.s32.totalorder %s11, 3
    %p64 = scmp.ne.s32.totalorder %s59, %s61
    %p65 = scmp.eq.s32.totalorder %s11, 0
    %p66 = por %p64, %p65
    %p67 = scmp.ne.s32.totalorder %s59, %s61
    %p68 = scmp.eq.s32.totalorder %s16, 3
    %p69 = por %p67, %p68
    %p70 = scmp.ne.s32.totalorder %s61, %s62
    %p71 = scmp.eq.s32.totalorder %s16, 0
    %p72 = por %p70, %p71
    %p73 = scmp.ne.s32.totalorder %s61, %s62
    %p74 = scmp.eq.s32.totalorder %s17, 3
    %p75 = por %p73, %p74
    %p77 = scmp.ne.s32.totalorder %s62, %s76
    %p78 = scmp.eq.s32.totalorder %s17, 0
    %p79 = por %p77, %p78
    %s81 = sadd.s32 %s80, 1
    %p84 = scmp.eq.s32.totalorder %s11, 3
    %p85 = scmp.ne.s32.totalorder %s80, %s82
    %p86 = scmp.eq.s32.totalorder %s11, 0
    %p87 = por %p85, %p86
    %p88 = scmp.ne.s32.totalorder %s80, %s82
    %p89 = scmp.eq.s32.totalorder %s16, 3
    %p90 = por %p88, %p89
    %p91 = scmp.ne.s32.totalorder %s82, %s83
    %p92 = scmp.eq.s32.totalorder %s16, 0
    %p93 = por %p91, %p92
    %p94 = scmp.ne.s32.totalorder %s82, %s83
    %p95 = scmp.eq.s32.totalorder %s17, 3
    %p96 = por %p94, %p95
    %p98 = scmp.ne.s32.totalorder %s83, %s97
    %p99 = scmp.eq.s32.totalorder %s17, 0
    %p100 = por %p98, %p99
    %s101 = ssub.s32 %s19, %s26
    %s102 = ssub.s32 %s18, %s30
    %s103 = sor.u32 %s101, %s102
    %p104 = scmp.eq.s32.totalorder %s103, 0
    %s106 = sadd.s32 %s105, 1
    %s107 = scalar_select %p104, %s105, %s106
    %p110 = pneg %p104
    %p111 = scmp.eq.s32.totalorder %s11, 3
    %p112 = por %p110, %p111
    %p113 = scmp.ne.s32.totalorder %s105, %s108
    %p114 = scmp.eq.s32.totalorder %s11, 0
    %p115 = por %p113, %p114
    %p116 = scmp.ne.s32.totalorder %s105, %s108
    %p117 = scmp.eq.s32.totalorder %s16, 3
    %p118 = por %p116, %p117
    %p119 = scmp.ne.s32.totalorder %s108, %s109
    %p120 = scmp.eq.s32.totalorder %s16, 0
    %p121 = por %p119, %p120
    %p122 = scmp.ne.s32.totalorder %s108, %s109
    %p123 = scmp.eq.s32.totalorder %s17, 3
    %p124 = por %p122, %p123
    %p126 = scmp.ne.s32.totalorder %s109, %s125
    %p127 = scmp.eq.s32.totalorder %s17, 0
    %p128 = por %p126, %p127
    %s129 = ssub.s32 %s18, %s30
    %p130 = scmp.eq.s32.totalorder %s129, 0
    %s132 = sadd.s32 %s131, 1
    %s133 = scalar_select %p130, %s131, %s132
    %p136 = pneg %p130
    %p137 = scmp.eq.s32.totalorder %s11, 3
    %p138 = por %p136, %p137
    %p139 = scmp.ne.s32.totalorder %s131, %s134
    %p140 = scmp.eq.s32.totalorder %s11, 0
    %p141 = por %p139, %p140
    %p142 = scmp.ne.s32.totalorder %s131, %s134
    %p143 = scmp.eq.s32.totalorder %s16, 3
    %p144 = por %p142, %p143
    %p145 = scmp.ne.s32.totalorder %s134, %s135
    %p146 = scmp.eq.s32.totalorder %s16, 0
    %p147 = por %p145, %p146
    %p148 = scmp.ne.s32.totalorder %s134, %s135
    %p149 = scmp.eq.s32.totalorder %s17, 3
    %p150 = por %p148, %p149
    %p152 = scmp.ne.s32.totalorder %s135, %s151
    %p153 = scmp.eq.s32.totalorder %s17, 0
    %p154 = por %p152, %p153
    %p155 = scmp.le.s32.totalorder 1, %s11
    %p156 = scmp.lt.s32.totalorder %s11, 5
    %p157 = pnand %p155, %p156
    %p158 = pneg %p157
    // Predicated region
    $region9: #{detection_backbone_forward.7} parent=5 // pred_check
      _
    $region10: #{detection_backbone_forward.7} parent=5 // pred_check_branch
      %160 = sbr.rel (%p157) target = $region12
    $region11: #{detection_backbone_forward.7} parent=5 // pred_region
      %s161 = ssub.s32 %s11, 1
      // Predicated region
      $region13: #{detection_backbone_forward.7} parent=11 // pred_check
        %p162 = pneg %p72
      $region14: #{detection_backbone_forward.7} parent=11 // pred_check_branch
        %164 = sbr.rel (%p162) target = $region16
      $region15: #{detection_backbone_forward.7} parent=11 // pred_region
        _
      $region16: #{detection_backbone_forward.7} parent=11 // pred_fallthru
        _
      // Predicated region
      $region17: #{detection_backbone_forward.7} parent=11 // pred_check
        %p165 = pneg %p93
      $region18: #{detection_backbone_forward.7} parent=11 // pred_check_branch
        %167 = sbr.rel (%p165) target = $region20
      $region19: #{detection_backbone_forward.7} parent=11 // pred_region
        _
      $region20: #{detection_backbone_forward.7} parent=11 // pred_fallthru
        _
    $region12: #{detection_backbone_forward.7} parent=5 // pred_fallthru
      _
    %p168 = scmp.lt.s32.totalorder %s11, 4
    // Predicated region
    $region21: #{detection_backbone_forward.7} parent=5 // pred_check
      %p169 = pneg %p168
    $region22: #{detection_backbone_forward.7} parent=5 // pred_check_branch
      %171 = sbr.rel (%p169) target = $region24
    $region23: #{detection_backbone_forward.7} parent=5 // pred_region
      // Predicated region
      $region25: #{detection_backbone_forward.7} parent=23 // pred_check
        %p172 = pneg %p45
      $region26: #{detection_backbone_forward.7} parent=23 // pred_check_branch
        %174 = sbr.rel (%p172) target = $region28
      $region27: #{detection_backbone_forward.7} parent=23 // pred_region
        %s175 = smul.u32 16, %s18
        %p176 = scmp.lt.s32.totalorder %s19, 3
        %s177 = scalar_select %p176, %s19, 3
        %p178 = scmp.lt.s32.totalorder %s175, 15
        %s179 = scalar_select %p178, %s175, 15
        %s180 = smul.addr %s179, 2
        %s181 = smul.addr %s177, 32
        %s182 = sadd.s32 %s180, %s181
        %s183 = smul.addr %s182, 4
        %s184 = scalar_lea.vmem %s0, %s183
        %s185 = smul.u32 16, %s18
      $region28: #{detection_backbone_forward.7} parent=23 // pred_fallthru
        _
    $region24: #{detection_backbone_forward.7} parent=5 // pred_fallthru
      _
    %p186 = scmp.le.s32.totalorder 1, %s11
    %p187 = scmp.lt.s32.totalorder %s11, 5
    %p188 = pnand %p186, %p187
    %p189 = pneg %p188
    // Predicated region
    $region29: #{detection_backbone_forward.7} parent=5 // pred_check
      _
    $region30: #{detection_backbone_forward.7} parent=5 // pred_check_branch
      %191 = sbr.rel (%p188) target = $region32
    $region31: #{detection_backbone_forward.7} parent=5 // pred_region
      %s192 = ssub.s32 %s11, 1
      %s193 = smul.u32 16, %s20
      %p194 = scmp.lt.s32.totalorder %s21, 3
      %s195 = scalar_select %p194, %s21, 3
      %p196 = scmp.lt.s32.totalorder %s193, 15
      %s197 = scalar_select %p196, %s193, 15
      %s198 = smul.addr %s197, 2
      %s199 = smul.addr %s195, 32
      %s200 = sadd.s32 %s198, %s199
      %s201 = smul.addr %s200, 4
      %s202 = scalar_lea.vmem %s0, %s201
      %p203 = pneg %p51
      %p204 = pneg %p48
      %p205 = pneg %p72
      %p206 = pneg %p69
      %p207 = pneg %p93
      %p208 = pneg %p90
      %p209 = pneg %p121
      %p210 = pneg %p118
      %s211 = smul.u32 16, %s20
      %p212 = scmp.lt.s32.totalorder %s21, 3
      %s213 = scalar_select %p212, %s21, 3
      %p214 = scmp.lt.s32.totalorder %s211, 15
      %s215 = scalar_select %p214, %s211, 15
      %s216 = smul.addr %s213, 16
      %s217 = sadd.s32 %s215, %s216
      %s218 = smul.addr %s217, 4
      %s219 = scalar_lea.vmem %s3, %s218
      %p220 = pneg %p147
      %p221 = pneg %p144
      %s222 = smul.u32 16, %s20
      %p223 = scmp.lt.s32.totalorder %s222, 15
      %s224 = scalar_select %p223, %s222, 15
      %s225 = smul.addr %s224, 8
      %s226 = scalar_lea.vmem %s4, %s225
      %s227 = smul.u32 16, %s20
      %p228 = scmp.lt.s32.totalorder %s21, 3
      %s229 = scalar_select %p228, %s21, 3
      %p230 = scmp.lt.s32.totalorder %s227, 15
      %s231 = scalar_select %p230, %s227, 15
      %s232 = smul.addr %s231, 2
      %s233 = smul.addr %s229, 32
      %s234 = sadd.s32 %s232, %s233
      %s235 = smul.addr %s234, 4
      %s236 = scalar_lea.vmem %s0, %s235
      %s237 = smul.u32 16, %s20
      %s238 = smul.u32 16, %s20
      %p239 = scmp.lt.s32.totalorder %s21, 3
      %s240 = scalar_select %p239, %s21, 3
      %p241 = scmp.lt.s32.totalorder %s238, 15
      %s242 = scalar_select %p241, %s238, 15
      %s243 = smul.addr %s240, 16
      %s244 = sadd.s32 %s242, %s243
      %s245 = smul.addr %s244, 4
      %s246 = scalar_lea.vmem %s3, %s245
      %s247 = smul.u32 16, %s20
      %s248 = smul.u32 16, %s20
      %p249 = scmp.lt.s32.totalorder %s248, 15
      %s250 = scalar_select %p249, %s248, 15
      %s251 = smul.addr %s250, 8
      %s252 = scalar_lea.vmem %s4, %s251
      %s253 = smul.u32 16, %s20
      %p255 = scmp.eq.s32.totalorder %s21, 0
      // Predicated region
      $region33: #{detection_backbone_forward.7} parent=31 // pred_check
        %p256 = pneg %p255
      $region34: #{detection_backbone_forward.7} parent=31 // pred_check_branch
        %258 = sbr.rel (%p256) target = $region36
      $region35: #{detection_backbone_forward.7} parent=31 // pred_region
        %259 = vst [vmem:[#allocation2] sm:$0xff] 0.0
        %260 = vst [vmem:[#allocation2 + $0x8] sm:$0xff] 0.0
        %261 = vst [vmem:[#allocation2 + $0x10] sm:$0xff] 0.0
        %262 = vst [vmem:[#allocation2 + $0x18] sm:$0xff] 0.0
        %263 = vst [vmem:[#allocation2 + $0x20] sm:$0xff] 0.0
        %264 = vst [vmem:[#allocation2 + $0x28] sm:$0xff] 0.0
        %265 = vst [vmem:[#allocation2 + $0x30] sm:$0xff] 0.0
        %266 = vst [vmem:[#allocation2 + $0x38] sm:$0xff] 0.0
        %267 = vst [vmem:[#allocation2 + $0x40] sm:$0xff] 0.0
        %268 = vst [vmem:[#allocation2 + $0x48] sm:$0xff] 0.0
        %269 = vst [vmem:[#allocation2 + $0x50] sm:$0xff] 0.0
        %270 = vst [vmem:[#allocation2 + $0x58] sm:$0xff] 0.0
        %271 = vst [vmem:[#allocation2 + $0x60] sm:$0xff] 0.0
        %272 = vst [vmem:[#allocation2 + $0x68] sm:$0xff] 0.0
        %273 = vst [vmem:[#allocation2 + $0x70] sm:$0xff] 0.0
        %274 = vst [vmem:[#allocation2 + $0x78] sm:$0xff] 0.0
        %275 = vst [vmem:[#allocation3] sm:$0xff] 0.0
        %276 = vst [vmem:[#allocation3 + $0x8] sm:$0xff] 0.0
        %277 = vst [vmem:[#allocation3 + $0x10] sm:$0xff] 0.0
        %278 = vst [vmem:[#allocation3 + $0x18] sm:$0xff] 0.0
        %279 = vst [vmem:[#allocation3 + $0x20] sm:$0xff] 0.0
        %280 = vst [vmem:[#allocation3 + $0x28] sm:$0xff] 0.0
        %281 = vst [vmem:[#allocation3 + $0x30] sm:$0xff] 0.0
        %282 = vst [vmem:[#allocation3 + $0x38] sm:$0xff] 0.0
        %283 = vst [vmem:[#allocation3 + $0x40] sm:$0xff] 0.0
        %284 = vst [vmem:[#allocation3 + $0x48] sm:$0xff] 0.0
        %285 = vst [vmem:[#allocation3 + $0x50] sm:$0xff] 0.0
        %286 = vst [vmem:[#allocation3 + $0x58] sm:$0xff] 0.0
        %287 = vst [vmem:[#allocation3 + $0x60] sm:$0xff] 0.0
        %288 = vst [vmem:[#allocation3 + $0x68] sm:$0xff] 0.0
        %289 = vst [vmem:[#allocation3 + $0x70] sm:$0xff] 0.0
        %290 = vst [vmem:[#allocation3 + $0x78] sm:$0xff] 0.0
        %291 = vst [vmem:[%s252] sm:$0xff] 0.0
        %292 = vst [vmem:[%s252 + $0x8] sm:$0xff] 0.0
        %293 = vst [vmem:[%s252 + $0x10] sm:$0xff] 0.0
        %294 = vst [vmem:[%s252 + $0x18] sm:$0xff] 0.0
        %295 = vst [vmem:[%s252 + $0x20] sm:$0xff] 0.0
        %296 = vst [vmem:[%s252 + $0x28] sm:$0xff] 0.0
        %297 = vst [vmem:[%s252 + $0x30] sm:$0xff] 0.0
        %298 = vst [vmem:[%s252 + $0x38] sm:$0xff] 0.0
        %299 = vst [vmem:[%s252 + $0x40] sm:$0xff] 0.0
        %300 = vst [vmem:[%s252 + $0x48] sm:$0xff] 0.0
        %301 = vst [vmem:[%s252 + $0x50] sm:$0xff] 0.0
        %302 = vst [vmem:[%s252 + $0x58] sm:$0xff] 0.0
        %303 = vst [vmem:[%s252 + $0x60] sm:$0xff] 0.0
        %304 = vst [vmem:[%s252 + $0x68] sm:$0xff] 0.0
        %305 = vst [vmem:[%s252 + $0x70] sm:$0xff] 0.0
        %306 = vst [vmem:[%s252 + $0x78] sm:$0xff] 0.0
      $region36: #{detection_backbone_forward.7} parent=31 // pred_fallthru
        _
      %v307 = vld [vmem:[%s236] sm:$0xff]
      %v308 = vld [vmem:[%s236 + $0x8] sm:$0xff]
      %v309 = vld [vmem:[%s236 + $0x10] sm:$0xff]
      %v310 = vld [vmem:[%s236 + $0x18] sm:$0xff]
      %v311 = vld [vmem:[%s236 + $0x20] sm:$0xff]
      %v312 = vld [vmem:[%s236 + $0x28] sm:$0xff]
      %v313 = vld [vmem:[%s236 + $0x30] sm:$0xff]
      %v314 = vld [vmem:[%s236 + $0x38] sm:$0xff]
      %v315 = vld [vmem:[%s236 + $0x40] sm:$0xff]
      %v316 = vld [vmem:[%s236 + $0x48] sm:$0xff]
      %v317 = vld [vmem:[%s236 + $0x50] sm:$0xff]
      %v318 = vld [vmem:[%s236 + $0x58] sm:$0xff]
      %v319 = vld [vmem:[%s236 + $0x60] sm:$0xff]
      %v320 = vld [vmem:[%s236 + $0x68] sm:$0xff]
      %v321 = vld [vmem:[%s236 + $0x70] sm:$0xff]
      %v322 = vld [vmem:[%s236 + $0x78] sm:$0xff]
      %v323 = vld [vmem:[%s1] sm:$0xf]
      %v324 = vld [vmem:[%s1 + $0x4] sm:$0xf]
      %v325 = vld [vmem:[%s1 + $0x8] sm:$0xf]
      %v326 = vld [vmem:[%s1 + $0xc] sm:$0xf]
      %v327 = vld [vmem:[%s1 + $0x10] sm:$0xf]
      %v328 = vld [vmem:[%s1 + $0x14] sm:$0xf]
      %v329 = vld [vmem:[%s1 + $0x18] sm:$0xf]
      %v330 = vld [vmem:[%s1 + $0x1c] sm:$0xf]
      %v331 = vld [vmem:[%s1 + $0x20] sm:$0xf]
      %v332 = vld [vmem:[%s1 + $0x24] sm:$0xf]
      %v333 = vld [vmem:[%s1 + $0x28] sm:$0xf]
      %v334 = vld [vmem:[%s1 + $0x2c] sm:$0xf]
      %v335 = vld [vmem:[%s1 + $0x30] sm:$0xf]
      %v336 = vld [vmem:[%s1 + $0x34] sm:$0xf]
      %v337 = vld [vmem:[%s1 + $0x38] sm:$0xf]
      %v338 = vld [vmem:[%s1 + $0x3c] sm:$0xf]
      %v339 = vld [vmem:[%s1 + $0x40] sm:$0xf]
      %v340 = vld [vmem:[%s1 + $0x44] sm:$0xf]
      %v341 = vld [vmem:[%s2] sm:$0x1]
      %v343 = vperm.slane %v341, 0
      %v361 = vunpack.c.l.b16 %v307
      %v362 = vunpack.c.h.b16 %v307
      %v363 = vunpack.c.l.b16 %v308
      %v364 = vunpack.c.h.b16 %v308
      %v365 = vunpack.c.l.b16 %v309
      %v366 = vunpack.c.h.b16 %v309
      %v367 = vunpack.c.l.b16 %v310
      %v368 = vunpack.c.h.b16 %v310
      %v369 = vunpack.c.l.b16 %v311
      %v370 = vunpack.c.h.b16 %v311
      %v371 = vunpack.c.l.b16 %v312
      %v372 = vunpack.c.h.b16 %v312
      %v373 = vunpack.c.l.b16 %v313
      %v374 = vunpack.c.h.b16 %v313
      %v375 = vunpack.c.l.b16 %v314
      %v376 = vunpack.c.h.b16 %v314
      %v377 = vunpack.c.l.b16 %v315
      %v378 = vunpack.c.h.b16 %v315
      %v379 = vunpack.c.l.b16 %v316
      %v380 = vunpack.c.h.b16 %v316
      %v381 = vunpack.c.l.b16 %v317
      %v382 = vunpack.c.h.b16 %v317
      %v383 = vunpack.c.l.b16 %v318
      %v384 = vunpack.c.h.b16 %v318
      %v385 = vunpack.c.l.b16 %v319
      %v386 = vunpack.c.h.b16 %v319
      %v387 = vunpack.c.l.b16 %v320
      %v388 = vunpack.c.h.b16 %v320
      %v389 = vunpack.c.l.b16 %v321
      %v390 = vunpack.c.h.b16 %v321
      %v391 = vunpack.c.l.b16 %v322
      %v392 = vunpack.c.h.b16 %v322
      %v393 = vpack.c.b16 %v363, %v361
      %v394 = vpack.c.b16 %v364, %v362
      %v395 = vpack.c.b16 %v367, %v365
      %v396 = vpack.c.b16 %v368, %v366
      %v397 = vpack.c.b16 %v371, %v369
      %v398 = vpack.c.b16 %v372, %v370
      %v399 = vpack.c.b16 %v375, %v373
      %v400 = vpack.c.b16 %v376, %v374
      %v401 = vpack.c.b16 %v379, %v377
      %v402 = vpack.c.b16 %v380, %v378
      %v403 = vpack.c.b16 %v383, %v381
      %v404 = vpack.c.b16 %v384, %v382
      %v405 = vpack.c.b16 %v387, %v385
      %v406 = vpack.c.b16 %v388, %v386
      %v407 = vpack.c.b16 %v391, %v389
      %v408 = vpack.c.b16 %v392, %v390
      %v435 = vunpack.c.l.b16 %v323
      %v436 = vunpack.c.l.b16 %v324
      %v437 = vunpack.c.l.b16 %v325
      %v438 = vunpack.c.l.b16 %v326
      %v439 = vunpack.c.l.b16 %v327
      %v440 = vunpack.c.l.b16 %v328
      %v441 = vunpack.c.l.b16 %v329
      %v442 = vunpack.c.l.b16 %v330
      %v443 = vunpack.c.l.b16 %v331
      %v444 = vunpack.c.l.b16 %v332
      %v445 = vunpack.c.l.b16 %v333
      %v446 = vunpack.c.l.b16 %v334
      %v447 = vunpack.c.l.b16 %v335
      %v448 = vunpack.c.l.b16 %v336
      %v449 = vunpack.c.l.b16 %v337
      %v450 = vunpack.c.l.b16 %v338
      %v451 = vunpack.c.l.b16 %v339
      %v452 = vunpack.c.l.b16 %v340
      %v453 = vpack.c.b16 %v436, %v435
      %v454 = vpack.c.b16 %v438, %v437
      %v455 = vpack.c.b16 %v440, %v439
      %v456 = vpack.c.b16 %v442, %v441
      %v457 = vpack.c.b16 %v444, %v443
      %v458 = vpack.c.b16 %v446, %v445
      %v459 = vpack.c.b16 %v448, %v447
      %v460 = vpack.c.b16 %v450, %v449
      %v461 = vpack.c.b16 %v452, %v451
      %vm471 = vcmask 130048
      %v473 = vsel %vm471, %v394, 0
      %v476 = vsel %vm471, %v396, 0
      %v479 = vsel %vm471, %v398, 0
      %v482 = vsel %vm471, %v400, 0
      %v485 = vsel %vm471, %v402, 0
      %v488 = vsel %vm471, %v404, 0
      %v491 = vsel %vm471, %v406, 0
      %v494 = vsel %vm471, %v408, 0
      %496 = vmatpush.bf16.msra.mxu0 %v460
      %497 = vmatpush.bf16.msra.mxu0 %v459
      %498 = vmatpush.bf16.msra.mxu0 %v458
      %499 = vmatpush.bf16.msra.mxu0 %v457
      %500 = vmatpush.bf16.msra.mxu0 %v456
      %501 = vmatpush.bf16.msra.mxu0 %v455
      %502 = vmatpush.bf16.msra.mxu0 %v454
      %503 = vmatpush.bf16.msra.mxu0 %v453
      %504 = vmatmul.bf16.gmra.mxu0 %v393
      %v505 = vpop.f32.mrf.mxu0
      %v506 = vadd.f32 %v343, %v505
      %v507 = vpop.f32.mrf.mxu0
      %v508 = vadd.f32 %v343, %v507
      %509 = vmatmul.bf16.gmra.mxu0 %v395
      %v510 = vpop.f32.mrf.mxu0
      %v511 = vadd.f32 %v343, %v510
      %v512 = vpop.f32.mrf.mxu0
      %v513 = vadd.f32 %v343, %v512
      %514 = vmatmul.bf16.gmra.mxu0 %v397
      %v515 = vpop.f32.mrf.mxu0
      %v516 = vadd.f32 %v343, %v515
      %v517 = vpop.f32.mrf.mxu0
      %v518 = vadd.f32 %v343, %v517
      %519 = vmatmul.bf16.gmra.mxu0 %v399
      %v520 = vpop.f32.mrf.mxu0
      %v521 = vadd.f32 %v343, %v520
      %v522 = vpop.f32.mrf.mxu0
      %v523 = vadd.f32 %v343, %v522
      %524 = vmatmul.bf16.gmra.mxu0 %v401
      %v525 = vpop.f32.mrf.mxu0
      %v526 = vadd.f32 %v343, %v525
      %v527 = vpop.f32.mrf.mxu0
      %v528 = vadd.f32 %v343, %v527
      %529 = vmatmul.bf16.gmra.mxu0 %v403
      %v530 = vpop.f32.mrf.mxu0
      %v531 = vadd.f32 %v343, %v530
      %v532 = vpop.f32.mrf.mxu0
      %v533 = vadd.f32 %v343, %v532
      %534 = vmatmul.bf16.gmra.mxu0 %v405
      %v535 = vpop.f32.mrf.mxu0
      %v536 = vadd.f32 %v343, %v535
      %v537 = vpop.f32.mrf.mxu0
      %v538 = vadd.f32 %v343, %v537
      %539 = vmatmul.bf16.gmra.mxu0 %v407
      %v540 = vpop.f32.mrf.mxu0
      %v541 = vadd.f32 %v343, %v540
      %v542 = vpop.f32.mrf.mxu0
      %v543 = vadd.f32 %v343, %v542
      %544 = vdwg.mxu0
      %545 = vmatpush.bf16.msra.mxu0 0
      %546 = vmatpush.bf16.msra.mxu0 0
      %547 = vmatpush.bf16.msra.mxu0 0
      %548 = vmatpush.bf16.msra.mxu0 0
      %549 = vmatpush.bf16.msra.mxu0 0
      %550 = vmatpush.bf16.msra.mxu0 0
      %551 = vmatpush.bf16.msra.mxu0 0
      %552 = vmatpush.bf16.msra.mxu0 %v461
      %553 = vmatmul.bf16.gmra.mxu0 %v473
      %v554 = vpop.f32.mrf.mxu0
      %v555 = vadd.f32 %v506, %v554
      %v556 = vpop.f32.mrf.mxu0
      %v557 = vadd.f32 %v508, %v556
      %558 = vmatmul.bf16.gmra.mxu0 %v476
      %v559 = vpop.f32.mrf.mxu0
      %v560 = vadd.f32 %v511, %v559
      %v561 = vpop.f32.mrf.mxu0
      %v562 = vadd.f32 %v513, %v561
      %563 = vmatmul.bf16.gmra.mxu0 %v479
      %v564 = vpop.f32.mrf.mxu0
      %v565 = vadd.f32 %v516, %v564
      %v566 = vpop.f32.mrf.mxu0
      %v567 = vadd.f32 %v518, %v566
      %568 = vmatmul.bf16.gmra.mxu0 %v482
      %v569 = vpop.f32.mrf.mxu0
      %v570 = vadd.f32 %v521, %v569
      %v571 = vpop.f32.mrf.mxu0
      %v572 = vadd.f32 %v523, %v571
      %573 = vmatmul.bf16.gmra.mxu0 %v485
      %v574 = vpop.f32.mrf.mxu0
      %v575 = vadd.f32 %v526, %v574
      %v576 = vpop.f32.mrf.mxu0
      %v577 = vadd.f32 %v528, %v576
      %578 = vmatmul.bf16.gmra.mxu0 %v488
      %v579 = vpop.f32.mrf.mxu0
      %v580 = vadd.f32 %v531, %v579
      %v581 = vpop.f32.mrf.mxu0
      %v582 = vadd.f32 %v533, %v581
      %583 = vmatmul.bf16.gmra.mxu0 %v491
      %v584 = vpop.f32.mrf.mxu0
      %v585 = vadd.f32 %v536, %v584
      %v586 = vpop.f32.mrf.mxu0
      %v587 = vadd.f32 %v538, %v586
      %588 = vmatmul.bf16.gmra.mxu0 %v494
      %v589 = vpop.f32.mrf.mxu0
      %v590 = vadd.f32 %v541, %v589
      %v591 = vpop.f32.mrf.mxu0
      %v592 = vadd.f32 %v543, %v591
      %593 = vdwg.mxu0
      %v594 = vld [vmem:[#allocation2] sm:$0xff]
      %v595 = vld [vmem:[#allocation2 + $0x8] sm:$0xff]
      %v596 = vld [vmem:[#allocation2 + $0x10] sm:$0xff]
      %v597 = vld [vmem:[#allocation2 + $0x18] sm:$0xff]
      %v598 = vld [vmem:[#allocation2 + $0x20] sm:$0xff]
      %v599 = vld [vmem:[#allocation2 + $0x28] sm:$0xff]
      %v600 = vld [vmem:[#allocation2 + $0x30] sm:$0xff]
      %v601 = vld [vmem:[#allocation2 + $0x38] sm:$0xff]
      %v602 = vld [vmem:[#allocation2 + $0x40] sm:$0xff]
      %v603 = vld [vmem:[#allocation2 + $0x48] sm:$0xff]
      %v604 = vld [vmem:[#allocation2 + $0x50] sm:$0xff]
      %v605 = vld [vmem:[#allocation2 + $0x58] sm:$0xff]
      %v606 = vld [vmem:[#allocation2 + $0x60] sm:$0xff]
      %v607 = vld [vmem:[#allocation2 + $0x68] sm:$0xff]
      %v608 = vld [vmem:[#allocation2 + $0x70] sm:$0xff]
      %v609 = vld [vmem:[#allocation2 + $0x78] sm:$0xff]
      %v610 = vsub.f32 %v555, %v594
      %v611 = vsub.f32 %v557, %v595
      %v612 = vsub.f32 %v560, %v596
      %v613 = vsub.f32 %v562, %v597
      %v614 = vsub.f32 %v565, %v598
      %v615 = vsub.f32 %v567, %v599
      %v616 = vsub.f32 %v570, %v600
      %v617 = vsub.f32 %v572, %v601
      %v618 = vsub.f32 %v575, %v602
      %v619 = vsub.f32 %v577, %v603
      %v620 = vsub.f32 %v580, %v604
      %v621 = vsub.f32 %v582, %v605
      %v622 = vsub.f32 %v585, %v606
      %v623 = vsub.f32 %v587, %v607
      %v624 = vsub.f32 %v590, %v608
      %v625 = vsub.f32 %v592, %v609
      %v626 = vmul.f32 %v610, 0.5
      %v627 = vmul.f32 %v611, 0.5
      %v628 = vmul.f32 %v612, 0.5
      %v629 = vmul.f32 %v613, 0.5
      %v630 = vmul.f32 %v614, 0.5
      %v631 = vmul.f32 %v615, 0.5
      %v632 = vmul.f32 %v616, 0.5
      %v633 = vmul.f32 %v617, 0.5
      %v634 = vmul.f32 %v618, 0.5
      %v635 = vmul.f32 %v619, 0.5
      %v636 = vmul.f32 %v620, 0.5
      %v637 = vmul.f32 %v621, 0.5
      %v638 = vmul.f32 %v622, 0.5
      %v639 = vmul.f32 %v623, 0.5
      %v640 = vmul.f32 %v624, 0.5
      %v641 = vmul.f32 %v625, 0.5
      %v642 = vadd.f32 %v594, %v626
      %v643 = vadd.f32 %v595, %v627
      %v644 = vadd.f32 %v596, %v628
      %v645 = vadd.f32 %v597, %v629
      %v646 = vadd.f32 %v598, %v630
      %v647 = vadd.f32 %v599, %v631
      %v648 = vadd.f32 %v600, %v632
      %v649 = vadd.f32 %v601, %v633
      %v650 = vadd.f32 %v602, %v634
      %v651 = vadd.f32 %v603, %v635
      %v652 = vadd.f32 %v604, %v636
      %v653 = vadd.f32 %v605, %v637
      %v654 = vadd.f32 %v606, %v638
      %v655 = vadd.f32 %v607, %v639
      %v656 = vadd.f32 %v608, %v640
      %v657 = vadd.f32 %v609, %v641
      %vm658 = vcmp.ge.f32.partialorder %v642, 1.0
      %vm659 = vcmp.ge.f32.partialorder %v643, 1.0
      %vm660 = vcmp.ge.f32.partialorder %v644, 1.0
      %vm661 = vcmp.ge.f32.partialorder %v645, 1.0
      %vm662 = vcmp.ge.f32.partialorder %v646, 1.0
      %vm663 = vcmp.ge.f32.partialorder %v647, 1.0
      %vm664 = vcmp.ge.f32.partialorder %v648, 1.0
      %vm665 = vcmp.ge.f32.partialorder %v649, 1.0
      %vm666 = vcmp.ge.f32.partialorder %v650, 1.0
      %vm667 = vcmp.ge.f32.partialorder %v651, 1.0
      %vm668 = vcmp.ge.f32.partialorder %v652, 1.0
      %vm669 = vcmp.ge.f32.partialorder %v653, 1.0
      %vm670 = vcmp.ge.f32.partialorder %v654, 1.0
      %vm671 = vcmp.ge.f32.partialorder %v655, 1.0
      %vm672 = vcmp.ge.f32.partialorder %v656, 1.0
      %vm673 = vcmp.ge.f32.partialorder %v657, 1.0
      %v674 = vsel %vm658, 1, 0
      %v675 = vsel %vm659, 1, 0
      %v676 = vsel %vm660, 1, 0
      %v677 = vsel %vm661, 1, 0
      %v678 = vsel %vm662, 1, 0
      %v679 = vsel %vm663, 1, 0
      %v680 = vsel %vm664, 1, 0
      %v681 = vsel %vm665, 1, 0
      %v682 = vsel %vm666, 1, 0
      %v683 = vsel %vm667, 1, 0
      %v684 = vsel %vm668, 1, 0
      %v685 = vsel %vm669, 1, 0
      %v686 = vsel %vm670, 1, 0
      %v687 = vsel %vm671, 1, 0
      %v688 = vsel %vm672, 1, 0
      %v689 = vsel %vm673, 1, 0
      %v690 = vcvt.s32.f32 %v674
      %v691 = vcvt.s32.f32 %v675
      %v692 = vcvt.s32.f32 %v676
      %v693 = vcvt.s32.f32 %v677
      %v694 = vcvt.s32.f32 %v678
      %v695 = vcvt.s32.f32 %v679
      %v696 = vcvt.s32.f32 %v680
      %v697 = vcvt.s32.f32 %v681
      %v698 = vcvt.s32.f32 %v682
      %v699 = vcvt.s32.f32 %v683
      %v700 = vcvt.s32.f32 %v684
      %v701 = vcvt.s32.f32 %v685
      %v702 = vcvt.s32.f32 %v686
      %v703 = vcvt.s32.f32 %v687
      %v704 = vcvt.s32.f32 %v688
      %v705 = vcvt.s32.f32 %v689
      %vm706 = vcmp.gt.f32.partialorder %v690, 0.0
      %vm707 = vcmp.gt.f32.partialorder %v691, 0.0
      %vm708 = vcmp.gt.f32.partialorder %v692, 0.0
      %vm709 = vcmp.gt.f32.partialorder %v693, 0.0
      %vm710 = vcmp.gt.f32.partialorder %v694, 0.0
      %vm711 = vcmp.gt.f32.partialorder %v695, 0.0
      %vm712 = vcmp.gt.f32.partialorder %v696, 0.0
      %vm713 = vcmp.gt.f32.partialorder %v697, 0.0
      %vm714 = vcmp.gt.f32.partialorder %v698, 0.0
      %vm715 = vcmp.gt.f32.partialorder %v699, 0.0
      %vm716 = vcmp.gt.f32.partialorder %v700, 0.0
      %vm717 = vcmp.gt.f32.partialorder %v701, 0.0
      %vm718 = vcmp.gt.f32.partialorder %v702, 0.0
      %vm719 = vcmp.gt.f32.partialorder %v703, 0.0
      %vm720 = vcmp.gt.f32.partialorder %v704, 0.0
      %vm721 = vcmp.gt.f32.partialorder %v705, 0.0
      %v722 = vsel %vm706, 0.0, %v642
      %v723 = vsel %vm707, 0.0, %v643
      %v724 = vsel %vm708, 0.0, %v644
      %v725 = vsel %vm709, 0.0, %v645
      %v726 = vsel %vm710, 0.0, %v646
      %v727 = vsel %vm711, 0.0, %v647
      %v728 = vsel %vm712, 0.0, %v648
      %v729 = vsel %vm713, 0.0, %v649
      %v730 = vsel %vm714, 0.0, %v650
      %v731 = vsel %vm715, 0.0, %v651
      %v732 = vsel %vm716, 0.0, %v652
      %v733 = vsel %vm717, 0.0, %v653
      %v734 = vsel %vm718, 0.0, %v654
      %v735 = vsel %vm719, 0.0, %v655
      %v736 = vsel %vm720, 0.0, %v656
      %v737 = vsel %vm721, 0.0, %v657
      %738 = vst [vmem:[#allocation2] sm:$0xff] %v722
      %739 = vst [vmem:[#allocation2 + $0x8] sm:$0xff] %v723
      %740 = vst [vmem:[#allocation2 + $0x10] sm:$0xff] %v724
      %741 = vst [vmem:[#allocation2 + $0x18] sm:$0xff] %v725
      %742 = vst [vmem:[#allocation2 + $0x20] sm:$0xff] %v726
      %743 = vst [vmem:[#allocation2 + $0x28] sm:$0xff] %v727
      %744 = vst [vmem:[#allocation2 + $0x30] sm:$0xff] %v728
      %745 = vst [vmem:[#allocation2 + $0x38] sm:$0xff] %v729
      %746 = vst [vmem:[#allocation2 + $0x40] sm:$0xff] %v730
      %747 = vst [vmem:[#allocation2 + $0x48] sm:$0xff] %v731
      %748 = vst [vmem:[#allocation2 + $0x50] sm:$0xff] %v732
      %749 = vst [vmem:[#allocation2 + $0x58] sm:$0xff] %v733
      %750 = vst [vmem:[#allocation2 + $0x60] sm:$0xff] %v734
      %751 = vst [vmem:[#allocation2 + $0x68] sm:$0xff] %v735
      %752 = vst [vmem:[#allocation2 + $0x70] sm:$0xff] %v736
      %753 = vst [vmem:[#allocation2 + $0x78] sm:$0xff] %v737
      %v754 = vpack.c.bf16 %v690, %v690
      %v755 = vpack.c.bf16 %v691, %v691
      %v756 = vpack.c.bf16 %v692, %v692
      %v757 = vpack.c.bf16 %v693, %v693
      %v758 = vpack.c.bf16 %v694, %v694
      %v759 = vpack.c.bf16 %v695, %v695
      %v760 = vpack.c.bf16 %v696, %v696
      %v761 = vpack.c.bf16 %v697, %v697
      %v762 = vpack.c.bf16 %v698, %v698
      %v763 = vpack.c.bf16 %v699, %v699
      %v764 = vpack.c.bf16 %v700, %v700
      %v765 = vpack.c.bf16 %v701, %v701
      %v766 = vpack.c.bf16 %v702, %v702
      %v767 = vpack.c.bf16 %v703, %v703
      %v768 = vpack.c.bf16 %v704, %v704
      %v769 = vpack.c.bf16 %v705, %v705
      %770 = vst [vmem:[%s246] sm:$0xf] %v754
      %771 = vst [vmem:[%s246 + $0x4] sm:$0xf] %v755
      %772 = vst [vmem:[%s246 + $0x8] sm:$0xf] %v756
      %773 = vst [vmem:[%s246 + $0xc] sm:$0xf] %v757
      %774 = vst [vmem:[%s246 + $0x10] sm:$0xf] %v758
      %775 = vst [vmem:[%s246 + $0x14] sm:$0xf] %v759
      %776 = vst [vmem:[%s246 + $0x18] sm:$0xf] %v760
      %777 = vst [vmem:[%s246 + $0x1c] sm:$0xf] %v761
      %778 = vst [vmem:[%s246 + $0x20] sm:$0xf] %v762
      %779 = vst [vmem:[%s246 + $0x24] sm:$0xf] %v763
      %780 = vst [vmem:[%s246 + $0x28] sm:$0xf] %v764
      %781 = vst [vmem:[%s246 + $0x2c] sm:$0xf] %v765
      %782 = vst [vmem:[%s246 + $0x30] sm:$0xf] %v766
      %783 = vst [vmem:[%s246 + $0x34] sm:$0xf] %v767
      %784 = vst [vmem:[%s246 + $0x38] sm:$0xf] %v768
      %785 = vst [vmem:[%s246 + $0x3c] sm:$0xf] %v769
      %v786 = vld [vmem:[#allocation3] sm:$0xff]
      %v787 = vld [vmem:[#allocation3 + $0x8] sm:$0xff]
      %v788 = vld [vmem:[#allocation3 + $0x10] sm:$0xff]
      %v789 = vld [vmem:[#allocation3 + $0x18] sm:$0xff]
      %v790 = vld [vmem:[#allocation3 + $0x20] sm:$0xff]
      %v791 = vld [vmem:[#allocation3 + $0x28] sm:$0xff]
      %v792 = vld [vmem:[#allocation3 + $0x30] sm:$0xff]
      %v793 = vld [vmem:[#allocation3 + $0x38] sm:$0xff]
      %v794 = vld [vmem:[#allocation3 + $0x40] sm:$0xff]
      %v795 = vld [vmem:[#allocation3 + $0x48] sm:$0xff]
      %v796 = vld [vmem:[#allocation3 + $0x50] sm:$0xff]
      %v797 = vld [vmem:[#allocation3 + $0x58] sm:$0xff]
      %v798 = vld [vmem:[#allocation3 + $0x60] sm:$0xff]
      %v799 = vld [vmem:[#allocation3 + $0x68] sm:$0xff]
      %v800 = vld [vmem:[#allocation3 + $0x70] sm:$0xff]
      %v801 = vld [vmem:[#allocation3 + $0x78] sm:$0xff]
      %v802 = vsub.f32 %v690, %v786
      %v803 = vsub.f32 %v691, %v787
      %v804 = vsub.f32 %v692, %v788
      %v805 = vsub.f32 %v693, %v789
      %v806 = vsub.f32 %v694, %v790
      %v807 = vsub.f32 %v695, %v791
      %v808 = vsub.f32 %v696, %v792
      %v809 = vsub.f32 %v697, %v793
      %v810 = vsub.f32 %v698, %v794
      %v811 = vsub.f32 %v699, %v795
      %v812 = vsub.f32 %v700, %v796
      %v813 = vsub.f32 %v701, %v797
      %v814 = vsub.f32 %v702, %v798
      %v815 = vsub.f32 %v703, %v799
      %v816 = vsub.f32 %v704, %v800
      %v817 = vsub.f32 %v705, %v801
      %v818 = vmul.f32 %v802, 0.5
      %v819 = vmul.f32 %v803, 0.5
      %v820 = vmul.f32 %v804, 0.5
      %v821 = vmul.f32 %v805, 0.5
      %v822 = vmul.f32 %v806, 0.5
      %v823 = vmul.f32 %v807, 0.5
      %v824 = vmul.f32 %v808, 0.5
      %v825 = vmul.f32 %v809, 0.5
      %v826 = vmul.f32 %v810, 0.5
      %v827 = vmul.f32 %v811, 0.5
      %v828 = vmul.f32 %v812, 0.5
      %v829 = vmul.f32 %v813, 0.5
      %v830 = vmul.f32 %v814, 0.5
      %v831 = vmul.f32 %v815, 0.5
      %v832 = vmul.f32 %v816, 0.5
      %v833 = vmul.f32 %v817, 0.5
      %v834 = vadd.f32 %v786, %v818
      %v835 = vadd.f32 %v787, %v819
      %v836 = vadd.f32 %v788, %v820
      %v837 = vadd.f32 %v789, %v821
      %v838 = vadd.f32 %v790, %v822
      %v839 = vadd.f32 %v791, %v823
      %v840 = vadd.f32 %v792, %v824
      %v841 = vadd.f32 %v793, %v825
      %v842 = vadd.f32 %v794, %v826
      %v843 = vadd.f32 %v795, %v827
      %v844 = vadd.f32 %v796, %v828
      %v845 = vadd.f32 %v797, %v829
      %v846 = vadd.f32 %v798, %v830
      %v847 = vadd.f32 %v799, %v831
      %v848 = vadd.f32 %v800, %v832
      %v849 = vadd.f32 %v801, %v833
      %vm850 = vcmp.ge.f32.partialorder %v834, 1.0
      %vm851 = vcmp.ge.f32.partialorder %v835, 1.0
      %vm852 = vcmp.ge.f32.partialorder %v836, 1.0
      %vm853 = vcmp.ge.f32.partialorder %v837, 1.0
      %vm854 = vcmp.ge.f32.partialorder %v838, 1.0
      %vm855 = vcmp.ge.f32.partialorder %v839, 1.0
      %vm856 = vcmp.ge.f32.partialorder %v840, 1.0
      %vm857 = vcmp.ge.f32.partialorder %v841, 1.0
      %vm858 = vcmp.ge.f32.partialorder %v842, 1.0
      %vm859 = vcmp.ge.f32.partialorder %v843, 1.0
      %vm860 = vcmp.ge.f32.partialorder %v844, 1.0
      %vm861 = vcmp.ge.f32.partialorder %v845, 1.0
      %vm862 = vcmp.ge.f32.partialorder %v846, 1.0
      %vm863 = vcmp.ge.f32.partialorder %v847, 1.0
      %vm864 = vcmp.ge.f32.partialorder %v848, 1.0
      %vm865 = vcmp.ge.f32.partialorder %v849, 1.0
      %v866 = vsel %vm850, 1, 0
      %v867 = vsel %vm851, 1, 0
      %v868 = vsel %vm852, 1, 0
      %v869 = vsel %vm853, 1, 0
      %v870 = vsel %vm854, 1, 0
      %v871 = vsel %vm855, 1, 0
      %v872 = vsel %vm856, 1, 0
      %v873 = vsel %vm857, 1, 0
      %v874 = vsel %vm858, 1, 0
      %v875 = vsel %vm859, 1, 0
      %v876 = vsel %vm860, 1, 0
      %v877 = vsel %vm861, 1, 0
      %v878 = vsel %vm862, 1, 0
      %v879 = vsel %vm863, 1, 0
      %v880 = vsel %vm864, 1, 0
      %v881 = vsel %vm865, 1, 0
      %v882 = vcvt.s32.f32 %v866
      %v883 = vcvt.s32.f32 %v867
      %v884 = vcvt.s32.f32 %v868
      %v885 = vcvt.s32.f32 %v869
      %v886 = vcvt.s32.f32 %v870
      %v887 = vcvt.s32.f32 %v871
      %v888 = vcvt.s32.f32 %v872
      %v889 = vcvt.s32.f32 %v873
      %v890 = vcvt.s32.f32 %v874
      %v891 = vcvt.s32.f32 %v875
      %v892 = vcvt.s32.f32 %v876
      %v893 = vcvt.s32.f32 %v877
      %v894 = vcvt.s32.f32 %v878
      %v895 = vcvt.s32.f32 %v879
      %v896 = vcvt.s32.f32 %v880
      %v897 = vcvt.s32.f32 %v881
      %vm898 = vcmp.gt.f32.partialorder %v882, 0.0
      %vm899 = vcmp.gt.f32.partialorder %v883, 0.0
      %vm900 = vcmp.gt.f32.partialorder %v884, 0.0
      %vm901 = vcmp.gt.f32.partialorder %v885, 0.0
      %vm902 = vcmp.gt.f32.partialorder %v886, 0.0
      %vm903 = vcmp.gt.f32.partialorder %v887, 0.0
      %vm904 = vcmp.gt.f32.partialorder %v888, 0.0
      %vm905 = vcmp.gt.f32.partialorder %v889, 0.0
      %vm906 = vcmp.gt.f32.partialorder %v890, 0.0
      %vm907 = vcmp.gt.f32.partialorder %v891, 0.0
      %vm908 = vcmp.gt.f32.partialorder %v892, 0.0
      %vm909 = vcmp.gt.f32.partialorder %v893, 0.0
      %vm910 = vcmp.gt.f32.partialorder %v894, 0.0
      %vm911 = vcmp.gt.f32.partialorder %v895, 0.0
      %vm912 = vcmp.gt.f32.partialorder %v896, 0.0
      %vm913 = vcmp.gt.f32.partialorder %v897, 0.0
      %v914 = vsel %vm898, 0.0, %v834
      %v915 = vsel %vm899, 0.0, %v835
      %v916 = vsel %vm900, 0.0, %v836
      %v917 = vsel %vm901, 0.0, %v837
      %v918 = vsel %vm902, 0.0, %v838
      %v919 = vsel %vm903, 0.0, %v839
      %v920 = vsel %vm904, 0.0, %v840
      %v921 = vsel %vm905, 0.0, %v841
      %v922 = vsel %vm906, 0.0, %v842
      %v923 = vsel %vm907, 0.0, %v843
      %v924 = vsel %vm908, 0.0, %v844
      %v925 = vsel %vm909, 0.0, %v845
      %v926 = vsel %vm910, 0.0, %v846
      %v927 = vsel %vm911, 0.0, %v847
      %v928 = vsel %vm912, 0.0, %v848
      %v929 = vsel %vm913, 0.0, %v849
      %930 = vst [vmem:[#allocation3] sm:$0xff] %v914
      %931 = vst [vmem:[#allocation3 + $0x8] sm:$0xff] %v915
      %932 = vst [vmem:[#allocation3 + $0x10] sm:$0xff] %v916
      %933 = vst [vmem:[#allocation3 + $0x18] sm:$0xff] %v917
      %934 = vst [vmem:[#allocation3 + $0x20] sm:$0xff] %v918
      %935 = vst [vmem:[#allocation3 + $0x28] sm:$0xff] %v919
      %936 = vst [vmem:[#allocation3 + $0x30] sm:$0xff] %v920
      %937 = vst [vmem:[#allocation3 + $0x38] sm:$0xff] %v921
      %938 = vst [vmem:[#allocation3 + $0x40] sm:$0xff] %v922
      %939 = vst [vmem:[#allocation3 + $0x48] sm:$0xff] %v923
      %940 = vst [vmem:[#allocation3 + $0x50] sm:$0xff] %v924
      %941 = vst [vmem:[#allocation3 + $0x58] sm:$0xff] %v925
      %942 = vst [vmem:[#allocation3 + $0x60] sm:$0xff] %v926
      %943 = vst [vmem:[#allocation3 + $0x68] sm:$0xff] %v927
      %944 = vst [vmem:[#allocation3 + $0x70] sm:$0xff] %v928
      %945 = vst [vmem:[#allocation3 + $0x78] sm:$0xff] %v929
      %v946 = vld [vmem:[%s252] sm:$0xff]
      %v947 = vld [vmem:[%s252 + $0x8] sm:$0xff]
      %v948 = vld [vmem:[%s252 + $0x10] sm:$0xff]
      %v949 = vld [vmem:[%s252 + $0x18] sm:$0xff]
      %v950 = vld [vmem:[%s252 + $0x20] sm:$0xff]
      %v951 = vld [vmem:[%s252 + $0x28] sm:$0xff]
      %v952 = vld [vmem:[%s252 + $0x30] sm:$0xff]
      %v953 = vld [vmem:[%s252 + $0x38] sm:$0xff]
      %v954 = vld [vmem:[%s252 + $0x40] sm:$0xff]
      %v955 = vld [vmem:[%s252 + $0x48] sm:$0xff]
      %v956 = vld [vmem:[%s252 + $0x50] sm:$0xff]
      %v957 = vld [vmem:[%s252 + $0x58] sm:$0xff]
      %v958 = vld [vmem:[%s252 + $0x60] sm:$0xff]
      %v959 = vld [vmem:[%s252 + $0x68] sm:$0xff]
      %v960 = vld [vmem:[%s252 + $0x70] sm:$0xff]
      %v961 = vld [vmem:[%s252 + $0x78] sm:$0xff]
      %v962 = vadd.f32 %v946, %v882
      %v963 = vadd.f32 %v947, %v883
      %v964 = vadd.f32 %v948, %v884
      %v965 = vadd.f32 %v949, %v885
      %v966 = vadd.f32 %v950, %v886
      %v967 = vadd.f32 %v951, %v887
      %v968 = vadd.f32 %v952, %v888
      %v969 = vadd.f32 %v953, %v889
      %v970 = vadd.f32 %v954, %v890
      %v971 = vadd.f32 %v955, %v891
      %v972 = vadd.f32 %v956, %v892
      %v973 = vadd.f32 %v957, %v893
      %v974 = vadd.f32 %v958, %v894
      %v975 = vadd.f32 %v959, %v895
      %v976 = vadd.f32 %v960, %v896
      %v977 = vadd.f32 %v961, %v897
      %978 = vst [vmem:[%s252] sm:$0xff] %v962
      %979 = vst [vmem:[%s252 + $0x8] sm:$0xff] %v963
      %980 = vst [vmem:[%s252 + $0x10] sm:$0xff] %v964
      %981 = vst [vmem:[%s252 + $0x18] sm:$0xff] %v965
      %982 = vst [vmem:[%s252 + $0x20] sm:$0xff] %v966
      %983 = vst [vmem:[%s252 + $0x28] sm:$0xff] %v967
      %984 = vst [vmem:[%s252 + $0x30] sm:$0xff] %v968
      %985 = vst [vmem:[%s252 + $0x38] sm:$0xff] %v969
      %986 = vst [vmem:[%s252 + $0x40] sm:$0xff] %v970
      %987 = vst [vmem:[%s252 + $0x48] sm:$0xff] %v971
      %988 = vst [vmem:[%s252 + $0x50] sm:$0xff] %v972
      %989 = vst [vmem:[%s252 + $0x58] sm:$0xff] %v973
      %990 = vst [vmem:[%s252 + $0x60] sm:$0xff] %v974
      %991 = vst [vmem:[%s252 + $0x68] sm:$0xff] %v975
      %992 = vst [vmem:[%s252 + $0x70] sm:$0xff] %v976
      %993 = vst [vmem:[%s252 + $0x78] sm:$0xff] %v977
      %p994 = scmp.eq.s32.totalorder %s21, 3
      // Predicated region
      $region37: #{detection_backbone_forward.7} parent=31 // pred_check
        %p995 = pneg %p994
      $region38: #{detection_backbone_forward.7} parent=31 // pred_check_branch
        %997 = sbr.rel (%p995) target = $region40
      $region39: #{detection_backbone_forward.7} parent=31 // pred_region
        %v998 = vld [vmem:[%s252] sm:$0xff]
        %v999 = vld [vmem:[%s252 + $0x8] sm:$0xff]
        %v1000 = vld [vmem:[%s252 + $0x10] sm:$0xff]
        %v1001 = vld [vmem:[%s252 + $0x18] sm:$0xff]
        %v1002 = vld [vmem:[%s252 + $0x20] sm:$0xff]
        %v1003 = vld [vmem:[%s252 + $0x28] sm:$0xff]
        %v1004 = vld [vmem:[%s252 + $0x30] sm:$0xff]
        %v1005 = vld [vmem:[%s252 + $0x38] sm:$0xff]
        %v1006 = vld [vmem:[%s252 + $0x40] sm:$0xff]
        %v1007 = vld [vmem:[%s252 + $0x48] sm:$0xff]
        %v1008 = vld [vmem:[%s252 + $0x50] sm:$0xff]
        %v1009 = vld [vmem:[%s252 + $0x58] sm:$0xff]
        %v1010 = vld [vmem:[%s252 + $0x60] sm:$0xff]
        %v1011 = vld [vmem:[%s252 + $0x68] sm:$0xff]
        %v1012 = vld [vmem:[%s252 + $0x70] sm:$0xff]
        %v1013 = vld [vmem:[%s252 + $0x78] sm:$0xff]
        %v1014 = vmul.f32 %v998, 0.25
        %v1015 = vmul.f32 %v999, 0.25
        %v1016 = vmul.f32 %v1000, 0.25
        %v1017 = vmul.f32 %v1001, 0.25
        %v1018 = vmul.f32 %v1002, 0.25
        %v1019 = vmul.f32 %v1003, 0.25
        %v1020 = vmul.f32 %v1004, 0.25
        %v1021 = vmul.f32 %v1005, 0.25
        %v1022 = vmul.f32 %v1006, 0.25
        %v1023 = vmul.f32 %v1007, 0.25
        %v1024 = vmul.f32 %v1008, 0.25
        %v1025 = vmul.f32 %v1009, 0.25
        %v1026 = vmul.f32 %v1010, 0.25
        %v1027 = vmul.f32 %v1011, 0.25
        %v1028 = vmul.f32 %v1012, 0.25
        %v1029 = vmul.f32 %v1013, 0.25
        %1030 = vst [vmem:[%s252] sm:$0xff] %v1014
        %1031 = vst [vmem:[%s252 + $0x8] sm:$0xff] %v1015
        %1032 = vst [vmem:[%s252 + $0x10] sm:$0xff] %v1016
        %1033 = vst [vmem:[%s252 + $0x18] sm:$0xff] %v1017
        %1034 = vst [vmem:[%s252 + $0x20] sm:$0xff] %v1018
        %1035 = vst [vmem:[%s252 + $0x28] sm:$0xff] %v1019
        %1036 = vst [vmem:[%s252 + $0x30] sm:$0xff] %v1020
        %1037 = vst [vmem:[%s252 + $0x38] sm:$0xff] %v1021
        %1038 = vst [vmem:[%s252 + $0x40] sm:$0xff] %v1022
        %1039 = vst [vmem:[%s252 + $0x48] sm:$0xff] %v1023
        %1040 = vst [vmem:[%s252 + $0x50] sm:$0xff] %v1024
        %1041 = vst [vmem:[%s252 + $0x58] sm:$0xff] %v1025
        %1042 = vst [vmem:[%s252 + $0x60] sm:$0xff] %v1026
        %1043 = vst [vmem:[%s252 + $0x68] sm:$0xff] %v1027
        %1044 = vst [vmem:[%s252 + $0x70] sm:$0xff] %v1028
        %1045 = vst [vmem:[%s252 + $0x78] sm:$0xff] %v1029
      $region40: #{detection_backbone_forward.7} parent=31 // pred_fallthru
        _
      %s1046 = smul.u32 16, %s20
      %p1047 = scmp.lt.s32.totalorder %s21, 3
      %s1048 = scalar_select %p1047, %s21, 3
      %p1049 = scmp.lt.s32.totalorder %s1046, 15
      %s1050 = scalar_select %p1049, %s1046, 15
      %s1051 = smul.addr %s1048, 16
      %s1052 = sadd.s32 %s1050, %s1051
      %s1053 = smul.addr %s1052, 4
      %s1054 = scalar_lea.vmem %s3, %s1053
      %s1055 = smul.u32 16, %s20
      %p1056 = scmp.lt.s32.totalorder %s1055, 15
      %s1057 = scalar_select %p1056, %s1055, 15
      %s1058 = smul.addr %s1057, 8
      %s1059 = scalar_lea.vmem %s4, %s1058
      // Predicated region
      $region41: #{detection_backbone_forward.7} parent=31 // pred_check
        %p1060 = pneg %p118
      $region42: #{detection_backbone_forward.7} parent=31 // pred_check_branch
        %1062 = sbr.rel (%p1060) target = $region44
      $region43: #{detection_backbone_forward.7} parent=31 // pred_region
        %s1063 = smul.u32 16, %s20
      $region44: #{detection_backbone_forward.7} parent=31 // pred_fallthru
        _
      // Predicated region
      $region45: #{detection_backbone_forward.7} parent=31 // pred_check
        %p1064 = pneg %p144
      $region46: #{detection_backbone_forward.7} parent=31 // pred_check_branch
        %1066 = sbr.rel (%p1064) target = $region48
      $region47: #{detection_backbone_forward.7} parent=31 // pred_region
        %s1067 = smul.u32 16, %s20
      $region48: #{detection_backbone_forward.7} parent=31 // pred_fallthru
        _
      // Predicated region
      $region49: #{detection_backbone_forward.7} parent=31 // pred_check
        %p1068 = pneg %p144
      $region50: #{detection_backbone_forward.7} parent=31 // pred_check_branch
        %1070 = sbr.rel (%p1068) target = $region52
      $region51: #{detection_backbone_forward.7} parent=31 // pred_region
        %s1071 = smul.u32 16, %s20
        %p1072 = scmp.lt.s32.totalorder %s1071, 15
        %s1073 = scalar_select %p1072, %s1071, 15
        %s1074 = smul.addr %s1073, 8
        %s1075 = scalar_lea.vmem %s4, %s1074
      $region52: #{detection_backbone_forward.7} parent=31 // pred_fallthru
        _
    $region32: #{detection_backbone_forward.7} parent=5 // pred_fallthru
      _
    %p1076 = scmp.le.s32.totalorder 2, %s11
    // Predicated region
    $region53: #{detection_backbone_forward.7} parent=5 // pred_check
      %p1077 = pneg %p1076
    $region54: #{detection_backbone_forward.7} parent=5 // pred_check_branch
      %1079 = sbr.rel (%p1077) target = $region56
    $region55: #{detection_backbone_forward.7} parent=5 // pred_region
      %s1080 = ssub.s32 %s11, 2
      // Predicated region
      $region57: #{detection_backbone_forward.7} parent=55 // pred_check
        %p1081 = pneg %p124
      $region58: #{detection_backbone_forward.7} parent=55 // pred_check_branch
        %1083 = sbr.rel (%p1081) target = $region60
      $region59: #{detection_backbone_forward.7} parent=55 // pred_region
        %s1084 = smul.u32 16, %s22
        %p1085 = scmp.lt.s32.totalorder %s23, 3
        %s1086 = scalar_select %p1085, %s23, 3
        %p1087 = scmp.lt.s32.totalorder %s1084, 15
        %s1088 = scalar_select %p1087, %s1084, 15
        %s1089 = smul.addr %s1086, 16
        %s1090 = sadd.s32 %s1088, %s1089
        %s1091 = smul.addr %s1090, 4
        %s1092 = scalar_lea.vmem %s3, %s1091
      $region60: #{detection_backbone_forward.7} parent=55 // pred_fallthru
        _
    $region56: #{detection_backbone_forward.7} parent=5 // pred_fallthru
      _
  $region6: #{detection_backbone_forward.7} parent=0 // loop_footer
    %s15 = sadd.s32 1, %s11
  $region7: #{detection_backbone_forward.7} parent=0 // loop_footer_branch
    %10 = sbr.rel target = $region3
  $region8: #{detection_backbone_forward.7} parent=0 // loop_exit
    _

// kernel: detection_backbone_forward.8
$region0: #{detection_backbone_forward.8}
  #allocation0 [shape = 'u32[]', space=smem, size = 0x4, offset = 0x4, fixed_abs, tag = 'smem constant byte address 0x4 - core index']
  #allocation1 [shape = 'u32[72,128]{1,0:T(1,128)}', space=vmem, size = 0x9000, scoped, tag = 'internal scratch']
  #allocation2 [shape = 'f32[128,128]{1,0:T(8,128)}', space=vmem, size = 0x10000, scoped, tag = 'scratch operand']
  #allocation3 [shape = 'f32[128,128]{1,0:T(8,128)}', space=vmem, size = 0x10000, scoped, tag = 'scratch operand']
  %s0 = inlined_call_operand.vmem [shape: bf16[4,128,288], index: 0, kind: input, shape index: {}]
  %s1 = inlined_call_operand.vmem [shape: bf16[288,128], index: 1, kind: input, shape index: {}]
  %s2 = inlined_call_operand.vmem [shape: f32[1,128], index: 2, kind: input, shape index: {}]
  %s3 = inlined_call_operand.vmem [shape: bf16[4,128,128], index: 3, kind: output, shape index: {0}]
  %s4 = inlined_call_operand.vmem [shape: f32[128,128], index: 4, kind: output, shape index: {1}]
  %5 = xla_tuple %s3, %s4
  %s6 = sld [smem:[#allocation0]]
  $region61: #{detection_backbone_forward.8} parent=0
    _
  %s8 = ssub.s32 1, %s6
  %s9 = scalar_select 0, %s8, %s6
  loop: start=0, step=1, limit=6
  $region2: #{detection_backbone_forward.8} parent=0 // loop_pre_header
    _
  $region3: #{detection_backbone_forward.8} parent=0 // loop_header
    %s11 = sphi 0, %s15
    %p12 = scmp.ge.s32.totalorder %s11, 6
    %s18 = sphi 0, %s30
    %s19 = sphi 0, %s26
    %s20 = sphi 0, %s18
    %s21 = sphi 0, %s19
    %s22 = sphi 0, %s20
    %s23 = sphi 0, %s21
    %s35 = sphi 0, %s37
    %s38 = sphi 0, %s35
    %s39 = sphi 0, %s38
    %s55 = sphi 0, %s39
    %s59 = sphi 0, %s59
    %s61 = sphi 0, %s59
    %s62 = sphi 0, %s61
    %s76 = sphi 0, %s62
    %s80 = sphi 0, %s80
    %s82 = sphi 0, %s80
    %s83 = sphi 0, %s82
    %s97 = sphi 0, %s83
    %s105 = sphi 0, %s107
    %s108 = sphi 0, %s105
    %s109 = sphi 0, %s108
    %s125 = sphi 0, %s109
    %s131 = sphi 0, %s133
    %s134 = sphi 0, %s131
    %s135 = sphi 0, %s134
    %s151 = sphi 0, %s135
  $region4: #{detection_backbone_forward.8} parent=0 // loop_header_branch
    %14 = sbr.rel (%p12) target = $region8
  $region5: #{detection_backbone_forward.8} parent=0 // loop_body
    %s16 = ssub.s32 %s11, 1
    %s17 = ssub.s32 %s11, 2
    %s24 = sadd.s32 1, %s19
    %p25 = scmp.ge.s32.totalorder %s24, 4
    %s26 = scalar_select %p25, 0, %s24
    %s27 = sadd.s32 1, %s18
    %s28 = scalar_select %p25, %s27, %s18
    %p29 = scmp.ge.s32.totalorder %s28, 1
    %s30 = scalar_select %p29, 0, %s28
    %s31 = ssub.s32 %s19, %s26
    %s32 = ssub.s32 %s18, %s30
    %s33 = sor.u32 %s31, %s32
    %p34 = scmp.eq.s32.totalorder %s33, 0
    %s36 = sadd.s32 %s35, 1
    %s37 = scalar_select %p34, %s35, %s36
    %p40 = pneg %p34
    %p41 = scmp.eq.s32.totalorder %s11, 3
    %p42 = por %p40, %p41
    %p43 = scmp.ne.s32.totalorder %s35, %s38
    %p44 = scmp.eq.s32.totalorder %s11, 0
    %p45 = por %p43, %p44
    %p46 = scmp.ne.s32.totalorder %s35, %s38
    %p47 = scmp.eq.s32.totalorder %s16, 3
    %p48 = por %p46, %p47
    %p49 = scmp.ne.s32.totalorder %s38, %s39
    %p50 = scmp.eq.s32.totalorder %s16, 0
    %p51 = por %p49, %p50
    %p52 = scmp.ne.s32.totalorder %s38, %s39
    %p53 = scmp.eq.s32.totalorder %s17, 3
    %p54 = por %p52, %p53
    %p56 = scmp.ne.s32.totalorder %s39, %s55
    %p57 = scmp.eq.s32.totalorder %s17, 0
    %p58 = por %p56, %p57
    %s60 = sadd.s32 %s59, 1
    %p63 = scmp.eq.s32.totalorder %s11, 3
    %p64 = scmp.ne.s32.totalorder %s59, %s61
    %p65 = scmp.eq.s32.totalorder %s11, 0
    %p66 = por %p64, %p65
    %p67 = scmp.ne.s32.totalorder %s59, %s61
    %p68 = scmp.eq.s32.totalorder %s16, 3
    %p69 = por %p67, %p68
    %p70 = scmp.ne.s32.totalorder %s61, %s62
    %p71 = scmp.eq.s32.totalorder %s16, 0
    %p72 = por %p70, %p71
    %p73 = scmp.ne.s32.totalorder %s61, %s62
    %p74 = scmp.eq.s32.totalorder %s17, 3
    %p75 = por %p73, %p74
    %p77 = scmp.ne.s32.totalorder %s62, %s76
    %p78 = scmp.eq.s32.totalorder %s17, 0
    %p79 = por %p77, %p78
    %s81 = sadd.s32 %s80, 1
    %p84 = scmp.eq.s32.totalorder %s11, 3
    %p85 = scmp.ne.s32.totalorder %s80, %s82
    %p86 = scmp.eq.s32.totalorder %s11, 0
    %p87 = por %p85, %p86
    %p88 = scmp.ne.s32.totalorder %s80, %s82
    %p89 = scmp.eq.s32.totalorder %s16, 3
    %p90 = por %p88, %p89
    %p91 = scmp.ne.s32.totalorder %s82, %s83
    %p92 = scmp.eq.s32.totalorder %s16, 0
    %p93 = por %p91, %p92
    %p94 = scmp.ne.s32.totalorder %s82, %s83
    %p95 = scmp.eq.s32.totalorder %s17, 3
    %p96 = por %p94, %p95
    %p98 = scmp.ne.s32.totalorder %s83, %s97
    %p99 = scmp.eq.s32.totalorder %s17, 0
    %p100 = por %p98, %p99
    %s101 = ssub.s32 %s19, %s26
    %s102 = ssub.s32 %s18, %s30
    %s103 = sor.u32 %s101, %s102
    %p104 = scmp.eq.s32.totalorder %s103, 0
    %s106 = sadd.s32 %s105, 1
    %s107 = scalar_select %p104, %s105, %s106
    %p110 = pneg %p104
    %p111 = scmp.eq.s32.totalorder %s11, 3
    %p112 = por %p110, %p111
    %p113 = scmp.ne.s32.totalorder %s105, %s108
    %p114 = scmp.eq.s32.totalorder %s11, 0
    %p115 = por %p113, %p114
    %p116 = scmp.ne.s32.totalorder %s105, %s108
    %p117 = scmp.eq.s32.totalorder %s16, 3
    %p118 = por %p116, %p117
    %p119 = scmp.ne.s32.totalorder %s108, %s109
    %p120 = scmp.eq.s32.totalorder %s16, 0
    %p121 = por %p119, %p120
    %p122 = scmp.ne.s32.totalorder %s108, %s109
    %p123 = scmp.eq.s32.totalorder %s17, 3
    %p124 = por %p122, %p123
    %p126 = scmp.ne.s32.totalorder %s109, %s125
    %p127 = scmp.eq.s32.totalorder %s17, 0
    %p128 = por %p126, %p127
    %s129 = ssub.s32 %s18, %s30
    %p130 = scmp.eq.s32.totalorder %s129, 0
    %s132 = sadd.s32 %s131, 1
    %s133 = scalar_select %p130, %s131, %s132
    %p136 = pneg %p130
    %p137 = scmp.eq.s32.totalorder %s11, 3
    %p138 = por %p136, %p137
    %p139 = scmp.ne.s32.totalorder %s131, %s134
    %p140 = scmp.eq.s32.totalorder %s11, 0
    %p141 = por %p139, %p140
    %p142 = scmp.ne.s32.totalorder %s131, %s134
    %p143 = scmp.eq.s32.totalorder %s16, 3
    %p144 = por %p142, %p143
    %p145 = scmp.ne.s32.totalorder %s134, %s135
    %p146 = scmp.eq.s32.totalorder %s16, 0
    %p147 = por %p145, %p146
    %p148 = scmp.ne.s32.totalorder %s134, %s135
    %p149 = scmp.eq.s32.totalorder %s17, 3
    %p150 = por %p148, %p149
    %p152 = scmp.ne.s32.totalorder %s135, %s151
    %p153 = scmp.eq.s32.totalorder %s17, 0
    %p154 = por %p152, %p153
    %p155 = scmp.le.s32.totalorder 1, %s11
    %p156 = scmp.lt.s32.totalorder %s11, 5
    %p157 = pnand %p155, %p156
    %p158 = pneg %p157
    // Predicated region
    $region9: #{detection_backbone_forward.8} parent=5 // pred_check
      _
    $region10: #{detection_backbone_forward.8} parent=5 // pred_check_branch
      %160 = sbr.rel (%p157) target = $region12
    $region11: #{detection_backbone_forward.8} parent=5 // pred_region
      %s161 = ssub.s32 %s11, 1
      // Predicated region
      $region13: #{detection_backbone_forward.8} parent=11 // pred_check
        %p162 = pneg %p72
      $region14: #{detection_backbone_forward.8} parent=11 // pred_check_branch
        %164 = sbr.rel (%p162) target = $region16
      $region15: #{detection_backbone_forward.8} parent=11 // pred_region
        _
      $region16: #{detection_backbone_forward.8} parent=11 // pred_fallthru
        _
      // Predicated region
      $region17: #{detection_backbone_forward.8} parent=11 // pred_check
        %p165 = pneg %p93
      $region18: #{detection_backbone_forward.8} parent=11 // pred_check_branch
        %167 = sbr.rel (%p165) target = $region20
      $region19: #{detection_backbone_forward.8} parent=11 // pred_region
        _
      $region20: #{detection_backbone_forward.8} parent=11 // pred_fallthru
        _
    $region12: #{detection_backbone_forward.8} parent=5 // pred_fallthru
      _
    %p168 = scmp.lt.s32.totalorder %s11, 4
    // Predicated region
    $region21: #{detection_backbone_forward.8} parent=5 // pred_check
      %p169 = pneg %p168
    $region22: #{detection_backbone_forward.8} parent=5 // pred_check_branch
      %171 = sbr.rel (%p169) target = $region24
    $region23: #{detection_backbone_forward.8} parent=5 // pred_region
      // Predicated region
      $region25: #{detection_backbone_forward.8} parent=23 // pred_check
        %p172 = pneg %p45
      $region26: #{detection_backbone_forward.8} parent=23 // pred_check_branch
        %174 = sbr.rel (%p172) target = $region28
      $region27: #{detection_backbone_forward.8} parent=23 // pred_region
        %s175 = smul.u32 16, %s18
        %p176 = scmp.lt.s32.totalorder %s19, 3
        %s177 = scalar_select %p176, %s19, 3
        %p178 = scmp.lt.s32.totalorder %s175, 15
        %s179 = scalar_select %p178, %s175, 15
        %s180 = smul.addr %s179, 3
        %s181 = smul.addr %s177, 48
        %s182 = sadd.s32 %s180, %s181
        %s183 = smul.addr %s182, 4
        %s184 = scalar_lea.vmem %s0, %s183
        %s185 = smul.u32 16, %s18
      $region28: #{detection_backbone_forward.8} parent=23 // pred_fallthru
        _
    $region24: #{detection_backbone_forward.8} parent=5 // pred_fallthru
      _
    %p186 = scmp.le.s32.totalorder 1, %s11
    %p187 = scmp.lt.s32.totalorder %s11, 5
    %p188 = pnand %p186, %p187
    %p189 = pneg %p188
    // Predicated region
    $region29: #{detection_backbone_forward.8} parent=5 // pred_check
      _
    $region30: #{detection_backbone_forward.8} parent=5 // pred_check_branch
      %191 = sbr.rel (%p188) target = $region32
    $region31: #{detection_backbone_forward.8} parent=5 // pred_region
      %s192 = ssub.s32 %s11, 1
      %s193 = smul.u32 16, %s20
      %p194 = scmp.lt.s32.totalorder %s21, 3
      %s195 = scalar_select %p194, %s21, 3
      %p196 = scmp.lt.s32.totalorder %s193, 15
      %s197 = scalar_select %p196, %s193, 15
      %s198 = smul.addr %s197, 3
      %s199 = smul.addr %s195, 48
      %s200 = sadd.s32 %s198, %s199
      %s201 = smul.addr %s200, 4
      %s202 = scalar_lea.vmem %s0, %s201
      %p203 = pneg %p51
      %p204 = pneg %p48
      %p205 = pneg %p72
      %p206 = pneg %p69
      %p207 = pneg %p93
      %p208 = pneg %p90
      %p209 = pneg %p121
      %p210 = pneg %p118
      %s211 = smul.u32 16, %s20
      %p212 = scmp.lt.s32.totalorder %s21, 3
      %s213 = scalar_select %p212, %s21, 3
      %p214 = scmp.lt.s32.totalorder %s211, 15
      %s215 = scalar_select %p214, %s211, 15
      %s216 = smul.addr %s213, 16
      %s217 = sadd.s32 %s215, %s216
      %s218 = smul.addr %s217, 4
      %s219 = scalar_lea.vmem %s3, %s218
      %p220 = pneg %p147
      %p221 = pneg %p144
      %s222 = smul.u32 16, %s20
      %p223 = scmp.lt.s32.totalorder %s222, 15
      %s224 = scalar_select %p223, %s222, 15
      %s225 = smul.addr %s224, 8
      %s226 = scalar_lea.vmem %s4, %s225
      %s227 = smul.u32 16, %s20
      %p228 = scmp.lt.s32.totalorder %s21, 3
      %s229 = scalar_select %p228, %s21, 3
      %p230 = scmp.lt.s32.totalorder %s227, 15
      %s231 = scalar_select %p230, %s227, 15
      %s232 = smul.addr %s231, 3
      %s233 = smul.addr %s229, 48
      %s234 = sadd.s32 %s232, %s233
      %s235 = smul.addr %s234, 4
      %s236 = scalar_lea.vmem %s0, %s235
      %s237 = smul.u32 16, %s20
      %s238 = smul.u32 16, %s20
      %p239 = scmp.lt.s32.totalorder %s21, 3
      %s240 = scalar_select %p239, %s21, 3
      %p241 = scmp.lt.s32.totalorder %s238, 15
      %s242 = scalar_select %p241, %s238, 15
      %s243 = smul.addr %s240, 16
      %s244 = sadd.s32 %s242, %s243
      %s245 = smul.addr %s244, 4
      %s246 = scalar_lea.vmem %s3, %s245
      %s247 = smul.u32 16, %s20
      %s248 = smul.u32 16, %s20
      %p249 = scmp.lt.s32.totalorder %s248, 15
      %s250 = scalar_select %p249, %s248, 15
      %s251 = smul.addr %s250, 8
      %s252 = scalar_lea.vmem %s4, %s251
      %s253 = smul.u32 16, %s20
      %p255 = scmp.eq.s32.totalorder %s21, 0
      // Predicated region
      $region33: #{detection_backbone_forward.8} parent=31 // pred_check
        %p256 = pneg %p255
      $region34: #{detection_backbone_forward.8} parent=31 // pred_check_branch
        %258 = sbr.rel (%p256) target = $region36
      $region35: #{detection_backbone_forward.8} parent=31 // pred_region
        %259 = vst [vmem:[#allocation2] sm:$0xff] 0.0
        %260 = vst [vmem:[#allocation2 + $0x8] sm:$0xff] 0.0
        %261 = vst [vmem:[#allocation2 + $0x10] sm:$0xff] 0.0
        %262 = vst [vmem:[#allocation2 + $0x18] sm:$0xff] 0.0
        %263 = vst [vmem:[#allocation2 + $0x20] sm:$0xff] 0.0
        %264 = vst [vmem:[#allocation2 + $0x28] sm:$0xff] 0.0
        %265 = vst [vmem:[#allocation2 + $0x30] sm:$0xff] 0.0
        %266 = vst [vmem:[#allocation2 + $0x38] sm:$0xff] 0.0
        %267 = vst [vmem:[#allocation2 + $0x40] sm:$0xff] 0.0
        %268 = vst [vmem:[#allocation2 + $0x48] sm:$0xff] 0.0
        %269 = vst [vmem:[#allocation2 + $0x50] sm:$0xff] 0.0
        %270 = vst [vmem:[#allocation2 + $0x58] sm:$0xff] 0.0
        %271 = vst [vmem:[#allocation2 + $0x60] sm:$0xff] 0.0
        %272 = vst [vmem:[#allocation2 + $0x68] sm:$0xff] 0.0
        %273 = vst [vmem:[#allocation2 + $0x70] sm:$0xff] 0.0
        %274 = vst [vmem:[#allocation2 + $0x78] sm:$0xff] 0.0
        %275 = vst [vmem:[#allocation3] sm:$0xff] 0.0
        %276 = vst [vmem:[#allocation3 + $0x8] sm:$0xff] 0.0
        %277 = vst [vmem:[#allocation3 + $0x10] sm:$0xff] 0.0
        %278 = vst [vmem:[#allocation3 + $0x18] sm:$0xff] 0.0
        %279 = vst [vmem:[#allocation3 + $0x20] sm:$0xff] 0.0
        %280 = vst [vmem:[#allocation3 + $0x28] sm:$0xff] 0.0
        %281 = vst [vmem:[#allocation3 + $0x30] sm:$0xff] 0.0
        %282 = vst [vmem:[#allocation3 + $0x38] sm:$0xff] 0.0
        %283 = vst [vmem:[#allocation3 + $0x40] sm:$0xff] 0.0
        %284 = vst [vmem:[#allocation3 + $0x48] sm:$0xff] 0.0
        %285 = vst [vmem:[#allocation3 + $0x50] sm:$0xff] 0.0
        %286 = vst [vmem:[#allocation3 + $0x58] sm:$0xff] 0.0
        %287 = vst [vmem:[#allocation3 + $0x60] sm:$0xff] 0.0
        %288 = vst [vmem:[#allocation3 + $0x68] sm:$0xff] 0.0
        %289 = vst [vmem:[#allocation3 + $0x70] sm:$0xff] 0.0
        %290 = vst [vmem:[#allocation3 + $0x78] sm:$0xff] 0.0
        %291 = vst [vmem:[%s252] sm:$0xff] 0.0
        %292 = vst [vmem:[%s252 + $0x8] sm:$0xff] 0.0
        %293 = vst [vmem:[%s252 + $0x10] sm:$0xff] 0.0
        %294 = vst [vmem:[%s252 + $0x18] sm:$0xff] 0.0
        %295 = vst [vmem:[%s252 + $0x20] sm:$0xff] 0.0
        %296 = vst [vmem:[%s252 + $0x28] sm:$0xff] 0.0
        %297 = vst [vmem:[%s252 + $0x30] sm:$0xff] 0.0
        %298 = vst [vmem:[%s252 + $0x38] sm:$0xff] 0.0
        %299 = vst [vmem:[%s252 + $0x40] sm:$0xff] 0.0
        %300 = vst [vmem:[%s252 + $0x48] sm:$0xff] 0.0
        %301 = vst [vmem:[%s252 + $0x50] sm:$0xff] 0.0
        %302 = vst [vmem:[%s252 + $0x58] sm:$0xff] 0.0
        %303 = vst [vmem:[%s252 + $0x60] sm:$0xff] 0.0
        %304 = vst [vmem:[%s252 + $0x68] sm:$0xff] 0.0
        %305 = vst [vmem:[%s252 + $0x70] sm:$0xff] 0.0
        %306 = vst [vmem:[%s252 + $0x78] sm:$0xff] 0.0
      $region36: #{detection_backbone_forward.8} parent=31 // pred_fallthru
        _
      %v307 = vld [vmem:[%s236] sm:$0xff]
      %v308 = vld [vmem:[%s236 + $0x8] sm:$0xf]
      %v309 = vld [vmem:[%s236 + $0xc] sm:$0xff]
      %v310 = vld [vmem:[%s236 + $0x14] sm:$0xf]
      %v311 = vld [vmem:[%s236 + $0x18] sm:$0xff]
      %v312 = vld [vmem:[%s236 + $0x20] sm:$0xf]
      %v313 = vld [vmem:[%s236 + $0x24] sm:$0xff]
      %v314 = vld [vmem:[%s236 + $0x2c] sm:$0xf]
      %v315 = vld [vmem:[%s236 + $0x30] sm:$0xff]
      %v316 = vld [vmem:[%s236 + $0x38] sm:$0xf]
      %v317 = vld [vmem:[%s236 + $0x3c] sm:$0xff]
      %v318 = vld [vmem:[%s236 + $0x44] sm:$0xf]
      %v319 = vld [vmem:[%s236 + $0x48] sm:$0xff]
      %v320 = vld [vmem:[%s236 + $0x50] sm:$0xf]
      %v321 = vld [vmem:[%s236 + $0x54] sm:$0xff]
      %v322 = vld [vmem:[%s236 + $0x5c] sm:$0xf]
      %v323 = vld [vmem:[%s236 + $0x60] sm:$0xff]
      %v324 = vld [vmem:[%s236 + $0x68] sm:$0xf]
      %v325 = vld [vmem:[%s236 + $0x6c] sm:$0xff]
      %v326 = vld [vmem:[%s236 + $0x74] sm:$0xf]
      %v327 = vld [vmem:[%s236 + $0x78] sm:$0xff]
      %v328 = vld [vmem:[%s236 + $0x80] sm:$0xf]
      %v329 = vld [vmem:[%s236 + $0x84] sm:$0xff]
      %v330 = vld [vmem:[%s236 + $0x8c] sm:$0xf]
      %v331 = vld [vmem:[%s236 + $0x90] sm:$0xff]
      %v332 = vld [vmem:[%s236 + $0x98] sm:$0xf]
      %v333 = vld [vmem:[%s236 + $0x9c] sm:$0xff]
      %v334 = vld [vmem:[%s236 + $0xa4] sm:$0xf]
      %v335 = vld [vmem:[%s236 + $0xa8] sm:$0xff]
      %v336 = vld [vmem:[%s236 + $0xb0] sm:$0xf]
      %v337 = vld [vmem:[%s236 + $0xb4] sm:$0xff]
      %v338 = vld [vmem:[%s236 + $0xbc] sm:$0xf]
      %v339 = vld [vmem:[%s1] sm:$0xf]
      %v340 = vld [vmem:[%s1 + $0x4] sm:$0xf]
      %v341 = vld [vmem:[%s1 + $0x8] sm:$0xf]
      %v342 = vld [vmem:[%s1 + $0xc] sm:$0xf]
      %v343 = vld [vmem:[%s1 + $0x10] sm:$0xf]
      %v344 = vld [vmem:[%s1 + $0x14] sm:$0xf]
      %v345 = vld [vmem:[%s1 + $0x18] sm:$0xf]
      %v346 = vld [vmem:[%s1 + $0x1c] sm:$0xf]
      %v347 = vld [vmem:[%s1 + $0x20] sm:$0xf]
      %v348 = vld [vmem:[%s1 + $0x24] sm:$0xf]
      %v349 = vld [vmem:[%s1 + $0x28] sm:$0xf]
      %v350 = vld [vmem:[%s1 + $0x2c] sm:$0xf]
      %v351 = vld [vmem:[%s1 + $0x30] sm:$0xf]
      %v352 = vld [vmem:[%s1 + $0x34] sm:$0xf]
      %v353 = vld [vmem:[%s1 + $0x38] sm:$0xf]
      %v354 = vld [vmem:[%s1 + $0x3c] sm:$0xf]
      %v355 = vld [vmem:[%s1 + $0x40] sm:$0xf]
      %v356 = vld [vmem:[%s1 + $0x44] sm:$0xf]
      %v357 = vld [vmem:[%s1 + $0x48] sm:$0xf]
      %v358 = vld [vmem:[%s1 + $0x4c] sm:$0xf]
      %v359 = vld [vmem:[%s1 + $0x50] sm:$0xf]
      %v360 = vld [vmem:[%s1 + $0x54] sm:$0xf]
      %v361 = vld [vmem:[%s1 + $0x58] sm:$0xf]
      %v362 = vld [vmem:[%s1 + $0x5c] sm:$0xf]
      %v363 = vld [vmem:[%s1 + $0x60] sm:$0xf]
      %v364 = vld [vmem:[%s1 + $0x64] sm:$0xf]
      %v365 = vld [vmem:[%s1 + $0x68] sm:$0xf]
      %v366 = vld [vmem:[%s1 + $0x6c] sm:$0xf]
      %v367 = vld [vmem:[%s1 + $0x70] sm:$0xf]
      %v368 = vld [vmem:[%s1 + $0x74] sm:$0xf]
      %v369 = vld [vmem:[%s1 + $0x78] sm:$0xf]
      %v370 = vld [vmem:[%s1 + $0x7c] sm:$0xf]
      %v371 = vld [vmem:[%s1 + $0x80] sm:$0xf]
      %v372 = vld [vmem:[%s1 + $0x84] sm:$0xf]
      %v373 = vld [vmem:[%s1 + $0x88] sm:$0xf]
      %v374 = vld [vmem:[%s1 + $0x8c] sm:$0xf]
      %v375 = vld [vmem:[%s2] sm:$0x1]
      %v377 = vperm.slane %v375, 0
      %v411 = vunpack.c.l.b16 %v307
      %v412 = vunpack.c.h.b16 %v307
      %v413 = vunpack.c.l.b16 %v308
      %v414 = vunpack.c.l.b16 %v309
      %v415 = vunpack.c.h.b16 %v309
      %v416 = vunpack.c.l.b16 %v310
      %v417 = vunpack.c.l.b16 %v311
      %v418 = vunpack.c.h.b16 %v311
      %v419 = vunpack.c.l.b16 %v312
      %v420 = vunpack.c.l.b16 %v313
      %v421 = vunpack.c.h.b16 %v313
      %v422 = vunpack.c.l.b16 %v314
      %v423 = vunpack.c.l.b16 %v315
      %v424 = vunpack.c.h.b16 %v315
      %v425 = vunpack.c.l.b16 %v316
      %v426 = vunpack.c.l.b16 %v317
      %v427 = vunpack.c.h.b16 %v317
      %v428 = vunpack.c.l.b16 %v318
      %v429 = vunpack.c.l.b16 %v319
      %v430 = vunpack.c.h.b16 %v319
      %v431 = vunpack.c.l.b16 %v320
      %v432 = vunpack.c.l.b16 %v321
      %v433 = vunpack.c.h.b16 %v321
      %v434 = vunpack.c.l.b16 %v322
      %v435 = vunpack.c.l.b16 %v323
      %v436 = vunpack.c.h.b16 %v323
      %v437 = vunpack.c.l.b16 %v324
      %v438 = vunpack.c.l.b16 %v325
      %v439 = vunpack.c.h.b16 %v325
      %v440 = vunpack.c.l.b16 %v326
      %v441 = vunpack.c.l.b16 %v327
      %v442 = vunpack.c.h.b16 %v327
      %v443 = vunpack.c.l.b16 %v328
      %v444 = vunpack.c.l.b16 %v329
      %v445 = vunpack.c.h.b16 %v329
      %v446 = vunpack.c.l.b16 %v330
      %v447 = vunpack.c.l.b16 %v331
      %v448 = vunpack.c.h.b16 %v331
      %v449 = vunpack.c.l.b16 %v332
      %v450 = vunpack.c.l.b16 %v333
      %v451 = vunpack.c.h.b16 %v333
      %v452 = vunpack.c.l.b16 %v334
      %v453 = vunpack.c.l.b16 %v335
      %v454 = vunpack.c.h.b16 %v335
      %v455 = vunpack.c.l.b16 %v336
      %v456 = vunpack.c.l.b16 %v337
      %v457 = vunpack.c.h.b16 %v337
      %v458 = vunpack.c.l.b16 %v338
      %v459 = vpack.c.b16 %v414, %v411
      %v460 = vpack.c.b16 %v415, %v412
      %v461 = vpack.c.b16 %v416, %v413
      %v462 = vpack.c.b16 %v420, %v417
      %v463 = vpack.c.b16 %v421, %v418
      %v464 = vpack.c.b16 %v422, %v419
      %v465 = vpack.c.b16 %v426, %v423
      %v466 = vpack.c.b16 %v427, %v424
      %v467 = vpack.c.b16 %v428, %v425
      %v468 = vpack.c.b16 %v432, %v429
      %v469 = vpack.c.b16 %v433, %v430
      %v470 = vpack.c.b16 %v434, %v431
      %v471 = vpack.c.b16 %v438, %v435
      %v472 = vpack.c.b16 %v439, %v436
      %v473 = vpack.c.b16 %v440, %v437
      %v474 = vpack.c.b16 %v444, %v441
      %v475 = vpack.c.b16 %v445, %v442
      %v476 = vpack.c.b16 %v446, %v443
      %v477 = vpack.c.b16 %v450, %v447
      %v478 = vpack.c.b16 %v451, %v448
      %v479 = vpack.c.b16 %v452, %v449
      %v480 = vpack.c.b16 %v456, %v453
      %v481 = vpack.c.b16 %v457, %v454
      %v482 = vpack.c.b16 %v458, %v455
      %v535 = vunpack.c.l.b16 %v339
      %v536 = vunpack.c.l.b16 %v340
      %v537 = vunpack.c.l.b16 %v341
      %v538 = vunpack.c.l.b16 %v342
      %v539 = vunpack.c.l.b16 %v343
      %v540 = vunpack.c.l.b16 %v344
      %v541 = vunpack.c.l.b16 %v345
      %v542 = vunpack.c.l.b16 %v346
      %v543 = vunpack.c.l.b16 %v347
      %v544 = vunpack.c.l.b16 %v348
      %v545 = vunpack.c.l.b16 %v349
      %v546 = vunpack.c.l.b16 %v350
      %v547 = vunpack.c.l.b16 %v351
      %v548 = vunpack.c.l.b16 %v352
      %v549 = vunpack.c.l.b16 %v353
      %v550 = vunpack.c.l.b16 %v354
      %v551 = vunpack.c.l.b16 %v355
      %v552 = vunpack.c.l.b16 %v356
      %v553 = vunpack.c.l.b16 %v357
      %v554 = vunpack.c.l.b16 %v358
      %v555 = vunpack.c.l.b16 %v359
      %v556 = vunpack.c.l.b16 %v360
      %v557 = vunpack.c.l.b16 %v361
      %v558 = vunpack.c.l.b16 %v362
      %v559 = vunpack.c.l.b16 %v363
      %v560 = vunpack.c.l.b16 %v364
      %v561 = vunpack.c.l.b16 %v365
      %v562 = vunpack.c.l.b16 %v366
      %v563 = vunpack.c.l.b16 %v367
      %v564 = vunpack.c.l.b16 %v368
      %v565 = vunpack.c.l.b16 %v369
      %v566 = vunpack.c.l.b16 %v370
      %v567 = vunpack.c.l.b16 %v371
      %v568 = vunpack.c.l.b16 %v372
      %v569 = vunpack.c.l.b16 %v373
      %v570 = vunpack.c.l.b16 %v374
      %v571 = vpack.c.b16 %v536, %v535
      %v572 = vpack.c.b16 %v538, %v537
      %v573 = vpack.c.b16 %v540, %v539
      %v574 = vpack.c.b16 %v542, %v541
      %v575 = vpack.c.b16 %v544, %v543
      %v576 = vpack.c.b16 %v546, %v545
      %v577 = vpack.c.b16 %v548, %v547
      %v578 = vpack.c.b16 %v550, %v549
      %v579 = vpack.c.b16 %v552, %v551
      %v580 = vpack.c.b16 %v554, %v553
      %v581 = vpack.c.b16 %v556, %v555
      %v582 = vpack.c.b16 %v558, %v557
      %v583 = vpack.c.b16 %v560, %v559
      %v584 = vpack.c.b16 %v562, %v561
      %v585 = vpack.c.b16 %v564, %v563
      %v586 = vpack.c.b16 %v566, %v565
      %v587 = vpack.c.b16 %v568, %v567
      %v588 = vpack.c.b16 %v570, %v569
      %vm607 = vcmask 261120
      %v609 = vsel %vm607, %v461, 0
      %v612 = vsel %vm607, %v464, 0
      %v615 = vsel %vm607, %v467, 0
      %v618 = vsel %vm607, %v470, 0
      %v621 = vsel %vm607, %v473, 0
      %v624 = vsel %vm607, %v476, 0
      %v627 = vsel %vm607, %v479, 0
      %v630 = vsel %vm607, %v482, 0
      %632 = vmatpush.bf16.msra.mxu0 %v578
      %633 = vmatpush.bf16.msra.mxu0 %v577
      %634 = vmatpush.bf16.msra.mxu0 %v576
      %635 = vmatpush.bf16.msra.mxu0 %v575
      %636 = vmatpush.bf16.msra.mxu0 %v574
      %637 = vmatpush.bf16.msra.mxu0 %v573
      %638 = vmatpush.bf16.msra.mxu0 %v572
      %639 = vmatpush.bf16.msra.mxu0 %v571
      %640 = vmatmul.bf16.gmra.mxu0 %v459
      %v641 = vpop.f32.mrf.mxu0
      %v642 = vadd.f32 %v377, %v641
      %v643 = vpop.f32.mrf.mxu0
      %v644 = vadd.f32 %v377, %v643
      %645 = vmatmul.bf16.gmra.mxu0 %v462
      %v646 = vpop.f32.mrf.mxu0
      %v647 = vadd.f32 %v377, %v646
      %v648 = vpop.f32.mrf.mxu0
      %v649 = vadd.f32 %v377, %v648
      %650 = vmatmul.bf16.gmra.mxu0 %v465
      %v651 = vpop.f32.mrf.mxu0
      %v652 = vadd.f32 %v377, %v651
      %v653 = vpop.f32.mrf.mxu0
      %v654 = vadd.f32 %v377, %v653
      %655 = vmatmul.bf16.gmra.mxu0 %v468
      %v656 = vpop.f32.mrf.mxu0
      %v657 = vadd.f32 %v377, %v656
      %v658 = vpop.f32.mrf.mxu0
      %v659 = vadd.f32 %v377, %v658
      %660 = vmatmul.bf16.gmra.mxu0 %v471
      %v661 = vpop.f32.mrf.mxu0
      %v662 = vadd.f32 %v377, %v661
      %v663 = vpop.f32.mrf.mxu0
      %v664 = vadd.f32 %v377, %v663
      %665 = vmatmul.bf16.gmra.mxu0 %v474
      %v666 = vpop.f32.mrf.mxu0
      %v667 = vadd.f32 %v377, %v666
      %v668 = vpop.f32.mrf.mxu0
      %v669 = vadd.f32 %v377, %v668
      %670 = vmatmul.bf16.gmra.mxu0 %v477
      %v671 = vpop.f32.mrf.mxu0
      %v672 = vadd.f32 %v377, %v671
      %v673 = vpop.f32.mrf.mxu0
      %v674 = vadd.f32 %v377, %v673
      %675 = vmatmul.bf16.gmra.mxu0 %v480
      %v676 = vpop.f32.mrf.mxu0
      %v677 = vadd.f32 %v377, %v676
      %v678 = vpop.f32.mrf.mxu0
      %v679 = vadd.f32 %v377, %v678
      %680 = vdwg.mxu0
      %681 = vmatpush.bf16.msra.mxu0 %v586
      %682 = vmatpush.bf16.msra.mxu0 %v585
      %683 = vmatpush.bf16.msra.mxu0 %v584
      %684 = vmatpush.bf16.msra.mxu0 %v583
      %685 = vmatpush.bf16.msra.mxu0 %v582
      %686 = vmatpush.bf16.msra.mxu0 %v581
      %687 = vmatpush.bf16.msra.mxu0 %v580
      %688 = vmatpush.bf16.msra.mxu0 %v579
      %689 = vmatmul.bf16.gmra.mxu0 %v460
      %v690 = vpop.f32.mrf.mxu0
      %v691 = vadd.f32 %v642, %v690
      %v692 = vpop.f32.mrf.mxu0
      %v693 = vadd.f32 %v644, %v692
      %694 = vmatmul.bf16.gmra.mxu0 %v463
      %v695 = vpop.f32.mrf.mxu0
      %v696 = vadd.f32 %v647, %v695
      %v697 = vpop.f32.mrf.mxu0
      %v698 = vadd.f32 %v649, %v697
      %699 = vmatmul.bf16.gmra.mxu0 %v466
      %v700 = vpop.f32.mrf.mxu0
      %v701 = vadd.f32 %v652, %v700
      %v702 = vpop.f32.mrf.mxu0
      %v703 = vadd.f32 %v654, %v702
      %704 = vmatmul.bf16.gmra.mxu0 %v469
      %v705 = vpop.f32.mrf.mxu0
      %v706 = vadd.f32 %v657, %v705
      %v707 = vpop.f32.mrf.mxu0
      %v708 = vadd.f32 %v659, %v707
      %709 = vmatmul.bf16.gmra.mxu0 %v472
      %v710 = vpop.f32.mrf.mxu0
      %v711 = vadd.f32 %v662, %v710
      %v712 = vpop.f32.mrf.mxu0
      %v713 = vadd.f32 %v664, %v712
      %714 = vmatmul.bf16.gmra.mxu0 %v475
      %v715 = vpop.f32.mrf.mxu0
      %v716 = vadd.f32 %v667, %v715
      %v717 = vpop.f32.mrf.mxu0
      %v718 = vadd.f32 %v669, %v717
      %719 = vmatmul.bf16.gmra.mxu0 %v478
      %v720 = vpop.f32.mrf.mxu0
      %v721 = vadd.f32 %v672, %v720
      %v722 = vpop.f32.mrf.mxu0
      %v723 = vadd.f32 %v674, %v722
      %724 = vmatmul.bf16.gmra.mxu0 %v481
      %v725 = vpop.f32.mrf.mxu0
      %v726 = vadd.f32 %v677, %v725
      %v727 = vpop.f32.mrf.mxu0
      %v728 = vadd.f32 %v679, %v727
      %729 = vdwg.mxu0
      %730 = vmatpush.bf16.msra.mxu0 0
      %731 = vmatpush.bf16.msra.mxu0 0
      %732 = vmatpush.bf16.msra.mxu0 0
      %733 = vmatpush.bf16.msra.mxu0 0
      %734 = vmatpush.bf16.msra.mxu0 0
      %735 = vmatpush.bf16.msra.mxu0 0
      %736 = vmatpush.bf16.msra.mxu0 %v588
      %737 = vmatpush.bf16.msra.mxu0 %v587
      %738 = vmatmul.bf16.gmra.mxu0 %v609
      %v739 = vpop.f32.mrf.mxu0
      %v740 = vadd.f32 %v691, %v739
      %v741 = vpop.f32.mrf.mxu0
      %v742 = vadd.f32 %v693, %v741
      %743 = vmatmul.bf16.gmra.mxu0 %v612
      %v744 = vpop.f32.mrf.mxu0
      %v745 = vadd.f32 %v696, %v744
      %v746 = vpop.f32.mrf.mxu0
      %v747 = vadd.f32 %v698, %v746
      %748 = vmatmul.bf16.gmra.mxu0 %v615
      %v749 = vpop.f32.mrf.mxu0
      %v750 = vadd.f32 %v701, %v749
      %v751 = vpop.f32.mrf.mxu0
      %v752 = vadd.f32 %v703, %v751
      %753 = vmatmul.bf16.gmra.mxu0 %v618
      %v754 = vpop.f32.mrf.mxu0
      %v755 = vadd.f32 %v706, %v754
      %v756 = vpop.f32.mrf.mxu0
      %v757 = vadd.f32 %v708, %v756
      %758 = vmatmul.bf16.gmra.mxu0 %v621
      %v759 = vpop.f32.mrf.mxu0
      %v760 = vadd.f32 %v711, %v759
      %v761 = vpop.f32.mrf.mxu0
      %v762 = vadd.f32 %v713, %v761
      %763 = vmatmul.bf16.gmra.mxu0 %v624
      %v764 = vpop.f32.mrf.mxu0
      %v765 = vadd.f32 %v716, %v764
      %v766 = vpop.f32.mrf.mxu0
      %v767 = vadd.f32 %v718, %v766
      %768 = vmatmul.bf16.gmra.mxu0 %v627
      %v769 = vpop.f32.mrf.mxu0
      %v770 = vadd.f32 %v721, %v769
      %v771 = vpop.f32.mrf.mxu0
      %v772 = vadd.f32 %v723, %v771
      %773 = vmatmul.bf16.gmra.mxu0 %v630
      %v774 = vpop.f32.mrf.mxu0
      %v775 = vadd.f32 %v726, %v774
      %v776 = vpop.f32.mrf.mxu0
      %v777 = vadd.f32 %v728, %v776
      %778 = vdwg.mxu0
      %v779 = vld [vmem:[#allocation2] sm:$0xff]
      %v780 = vld [vmem:[#allocation2 + $0x8] sm:$0xff]
      %v781 = vld [vmem:[#allocation2 + $0x10] sm:$0xff]
      %v782 = vld [vmem:[#allocation2 + $0x18] sm:$0xff]
      %v783 = vld [vmem:[#allocation2 + $0x20] sm:$0xff]
      %v784 = vld [vmem:[#allocation2 + $0x28] sm:$0xff]
      %v785 = vld [vmem:[#allocation2 + $0x30] sm:$0xff]
      %v786 = vld [vmem:[#allocation2 + $0x38] sm:$0xff]
      %v787 = vld [vmem:[#allocation2 + $0x40] sm:$0xff]
      %v788 = vld [vmem:[#allocation2 + $0x48] sm:$0xff]
      %v789 = vld [vmem:[#allocation2 + $0x50] sm:$0xff]
      %v790 = vld [vmem:[#allocation2 + $0x58] sm:$0xff]
      %v791 = vld [vmem:[#allocation2 + $0x60] sm:$0xff]
      %v792 = vld [vmem:[#allocation2 + $0x68] sm:$0xff]
      %v793 = vld [vmem:[#allocation2 + $0x70] sm:$0xff]
      %v794 = vld [vmem:[#allocation2 + $0x78] sm:$0xff]
      %v795 = vsub.f32 %v740, %v779
      %v796 = vsub.f32 %v742, %v780
      %v797 = vsub.f32 %v745, %v781
      %v798 = vsub.f32 %v747, %v782
      %v799 = vsub.f32 %v750, %v783
      %v800 = vsub.f32 %v752, %v784
      %v801 = vsub.f32 %v755, %v785
      %v802 = vsub.f32 %v757, %v786
      %v803 = vsub.f32 %v760, %v787
      %v804 = vsub.f32 %v762, %v788
      %v805 = vsub.f32 %v765, %v789
      %v806 = vsub.f32 %v767, %v790
      %v807 = vsub.f32 %v770, %v791
      %v808 = vsub.f32 %v772, %v792
      %v809 = vsub.f32 %v775, %v793
      %v810 = vsub.f32 %v777, %v794
      %v811 = vmul.f32 %v795, 0.5
      %v812 = vmul.f32 %v796, 0.5
      %v813 = vmul.f32 %v797, 0.5
      %v814 = vmul.f32 %v798, 0.5
      %v815 = vmul.f32 %v799, 0.5
      %v816 = vmul.f32 %v800, 0.5
      %v817 = vmul.f32 %v801, 0.5
      %v818 = vmul.f32 %v802, 0.5
      %v819 = vmul.f32 %v803, 0.5
      %v820 = vmul.f32 %v804, 0.5
      %v821 = vmul.f32 %v805, 0.5
      %v822 = vmul.f32 %v806, 0.5
      %v823 = vmul.f32 %v807, 0.5
      %v824 = vmul.f32 %v808, 0.5
      %v825 = vmul.f32 %v809, 0.5
      %v826 = vmul.f32 %v810, 0.5
      %v827 = vadd.f32 %v779, %v811
      %v828 = vadd.f32 %v780, %v812
      %v829 = vadd.f32 %v781, %v813
      %v830 = vadd.f32 %v782, %v814
      %v831 = vadd.f32 %v783, %v815
      %v832 = vadd.f32 %v784, %v816
      %v833 = vadd.f32 %v785, %v817
      %v834 = vadd.f32 %v786, %v818
      %v835 = vadd.f32 %v787, %v819
      %v836 = vadd.f32 %v788, %v820
      %v837 = vadd.f32 %v789, %v821
      %v838 = vadd.f32 %v790, %v822
      %v839 = vadd.f32 %v791, %v823
      %v840 = vadd.f32 %v792, %v824
      %v841 = vadd.f32 %v793, %v825
      %v842 = vadd.f32 %v794, %v826
      %vm843 = vcmp.ge.f32.partialorder %v827, 1.0
      %vm844 = vcmp.ge.f32.partialorder %v828, 1.0
      %vm845 = vcmp.ge.f32.partialorder %v829, 1.0
      %vm846 = vcmp.ge.f32.partialorder %v830, 1.0
      %vm847 = vcmp.ge.f32.partialorder %v831, 1.0
      %vm848 = vcmp.ge.f32.partialorder %v832, 1.0
      %vm849 = vcmp.ge.f32.partialorder %v833, 1.0
      %vm850 = vcmp.ge.f32.partialorder %v834, 1.0
      %vm851 = vcmp.ge.f32.partialorder %v835, 1.0
      %vm852 = vcmp.ge.f32.partialorder %v836, 1.0
      %vm853 = vcmp.ge.f32.partialorder %v837, 1.0
      %vm854 = vcmp.ge.f32.partialorder %v838, 1.0
      %vm855 = vcmp.ge.f32.partialorder %v839, 1.0
      %vm856 = vcmp.ge.f32.partialorder %v840, 1.0
      %vm857 = vcmp.ge.f32.partialorder %v841, 1.0
      %vm858 = vcmp.ge.f32.partialorder %v842, 1.0
      %v859 = vsel %vm843, 1, 0
      %v860 = vsel %vm844, 1, 0
      %v861 = vsel %vm845, 1, 0
      %v862 = vsel %vm846, 1, 0
      %v863 = vsel %vm847, 1, 0
      %v864 = vsel %vm848, 1, 0
      %v865 = vsel %vm849, 1, 0
      %v866 = vsel %vm850, 1, 0
      %v867 = vsel %vm851, 1, 0
      %v868 = vsel %vm852, 1, 0
      %v869 = vsel %vm853, 1, 0
      %v870 = vsel %vm854, 1, 0
      %v871 = vsel %vm855, 1, 0
      %v872 = vsel %vm856, 1, 0
      %v873 = vsel %vm857, 1, 0
      %v874 = vsel %vm858, 1, 0
      %v875 = vcvt.s32.f32 %v859
      %v876 = vcvt.s32.f32 %v860
      %v877 = vcvt.s32.f32 %v861
      %v878 = vcvt.s32.f32 %v862
      %v879 = vcvt.s32.f32 %v863
      %v880 = vcvt.s32.f32 %v864
      %v881 = vcvt.s32.f32 %v865
      %v882 = vcvt.s32.f32 %v866
      %v883 = vcvt.s32.f32 %v867
      %v884 = vcvt.s32.f32 %v868
      %v885 = vcvt.s32.f32 %v869
      %v886 = vcvt.s32.f32 %v870
      %v887 = vcvt.s32.f32 %v871
      %v888 = vcvt.s32.f32 %v872
      %v889 = vcvt.s32.f32 %v873
      %v890 = vcvt.s32.f32 %v874
      %vm891 = vcmp.gt.f32.partialorder %v875, 0.0
      %vm892 = vcmp.gt.f32.partialorder %v876, 0.0
      %vm893 = vcmp.gt.f32.partialorder %v877, 0.0
      %vm894 = vcmp.gt.f32.partialorder %v878, 0.0
      %vm895 = vcmp.gt.f32.partialorder %v879, 0.0
      %vm896 = vcmp.gt.f32.partialorder %v880, 0.0
      %vm897 = vcmp.gt.f32.partialorder %v881, 0.0
      %vm898 = vcmp.gt.f32.partialorder %v882, 0.0
      %vm899 = vcmp.gt.f32.partialorder %v883, 0.0
      %vm900 = vcmp.gt.f32.partialorder %v884, 0.0
      %vm901 = vcmp.gt.f32.partialorder %v885, 0.0
      %vm902 = vcmp.gt.f32.partialorder %v886, 0.0
      %vm903 = vcmp.gt.f32.partialorder %v887, 0.0
      %vm904 = vcmp.gt.f32.partialorder %v888, 0.0
      %vm905 = vcmp.gt.f32.partialorder %v889, 0.0
      %vm906 = vcmp.gt.f32.partialorder %v890, 0.0
      %v907 = vsel %vm891, 0.0, %v827
      %v908 = vsel %vm892, 0.0, %v828
      %v909 = vsel %vm893, 0.0, %v829
      %v910 = vsel %vm894, 0.0, %v830
      %v911 = vsel %vm895, 0.0, %v831
      %v912 = vsel %vm896, 0.0, %v832
      %v913 = vsel %vm897, 0.0, %v833
      %v914 = vsel %vm898, 0.0, %v834
      %v915 = vsel %vm899, 0.0, %v835
      %v916 = vsel %vm900, 0.0, %v836
      %v917 = vsel %vm901, 0.0, %v837
      %v918 = vsel %vm902, 0.0, %v838
      %v919 = vsel %vm903, 0.0, %v839
      %v920 = vsel %vm904, 0.0, %v840
      %v921 = vsel %vm905, 0.0, %v841
      %v922 = vsel %vm906, 0.0, %v842
      %923 = vst [vmem:[#allocation2] sm:$0xff] %v907
      %924 = vst [vmem:[#allocation2 + $0x8] sm:$0xff] %v908
      %925 = vst [vmem:[#allocation2 + $0x10] sm:$0xff] %v909
      %926 = vst [vmem:[#allocation2 + $0x18] sm:$0xff] %v910
      %927 = vst [vmem:[#allocation2 + $0x20] sm:$0xff] %v911
      %928 = vst [vmem:[#allocation2 + $0x28] sm:$0xff] %v912
      %929 = vst [vmem:[#allocation2 + $0x30] sm:$0xff] %v913
      %930 = vst [vmem:[#allocation2 + $0x38] sm:$0xff] %v914
      %931 = vst [vmem:[#allocation2 + $0x40] sm:$0xff] %v915
      %932 = vst [vmem:[#allocation2 + $0x48] sm:$0xff] %v916
      %933 = vst [vmem:[#allocation2 + $0x50] sm:$0xff] %v917
      %934 = vst [vmem:[#allocation2 + $0x58] sm:$0xff] %v918
      %935 = vst [vmem:[#allocation2 + $0x60] sm:$0xff] %v919
      %936 = vst [vmem:[#allocation2 + $0x68] sm:$0xff] %v920
      %937 = vst [vmem:[#allocation2 + $0x70] sm:$0xff] %v921
      %938 = vst [vmem:[#allocation2 + $0x78] sm:$0xff] %v922
      %v939 = vpack.c.bf16 %v875, %v875
      %v940 = vpack.c.bf16 %v876, %v876
      %v941 = vpack.c.bf16 %v877, %v877
      %v942 = vpack.c.bf16 %v878, %v878
      %v943 = vpack.c.bf16 %v879, %v879
      %v944 = vpack.c.bf16 %v880, %v880
      %v945 = vpack.c.bf16 %v881, %v881
      %v946 = vpack.c.bf16 %v882, %v882
      %v947 = vpack.c.bf16 %v883, %v883
      %v948 = vpack.c.bf16 %v884, %v884
      %v949 = vpack.c.bf16 %v885, %v885
      %v950 = vpack.c.bf16 %v886, %v886
      %v951 = vpack.c.bf16 %v887, %v887
      %v952 = vpack.c.bf16 %v888, %v888
      %v953 = vpack.c.bf16 %v889, %v889
      %v954 = vpack.c.bf16 %v890, %v890
      %955 = vst [vmem:[%s246] sm:$0xf] %v939
      %956 = vst [vmem:[%s246 + $0x4] sm:$0xf] %v940
      %957 = vst [vmem:[%s246 + $0x8] sm:$0xf] %v941
      %958 = vst [vmem:[%s246 + $0xc] sm:$0xf] %v942
      %959 = vst [vmem:[%s246 + $0x10] sm:$0xf] %v943
      %960 = vst [vmem:[%s246 + $0x14] sm:$0xf] %v944
      %961 = vst [vmem:[%s246 + $0x18] sm:$0xf] %v945
      %962 = vst [vmem:[%s246 + $0x1c] sm:$0xf] %v946
      %963 = vst [vmem:[%s246 + $0x20] sm:$0xf] %v947
      %964 = vst [vmem:[%s246 + $0x24] sm:$0xf] %v948
      %965 = vst [vmem:[%s246 + $0x28] sm:$0xf] %v949
      %966 = vst [vmem:[%s246 + $0x2c] sm:$0xf] %v950
      %967 = vst [vmem:[%s246 + $0x30] sm:$0xf] %v951
      %968 = vst [vmem:[%s246 + $0x34] sm:$0xf] %v952
      %969 = vst [vmem:[%s246 + $0x38] sm:$0xf] %v953
      %970 = vst [vmem:[%s246 + $0x3c] sm:$0xf] %v954
      %v971 = vld [vmem:[#allocation3] sm:$0xff]
      %v972 = vld [vmem:[#allocation3 + $0x8] sm:$0xff]
      %v973 = vld [vmem:[#allocation3 + $0x10] sm:$0xff]
      %v974 = vld [vmem:[#allocation3 + $0x18] sm:$0xff]
      %v975 = vld [vmem:[#allocation3 + $0x20] sm:$0xff]
      %v976 = vld [vmem:[#allocation3 + $0x28] sm:$0xff]
      %v977 = vld [vmem:[#allocation3 + $0x30] sm:$0xff]
      %v978 = vld [vmem:[#allocation3 + $0x38] sm:$0xff]
      %v979 = vld [vmem:[#allocation3 + $0x40] sm:$0xff]
      %v980 = vld [vmem:[#allocation3 + $0x48] sm:$0xff]
      %v981 = vld [vmem:[#allocation3 + $0x50] sm:$0xff]
      %v982 = vld [vmem:[#allocation3 + $0x58] sm:$0xff]
      %v983 = vld [vmem:[#allocation3 + $0x60] sm:$0xff]
      %v984 = vld [vmem:[#allocation3 + $0x68] sm:$0xff]
      %v985 = vld [vmem:[#allocation3 + $0x70] sm:$0xff]
      %v986 = vld [vmem:[#allocation3 + $0x78] sm:$0xff]
      %v987 = vsub.f32 %v875, %v971
      %v988 = vsub.f32 %v876, %v972
      %v989 = vsub.f32 %v877, %v973
      %v990 = vsub.f32 %v878, %v974
      %v991 = vsub.f32 %v879, %v975
      %v992 = vsub.f32 %v880, %v976
      %v993 = vsub.f32 %v881, %v977
      %v994 = vsub.f32 %v882, %v978
      %v995 = vsub.f32 %v883, %v979
      %v996 = vsub.f32 %v884, %v980
      %v997 = vsub.f32 %v885, %v981
      %v998 = vsub.f32 %v886, %v982
      %v999 = vsub.f32 %v887, %v983
      %v1000 = vsub.f32 %v888, %v984
      %v1001 = vsub.f32 %v889, %v985
      %v1002 = vsub.f32 %v890, %v986
      %v1003 = vmul.f32 %v987, 0.5
      %v1004 = vmul.f32 %v988, 0.5
      %v1005 = vmul.f32 %v989, 0.5
      %v1006 = vmul.f32 %v990, 0.5
      %v1007 = vmul.f32 %v991, 0.5
      %v1008 = vmul.f32 %v992, 0.5
      %v1009 = vmul.f32 %v993, 0.5
      %v1010 = vmul.f32 %v994, 0.5
      %v1011 = vmul.f32 %v995, 0.5
      %v1012 = vmul.f32 %v996, 0.5
      %v1013 = vmul.f32 %v997, 0.5
      %v1014 = vmul.f32 %v998, 0.5
      %v1015 = vmul.f32 %v999, 0.5
      %v1016 = vmul.f32 %v1000, 0.5
      %v1017 = vmul.f32 %v1001, 0.5
      %v1018 = vmul.f32 %v1002, 0.5
      %v1019 = vadd.f32 %v971, %v1003
      %v1020 = vadd.f32 %v972, %v1004
      %v1021 = vadd.f32 %v973, %v1005
      %v1022 = vadd.f32 %v974, %v1006
      %v1023 = vadd.f32 %v975, %v1007
      %v1024 = vadd.f32 %v976, %v1008
      %v1025 = vadd.f32 %v977, %v1009
      %v1026 = vadd.f32 %v978, %v1010
      %v1027 = vadd.f32 %v979, %v1011
      %v1028 = vadd.f32 %v980, %v1012
      %v1029 = vadd.f32 %v981, %v1013
      %v1030 = vadd.f32 %v982, %v1014
      %v1031 = vadd.f32 %v983, %v1015
      %v1032 = vadd.f32 %v984, %v1016
      %v1033 = vadd.f32 %v985, %v1017
      %v1034 = vadd.f32 %v986, %v1018
      %vm1035 = vcmp.ge.f32.partialorder %v1019, 1.0
      %vm1036 = vcmp.ge.f32.partialorder %v1020, 1.0
      %vm1037 = vcmp.ge.f32.partialorder %v1021, 1.0
      %vm1038 = vcmp.ge.f32.partialorder %v1022, 1.0
      %vm1039 = vcmp.ge.f32.partialorder %v1023, 1.0
      %vm1040 = vcmp.ge.f32.partialorder %v1024, 1.0
      %vm1041 = vcmp.ge.f32.partialorder %v1025, 1.0
      %vm1042 = vcmp.ge.f32.partialorder %v1026, 1.0
      %vm1043 = vcmp.ge.f32.partialorder %v1027, 1.0
      %vm1044 = vcmp.ge.f32.partialorder %v1028, 1.0
      %vm1045 = vcmp.ge.f32.partialorder %v1029, 1.0
      %vm1046 = vcmp.ge.f32.partialorder %v1030, 1.0
      %vm1047 = vcmp.ge.f32.partialorder %v1031, 1.0
      %vm1048 = vcmp.ge.f32.partialorder %v1032, 1.0
      %vm1049 = vcmp.ge.f32.partialorder %v1033, 1.0
      %vm1050 = vcmp.ge.f32.partialorder %v1034, 1.0
      %v1051 = vsel %vm1035, 1, 0
      %v1052 = vsel %vm1036, 1, 0
      %v1053 = vsel %vm1037, 1, 0
      %v1054 = vsel %vm1038, 1, 0
      %v1055 = vsel %vm1039, 1, 0
      %v1056 = vsel %vm1040, 1, 0
      %v1057 = vsel %vm1041, 1, 0
      %v1058 = vsel %vm1042, 1, 0
      %v1059 = vsel %vm1043, 1, 0
      %v1060 = vsel %vm1044, 1, 0
      %v1061 = vsel %vm1045, 1, 0
      %v1062 = vsel %vm1046, 1, 0
      %v1063 = vsel %vm1047, 1, 0
      %v1064 = vsel %vm1048, 1, 0
      %v1065 = vsel %vm1049, 1, 0
      %v1066 = vsel %vm1050, 1, 0
      %v1067 = vcvt.s32.f32 %v1051
      %v1068 = vcvt.s32.f32 %v1052
      %v1069 = vcvt.s32.f32 %v1053
      %v1070 = vcvt.s32.f32 %v1054
      %v1071 = vcvt.s32.f32 %v1055
      %v1072 = vcvt.s32.f32 %v1056
      %v1073 = vcvt.s32.f32 %v1057
      %v1074 = vcvt.s32.f32 %v1058
      %v1075 = vcvt.s32.f32 %v1059
      %v1076 = vcvt.s32.f32 %v1060
      %v1077 = vcvt.s32.f32 %v1061
      %v1078 = vcvt.s32.f32 %v1062
      %v1079 = vcvt.s32.f32 %v1063
      %v1080 = vcvt.s32.f32 %v1064
      %v1081 = vcvt.s32.f32 %v1065
      %v1082 = vcvt.s32.f32 %v1066
      %vm1083 = vcmp.gt.f32.partialorder %v1067, 0.0
      %vm1084 = vcmp.gt.f32.partialorder %v1068, 0.0
      %vm1085 = vcmp.gt.f32.partialorder %v1069, 0.0
      %vm1086 = vcmp.gt.f32.partialorder %v1070, 0.0
      %vm1087 = vcmp.gt.f32.partialorder %v1071, 0.0
      %vm1088 = vcmp.gt.f32.partialorder %v1072, 0.0
      %vm1089 = vcmp.gt.f32.partialorder %v1073, 0.0
      %vm1090 = vcmp.gt.f32.partialorder %v1074, 0.0
      %vm1091 = vcmp.gt.f32.partialorder %v1075, 0.0
      %vm1092 = vcmp.gt.f32.partialorder %v1076, 0.0
      %vm1093 = vcmp.gt.f32.partialorder %v1077, 0.0
      %vm1094 = vcmp.gt.f32.partialorder %v1078, 0.0
      %vm1095 = vcmp.gt.f32.partialorder %v1079, 0.0
      %vm1096 = vcmp.gt.f32.partialorder %v1080, 0.0
      %vm1097 = vcmp.gt.f32.partialorder %v1081, 0.0
      %vm1098 = vcmp.gt.f32.partialorder %v1082, 0.0
      %v1099 = vsel %vm1083, 0.0, %v1019
      %v1100 = vsel %vm1084, 0.0, %v1020
      %v1101 = vsel %vm1085, 0.0, %v1021
      %v1102 = vsel %vm1086, 0.0, %v1022
      %v1103 = vsel %vm1087, 0.0, %v1023
      %v1104 = vsel %vm1088, 0.0, %v1024
      %v1105 = vsel %vm1089, 0.0, %v1025
      %v1106 = vsel %vm1090, 0.0, %v1026
      %v1107 = vsel %vm1091, 0.0, %v1027
      %v1108 = vsel %vm1092, 0.0, %v1028
      %v1109 = vsel %vm1093, 0.0, %v1029
      %v1110 = vsel %vm1094, 0.0, %v1030
      %v1111 = vsel %vm1095, 0.0, %v1031
      %v1112 = vsel %vm1096, 0.0, %v1032
      %v1113 = vsel %vm1097, 0.0, %v1033
      %v1114 = vsel %vm1098, 0.0, %v1034
      %1115 = vst [vmem:[#allocation3] sm:$0xff] %v1099
      %1116 = vst [vmem:[#allocation3 + $0x8] sm:$0xff] %v1100
      %1117 = vst [vmem:[#allocation3 + $0x10] sm:$0xff] %v1101
      %1118 = vst [vmem:[#allocation3 + $0x18] sm:$0xff] %v1102
      %1119 = vst [vmem:[#allocation3 + $0x20] sm:$0xff] %v1103
      %1120 = vst [vmem:[#allocation3 + $0x28] sm:$0xff] %v1104
      %1121 = vst [vmem:[#allocation3 + $0x30] sm:$0xff] %v1105
      %1122 = vst [vmem:[#allocation3 + $0x38] sm:$0xff] %v1106
      %1123 = vst [vmem:[#allocation3 + $0x40] sm:$0xff] %v1107
      %1124 = vst [vmem:[#allocation3 + $0x48] sm:$0xff] %v1108
      %1125 = vst [vmem:[#allocation3 + $0x50] sm:$0xff] %v1109
      %1126 = vst [vmem:[#allocation3 + $0x58] sm:$0xff] %v1110
      %1127 = vst [vmem:[#allocation3 + $0x60] sm:$0xff] %v1111
      %1128 = vst [vmem:[#allocation3 + $0x68] sm:$0xff] %v1112
      %1129 = vst [vmem:[#allocation3 + $0x70] sm:$0xff] %v1113
      %1130 = vst [vmem:[#allocation3 + $0x78] sm:$0xff] %v1114
      %v1131 = vld [vmem:[%s252] sm:$0xff]
      %v1132 = vld [vmem:[%s252 + $0x8] sm:$0xff]
      %v1133 = vld [vmem:[%s252 + $0x10] sm:$0xff]
      %v1134 = vld [vmem:[%s252 + $0x18] sm:$0xff]
      %v1135 = vld [vmem:[%s252 + $0x20] sm:$0xff]
      %v1136 = vld [vmem:[%s252 + $0x28] sm:$0xff]
      %v1137 = vld [vmem:[%s252 + $0x30] sm:$0xff]
      %v1138 = vld [vmem:[%s252 + $0x38] sm:$0xff]
      %v1139 = vld [vmem:[%s252 + $0x40] sm:$0xff]
      %v1140 = vld [vmem:[%s252 + $0x48] sm:$0xff]
      %v1141 = vld [vmem:[%s252 + $0x50] sm:$0xff]
      %v1142 = vld [vmem:[%s252 + $0x58] sm:$0xff]
      %v1143 = vld [vmem:[%s252 + $0x60] sm:$0xff]
      %v1144 = vld [vmem:[%s252 + $0x68] sm:$0xff]
      %v1145 = vld [vmem:[%s252 + $0x70] sm:$0xff]
      %v1146 = vld [vmem:[%s252 + $0x78] sm:$0xff]
      %v1147 = vadd.f32 %v1131, %v1067
      %v1148 = vadd.f32 %v1132, %v1068
      %v1149 = vadd.f32 %v1133, %v1069
      %v1150 = vadd.f32 %v1134, %v1070
      %v1151 = vadd.f32 %v1135, %v1071
      %v1152 = vadd.f32 %v1136, %v1072
      %v1153 = vadd.f32 %v1137, %v1073
      %v1154 = vadd.f32 %v1138, %v1074
      %v1155 = vadd.f32 %v1139, %v1075
      %v1156 = vadd.f32 %v1140, %v1076
      %v1157 = vadd.f32 %v1141, %v1077
      %v1158 = vadd.f32 %v1142, %v1078
      %v1159 = vadd.f32 %v1143, %v1079
      %v1160 = vadd.f32 %v1144, %v1080
      %v1161 = vadd.f32 %v1145, %v1081
      %v1162 = vadd.f32 %v1146, %v1082
      %1163 = vst [vmem:[%s252] sm:$0xff] %v1147
      %1164 = vst [vmem:[%s252 + $0x8] sm:$0xff] %v1148
      %1165 = vst [vmem:[%s252 + $0x10] sm:$0xff] %v1149
      %1166 = vst [vmem:[%s252 + $0x18] sm:$0xff] %v1150
      %1167 = vst [vmem:[%s252 + $0x20] sm:$0xff] %v1151
      %1168 = vst [vmem:[%s252 + $0x28] sm:$0xff] %v1152
      %1169 = vst [vmem:[%s252 + $0x30] sm:$0xff] %v1153
      %1170 = vst [vmem:[%s252 + $0x38] sm:$0xff] %v1154
      %1171 = vst [vmem:[%s252 + $0x40] sm:$0xff] %v1155
      %1172 = vst [vmem:[%s252 + $0x48] sm:$0xff] %v1156
      %1173 = vst [vmem:[%s252 + $0x50] sm:$0xff] %v1157
      %1174 = vst [vmem:[%s252 + $0x58] sm:$0xff] %v1158
      %1175 = vst [vmem:[%s252 + $0x60] sm:$0xff] %v1159
      %1176 = vst [vmem:[%s252 + $0x68] sm:$0xff] %v1160
      %1177 = vst [vmem:[%s252 + $0x70] sm:$0xff] %v1161
      %1178 = vst [vmem:[%s252 + $0x78] sm:$0xff] %v1162
      %p1179 = scmp.eq.s32.totalorder %s21, 3
      // Predicated region
      $region37: #{detection_backbone_forward.8} parent=31 // pred_check
        %p1180 = pneg %p1179
      $region38: #{detection_backbone_forward.8} parent=31 // pred_check_branch
        %1182 = sbr.rel (%p1180) target = $region40
      $region39: #{detection_backbone_forward.8} parent=31 // pred_region
        %v1183 = vld [vmem:[%s252] sm:$0xff]
        %v1184 = vld [vmem:[%s252 + $0x8] sm:$0xff]
        %v1185 = vld [vmem:[%s252 + $0x10] sm:$0xff]
        %v1186 = vld [vmem:[%s252 + $0x18] sm:$0xff]
        %v1187 = vld [vmem:[%s252 + $0x20] sm:$0xff]
        %v1188 = vld [vmem:[%s252 + $0x28] sm:$0xff]
        %v1189 = vld [vmem:[%s252 + $0x30] sm:$0xff]
        %v1190 = vld [vmem:[%s252 + $0x38] sm:$0xff]
        %v1191 = vld [vmem:[%s252 + $0x40] sm:$0xff]
        %v1192 = vld [vmem:[%s252 + $0x48] sm:$0xff]
        %v1193 = vld [vmem:[%s252 + $0x50] sm:$0xff]
        %v1194 = vld [vmem:[%s252 + $0x58] sm:$0xff]
        %v1195 = vld [vmem:[%s252 + $0x60] sm:$0xff]
        %v1196 = vld [vmem:[%s252 + $0x68] sm:$0xff]
        %v1197 = vld [vmem:[%s252 + $0x70] sm:$0xff]
        %v1198 = vld [vmem:[%s252 + $0x78] sm:$0xff]
        %v1199 = vmul.f32 %v1183, 0.25
        %v1200 = vmul.f32 %v1184, 0.25
        %v1201 = vmul.f32 %v1185, 0.25
        %v1202 = vmul.f32 %v1186, 0.25
        %v1203 = vmul.f32 %v1187, 0.25
        %v1204 = vmul.f32 %v1188, 0.25
        %v1205 = vmul.f32 %v1189, 0.25
        %v1206 = vmul.f32 %v1190, 0.25
        %v1207 = vmul.f32 %v1191, 0.25
        %v1208 = vmul.f32 %v1192, 0.25
        %v1209 = vmul.f32 %v1193, 0.25
        %v1210 = vmul.f32 %v1194, 0.25
        %v1211 = vmul.f32 %v1195, 0.25
        %v1212 = vmul.f32 %v1196, 0.25
        %v1213 = vmul.f32 %v1197, 0.25
        %v1214 = vmul.f32 %v1198, 0.25
        %1215 = vst [vmem:[%s252] sm:$0xff] %v1199
        %1216 = vst [vmem:[%s252 + $0x8] sm:$0xff] %v1200
        %1217 = vst [vmem:[%s252 + $0x10] sm:$0xff] %v1201
        %1218 = vst [vmem:[%s252 + $0x18] sm:$0xff] %v1202
        %1219 = vst [vmem:[%s252 + $0x20] sm:$0xff] %v1203
        %1220 = vst [vmem:[%s252 + $0x28] sm:$0xff] %v1204
        %1221 = vst [vmem:[%s252 + $0x30] sm:$0xff] %v1205
        %1222 = vst [vmem:[%s252 + $0x38] sm:$0xff] %v1206
        %1223 = vst [vmem:[%s252 + $0x40] sm:$0xff] %v1207
        %1224 = vst [vmem:[%s252 + $0x48] sm:$0xff] %v1208
        %1225 = vst [vmem:[%s252 + $0x50] sm:$0xff] %v1209
        %1226 = vst [vmem:[%s252 + $0x58] sm:$0xff] %v1210
        %1227 = vst [vmem:[%s252 + $0x60] sm:$0xff] %v1211
        %1228 = vst [vmem:[%s252 + $0x68] sm:$0xff] %v1212
        %1229 = vst [vmem:[%s252 + $0x70] sm:$0xff] %v1213
        %1230 = vst [vmem:[%s252 + $0x78] sm:$0xff] %v1214
      $region40: #{detection_backbone_forward.8} parent=31 // pred_fallthru
        _
      %s1231 = smul.u32 16, %s20
      %p1232 = scmp.lt.s32.totalorder %s21, 3
      %s1233 = scalar_select %p1232, %s21, 3
      %p1234 = scmp.lt.s32.totalorder %s1231, 15
      %s1235 = scalar_select %p1234, %s1231, 15
      %s1236 = smul.addr %s1233, 16
      %s1237 = sadd.s32 %s1235, %s1236
      %s1238 = smul.addr %s1237, 4
      %s1239 = scalar_lea.vmem %s3, %s1238
      %s1240 = smul.u32 16, %s20
      %p1241 = scmp.lt.s32.totalorder %s1240, 15
      %s1242 = scalar_select %p1241, %s1240, 15
      %s1243 = smul.addr %s1242, 8
      %s1244 = scalar_lea.vmem %s4, %s1243
      // Predicated region
      $region41: #{detection_backbone_forward.8} parent=31 // pred_check
        %p1245 = pneg %p118
      $region42: #{detection_backbone_forward.8} parent=31 // pred_check_branch
        %1247 = sbr.rel (%p1245) target = $region44
      $region43: #{detection_backbone_forward.8} parent=31 // pred_region
        %s1248 = smul.u32 16, %s20
      $region44: #{detection_backbone_forward.8} parent=31 // pred_fallthru
        _
      // Predicated region
      $region45: #{detection_backbone_forward.8} parent=31 // pred_check
        %p1249 = pneg %p144
      $region46: #{detection_backbone_forward.8} parent=31 // pred_check_branch
        %1251 = sbr.rel (%p1249) target = $region48
      $region47: #{detection_backbone_forward.8} parent=31 // pred_region
        %s1252 = smul.u32 16, %s20
      $region48: #{detection_backbone_forward.8} parent=31 // pred_fallthru
        _
      // Predicated region
      $region49: #{detection_backbone_forward.8} parent=31 // pred_check
        %p1253 = pneg %p144
      $region50: #{detection_backbone_forward.8} parent=31 // pred_check_branch
        %1255 = sbr.rel (%p1253) target = $region52
      $region51: #{detection_backbone_forward.8} parent=31 // pred_region
        %s1256 = smul.u32 16, %s20
        %p1257 = scmp.lt.s32.totalorder %s1256, 15
        %s1258 = scalar_select %p1257, %s1256, 15
        %s1259 = smul.addr %s1258, 8
        %s1260 = scalar_lea.vmem %s4, %s1259
      $region52: #{detection_backbone_forward.8} parent=31 // pred_fallthru
        _
    $region32: #{detection_backbone_forward.8} parent=5 // pred_fallthru
      _
    %p1261 = scmp.le.s32.totalorder 2, %s11
    // Predicated region
    $region53: #{detection_backbone_forward.8} parent=5 // pred_check
      %p1262 = pneg %p1261
    $region54: #{detection_backbone_forward.8} parent=5 // pred_check_branch
      %1264 = sbr.rel (%p1262) target = $region56
    $region55: #{detection_backbone_forward.8} parent=5 // pred_region
      %s1265 = ssub.s32 %s11, 2
      // Predicated region
      $region57: #{detection_backbone_forward.8} parent=55 // pred_check
        %p1266 = pneg %p124
      $region58: #{detection_backbone_forward.8} parent=55 // pred_check_branch
        %1268 = sbr.rel (%p1266) target = $region60
      $region59: #{detection_backbone_forward.8} parent=55 // pred_region
        %s1269 = smul.u32 16, %s22
        %p1270 = scmp.lt.s32.totalorder %s23, 3
        %s1271 = scalar_select %p1270, %s23, 3
        %p1272 = scmp.lt.s32.totalorder %s1269, 15
        %s1273 = scalar_select %p1272, %s1269, 15
        %s1274 = smul.addr %s1271, 16
        %s1275 = sadd.s32 %s1273, %s1274
        %s1276 = smul.addr %s1275, 4
        %s1277 = scalar_lea.vmem %s3, %s1276
      $region60: #{detection_backbone_forward.8} parent=55 // pred_fallthru
        _
    $region56: #{detection_backbone_forward.8} parent=5 // pred_fallthru
      _
  $region6: #{detection_backbone_forward.8} parent=0 // loop_footer
    %s15 = sadd.s32 1, %s11
  $region7: #{detection_backbone_forward.8} parent=0 // loop_footer_branch
    %10 = sbr.rel target = $region3
  $region8: #{detection_backbone_forward.8} parent=0 // loop_exit
    _

// kernel: detection_backbone_forward.9
$region0: #{detection_backbone_forward.9}
  #allocation0 [shape = 'u32[]', space=smem, size = 0x4, offset = 0x4, fixed_abs, tag = 'smem constant byte address 0x4 - core index']
  #allocation1 [shape = 'u32[72,128]{1,0:T(1,128)}', space=vmem, size = 0x9000, scoped, tag = 'internal scratch']
  #allocation2 [shape = 'f32[128,128]{1,0:T(8,128)}', space=vmem, size = 0x10000, scoped, tag = 'scratch operand']
  #allocation3 [shape = 'f32[128,128]{1,0:T(8,128)}', space=vmem, size = 0x10000, scoped, tag = 'scratch operand']
  %s0 = inlined_call_operand.vmem [shape: bf16[4,128,288], index: 0, kind: input, shape index: {}]
  %s1 = inlined_call_operand.vmem [shape: bf16[288,128], index: 1, kind: input, shape index: {}]
  %s2 = inlined_call_operand.vmem [shape: f32[1,128], index: 2, kind: input, shape index: {}]
  %s3 = inlined_call_operand.hbm [shape: bf16[4,128,128], index: 3, kind: output, shape index: {0}]
  %s4 = inlined_call_operand.vmem [shape: f32[128,128], index: 4, kind: output, shape index: {1}]
  %5 = xla_tuple %s3, %s4
  %s6 = sld [smem:[#allocation0]]
  $region61: #{detection_backbone_forward.9} parent=0
    _
  %s8 = ssub.s32 1, %s6
  %s9 = scalar_select 0, %s8, %s6
  $region1: #{detection_backbone_forward.9} parent=0
    #allocation4 [shape = 'u8[65536]{0}', space=vmem, size = 0x10000, scoped, tag = 'output window, operand 0']
    #allocation5 [shape = 's32[2]{0}', space=sflag, size = 0x8, scoped, tag = 'scoped memory for detection_backbone_forward.9']
    %10 = vsyncpa [#allocation5], 0
    %s11 = scalar_lea.sflag [#allocation5], 1
    %12 = vsyncpa %s11, 0
    loop: start=0, step=1, limit=6
    $region2: #{detection_backbone_forward.9} parent=1 // loop_pre_header
      _
    $region3: #{detection_backbone_forward.9} parent=1 // loop_header
      %s14 = sphi 0, %s18
      %p15 = scmp.ge.s32.totalorder %s14, 6
      %s21 = sphi 0, %s33
      %s22 = sphi 0, %s29
      %s23 = sphi 0, %s21
      %s24 = sphi 0, %s22
      %s25 = sphi 0, %s23
      %s26 = sphi 0, %s24
      %s38 = sphi 0, %s40
      %s41 = sphi 0, %s38
      %s42 = sphi 0, %s41
      %s58 = sphi 0, %s42
      %s62 = sphi 0, %s62
      %s64 = sphi 0, %s62
      %s65 = sphi 0, %s64
      %s79 = sphi 0, %s65
      %s83 = sphi 0, %s83
      %s85 = sphi 0, %s83
      %s86 = sphi 0, %s85
      %s100 = sphi 0, %s86
      %s108 = sphi 0, %s110
      %s111 = sphi 0, %s108
      %s112 = sphi 0, %s111
      %s128 = sphi 0, %s112
      %s134 = sphi 0, %s136
      %s137 = sphi 0, %s134
      %s138 = sphi 0, %s137
      %s154 = sphi 0, %s138
    $region4: #{detection_backbone_forward.9} parent=1 // loop_header_branch
      %17 = sbr.rel (%p15) target = $region8
    $region5: #{detection_backbone_forward.9} parent=1 // loop_body
      %s19 = ssub.s32 %s14, 1
      %s20 = ssub.s32 %s14, 2
      %s27 = sadd.s32 1, %s22
      %p28 = scmp.ge.s32.totalorder %s27, 4
      %s29 = scalar_select %p28, 0, %s27
      %s30 = sadd.s32 1, %s21
      %s31 = scalar_select %p28, %s30, %s21
      %p32 = scmp.ge.s32.totalorder %s31, 1
      %s33 = scalar_select %p32, 0, %s31
      %s34 = ssub.s32 %s22, %s29
      %s35 = ssub.s32 %s21, %s33
      %s36 = sor.u32 %s34, %s35
      %p37 = scmp.eq.s32.totalorder %s36, 0
      %s39 = sadd.s32 %s38, 1
      %s40 = scalar_select %p37, %s38, %s39
      %p43 = pneg %p37
      %p44 = scmp.eq.s32.totalorder %s14, 3
      %p45 = por %p43, %p44
      %p46 = scmp.ne.s32.totalorder %s38, %s41
      %p47 = scmp.eq.s32.totalorder %s14, 0
      %p48 = por %p46, %p47
      %p49 = scmp.ne.s32.totalorder %s38, %s41
      %p50 = scmp.eq.s32.totalorder %s19, 3
      %p51 = por %p49, %p50
      %p52 = scmp.ne.s32.totalorder %s41, %s42
      %p53 = scmp.eq.s32.totalorder %s19, 0
      %p54 = por %p52, %p53
      %p55 = scmp.ne.s32.totalorder %s41, %s42
      %p56 = scmp.eq.s32.totalorder %s20, 3
      %p57 = por %p55, %p56
      %p59 = scmp.ne.s32.totalorder %s42, %s58
      %p60 = scmp.eq.s32.totalorder %s20, 0
      %p61 = por %p59, %p60
      %s63 = sadd.s32 %s62, 1
      %p66 = scmp.eq.s32.totalorder %s14, 3
      %p67 = scmp.ne.s32.totalorder %s62, %s64
      %p68 = scmp.eq.s32.totalorder %s14, 0
      %p69 = por %p67, %p68
      %p70 = scmp.ne.s32.totalorder %s62, %s64
      %p71 = scmp.eq.s32.totalorder %s19, 3
      %p72 = por %p70, %p71
      %p73 = scmp.ne.s32.totalorder %s64, %s65
      %p74 = scmp.eq.s32.totalorder %s19, 0
      %p75 = por %p73, %p74
      %p76 = scmp.ne.s32.totalorder %s64, %s65
      %p77 = scmp.eq.s32.totalorder %s20, 3
      %p78 = por %p76, %p77
      %p80 = scmp.ne.s32.totalorder %s65, %s79
      %p81 = scmp.eq.s32.totalorder %s20, 0
      %p82 = por %p80, %p81
      %s84 = sadd.s32 %s83, 1
      %p87 = scmp.eq.s32.totalorder %s14, 3
      %p88 = scmp.ne.s32.totalorder %s83, %s85
      %p89 = scmp.eq.s32.totalorder %s14, 0
      %p90 = por %p88, %p89
      %p91 = scmp.ne.s32.totalorder %s83, %s85
      %p92 = scmp.eq.s32.totalorder %s19, 3
      %p93 = por %p91, %p92
      %p94 = scmp.ne.s32.totalorder %s85, %s86
      %p95 = scmp.eq.s32.totalorder %s19, 0
      %p96 = por %p94, %p95
      %p97 = scmp.ne.s32.totalorder %s85, %s86
      %p98 = scmp.eq.s32.totalorder %s20, 3
      %p99 = por %p97, %p98
      %p101 = scmp.ne.s32.totalorder %s86, %s100
      %p102 = scmp.eq.s32.totalorder %s20, 0
      %p103 = por %p101, %p102
      %s104 = ssub.s32 %s22, %s29
      %s105 = ssub.s32 %s21, %s33
      %s106 = sor.u32 %s104, %s105
      %p107 = scmp.eq.s32.totalorder %s106, 0
      %s109 = sadd.s32 %s108, 1
      %s110 = scalar_select %p107, %s108, %s109
      %p113 = pneg %p107
      %p114 = scmp.eq.s32.totalorder %s14, 3
      %p115 = por %p113, %p114
      %p116 = scmp.ne.s32.totalorder %s108, %s111
      %p117 = scmp.eq.s32.totalorder %s14, 0
      %p118 = por %p116, %p117
      %p119 = scmp.ne.s32.totalorder %s108, %s111
      %p120 = scmp.eq.s32.totalorder %s19, 3
      %p121 = por %p119, %p120
      %p122 = scmp.ne.s32.totalorder %s111, %s112
      %p123 = scmp.eq.s32.totalorder %s19, 0
      %p124 = por %p122, %p123
      %p125 = scmp.ne.s32.totalorder %s111, %s112
      %p126 = scmp.eq.s32.totalorder %s20, 3
      %p127 = por %p125, %p126
      %p129 = scmp.ne.s32.totalorder %s112, %s128
      %p130 = scmp.eq.s32.totalorder %s20, 0
      %p131 = por %p129, %p130
      %s132 = ssub.s32 %s21, %s33
      %p133 = scmp.eq.s32.totalorder %s132, 0
      %s135 = sadd.s32 %s134, 1
      %s136 = scalar_select %p133, %s134, %s135
      %p139 = pneg %p133
      %p140 = scmp.eq.s32.totalorder %s14, 3
      %p141 = por %p139, %p140
      %p142 = scmp.ne.s32.totalorder %s134, %s137
      %p143 = scmp.eq.s32.totalorder %s14, 0
      %p144 = por %p142, %p143
      %p145 = scmp.ne.s32.totalorder %s134, %s137
      %p146 = scmp.eq.s32.totalorder %s19, 3
      %p147 = por %p145, %p146
      %p148 = scmp.ne.s32.totalorder %s137, %s138
      %p149 = scmp.eq.s32.totalorder %s19, 0
      %p150 = por %p148, %p149
      %p151 = scmp.ne.s32.totalorder %s137, %s138
      %p152 = scmp.eq.s32.totalorder %s20, 3
      %p153 = por %p151, %p152
      %p155 = scmp.ne.s32.totalorder %s138, %s154
      %p156 = scmp.eq.s32.totalorder %s20, 0
      %p157 = por %p155, %p156
      %p158 = scmp.le.s32.totalorder 1, %s14
      %p159 = scmp.lt.s32.totalorder %s14, 5
      %p160 = pnand %p158, %p159
      %p161 = pneg %p160
      // Predicated region
      $region9: #{detection_backbone_forward.9} parent=5 // pred_check
        _
      $region10: #{detection_backbone_forward.9} parent=5 // pred_check_branch
        %163 = sbr.rel (%p160) target = $region12
      $region11: #{detection_backbone_forward.9} parent=5 // pred_region
        %s164 = ssub.s32 %s14, 1
        // Predicated region
        $region13: #{detection_backbone_forward.9} parent=11 // pred_check
          %p165 = pneg %p75
        $region14: #{detection_backbone_forward.9} parent=11 // pred_check_branch
          %167 = sbr.rel (%p165) target = $region16
        $region15: #{detection_backbone_forward.9} parent=11 // pred_region
          _
        $region16: #{detection_backbone_forward.9} parent=11 // pred_fallthru
          _
        // Predicated region
        $region17: #{detection_backbone_forward.9} parent=11 // pred_check
          %p168 = pneg %p96
        $region18: #{detection_backbone_forward.9} parent=11 // pred_check_branch
          %170 = sbr.rel (%p168) target = $region20
        $region19: #{detection_backbone_forward.9} parent=11 // pred_region
          _
        $region20: #{detection_backbone_forward.9} parent=11 // pred_fallthru
          _
      $region12: #{detection_backbone_forward.9} parent=5 // pred_fallthru
        _
      %p171 = scmp.lt.s32.totalorder %s14, 4
      // Predicated region
      $region21: #{detection_backbone_forward.9} parent=5 // pred_check
        %p172 = pneg %p171
      $region22: #{detection_backbone_forward.9} parent=5 // pred_check_branch
        %174 = sbr.rel (%p172) target = $region24
      $region23: #{detection_backbone_forward.9} parent=5 // pred_region
        // Predicated region
        $region25: #{detection_backbone_forward.9} parent=23 // pred_check
          %p175 = pneg %p48
        $region26: #{detection_backbone_forward.9} parent=23 // pred_check_branch
          %177 = sbr.rel (%p175) target = $region28
        $region27: #{detection_backbone_forward.9} parent=23 // pred_region
          %s178 = smul.u32 16, %s21
          %p179 = scmp.lt.s32.totalorder %s22, 3
          %s180 = scalar_select %p179, %s22, 3
          %p181 = scmp.lt.s32.totalorder %s178, 15
          %s182 = scalar_select %p181, %s178, 15
          %s183 = smul.addr %s182, 3
          %s184 = smul.addr %s180, 48
          %s185 = sadd.s32 %s183, %s184
          %s186 = smul.addr %s185, 4
          %s187 = scalar_lea.vmem %s0, %s186
          %s188 = smul.u32 16, %s21
        $region28: #{detection_backbone_forward.9} parent=23 // pred_fallthru
          _
      $region24: #{detection_backbone_forward.9} parent=5 // pred_fallthru
        _
      %p189 = scmp.le.s32.totalorder 1, %s14
      %p190 = scmp.lt.s32.totalorder %s14, 5
      %p191 = pnand %p189, %p190
      %p192 = pneg %p191
      // Predicated region
      $region29: #{detection_backbone_forward.9} parent=5 // pred_check
        _
      $region30: #{detection_backbone_forward.9} parent=5 // pred_check_branch
        %194 = sbr.rel (%p191) target = $region32
      $region31: #{detection_backbone_forward.9} parent=5 // pred_region
        %s195 = ssub.s32 %s14, 1
        %s196 = smul.u32 16, %s23
        %p197 = scmp.lt.s32.totalorder %s24, 3
        %s198 = scalar_select %p197, %s24, 3
        %p199 = scmp.lt.s32.totalorder %s196, 15
        %s200 = scalar_select %p199, %s196, 15
        %s201 = smul.addr %s200, 3
        %s202 = smul.addr %s198, 48
        %s203 = sadd.s32 %s201, %s202
        %s204 = smul.addr %s203, 4
        %s205 = scalar_lea.vmem %s0, %s204
        %p206 = pneg %p54
        %p207 = pneg %p51
        %p208 = pneg %p75
        %p209 = pneg %p72
        %p210 = pneg %p96
        %p211 = pneg %p93
        %p212 = pneg %p124
        %p213 = pneg %p121
        %s214 = sand.u32 %s111, 1
        %s215 = scalar_lea.sflag [#allocation5], %s214
        %s216 = sand.u32 %s111, 1
        %s217 = smul.addr %s216, 64
        %s218 = scalar_lea.vmem [#allocation4], %s217
        %p219 = pneg %p150
        %p220 = pneg %p147
        %s221 = smul.u32 16, %s23
        %p222 = scmp.lt.s32.totalorder %s221, 15
        %s223 = scalar_select %p222, %s221, 15
        %s224 = smul.addr %s223, 8
        %s225 = scalar_lea.vmem %s4, %s224
        %s226 = smul.u32 16, %s23
        %p227 = scmp.lt.s32.totalorder %s24, 3
        %s228 = scalar_select %p227, %s24, 3
        %p229 = scmp.lt.s32.totalorder %s226, 15
        %s230 = scalar_select %p229, %s226, 15
        %s231 = smul.addr %s230, 3
        %s232 = smul.addr %s228, 48
        %s233 = sadd.s32 %s231, %s232
        %s234 = smul.addr %s233, 4
        %s235 = scalar_lea.vmem %s0, %s234
        %s236 = smul.u32 16, %s23
        %s237 = smul.u32 16, %s23
        %s238 = smul.u32 16, %s23
        %p239 = scmp.lt.s32.totalorder %s238, 15
        %s240 = scalar_select %p239, %s238, 15
        %s241 = smul.addr %s240, 8
        %s242 = scalar_lea.vmem %s4, %s241
        %s243 = smul.u32 16, %s23
        %p245 = scmp.eq.s32.totalorder %s24, 0
        // Predicated region
        $region33: #{detection_backbone_forward.9} parent=31 // pred_check
          %p246 = pneg %p245
        $region34: #{detection_backbone_forward.9} parent=31 // pred_check_branch
          %248 = sbr.rel (%p246) target = $region36
        $region35: #{detection_backbone_forward.9} parent=31 // pred_region
          %249 = vst [vmem:[#allocation2] sm:$0xff] 0.0
          %250 = vst [vmem:[#allocation2 + $0x8] sm:$0xff] 0.0
          %251 = vst [vmem:[#allocation2 + $0x10] sm:$0xff] 0.0
          %252 = vst [vmem:[#allocation2 + $0x18] sm:$0xff] 0.0
          %253 = vst [vmem:[#allocation2 + $0x20] sm:$0xff] 0.0
          %254 = vst [vmem:[#allocation2 + $0x28] sm:$0xff] 0.0
          %255 = vst [vmem:[#allocation2 + $0x30] sm:$0xff] 0.0
          %256 = vst [vmem:[#allocation2 + $0x38] sm:$0xff] 0.0
          %257 = vst [vmem:[#allocation2 + $0x40] sm:$0xff] 0.0
          %258 = vst [vmem:[#allocation2 + $0x48] sm:$0xff] 0.0
          %259 = vst [vmem:[#allocation2 + $0x50] sm:$0xff] 0.0
          %260 = vst [vmem:[#allocation2 + $0x58] sm:$0xff] 0.0
          %261 = vst [vmem:[#allocation2 + $0x60] sm:$0xff] 0.0
          %262 = vst [vmem:[#allocation2 + $0x68] sm:$0xff] 0.0
          %263 = vst [vmem:[#allocation2 + $0x70] sm:$0xff] 0.0
          %264 = vst [vmem:[#allocation2 + $0x78] sm:$0xff] 0.0
          %265 = vst [vmem:[#allocation3] sm:$0xff] 0.0
          %266 = vst [vmem:[#allocation3 + $0x8] sm:$0xff] 0.0
          %267 = vst [vmem:[#allocation3 + $0x10] sm:$0xff] 0.0
          %268 = vst [vmem:[#allocation3 + $0x18] sm:$0xff] 0.0
          %269 = vst [vmem:[#allocation3 + $0x20] sm:$0xff] 0.0
          %270 = vst [vmem:[#allocation3 + $0x28] sm:$0xff] 0.0
          %271 = vst [vmem:[#allocation3 + $0x30] sm:$0xff] 0.0
          %272 = vst [vmem:[#allocation3 + $0x38] sm:$0xff] 0.0
          %273 = vst [vmem:[#allocation3 + $0x40] sm:$0xff] 0.0
          %274 = vst [vmem:[#allocation3 + $0x48] sm:$0xff] 0.0
          %275 = vst [vmem:[#allocation3 + $0x50] sm:$0xff] 0.0
          %276 = vst [vmem:[#allocation3 + $0x58] sm:$0xff] 0.0
          %277 = vst [vmem:[#allocation3 + $0x60] sm:$0xff] 0.0
          %278 = vst [vmem:[#allocation3 + $0x68] sm:$0xff] 0.0
          %279 = vst [vmem:[#allocation3 + $0x70] sm:$0xff] 0.0
          %280 = vst [vmem:[#allocation3 + $0x78] sm:$0xff] 0.0
          %281 = vst [vmem:[%s242] sm:$0xff] 0.0
          %282 = vst [vmem:[%s242 + $0x8] sm:$0xff] 0.0
          %283 = vst [vmem:[%s242 + $0x10] sm:$0xff] 0.0
          %284 = vst [vmem:[%s242 + $0x18] sm:$0xff] 0.0
          %285 = vst [vmem:[%s242 + $0x20] sm:$0xff] 0.0
          %286 = vst [vmem:[%s242 + $0x28] sm:$0xff] 0.0
          %287 = vst [vmem:[%s242 + $0x30] sm:$0xff] 0.0
          %288 = vst [vmem:[%s242 + $0x38] sm:$0xff] 0.0
          %289 = vst [vmem:[%s242 + $0x40] sm:$0xff] 0.0
          %290 = vst [vmem:[%s242 + $0x48] sm:$0xff] 0.0
          %291 = vst [vmem:[%s242 + $0x50] sm:$0xff] 0.0
          %292 = vst [vmem:[%s242 + $0x58] sm:$0xff] 0.0
          %293 = vst [vmem:[%s242 + $0x60] sm:$0xff] 0.0
          %294 = vst [vmem:[%s242 + $0x68] sm:$0xff] 0.0
          %295 = vst [vmem:[%s242 + $0x70] sm:$0xff] 0.0
          %296 = vst [vmem:[%s242 + $0x78] sm:$0xff] 0.0
        $region36: #{detection_backbone_forward.9} parent=31 // pred_fallthru
          _
        %v297 = vld [vmem:[%s235] sm:$0xff]
        %v298 = vld [vmem:[%s235 + $0x8] sm:$0xf]
        %v299 = vld [vmem:[%s235 + $0xc] sm:$0xff]
        %v300 = vld [vmem:[%s235 + $0x14] sm:$0xf]
        %v301 = vld [vmem:[%s235 + $0x18] sm:$0xff]
        %v302 = vld [vmem:[%s235 + $0x20] sm:$0xf]
        %v303 = vld [vmem:[%s235 + $0x24] sm:$0xff]
        %v304 = vld [vmem:[%s235 + $0x2c] sm:$0xf]
        %v305 = vld [vmem:[%s235 + $0x30] sm:$0xff]
        %v306 = vld [vmem:[%s235 + $0x38] sm:$0xf]
        %v307 = vld [vmem:[%s235 + $0x3c] sm:$0xff]
        %v308 = vld [vmem:[%s235 + $0x44] sm:$0xf]
        %v309 = vld [vmem:[%s235 + $0x48] sm:$0xff]
        %v310 = vld [vmem:[%s235 + $0x50] sm:$0xf]
        %v311 = vld [vmem:[%s235 + $0x54] sm:$0xff]
        %v312 = vld [vmem:[%s235 + $0x5c] sm:$0xf]
        %v313 = vld [vmem:[%s235 + $0x60] sm:$0xff]
        %v314 = vld [vmem:[%s235 + $0x68] sm:$0xf]
        %v315 = vld [vmem:[%s235 + $0x6c] sm:$0xff]
        %v316 = vld [vmem:[%s235 + $0x74] sm:$0xf]
        %v317 = vld [vmem:[%s235 + $0x78] sm:$0xff]
        %v318 = vld [vmem:[%s235 + $0x80] sm:$0xf]
        %v319 = vld [vmem:[%s235 + $0x84] sm:$0xff]
        %v320 = vld [vmem:[%s235 + $0x8c] sm:$0xf]
        %v321 = vld [vmem:[%s235 + $0x90] sm:$0xff]
        %v322 = vld [vmem:[%s235 + $0x98] sm:$0xf]
        %v323 = vld [vmem:[%s235 + $0x9c] sm:$0xff]
        %v324 = vld [vmem:[%s235 + $0xa4] sm:$0xf]
        %v325 = vld [vmem:[%s235 + $0xa8] sm:$0xff]
        %v326 = vld [vmem:[%s235 + $0xb0] sm:$0xf]
        %v327 = vld [vmem:[%s235 + $0xb4] sm:$0xff]
        %v328 = vld [vmem:[%s235 + $0xbc] sm:$0xf]
        %v329 = vld [vmem:[%s1] sm:$0xf]
        %v330 = vld [vmem:[%s1 + $0x4] sm:$0xf]
        %v331 = vld [vmem:[%s1 + $0x8] sm:$0xf]
        %v332 = vld [vmem:[%s1 + $0xc] sm:$0xf]
        %v333 = vld [vmem:[%s1 + $0x10] sm:$0xf]
        %v334 = vld [vmem:[%s1 + $0x14] sm:$0xf]
        %v335 = vld [vmem:[%s1 + $0x18] sm:$0xf]
        %v336 = vld [vmem:[%s1 + $0x1c] sm:$0xf]
        %v337 = vld [vmem:[%s1 + $0x20] sm:$0xf]
        %v338 = vld [vmem:[%s1 + $0x24] sm:$0xf]
        %v339 = vld [vmem:[%s1 + $0x28] sm:$0xf]
        %v340 = vld [vmem:[%s1 + $0x2c] sm:$0xf]
        %v341 = vld [vmem:[%s1 + $0x30] sm:$0xf]
        %v342 = vld [vmem:[%s1 + $0x34] sm:$0xf]
        %v343 = vld [vmem:[%s1 + $0x38] sm:$0xf]
        %v344 = vld [vmem:[%s1 + $0x3c] sm:$0xf]
        %v345 = vld [vmem:[%s1 + $0x40] sm:$0xf]
        %v346 = vld [vmem:[%s1 + $0x44] sm:$0xf]
        %v347 = vld [vmem:[%s1 + $0x48] sm:$0xf]
        %v348 = vld [vmem:[%s1 + $0x4c] sm:$0xf]
        %v349 = vld [vmem:[%s1 + $0x50] sm:$0xf]
        %v350 = vld [vmem:[%s1 + $0x54] sm:$0xf]
        %v351 = vld [vmem:[%s1 + $0x58] sm:$0xf]
        %v352 = vld [vmem:[%s1 + $0x5c] sm:$0xf]
        %v353 = vld [vmem:[%s1 + $0x60] sm:$0xf]
        %v354 = vld [vmem:[%s1 + $0x64] sm:$0xf]
        %v355 = vld [vmem:[%s1 + $0x68] sm:$0xf]
        %v356 = vld [vmem:[%s1 + $0x6c] sm:$0xf]
        %v357 = vld [vmem:[%s1 + $0x70] sm:$0xf]
        %v358 = vld [vmem:[%s1 + $0x74] sm:$0xf]
        %v359 = vld [vmem:[%s1 + $0x78] sm:$0xf]
        %v360 = vld [vmem:[%s1 + $0x7c] sm:$0xf]
        %v361 = vld [vmem:[%s1 + $0x80] sm:$0xf]
        %v362 = vld [vmem:[%s1 + $0x84] sm:$0xf]
        %v363 = vld [vmem:[%s1 + $0x88] sm:$0xf]
        %v364 = vld [vmem:[%s1 + $0x8c] sm:$0xf]
        %v365 = vld [vmem:[%s2] sm:$0x1]
        %v367 = vperm.slane %v365, 0
        %v401 = vunpack.c.l.b16 %v297
        %v402 = vunpack.c.h.b16 %v297
        %v403 = vunpack.c.l.b16 %v298
        %v404 = vunpack.c.l.b16 %v299
        %v405 = vunpack.c.h.b16 %v299
        %v406 = vunpack.c.l.b16 %v300
        %v407 = vunpack.c.l.b16 %v301
        %v408 = vunpack.c.h.b16 %v301
        %v409 = vunpack.c.l.b16 %v302
        %v410 = vunpack.c.l.b16 %v303
        %v411 = vunpack.c.h.b16 %v303
        %v412 = vunpack.c.l.b16 %v304
        %v413 = vunpack.c.l.b16 %v305
        %v414 = vunpack.c.h.b16 %v305
        %v415 = vunpack.c.l.b16 %v306
        %v416 = vunpack.c.l.b16 %v307
        %v417 = vunpack.c.h.b16 %v307
        %v418 = vunpack.c.l.b16 %v308
        %v419 = vunpack.c.l.b16 %v309
        %v420 = vunpack.c.h.b16 %v309
        %v421 = vunpack.c.l.b16 %v310
        %v422 = vunpack.c.l.b16 %v311
        %v423 = vunpack.c.h.b16 %v311
        %v424 = vunpack.c.l.b16 %v312
        %v425 = vunpack.c.l.b16 %v313
        %v426 = vunpack.c.h.b16 %v313
        %v427 = vunpack.c.l.b16 %v314
        %v428 = vunpack.c.l.b16 %v315
        %v429 = vunpack.c.h.b16 %v315
        %v430 = vunpack.c.l.b16 %v316
        %v431 = vunpack.c.l.b16 %v317
        %v432 = vunpack.c.h.b16 %v317
        %v433 = vunpack.c.l.b16 %v318
        %v434 = vunpack.c.l.b16 %v319
        %v435 = vunpack.c.h.b16 %v319
        %v436 = vunpack.c.l.b16 %v320
        %v437 = vunpack.c.l.b16 %v321
        %v438 = vunpack.c.h.b16 %v321
        %v439 = vunpack.c.l.b16 %v322
        %v440 = vunpack.c.l.b16 %v323
        %v441 = vunpack.c.h.b16 %v323
        %v442 = vunpack.c.l.b16 %v324
        %v443 = vunpack.c.l.b16 %v325
        %v444 = vunpack.c.h.b16 %v325
        %v445 = vunpack.c.l.b16 %v326
        %v446 = vunpack.c.l.b16 %v327
        %v447 = vunpack.c.h.b16 %v327
        %v448 = vunpack.c.l.b16 %v328
        %v449 = vpack.c.b16 %v404, %v401
        %v450 = vpack.c.b16 %v405, %v402
        %v451 = vpack.c.b16 %v406, %v403
        %v452 = vpack.c.b16 %v410, %v407
        %v453 = vpack.c.b16 %v411, %v408
        %v454 = vpack.c.b16 %v412, %v409
        %v455 = vpack.c.b16 %v416, %v413
        %v456 = vpack.c.b16 %v417, %v414
        %v457 = vpack.c.b16 %v418, %v415
        %v458 = vpack.c.b16 %v422, %v419
        %v459 = vpack.c.b16 %v423, %v420
        %v460 = vpack.c.b16 %v424, %v421
        %v461 = vpack.c.b16 %v428, %v425
        %v462 = vpack.c.b16 %v429, %v426
        %v463 = vpack.c.b16 %v430, %v427
        %v464 = vpack.c.b16 %v434, %v431
        %v465 = vpack.c.b16 %v435, %v432
        %v466 = vpack.c.b16 %v436, %v433
        %v467 = vpack.c.b16 %v440, %v437
        %v468 = vpack.c.b16 %v441, %v438
        %v469 = vpack.c.b16 %v442, %v439
        %v470 = vpack.c.b16 %v446, %v443
        %v471 = vpack.c.b16 %v447, %v444
        %v472 = vpack.c.b16 %v448, %v445
        %v525 = vunpack.c.l.b16 %v329
        %v526 = vunpack.c.l.b16 %v330
        %v527 = vunpack.c.l.b16 %v331
        %v528 = vunpack.c.l.b16 %v332
        %v529 = vunpack.c.l.b16 %v333
        %v530 = vunpack.c.l.b16 %v334
        %v531 = vunpack.c.l.b16 %v335
        %v532 = vunpack.c.l.b16 %v336
        %v533 = vunpack.c.l.b16 %v337
        %v534 = vunpack.c.l.b16 %v338
        %v535 = vunpack.c.l.b16 %v339
        %v536 = vunpack.c.l.b16 %v340
        %v537 = vunpack.c.l.b16 %v341
        %v538 = vunpack.c.l.b16 %v342
        %v539 = vunpack.c.l.b16 %v343
        %v540 = vunpack.c.l.b16 %v344
        %v541 = vunpack.c.l.b16 %v345
        %v542 = vunpack.c.l.b16 %v346
        %v543 = vunpack.c.l.b16 %v347
        %v544 = vunpack.c.l.b16 %v348
        %v545 = vunpack.c.l.b16 %v349
        %v546 = vunpack.c.l.b16 %v350
        %v547 = vunpack.c.l.b16 %v351
        %v548 = vunpack.c.l.b16 %v352
        %v549 = vunpack.c.l.b16 %v353
        %v550 = vunpack.c.l.b16 %v354
        %v551 = vunpack.c.l.b16 %v355
        %v552 = vunpack.c.l.b16 %v356
        %v553 = vunpack.c.l.b16 %v357
        %v554 = vunpack.c.l.b16 %v358
        %v555 = vunpack.c.l.b16 %v359
        %v556 = vunpack.c.l.b16 %v360
        %v557 = vunpack.c.l.b16 %v361
        %v558 = vunpack.c.l.b16 %v362
        %v559 = vunpack.c.l.b16 %v363
        %v560 = vunpack.c.l.b16 %v364
        %v561 = vpack.c.b16 %v526, %v525
        %v562 = vpack.c.b16 %v528, %v527
        %v563 = vpack.c.b16 %v530, %v529
        %v564 = vpack.c.b16 %v532, %v531
        %v565 = vpack.c.b16 %v534, %v533
        %v566 = vpack.c.b16 %v536, %v535
        %v567 = vpack.c.b16 %v538, %v537
        %v568 = vpack.c.b16 %v540, %v539
        %v569 = vpack.c.b16 %v542, %v541
        %v570 = vpack.c.b16 %v544, %v543
        %v571 = vpack.c.b16 %v546, %v545
        %v572 = vpack.c.b16 %v548, %v547
        %v573 = vpack.c.b16 %v550, %v549
        %v574 = vpack.c.b16 %v552, %v551
        %v575 = vpack.c.b16 %v554, %v553
        %v576 = vpack.c.b16 %v556, %v555
        %v577 = vpack.c.b16 %v558, %v557
        %v578 = vpack.c.b16 %v560, %v559
        %vm597 = vcmask 261120
        %v599 = vsel %vm597, %v451, 0
        %v602 = vsel %vm597, %v454, 0
        %v605 = vsel %vm597, %v457, 0
        %v608 = vsel %vm597, %v460, 0
        %v611 = vsel %vm597, %v463, 0
        %v614 = vsel %vm597, %v466, 0
        %v617 = vsel %vm597, %v469, 0
        %v620 = vsel %vm597, %v472, 0
        %622 = vmatpush.bf16.msra.mxu0 %v568
        %623 = vmatpush.bf16.msra.mxu0 %v567
        %624 = vmatpush.bf16.msra.mxu0 %v566
        %625 = vmatpush.bf16.msra.mxu0 %v565
        %626 = vmatpush.bf16.msra.mxu0 %v564
        %627 = vmatpush.bf16.msra.mxu0 %v563
        %628 = vmatpush.bf16.msra.mxu0 %v562
        %629 = vmatpush.bf16.msra.mxu0 %v561
        %630 = vmatmul.bf16.gmra.mxu0 %v449
        %v631 = vpop.f32.mrf.mxu0
        %v632 = vadd.f32 %v367, %v631
        %v633 = vpop.f32.mrf.mxu0
        %v634 = vadd.f32 %v367, %v633
        %635 = vmatmul.bf16.gmra.mxu0 %v452
        %v636 = vpop.f32.mrf.mxu0
        %v637 = vadd.f32 %v367, %v636
        %v638 = vpop.f32.mrf.mxu0
        %v639 = vadd.f32 %v367, %v638
        %640 = vmatmul.bf16.gmra.mxu0 %v455
        %v641 = vpop.f32.mrf.mxu0
        %v642 = vadd.f32 %v367, %v641
        %v643 = vpop.f32.mrf.mxu0
        %v644 = vadd.f32 %v367, %v643
        %645 = vmatmul.bf16.gmra.mxu0 %v458
        %v646 = vpop.f32.mrf.mxu0
        %v647 = vadd.f32 %v367, %v646
        %v648 = vpop.f32.mrf.mxu0
        %v649 = vadd.f32 %v367, %v648
        %650 = vmatmul.bf16.gmra.mxu0 %v461
        %v651 = vpop.f32.mrf.mxu0
        %v652 = vadd.f32 %v367, %v651
        %v653 = vpop.f32.mrf.mxu0
        %v654 = vadd.f32 %v367, %v653
        %655 = vmatmul.bf16.gmra.mxu0 %v464
        %v656 = vpop.f32.mrf.mxu0
        %v657 = vadd.f32 %v367, %v656
        %v658 = vpop.f32.mrf.mxu0
        %v659 = vadd.f32 %v367, %v658
        %660 = vmatmul.bf16.gmra.mxu0 %v467
        %v661 = vpop.f32.mrf.mxu0
        %v662 = vadd.f32 %v367, %v661
        %v663 = vpop.f32.mrf.mxu0
        %v664 = vadd.f32 %v367, %v663
        %665 = vmatmul.bf16.gmra.mxu0 %v470
        %v666 = vpop.f32.mrf.mxu0
        %v667 = vadd.f32 %v367, %v666
        %v668 = vpop.f32.mrf.mxu0
        %v669 = vadd.f32 %v367, %v668
        %670 = vdwg.mxu0
        %671 = vmatpush.bf16.msra.mxu0 %v576
        %672 = vmatpush.bf16.msra.mxu0 %v575
        %673 = vmatpush.bf16.msra.mxu0 %v574
        %674 = vmatpush.bf16.msra.mxu0 %v573
        %675 = vmatpush.bf16.msra.mxu0 %v572
        %676 = vmatpush.bf16.msra.mxu0 %v571
        %677 = vmatpush.bf16.msra.mxu0 %v570
        %678 = vmatpush.bf16.msra.mxu0 %v569
        %679 = vmatmul.bf16.gmra.mxu0 %v450
        %v680 = vpop.f32.mrf.mxu0
        %v681 = vadd.f32 %v632, %v680
        %v682 = vpop.f32.mrf.mxu0
        %v683 = vadd.f32 %v634, %v682
        %684 = vmatmul.bf16.gmra.mxu0 %v453
        %v685 = vpop.f32.mrf.mxu0
        %v686 = vadd.f32 %v637, %v685
        %v687 = vpop.f32.mrf.mxu0
        %v688 = vadd.f32 %v639, %v687
        %689 = vmatmul.bf16.gmra.mxu0 %v456
        %v690 = vpop.f32.mrf.mxu0
        %v691 = vadd.f32 %v642, %v690
        %v692 = vpop.f32.mrf.mxu0
        %v693 = vadd.f32 %v644, %v692
        %694 = vmatmul.bf16.gmra.mxu0 %v459
        %v695 = vpop.f32.mrf.mxu0
        %v696 = vadd.f32 %v647, %v695
        %v697 = vpop.f32.mrf.mxu0
        %v698 = vadd.f32 %v649, %v697
        %699 = vmatmul.bf16.gmra.mxu0 %v462
        %v700 = vpop.f32.mrf.mxu0
        %v701 = vadd.f32 %v652, %v700
        %v702 = vpop.f32.mrf.mxu0
        %v703 = vadd.f32 %v654, %v702
        %704 = vmatmul.bf16.gmra.mxu0 %v465
        %v705 = vpop.f32.mrf.mxu0
        %v706 = vadd.f32 %v657, %v705
        %v707 = vpop.f32.mrf.mxu0
        %v708 = vadd.f32 %v659, %v707
        %709 = vmatmul.bf16.gmra.mxu0 %v468
        %v710 = vpop.f32.mrf.mxu0
        %v711 = vadd.f32 %v662, %v710
        %v712 = vpop.f32.mrf.mxu0
        %v713 = vadd.f32 %v664, %v712
        %714 = vmatmul.bf16.gmra.mxu0 %v471
        %v715 = vpop.f32.mrf.mxu0
        %v716 = vadd.f32 %v667, %v715
        %v717 = vpop.f32.mrf.mxu0
        %v718 = vadd.f32 %v669, %v717
        %719 = vdwg.mxu0
        %720 = vmatpush.bf16.msra.mxu0 0
        %721 = vmatpush.bf16.msra.mxu0 0
        %722 = vmatpush.bf16.msra.mxu0 0
        %723 = vmatpush.bf16.msra.mxu0 0
        %724 = vmatpush.bf16.msra.mxu0 0
        %725 = vmatpush.bf16.msra.mxu0 0
        %726 = vmatpush.bf16.msra.mxu0 %v578
        %727 = vmatpush.bf16.msra.mxu0 %v577
        %728 = vmatmul.bf16.gmra.mxu0 %v599
        %v729 = vpop.f32.mrf.mxu0
        %v730 = vadd.f32 %v681, %v729
        %v731 = vpop.f32.mrf.mxu0
        %v732 = vadd.f32 %v683, %v731
        %733 = vmatmul.bf16.gmra.mxu0 %v602
        %v734 = vpop.f32.mrf.mxu0
        %v735 = vadd.f32 %v686, %v734
        %v736 = vpop.f32.mrf.mxu0
        %v737 = vadd.f32 %v688, %v736
        %738 = vmatmul.bf16.gmra.mxu0 %v605
        %v739 = vpop.f32.mrf.mxu0
        %v740 = vadd.f32 %v691, %v739
        %v741 = vpop.f32.mrf.mxu0
        %v742 = vadd.f32 %v693, %v741
        %743 = vmatmul.bf16.gmra.mxu0 %v608
        %v744 = vpop.f32.mrf.mxu0
        %v745 = vadd.f32 %v696, %v744
        %v746 = vpop.f32.mrf.mxu0
        %v747 = vadd.f32 %v698, %v746
        %748 = vmatmul.bf16.gmra.mxu0 %v611
        %v749 = vpop.f32.mrf.mxu0
        %v750 = vadd.f32 %v701, %v749
        %v751 = vpop.f32.mrf.mxu0
        %v752 = vadd.f32 %v703, %v751
        %753 = vmatmul.bf16.gmra.mxu0 %v614
        %v754 = vpop.f32.mrf.mxu0
        %v755 = vadd.f32 %v706, %v754
        %v756 = vpop.f32.mrf.mxu0
        %v757 = vadd.f32 %v708, %v756
        %758 = vmatmul.bf16.gmra.mxu0 %v617
        %v759 = vpop.f32.mrf.mxu0
        %v760 = vadd.f32 %v711, %v759
        %v761 = vpop.f32.mrf.mxu0
        %v762 = vadd.f32 %v713, %v761
        %763 = vmatmul.bf16.gmra.mxu0 %v620
        %v764 = vpop.f32.mrf.mxu0
        %v765 = vadd.f32 %v716, %v764
        %v766 = vpop.f32.mrf.mxu0
        %v767 = vadd.f32 %v718, %v766
        %768 = vdwg.mxu0
        %v769 = vld [vmem:[#allocation2] sm:$0xff]
        %v770 = vld [vmem:[#allocation2 + $0x8] sm:$0xff]
        %v771 = vld [vmem:[#allocation2 + $0x10] sm:$0xff]
        %v772 = vld [vmem:[#allocation2 + $0x18] sm:$0xff]
        %v773 = vld [vmem:[#allocation2 + $0x20] sm:$0xff]
        %v774 = vld [vmem:[#allocation2 + $0x28] sm:$0xff]
        %v775 = vld [vmem:[#allocation2 + $0x30] sm:$0xff]
        %v776 = vld [vmem:[#allocation2 + $0x38] sm:$0xff]
        %v777 = vld [vmem:[#allocation2 + $0x40] sm:$0xff]
        %v778 = vld [vmem:[#allocation2 + $0x48] sm:$0xff]
        %v779 = vld [vmem:[#allocation2 + $0x50] sm:$0xff]
        %v780 = vld [vmem:[#allocation2 + $0x58] sm:$0xff]
        %v781 = vld [vmem:[#allocation2 + $0x60] sm:$0xff]
        %v782 = vld [vmem:[#allocation2 + $0x68] sm:$0xff]
        %v783 = vld [vmem:[#allocation2 + $0x70] sm:$0xff]
        %v784 = vld [vmem:[#allocation2 + $0x78] sm:$0xff]
        %v785 = vsub.f32 %v730, %v769
        %v786 = vsub.f32 %v732, %v770
        %v787 = vsub.f32 %v735, %v771
        %v788 = vsub.f32 %v737, %v772
        %v789 = vsub.f32 %v740, %v773
        %v790 = vsub.f32 %v742, %v774
        %v791 = vsub.f32 %v745, %v775
        %v792 = vsub.f32 %v747, %v776
        %v793 = vsub.f32 %v750, %v777
        %v794 = vsub.f32 %v752, %v778
        %v795 = vsub.f32 %v755, %v779
        %v796 = vsub.f32 %v757, %v780
        %v797 = vsub.f32 %v760, %v781
        %v798 = vsub.f32 %v762, %v782
        %v799 = vsub.f32 %v765, %v783
        %v800 = vsub.f32 %v767, %v784
        %v801 = vmul.f32 %v785, 0.5
        %v802 = vmul.f32 %v786, 0.5
        %v803 = vmul.f32 %v787, 0.5
        %v804 = vmul.f32 %v788, 0.5
        %v805 = vmul.f32 %v789, 0.5
        %v806 = vmul.f32 %v790, 0.5
        %v807 = vmul.f32 %v791, 0.5
        %v808 = vmul.f32 %v792, 0.5
        %v809 = vmul.f32 %v793, 0.5
        %v810 = vmul.f32 %v794, 0.5
        %v811 = vmul.f32 %v795, 0.5
        %v812 = vmul.f32 %v796, 0.5
        %v813 = vmul.f32 %v797, 0.5
        %v814 = vmul.f32 %v798, 0.5
        %v815 = vmul.f32 %v799, 0.5
        %v816 = vmul.f32 %v800, 0.5
        %v817 = vadd.f32 %v769, %v801
        %v818 = vadd.f32 %v770, %v802
        %v819 = vadd.f32 %v771, %v803
        %v820 = vadd.f32 %v772, %v804
        %v821 = vadd.f32 %v773, %v805
        %v822 = vadd.f32 %v774, %v806
        %v823 = vadd.f32 %v775, %v807
        %v824 = vadd.f32 %v776, %v808
        %v825 = vadd.f32 %v777, %v809
        %v826 = vadd.f32 %v778, %v810
        %v827 = vadd.f32 %v779, %v811
        %v828 = vadd.f32 %v780, %v812
        %v829 = vadd.f32 %v781, %v813
        %v830 = vadd.f32 %v782, %v814
        %v831 = vadd.f32 %v783, %v815
        %v832 = vadd.f32 %v784, %v816
        %vm833 = vcmp.ge.f32.partialorder %v817, 1.0
        %vm834 = vcmp.ge.f32.partialorder %v818, 1.0
        %vm835 = vcmp.ge.f32.partialorder %v819, 1.0
        %vm836 = vcmp.ge.f32.partialorder %v820, 1.0
        %vm837 = vcmp.ge.f32.partialorder %v821, 1.0
        %vm838 = vcmp.ge.f32.partialorder %v822, 1.0
        %vm839 = vcmp.ge.f32.partialorder %v823, 1.0
        %vm840 = vcmp.ge.f32.partialorder %v824, 1.0
        %vm841 = vcmp.ge.f32.partialorder %v825, 1.0
        %vm842 = vcmp.ge.f32.partialorder %v826, 1.0
        %vm843 = vcmp.ge.f32.partialorder %v827, 1.0
        %vm844 = vcmp.ge.f32.partialorder %v828, 1.0
        %vm845 = vcmp.ge.f32.partialorder %v829, 1.0
        %vm846 = vcmp.ge.f32.partialorder %v830, 1.0
        %vm847 = vcmp.ge.f32.partialorder %v831, 1.0
        %vm848 = vcmp.ge.f32.partialorder %v832, 1.0
        %v849 = vsel %vm833, 1, 0
        %v850 = vsel %vm834, 1, 0
        %v851 = vsel %vm835, 1, 0
        %v852 = vsel %vm836, 1, 0
        %v853 = vsel %vm837, 1, 0
        %v854 = vsel %vm838, 1, 0
        %v855 = vsel %vm839, 1, 0
        %v856 = vsel %vm840, 1, 0
        %v857 = vsel %vm841, 1, 0
        %v858 = vsel %vm842, 1, 0
        %v859 = vsel %vm843, 1, 0
        %v860 = vsel %vm844, 1, 0
        %v861 = vsel %vm845, 1, 0
        %v862 = vsel %vm846, 1, 0
        %v863 = vsel %vm847, 1, 0
        %v864 = vsel %vm848, 1, 0
        %v865 = vcvt.s32.f32 %v849
        %v866 = vcvt.s32.f32 %v850
        %v867 = vcvt.s32.f32 %v851
        %v868 = vcvt.s32.f32 %v852
        %v869 = vcvt.s32.f32 %v853
        %v870 = vcvt.s32.f32 %v854
        %v871 = vcvt.s32.f32 %v855
        %v872 = vcvt.s32.f32 %v856
        %v873 = vcvt.s32.f32 %v857
        %v874 = vcvt.s32.f32 %v858
        %v875 = vcvt.s32.f32 %v859
        %v876 = vcvt.s32.f32 %v860
        %v877 = vcvt.s32.f32 %v861
        %v878 = vcvt.s32.f32 %v862
        %v879 = vcvt.s32.f32 %v863
        %v880 = vcvt.s32.f32 %v864
        %vm881 = vcmp.gt.f32.partialorder %v865, 0.0
        %vm882 = vcmp.gt.f32.partialorder %v866, 0.0
        %vm883 = vcmp.gt.f32.partialorder %v867, 0.0
        %vm884 = vcmp.gt.f32.partialorder %v868, 0.0
        %vm885 = vcmp.gt.f32.partialorder %v869, 0.0
        %vm886 = vcmp.gt.f32.partialorder %v870, 0.0
        %vm887 = vcmp.gt.f32.partialorder %v871, 0.0
        %vm888 = vcmp.gt.f32.partialorder %v872, 0.0
        %vm889 = vcmp.gt.f32.partialorder %v873, 0.0
        %vm890 = vcmp.gt.f32.partialorder %v874, 0.0
        %vm891 = vcmp.gt.f32.partialorder %v875, 0.0
        %vm892 = vcmp.gt.f32.partialorder %v876, 0.0
        %vm893 = vcmp.gt.f32.partialorder %v877, 0.0
        %vm894 = vcmp.gt.f32.partialorder %v878, 0.0
        %vm895 = vcmp.gt.f32.partialorder %v879, 0.0
        %vm896 = vcmp.gt.f32.partialorder %v880, 0.0
        %v897 = vsel %vm881, 0.0, %v817
        %v898 = vsel %vm882, 0.0, %v818
        %v899 = vsel %vm883, 0.0, %v819
        %v900 = vsel %vm884, 0.0, %v820
        %v901 = vsel %vm885, 0.0, %v821
        %v902 = vsel %vm886, 0.0, %v822
        %v903 = vsel %vm887, 0.0, %v823
        %v904 = vsel %vm888, 0.0, %v824
        %v905 = vsel %vm889, 0.0, %v825
        %v906 = vsel %vm890, 0.0, %v826
        %v907 = vsel %vm891, 0.0, %v827
        %v908 = vsel %vm892, 0.0, %v828
        %v909 = vsel %vm893, 0.0, %v829
        %v910 = vsel %vm894, 0.0, %v830
        %v911 = vsel %vm895, 0.0, %v831
        %v912 = vsel %vm896, 0.0, %v832
        %913 = vst [vmem:[#allocation2] sm:$0xff] %v897
        %914 = vst [vmem:[#allocation2 + $0x8] sm:$0xff] %v898
        %915 = vst [vmem:[#allocation2 + $0x10] sm:$0xff] %v899
        %916 = vst [vmem:[#allocation2 + $0x18] sm:$0xff] %v900
        %917 = vst [vmem:[#allocation2 + $0x20] sm:$0xff] %v901
        %918 = vst [vmem:[#allocation2 + $0x28] sm:$0xff] %v902
        %919 = vst [vmem:[#allocation2 + $0x30] sm:$0xff] %v903
        %920 = vst [vmem:[#allocation2 + $0x38] sm:$0xff] %v904
        %921 = vst [vmem:[#allocation2 + $0x40] sm:$0xff] %v905
        %922 = vst [vmem:[#allocation2 + $0x48] sm:$0xff] %v906
        %923 = vst [vmem:[#allocation2 + $0x50] sm:$0xff] %v907
        %924 = vst [vmem:[#allocation2 + $0x58] sm:$0xff] %v908
        %925 = vst [vmem:[#allocation2 + $0x60] sm:$0xff] %v909
        %926 = vst [vmem:[#allocation2 + $0x68] sm:$0xff] %v910
        %927 = vst [vmem:[#allocation2 + $0x70] sm:$0xff] %v911
        %928 = vst [vmem:[#allocation2 + $0x78] sm:$0xff] %v912
        %v929 = vpack.c.bf16 %v865, %v865
        %v930 = vpack.c.bf16 %v866, %v866
        %v931 = vpack.c.bf16 %v867, %v867
        %v932 = vpack.c.bf16 %v868, %v868
        %v933 = vpack.c.bf16 %v869, %v869
        %v934 = vpack.c.bf16 %v870, %v870
        %v935 = vpack.c.bf16 %v871, %v871
        %v936 = vpack.c.bf16 %v872, %v872
        %v937 = vpack.c.bf16 %v873, %v873
        %v938 = vpack.c.bf16 %v874, %v874
        %v939 = vpack.c.bf16 %v875, %v875
        %v940 = vpack.c.bf16 %v876, %v876
        %v941 = vpack.c.bf16 %v877, %v877
        %v942 = vpack.c.bf16 %v878, %v878
        %v943 = vpack.c.bf16 %v879, %v879
        %v944 = vpack.c.bf16 %v880, %v880
        %945 = vst [vmem:[%s218] sm:$0xf] %v929
        %946 = vst [vmem:[%s218 + $0x4] sm:$0xf] %v930
        %947 = vst [vmem:[%s218 + $0x8] sm:$0xf] %v931
        %948 = vst [vmem:[%s218 + $0xc] sm:$0xf] %v932
        %949 = vst [vmem:[%s218 + $0x10] sm:$0xf] %v933
        %950 = vst [vmem:[%s218 + $0x14] sm:$0xf] %v934
        %951 = vst [vmem:[%s218 + $0x18] sm:$0xf] %v935
        %952 = vst [vmem:[%s218 + $0x1c] sm:$0xf] %v936
        %953 = vst [vmem:[%s218 + $0x20] sm:$0xf] %v937
        %954 = vst [vmem:[%s218 + $0x24] sm:$0xf] %v938
        %955 = vst [vmem:[%s218 + $0x28] sm:$0xf] %v939
        %956 = vst [vmem:[%s218 + $0x2c] sm:$0xf] %v940
        %957 = vst [vmem:[%s218 + $0x30] sm:$0xf] %v941
        %958 = vst [vmem:[%s218 + $0x34] sm:$0xf] %v942
        %959 = vst [vmem:[%s218 + $0x38] sm:$0xf] %v943
        %960 = vst [vmem:[%s218 + $0x3c] sm:$0xf] %v944
        %v961 = vld [vmem:[#allocation3] sm:$0xff]
        %v962 = vld [vmem:[#allocation3 + $0x8] sm:$0xff]
        %v963 = vld [vmem:[#allocation3 + $0x10] sm:$0xff]
        %v964 = vld [vmem:[#allocation3 + $0x18] sm:$0xff]
        %v965 = vld [vmem:[#allocation3 + $0x20] sm:$0xff]
        %v966 = vld [vmem:[#allocation3 + $0x28] sm:$0xff]
        %v967 = vld [vmem:[#allocation3 + $0x30] sm:$0xff]
        %v968 = vld [vmem:[#allocation3 + $0x38] sm:$0xff]
        %v969 = vld [vmem:[#allocation3 + $0x40] sm:$0xff]
        %v970 = vld [vmem:[#allocation3 + $0x48] sm:$0xff]
        %v971 = vld [vmem:[#allocation3 + $0x50] sm:$0xff]
        %v972 = vld [vmem:[#allocation3 + $0x58] sm:$0xff]
        %v973 = vld [vmem:[#allocation3 + $0x60] sm:$0xff]
        %v974 = vld [vmem:[#allocation3 + $0x68] sm:$0xff]
        %v975 = vld [vmem:[#allocation3 + $0x70] sm:$0xff]
        %v976 = vld [vmem:[#allocation3 + $0x78] sm:$0xff]
        %v977 = vsub.f32 %v865, %v961
        %v978 = vsub.f32 %v866, %v962
        %v979 = vsub.f32 %v867, %v963
        %v980 = vsub.f32 %v868, %v964
        %v981 = vsub.f32 %v869, %v965
        %v982 = vsub.f32 %v870, %v966
        %v983 = vsub.f32 %v871, %v967
        %v984 = vsub.f32 %v872, %v968
        %v985 = vsub.f32 %v873, %v969
        %v986 = vsub.f32 %v874, %v970
        %v987 = vsub.f32 %v875, %v971
        %v988 = vsub.f32 %v876, %v972
        %v989 = vsub.f32 %v877, %v973
        %v990 = vsub.f32 %v878, %v974
        %v991 = vsub.f32 %v879, %v975
        %v992 = vsub.f32 %v880, %v976
        %v993 = vmul.f32 %v977, 0.5
        %v994 = vmul.f32 %v978, 0.5
        %v995 = vmul.f32 %v979, 0.5
        %v996 = vmul.f32 %v980, 0.5
        %v997 = vmul.f32 %v981, 0.5
        %v998 = vmul.f32 %v982, 0.5
        %v999 = vmul.f32 %v983, 0.5
        %v1000 = vmul.f32 %v984, 0.5
        %v1001 = vmul.f32 %v985, 0.5
        %v1002 = vmul.f32 %v986, 0.5
        %v1003 = vmul.f32 %v987, 0.5
        %v1004 = vmul.f32 %v988, 0.5
        %v1005 = vmul.f32 %v989, 0.5
        %v1006 = vmul.f32 %v990, 0.5
        %v1007 = vmul.f32 %v991, 0.5
        %v1008 = vmul.f32 %v992, 0.5
        %v1009 = vadd.f32 %v961, %v993
        %v1010 = vadd.f32 %v962, %v994
        %v1011 = vadd.f32 %v963, %v995
        %v1012 = vadd.f32 %v964, %v996
        %v1013 = vadd.f32 %v965, %v997
        %v1014 = vadd.f32 %v966, %v998
        %v1015 = vadd.f32 %v967, %v999
        %v1016 = vadd.f32 %v968, %v1000
        %v1017 = vadd.f32 %v969, %v1001
        %v1018 = vadd.f32 %v970, %v1002
        %v1019 = vadd.f32 %v971, %v1003
        %v1020 = vadd.f32 %v972, %v1004
        %v1021 = vadd.f32 %v973, %v1005
        %v1022 = vadd.f32 %v974, %v1006
        %v1023 = vadd.f32 %v975, %v1007
        %v1024 = vadd.f32 %v976, %v1008
        %vm1025 = vcmp.ge.f32.partialorder %v1009, 1.0
        %vm1026 = vcmp.ge.f32.partialorder %v1010, 1.0
        %vm1027 = vcmp.ge.f32.partialorder %v1011, 1.0
        %vm1028 = vcmp.ge.f32.partialorder %v1012, 1.0
        %vm1029 = vcmp.ge.f32.partialorder %v1013, 1.0
        %vm1030 = vcmp.ge.f32.partialorder %v1014, 1.0
        %vm1031 = vcmp.ge.f32.partialorder %v1015, 1.0
        %vm1032 = vcmp.ge.f32.partialorder %v1016, 1.0
        %vm1033 = vcmp.ge.f32.partialorder %v1017, 1.0
        %vm1034 = vcmp.ge.f32.partialorder %v1018, 1.0
        %vm1035 = vcmp.ge.f32.partialorder %v1019, 1.0
        %vm1036 = vcmp.ge.f32.partialorder %v1020, 1.0
        %vm1037 = vcmp.ge.f32.partialorder %v1021, 1.0
        %vm1038 = vcmp.ge.f32.partialorder %v1022, 1.0
        %vm1039 = vcmp.ge.f32.partialorder %v1023, 1.0
        %vm1040 = vcmp.ge.f32.partialorder %v1024, 1.0
        %v1041 = vsel %vm1025, 1, 0
        %v1042 = vsel %vm1026, 1, 0
        %v1043 = vsel %vm1027, 1, 0
        %v1044 = vsel %vm1028, 1, 0
        %v1045 = vsel %vm1029, 1, 0
        %v1046 = vsel %vm1030, 1, 0
        %v1047 = vsel %vm1031, 1, 0
        %v1048 = vsel %vm1032, 1, 0
        %v1049 = vsel %vm1033, 1, 0
        %v1050 = vsel %vm1034, 1, 0
        %v1051 = vsel %vm1035, 1, 0
        %v1052 = vsel %vm1036, 1, 0
        %v1053 = vsel %vm1037, 1, 0
        %v1054 = vsel %vm1038, 1, 0
        %v1055 = vsel %vm1039, 1, 0
        %v1056 = vsel %vm1040, 1, 0
        %v1057 = vcvt.s32.f32 %v1041
        %v1058 = vcvt.s32.f32 %v1042
        %v1059 = vcvt.s32.f32 %v1043
        %v1060 = vcvt.s32.f32 %v1044
        %v1061 = vcvt.s32.f32 %v1045
        %v1062 = vcvt.s32.f32 %v1046
        %v1063 = vcvt.s32.f32 %v1047
        %v1064 = vcvt.s32.f32 %v1048
        %v1065 = vcvt.s32.f32 %v1049
        %v1066 = vcvt.s32.f32 %v1050
        %v1067 = vcvt.s32.f32 %v1051
        %v1068 = vcvt.s32.f32 %v1052
        %v1069 = vcvt.s32.f32 %v1053
        %v1070 = vcvt.s32.f32 %v1054
        %v1071 = vcvt.s32.f32 %v1055
        %v1072 = vcvt.s32.f32 %v1056
        %vm1073 = vcmp.gt.f32.partialorder %v1057, 0.0
        %vm1074 = vcmp.gt.f32.partialorder %v1058, 0.0
        %vm1075 = vcmp.gt.f32.partialorder %v1059, 0.0
        %vm1076 = vcmp.gt.f32.partialorder %v1060, 0.0
        %vm1077 = vcmp.gt.f32.partialorder %v1061, 0.0
        %vm1078 = vcmp.gt.f32.partialorder %v1062, 0.0
        %vm1079 = vcmp.gt.f32.partialorder %v1063, 0.0
        %vm1080 = vcmp.gt.f32.partialorder %v1064, 0.0
        %vm1081 = vcmp.gt.f32.partialorder %v1065, 0.0
        %vm1082 = vcmp.gt.f32.partialorder %v1066, 0.0
        %vm1083 = vcmp.gt.f32.partialorder %v1067, 0.0
        %vm1084 = vcmp.gt.f32.partialorder %v1068, 0.0
        %vm1085 = vcmp.gt.f32.partialorder %v1069, 0.0
        %vm1086 = vcmp.gt.f32.partialorder %v1070, 0.0
        %vm1087 = vcmp.gt.f32.partialorder %v1071, 0.0
        %vm1088 = vcmp.gt.f32.partialorder %v1072, 0.0
        %v1089 = vsel %vm1073, 0.0, %v1009
        %v1090 = vsel %vm1074, 0.0, %v1010
        %v1091 = vsel %vm1075, 0.0, %v1011
        %v1092 = vsel %vm1076, 0.0, %v1012
        %v1093 = vsel %vm1077, 0.0, %v1013
        %v1094 = vsel %vm1078, 0.0, %v1014
        %v1095 = vsel %vm1079, 0.0, %v1015
        %v1096 = vsel %vm1080, 0.0, %v1016
        %v1097 = vsel %vm1081, 0.0, %v1017
        %v1098 = vsel %vm1082, 0.0, %v1018
        %v1099 = vsel %vm1083, 0.0, %v1019
        %v1100 = vsel %vm1084, 0.0, %v1020
        %v1101 = vsel %vm1085, 0.0, %v1021
        %v1102 = vsel %vm1086, 0.0, %v1022
        %v1103 = vsel %vm1087, 0.0, %v1023
        %v1104 = vsel %vm1088, 0.0, %v1024
        %1105 = vst [vmem:[#allocation3] sm:$0xff] %v1089
        %1106 = vst [vmem:[#allocation3 + $0x8] sm:$0xff] %v1090
        %1107 = vst [vmem:[#allocation3 + $0x10] sm:$0xff] %v1091
        %1108 = vst [vmem:[#allocation3 + $0x18] sm:$0xff] %v1092
        %1109 = vst [vmem:[#allocation3 + $0x20] sm:$0xff] %v1093
        %1110 = vst [vmem:[#allocation3 + $0x28] sm:$0xff] %v1094
        %1111 = vst [vmem:[#allocation3 + $0x30] sm:$0xff] %v1095
        %1112 = vst [vmem:[#allocation3 + $0x38] sm:$0xff] %v1096
        %1113 = vst [vmem:[#allocation3 + $0x40] sm:$0xff] %v1097
        %1114 = vst [vmem:[#allocation3 + $0x48] sm:$0xff] %v1098
        %1115 = vst [vmem:[#allocation3 + $0x50] sm:$0xff] %v1099
        %1116 = vst [vmem:[#allocation3 + $0x58] sm:$0xff] %v1100
        %1117 = vst [vmem:[#allocation3 + $0x60] sm:$0xff] %v1101
        %1118 = vst [vmem:[#allocation3 + $0x68] sm:$0xff] %v1102
        %1119 = vst [vmem:[#allocation3 + $0x70] sm:$0xff] %v1103
        %1120 = vst [vmem:[#allocation3 + $0x78] sm:$0xff] %v1104
        %v1121 = vld [vmem:[%s242] sm:$0xff]
        %v1122 = vld [vmem:[%s242 + $0x8] sm:$0xff]
        %v1123 = vld [vmem:[%s242 + $0x10] sm:$0xff]
        %v1124 = vld [vmem:[%s242 + $0x18] sm:$0xff]
        %v1125 = vld [vmem:[%s242 + $0x20] sm:$0xff]
        %v1126 = vld [vmem:[%s242 + $0x28] sm:$0xff]
        %v1127 = vld [vmem:[%s242 + $0x30] sm:$0xff]
        %v1128 = vld [vmem:[%s242 + $0x38] sm:$0xff]
        %v1129 = vld [vmem:[%s242 + $0x40] sm:$0xff]
        %v1130 = vld [vmem:[%s242 + $0x48] sm:$0xff]
        %v1131 = vld [vmem:[%s242 + $0x50] sm:$0xff]
        %v1132 = vld [vmem:[%s242 + $0x58] sm:$0xff]
        %v1133 = vld [vmem:[%s242 + $0x60] sm:$0xff]
        %v1134 = vld [vmem:[%s242 + $0x68] sm:$0xff]
        %v1135 = vld [vmem:[%s242 + $0x70] sm:$0xff]
        %v1136 = vld [vmem:[%s242 + $0x78] sm:$0xff]
        %v1137 = vadd.f32 %v1121, %v1057
        %v1138 = vadd.f32 %v1122, %v1058
        %v1139 = vadd.f32 %v1123, %v1059
        %v1140 = vadd.f32 %v1124, %v1060
        %v1141 = vadd.f32 %v1125, %v1061
        %v1142 = vadd.f32 %v1126, %v1062
        %v1143 = vadd.f32 %v1127, %v1063
        %v1144 = vadd.f32 %v1128, %v1064
        %v1145 = vadd.f32 %v1129, %v1065
        %v1146 = vadd.f32 %v1130, %v1066
        %v1147 = vadd.f32 %v1131, %v1067
        %v1148 = vadd.f32 %v1132, %v1068
        %v1149 = vadd.f32 %v1133, %v1069
        %v1150 = vadd.f32 %v1134, %v1070
        %v1151 = vadd.f32 %v1135, %v1071
        %v1152 = vadd.f32 %v1136, %v1072
        %1153 = vst [vmem:[%s242] sm:$0xff] %v1137
        %1154 = vst [vmem:[%s242 + $0x8] sm:$0xff] %v1138
        %1155 = vst [vmem:[%s242 + $0x10] sm:$0xff] %v1139
        %1156 = vst [vmem:[%s242 + $0x18] sm:$0xff] %v1140
        %1157 = vst [vmem:[%s242 + $0x20] sm:$0xff] %v1141
        %1158 = vst [vmem:[%s242 + $0x28] sm:$0xff] %v1142
        %1159 = vst [vmem:[%s242 + $0x30] sm:$0xff] %v1143
        %1160 = vst [vmem:[%s242 + $0x38] sm:$0xff] %v1144
        %1161 = vst [vmem:[%s242 + $0x40] sm:$0xff] %v1145
        %1162 = vst [vmem:[%s242 + $0x48] sm:$0xff] %v1146
        %1163 = vst [vmem:[%s242 + $0x50] sm:$0xff] %v1147
        %1164 = vst [vmem:[%s242 + $0x58] sm:$0xff] %v1148
        %1165 = vst [vmem:[%s242 + $0x60] sm:$0xff] %v1149
        %1166 = vst [vmem:[%s242 + $0x68] sm:$0xff] %v1150
        %1167 = vst [vmem:[%s242 + $0x70] sm:$0xff] %v1151
        %1168 = vst [vmem:[%s242 + $0x78] sm:$0xff] %v1152
        %p1169 = scmp.eq.s32.totalorder %s24, 3
        // Predicated region
        $region37: #{detection_backbone_forward.9} parent=31 // pred_check
          %p1170 = pneg %p1169
        $region38: #{detection_backbone_forward.9} parent=31 // pred_check_branch
          %1172 = sbr.rel (%p1170) target = $region40
        $region39: #{detection_backbone_forward.9} parent=31 // pred_region
          %v1173 = vld [vmem:[%s242] sm:$0xff]
          %v1174 = vld [vmem:[%s242 + $0x8] sm:$0xff]
          %v1175 = vld [vmem:[%s242 + $0x10] sm:$0xff]
          %v1176 = vld [vmem:[%s242 + $0x18] sm:$0xff]
          %v1177 = vld [vmem:[%s242 + $0x20] sm:$0xff]
          %v1178 = vld [vmem:[%s242 + $0x28] sm:$0xff]
          %v1179 = vld [vmem:[%s242 + $0x30] sm:$0xff]
          %v1180 = vld [vmem:[%s242 + $0x38] sm:$0xff]
          %v1181 = vld [vmem:[%s242 + $0x40] sm:$0xff]
          %v1182 = vld [vmem:[%s242 + $0x48] sm:$0xff]
          %v1183 = vld [vmem:[%s242 + $0x50] sm:$0xff]
          %v1184 = vld [vmem:[%s242 + $0x58] sm:$0xff]
          %v1185 = vld [vmem:[%s242 + $0x60] sm:$0xff]
          %v1186 = vld [vmem:[%s242 + $0x68] sm:$0xff]
          %v1187 = vld [vmem:[%s242 + $0x70] sm:$0xff]
          %v1188 = vld [vmem:[%s242 + $0x78] sm:$0xff]
          %v1189 = vmul.f32 %v1173, 0.25
          %v1190 = vmul.f32 %v1174, 0.25
          %v1191 = vmul.f32 %v1175, 0.25
          %v1192 = vmul.f32 %v1176, 0.25
          %v1193 = vmul.f32 %v1177, 0.25
          %v1194 = vmul.f32 %v1178, 0.25
          %v1195 = vmul.f32 %v1179, 0.25
          %v1196 = vmul.f32 %v1180, 0.25
          %v1197 = vmul.f32 %v1181, 0.25
          %v1198 = vmul.f32 %v1182, 0.25
          %v1199 = vmul.f32 %v1183, 0.25
          %v1200 = vmul.f32 %v1184, 0.25
          %v1201 = vmul.f32 %v1185, 0.25
          %v1202 = vmul.f32 %v1186, 0.25
          %v1203 = vmul.f32 %v1187, 0.25
          %v1204 = vmul.f32 %v1188, 0.25
          %1205 = vst [vmem:[%s242] sm:$0xff] %v1189
          %1206 = vst [vmem:[%s242 + $0x8] sm:$0xff] %v1190
          %1207 = vst [vmem:[%s242 + $0x10] sm:$0xff] %v1191
          %1208 = vst [vmem:[%s242 + $0x18] sm:$0xff] %v1192
          %1209 = vst [vmem:[%s242 + $0x20] sm:$0xff] %v1193
          %1210 = vst [vmem:[%s242 + $0x28] sm:$0xff] %v1194
          %1211 = vst [vmem:[%s242 + $0x30] sm:$0xff] %v1195
          %1212 = vst [vmem:[%s242 + $0x38] sm:$0xff] %v1196
          %1213 = vst [vmem:[%s242 + $0x40] sm:$0xff] %v1197
          %1214 = vst [vmem:[%s242 + $0x48] sm:$0xff] %v1198
          %1215 = vst [vmem:[%s242 + $0x50] sm:$0xff] %v1199
          %1216 = vst [vmem:[%s242 + $0x58] sm:$0xff] %v1200
          %1217 = vst [vmem:[%s242 + $0x60] sm:$0xff] %v1201
          %1218 = vst [vmem:[%s242 + $0x68] sm:$0xff] %v1202
          %1219 = vst [vmem:[%s242 + $0x70] sm:$0xff] %v1203
          %1220 = vst [vmem:[%s242 + $0x78] sm:$0xff] %v1204
        $region40: #{detection_backbone_forward.9} parent=31 // pred_fallthru
          _
        %s1221 = sand.u32 %s111, 1
        %s1222 = scalar_lea.sflag [#allocation5], %s1221
        %s1223 = sand.u32 %s111, 1
        %s1224 = smul.addr %s1223, 64
        %s1225 = scalar_lea.vmem [#allocation4], %s1224
        %s1226 = smul.u32 16, %s23
        %p1227 = scmp.lt.s32.totalorder %s1226, 15
        %s1228 = scalar_select %p1227, %s1226, 15
        %s1229 = smul.addr %s1228, 8
        %s1230 = scalar_lea.vmem %s4, %s1229
        // Predicated region
        $region41: #{detection_backbone_forward.9} parent=31 // pred_check
          %p1231 = pneg %p121
        $region42: #{detection_backbone_forward.9} parent=31 // pred_check_branch
          %1233 = sbr.rel (%p1231) target = $region44
        $region43: #{detection_backbone_forward.9} parent=31 // pred_region
          %s1234 = smul.u32 16, %s23
          %1236 = vsyncadd %s1222, 0
          %s1237 = smul.addr %s24, 16
          %s1238 = sadd.s32 %s1234, %s1237
          %s1239 = smul.addr %s1238, 4
          %s1240 = scalar_lea.hbm %s3, %s1239
          %s1241 = sshll.u32 %s1225, 4
          %s1242 = int_to_ptr.vmem [resolvable:$true] %s1241
          %s1243 = sshll.u32 %s1240, 4
          %s1244 = int_to_ptr.hbm [resolvable:$true] %s1243
          %1249 = dma.vmem_to_hbm [thread:$0]  %s1242, 1024, %s1244, %s1222, 64, 64, 4
        $region44: #{detection_backbone_forward.9} parent=31 // pred_fallthru
          _
        // Predicated region
        $region45: #{detection_backbone_forward.9} parent=31 // pred_check
          %p1250 = pneg %p147
        $region46: #{detection_backbone_forward.9} parent=31 // pred_check_branch
          %1252 = sbr.rel (%p1250) target = $region48
        $region47: #{detection_backbone_forward.9} parent=31 // pred_region
          %s1253 = smul.u32 16, %s23
        $region48: #{detection_backbone_forward.9} parent=31 // pred_fallthru
          _
        // Predicated region
        $region49: #{detection_backbone_forward.9} parent=31 // pred_check
          %p1254 = pneg %p147
        $region50: #{detection_backbone_forward.9} parent=31 // pred_check_branch
          %1256 = sbr.rel (%p1254) target = $region52
        $region51: #{detection_backbone_forward.9} parent=31 // pred_region
          %s1257 = smul.u32 16, %s23
          %p1258 = scmp.lt.s32.totalorder %s1257, 15
          %s1259 = scalar_select %p1258, %s1257, 15
          %s1260 = smul.addr %s1259, 8
          %s1261 = scalar_lea.vmem %s4, %s1260
        $region52: #{detection_backbone_forward.9} parent=31 // pred_fallthru
          _
      $region32: #{detection_backbone_forward.9} parent=5 // pred_fallthru
        _
      %p1262 = scmp.le.s32.totalorder 2, %s14
      // Predicated region
      $region53: #{detection_backbone_forward.9} parent=5 // pred_check
        %p1263 = pneg %p1262
      $region54: #{detection_backbone_forward.9} parent=5 // pred_check_branch
        %1265 = sbr.rel (%p1263) target = $region56
      $region55: #{detection_backbone_forward.9} parent=5 // pred_region
        %s1266 = ssub.s32 %s14, 2
        // Predicated region
        $region57: #{detection_backbone_forward.9} parent=55 // pred_check
          %p1267 = pneg %p127
        $region58: #{detection_backbone_forward.9} parent=55 // pred_check_branch
          %1269 = sbr.rel (%p1267) target = $region60
        $region59: #{detection_backbone_forward.9} parent=55 // pred_region
          %s1270 = sand.u32 %s112, 1
          %s1271 = scalar_lea.sflag [#allocation5], %s1270
          %s1272 = sand.u32 %s112, 1
          %s1273 = smul.addr %s1272, 64
          %s1274 = scalar_lea.vmem [#allocation4], %s1273
          %1276 = dma.done %s1271, 1024
        $region60: #{detection_backbone_forward.9} parent=55 // pred_fallthru
          _
      $region56: #{detection_backbone_forward.9} parent=5 // pred_fallthru
        _
    $region6: #{detection_backbone_forward.9} parent=1 // loop_footer
      %s18 = sadd.s32 1, %s14
    $region7: #{detection_backbone_forward.9} parent=1 // loop_footer_branch
      %13 = sbr.rel target = $region3
    $region8: #{detection_backbone_forward.9} parent=1 // loop_exit
      _
    %1277 = vsyncpa [#allocation5], 1
    %s1278 = scalar_lea.sflag [#allocation5], 1
    %1279 = vsyncpa %s1278, 1

</llo_original>
